<compile_context>
chip_gen: v7x
topology: tpu7x:2x2x1
jax: 0.10.0
libtpu: 0.0.40
codegen_flags: <defaults>
</compile_context>

<pallas_src>
import math

import jax
import jax.numpy as jnp
import numpy as np
from jax.experimental import pallas as pl
from jax.experimental.pallas import tpu as pltpu


# ----------------------------------------------------------------------------
# Bessel coefficients:  c_bessel[k] = 2 * Re( J_k(-i) * i^k ) = 2 * I_k(1),
#                       c_bessel[0] = I_0(1).   (no scipy dependency)
# ----------------------------------------------------------------------------
def _modified_bessel_i(k: int, x: float = 1.0, terms: int = 40) -> float:
    s = 0.0
    for m in range(terms):
        s += (x / 2.0) ** (2 * m + k) / (math.factorial(m) * math.factorial(m + k))
    return s


def bessel_coefficients(order: int) -> np.ndarray:
    c = np.array([2.0 * _modified_bessel_i(k, 1.0) for k in range(order + 1)],
                 dtype=np.float64)
    c[0] /= 2.0
    return c


# ----------------------------------------------------------------------------
# Resident-adj kernel: whole (pre-scaled, bf16) adj lives in VMEM, single-
# buffered; the feature dimension is tiled by the grid and split into
# independent recurrence chains so the scheduler can overlap one chain's MXU
# drain with the other chain's VPU subtract/AXPY.
# ----------------------------------------------------------------------------
def make_resident_kernel(order: int, coeffs, n_chains: int, tfc: int):
    c = [float(v) for v in coeffs]           # compile-time constants

    def kernel(adj_ref, x_ref, o_ref):
        # adj_ref: (Np, Np) bf16 holding (2*alpha)*adj, grid-invariant.
        # x_ref:   (Np, tf) bf16 feature slab.   o_ref: (Np, tf) f32.
        pps, ps = [], []
        for ci in range(n_chains):
            lo = ci * tfc
            x_bf = x_ref[:, lo:lo + tfc]                       # z_0 (bf16)
            pp = x_bf.astype(jnp.float32)
            # z_1 = alpha * adj @ x   (adj already carries 2*alpha)
            p = 0.5 * jnp.dot(adj_ref[...], x_bf,
                              preferred_element_type=jnp.float32)
            # Accumulate directly into the VMEM-resident output block.
            o_ref[:, lo:lo + tfc] = c[0] * pp + c[1] * p
            pps.append(pp)
            ps.append(p)

        # order is a Python int -> fully unrolled; chains interleaved.
        for k in range(2, order + 1):
            for ci in range(n_chains):
                lo = ci * tfc
                n = jnp.dot(adj_ref[...], ps[ci].astype(jnp.bfloat16),
                            preferred_element_type=jnp.float32) - pps[ci]
                o_ref[:, lo:lo + tfc] += c[k] * n
                pps[ci], ps[ci] = ps[ci], n

    return kernel


# ----------------------------------------------------------------------------
# Streamed-adj kernel (large N): adj stays in HBM; per hop it is streamed in
# contiguous row blocks through a manually double-buffered VMEM buffer.
# The recurrence state lives in three f32 VMEM scratch slabs whose roles are
# rotated at the Python level (no data copies).
# ----------------------------------------------------------------------------
def make_streamed_kernel(order: int, coeffs, Np: int, tf: int, tr: int):
    c = [float(v) for v in coeffs]
    nrb = Np // tr                            # static row-block count

    def kernel(adj_ref, x_ref, o_ref, bufs, sems, s_a, s_b, s_c, pbf):
        # adj_ref: (Np, Np) bf16 in HBM (pl.ANY), pre-scaled by 2*alpha.
        # x_ref:   (Np, tf) bf16 block.      o_ref: (Np, tf) f32 block.
        # bufs:    (2, tr, Np) bf16 adj row-block double buffer; sems: DMA (2,).
        # s_a/s_b/s_c: (Np, tf) f32 state;   pbf: (Np, tf) bf16 MXU RHS.
        def adj_copy(rb, slot):
            return pltpu.make_async_copy(adj_ref.at[pl.ds(rb * tr, tr), :],
                                         bufs.at[slot], sems.at[slot])

        prev, cur, nxt = s_a, s_b, s_c        # Python-level role rotation
        cur[...] = x_ref[...].astype(jnp.float32)          # z_0
        o_ref[...] = c[0] * cur[...]

        for h in range(1, order + 1):
            pbf[...] = cur[...].astype(jnp.bfloat16)       # RHS for this hop
            adj_copy(0, 0).start()
            for rb in range(nrb):                          # static -> fully unrolled
                slot = rb % 2
                adj_copy(rb, slot).wait()
                if rb + 1 < nrb:
                    adj_copy(rb + 1, 1 - slot).start()     # prefetch next block
                rows = jnp.dot(bufs[slot], pbf[...],
                               preferred_element_type=jnp.float32)
                lo = rb * tr
                if h == 1:
                    nxt[lo:lo + tr, :] = 0.5 * rows        # alpha * adj @ z_0
                else:
                    nxt[lo:lo + tr, :] = rows - prev[lo:lo + tr, :]
            o_ref[...] += c[h] * nxt[...]
            prev, cur, nxt = cur, nxt, prev

    return kernel


# ----------------------------------------------------------------------------
# Wrapper
# ----------------------------------------------------------------------------
def _round_up(v: int, m: int) -> int:
    return ((v + m - 1) // m) * m


def _vmem_capacity_bytes() -> int:
    """Generation-aware VMEM capacity; conservative default (v7x per-TC)."""
    try:
        cap = getattr(pltpu.get_tpu_info(), "vmem_capacity_bytes", None)
        if cap:
            return int(cap)
    except Exception:
        pass
    return 64 * 1024 * 1024


def _vmem_limit(est_bytes: int, cap_bytes: int):
    if est_bytes <= 24 * 1024 * 1024:
        return None                           # default scoped limit suffices
    return int(min(max(est_bytes * 5 // 4, 32 << 20), (cap_bytes * 9) // 10))


def _choose_tiling(Fp: int):
    """(tf, n_chains, tfc): prefer 256-wide chains (full MXU width on
    v6e/v7x), two chains to hide the serial recurrence, and >= 2 grid steps
    so v7x can split the parallel feature axis across its two TensorCores."""
    for tf, n_chains in ((512, 2), (256, 1), (128, 1)):
        if Fp % tf == 0 and Fp // tf >= 2:
            return tf, n_chains, tf // n_chains
    if Fp % 512 == 0:
        return 512, 2, 256
    if Fp % 256 == 0:
        return 256, 1, 256
    return 128, 1, 128


def expnet_pallas(adj: jax.Array, x: jax.Array, alpha: float, order: int,
                  *, force_streamed: bool = False) -> jax.Array:
    """Pallas ExpNet forward.  adj: [N, N], x: [N, F], alpha scalar."""
    N, F = x.shape
    assert adj.shape == (N, N)
    coeffs = bessel_coefficients(order)

    # Zero-pad to MXU/vreg-friendly sizes (exact: padded rows/cols stay zero).
    Np = _round_up(max(N, 8), 256)            # 256 = full MXU pass on v6e/v7x
    Fp = _round_up(F, 128)
    tf, n_chains, tfc = _choose_tiling(Fp)

    # Fold 2*alpha into adj once; feed the MXU bf16.  x DMA'd as bf16 too.
    adj2 = (2.0 * jnp.float32(alpha)) * adj.astype(jnp.float32)
    adj2 = jnp.pad(adj2, ((0, Np - N), (0, Np - N))).astype(jnp.bfloat16)
    xp = jnp.pad(x.astype(jnp.float32), ((0, Np - N), (0, Fp - F))).astype(jnp.bfloat16)

    vmem_cap = _vmem_capacity_bytes()
    # Resident-path budget: adj (bf16, single-buffered) + double-buffered bf16
    # x / f32 out blocks + ~3 live f32 state slabs (pp, p, n) + slack.
    resident_est = (Np * Np * 2 + 2 * Np * tf * 2 + 2 * Np * tf * 4
                    + 3 * Np * tf * 4 + (2 << 20))
    use_streamed = force_streamed or resident_est > (vmem_cap * 9) // 10

    if use_streamed:
        tf_s = min(tf, 256)
        if Fp % tf_s != 0:
            tf_s = 128
        tr = 256 if Np >= 2048 else 128
        streamed_est = (2 * tr * Np * 2 + 3 * Np * tf_s * 4 + Np * tf_s * 2
                        + 2 * Np * tf_s * 2 + 2 * Np * tf_s * 4 + (2 << 20))
        out = pl.pallas_call(
            make_streamed_kernel(order, coeffs, Np, tf_s, tr),
            out_shape=jax.ShapeDtypeStruct((Np, Fp), jnp.float32),
            grid=(Fp // tf_s,),
            in_specs=[pl.BlockSpec(memory_space=pl.ANY),           # adj in HBM
                      pl.BlockSpec((Np, tf_s), lambda j: (0, j))],
            out_specs=pl.BlockSpec((Np, tf_s), lambda j: (0, j)),
            scratch_shapes=[
                pltpu.VMEM((2, tr, Np), jnp.bfloat16),             # adj row blocks
                pltpu.SemaphoreType.DMA((2,)),
                pltpu.VMEM((Np, tf_s), jnp.float32),               # state A
                pltpu.VMEM((Np, tf_s), jnp.float32),               # state B
                pltpu.VMEM((Np, tf_s), jnp.float32),               # state C
                pltpu.VMEM((Np, tf_s), jnp.bfloat16),              # bf16 RHS
            ],
            compiler_params=pltpu.CompilerParams(
                dimension_semantics=("parallel",),
                vmem_limit_bytes=_vmem_limit(streamed_est, vmem_cap)),
        )(adj2, xp)
        return out[:N, :F]

    kernel = make_resident_kernel(order, coeffs, n_chains, tfc)

    def call_resident(single_buffer_adj: bool):
        if single_buffer_adj:
            # adj's block index never changes -> request single buffering.
            adj_spec = pl.BlockSpec((Np, Np), lambda j: (0, 0),
                                    pipeline_mode=pl.Buffered(1))
        else:
            adj_spec = pl.BlockSpec((Np, Np), lambda j: (0, 0))
        return pl.pallas_call(
            kernel,
            out_shape=jax.ShapeDtypeStruct((Np, Fp), jnp.float32),
            grid=(Fp // tf,),
            in_specs=[adj_spec,                                    # grid-invariant
                      pl.BlockSpec((Np, tf), lambda j: (0, j))],   # x feature slab
            out_specs=pl.BlockSpec((Np, tf), lambda j: (0, j)),
            compiler_params=pltpu.CompilerParams(
                dimension_semantics=("parallel",),
                vmem_limit_bytes=_vmem_limit(resident_est, vmem_cap)),
        )(adj2, xp)

    try:
        out = call_resident(True)
    except (TypeError, ValueError, NotImplementedError, pltpu.LoweringException):
        # Only pipeline_mode=Buffered(1) rejections fall back; any unrelated
        # failure will recur on the fallback and propagate normally.
        out = call_resident(False)
    return out[:N, :F]


# ----------------------------------------------------------------------------
# Pure-JAX reference (mirrors the PyTorch forward exactly, f32 throughout)
# ----------------------------------------------------------------------------
def expnet_ref(adj, x, alpha, order):
    c = jnp.asarray(bessel_coefficients(order), dtype=jnp.float32)
    pp = x
    p = alpha * (adj @ x)
    zs = [pp, p]
    for _ in range(order - 1):
        n = 2.0 * alpha * (adj @ p) - pp
        zs.append(n)
        pp, p = p, n
    return (jnp.stack(zs, 0) * c[:, None, None]).sum(0)


if __name__ == "__main__":
    key = jax.random.PRNGKey(0)
    keys = jax.random.split(key, 3)

    def run_case(N, F, order, alpha, force_streamed, k):
        k_adj, k_x = jax.random.split(k)
        adj = jax.random.normal(k_adj, (N, N), dtype=jnp.float32) / math.sqrt(N)
        x = jax.random.normal(k_x, (N, F), dtype=jnp.float32)
        out = jax.block_until_ready(
            expnet_pallas(adj, x, alpha, order, force_streamed=force_streamed))
        ref = jax.block_until_ready(expnet_ref(adj, x, alpha, order))
        # bf16 MXU inputs / bf16-streamed x (f32 accumulation and carried
        # state) -> relaxed tolerance vs. the all-f32 reference.
        np.testing.assert_allclose(np.asarray(out), np.asarray(ref),
                                   rtol=3e-2, atol=6e-2)

    # 1) resident-adj kernel: two 256-wide chains, 2-step feature grid.
    run_case(N=64, F=1024, order=4, alpha=0.5, force_streamed=False, k=keys[0])
    # 2) odd, unpadded shapes: exercises padding + single-chain 128-wide path.
    run_case(N=50, F=130, order=3, alpha=0.4, force_streamed=False, k=keys[1])
    # 3) streamed-adj (large-N) path, forced at a small size for validation.
    run_case(N=320, F=256, order=3, alpha=0.3, force_streamed=True, k=keys[2])

    print("KERNEL_OK")
</pallas_src>

<mosaic_0001>
module attributes {stable_mosaic.version = 11 : i64} {
  func.func @kernel(%arg0: i32, %arg1: memref<256x256xbf16, #tpu.memory_space<vmem>>, %arg2: memref<256x512xbf16, #tpu.memory_space<vmem>>, %arg3: memref<256x512xf32, #tpu.memory_space<vmem>>) attributes {dimension_semantics = [#tpu.dimension_semantics<parallel>], iteration_bounds = array<i64: 2>, scalar_prefetch = 0 : i64, scratch_operands = 0 : i64, tpu.core_type = #tpu.core_type<tc>, window_params = [{pipeline_mode = #tpu.pipeline_mode<synchronous>, transform_indices = @transform_0, window_bounds = array<i64: 256, 256>}, {transform_indices = @transform_1, window_bounds = array<i64: 256, 512>}, {transform_indices = @transform_2, window_bounds = array<i64: 256, 512>}]} {
    %c0 = arith.constant 0 : index
    %c0_0 = arith.constant 0 : index
    %0 = vector.load %arg2[%c0, %c0_0] : memref<256x512xbf16, #tpu.memory_space<vmem>>, vector<256x256xbf16>
    %1 = arith.extf %0 : vector<256x256xbf16> to vector<256x256xf32>
    %c0_1 = arith.constant 0 : index
    %c0_2 = arith.constant 0 : index
    %2 = vector.load %arg1[%c0_1, %c0_2] : memref<256x256xbf16, #tpu.memory_space<vmem>>, vector<256x256xbf16>
    %cst = arith.constant dense<0.000000e+00> : vector<256x256xf32>
    %3 = tpu.matmul %2, %0, %cst {dimension_numbers = #tpu.dot_dimension_numbers<[1], [0], [0], [1], [0, 0, 1, 1], [], []>} : vector<256x256xbf16>, vector<256x256xbf16>, vector<256x256xf32> -> vector<256x256xf32>
    %cst_3 = arith.constant 5.000000e-01 : f32
    %4 = vector.broadcast %cst_3 : f32 to vector<256x256xf32>
    %5 = arith.mulf %4, %3 : vector<256x256xf32>
    %cst_4 = arith.constant 1.26606584 : f32
    %6 = vector.broadcast %cst_4 : f32 to vector<256x256xf32>
    %7 = arith.mulf %6, %1 : vector<256x256xf32>
    %cst_5 = arith.constant 1.13031816 : f32
    %8 = vector.broadcast %cst_5 : f32 to vector<256x256xf32>
    %9 = arith.mulf %8, %5 : vector<256x256xf32>
    %10 = arith.addf %7, %9 : vector<256x256xf32>
    %c0_6 = arith.constant 0 : index
    %c0_7 = arith.constant 0 : index
    %11 = vector.load %arg3[%c0_6, %c0_7] : memref<256x512xf32, #tpu.memory_space<vmem>>, vector<256x256xf32>
    tpu.vector_store %arg3[%c0_6, %c0_7], %10 {strides = array<i32>} : memref<256x512xf32, #tpu.memory_space<vmem>>, vector<256x256xf32>,
    %c0_8 = arith.constant 0 : index
    %c256 = arith.constant 256 : index
    %12 = vector.load %arg2[%c0_8, %c256] : memref<256x512xbf16, #tpu.memory_space<vmem>>, vector<256x256xbf16>
    %13 = arith.extf %12 : vector<256x256xbf16> to vector<256x256xf32>
    %c0_9 = arith.constant 0 : index
    %c0_10 = arith.constant 0 : index
    %14 = vector.load %arg1[%c0_9, %c0_10] : memref<256x256xbf16, #tpu.memory_space<vmem>>, vector<256x256xbf16>
    %cst_11 = arith.constant dense<0.000000e+00> : vector<256x256xf32>
    %15 = tpu.matmul %14, %12, %cst_11 {dimension_numbers = #tpu.dot_dimension_numbers<[1], [0], [0], [1], [0, 0, 1, 1], [], []>} : vector<256x256xbf16>, vector<256x256xbf16>, vector<256x256xf32> -> vector<256x256xf32>
    %cst_12 = arith.constant 5.000000e-01 : f32
    %16 = vector.broadcast %cst_12 : f32 to vector<256x256xf32>
    %17 = arith.mulf %16, %15 : vector<256x256xf32>
    %cst_13 = arith.constant 1.26606584 : f32
    %18 = vector.broadcast %cst_13 : f32 to vector<256x256xf32>
    %19 = arith.mulf %18, %13 : vector<256x256xf32>
    %cst_14 = arith.constant 1.13031816 : f32
    %20 = vector.broadcast %cst_14 : f32 to vector<256x256xf32>
    %21 = arith.mulf %20, %17 : vector<256x256xf32>
    %22 = arith.addf %19, %21 : vector<256x256xf32>
    %c0_15 = arith.constant 0 : index
    %c256_16 = arith.constant 256 : index
    %23 = vector.load %arg3[%c0_15, %c256_16] : memref<256x512xf32, #tpu.memory_space<vmem>>, vector<256x256xf32>
    tpu.vector_store %arg3[%c0_15, %c256_16], %22 {strides = array<i32>} : memref<256x512xf32, #tpu.memory_space<vmem>>, vector<256x256xf32>,
    %c0_17 = arith.constant 0 : index
    %c0_18 = arith.constant 0 : index
    %24 = vector.load %arg1[%c0_17, %c0_18] : memref<256x256xbf16, #tpu.memory_space<vmem>>, vector<256x256xbf16>
    %25 = arith.truncf %5 : vector<256x256xf32> to vector<256x256xbf16>
    %cst_19 = arith.constant dense<0.000000e+00> : vector<256x256xf32>
    %26 = tpu.matmul %24, %25, %cst_19 {dimension_numbers = #tpu.dot_dimension_numbers<[1], [0], [0], [1], [0, 0, 1, 1], [], []>} : vector<256x256xbf16>, vector<256x256xbf16>, vector<256x256xf32> -> vector<256x256xf32>
    %27 = arith.subf %26, %1 : vector<256x256xf32>
    %c0_20 = arith.constant 0 : index
    %c0_21 = arith.constant 0 : index
    %28 = vector.load %arg3[%c0_20, %c0_21] : memref<256x512xf32, #tpu.memory_space<vmem>>, vector<256x256xf32>
    %cst_22 = arith.constant 0.271495342 : f32
    %29 = vector.broadcast %cst_22 : f32 to vector<256x256xf32>
    %30 = arith.mulf %29, %27 : vector<256x256xf32>
    %31 = arith.addf %28, %30 : vector<256x256xf32>
    %c0_23 = arith.constant 0 : index
    %c0_24 = arith.constant 0 : index
    %32 = vector.load %arg3[%c0_23, %c0_24] : memref<256x512xf32, #tpu.memory_space<vmem>>, vector<256x256xf32>
    tpu.vector_store %arg3[%c0_23, %c0_24], %31 {strides = array<i32>} : memref<256x512xf32, #tpu.memory_space<vmem>>, vector<256x256xf32>,
    %c0_25 = arith.constant 0 : index
    %c0_26 = arith.constant 0 : index
    %33 = vector.load %arg1[%c0_25, %c0_26] : memref<256x256xbf16, #tpu.memory_space<vmem>>, vector<256x256xbf16>
    %34 = arith.truncf %17 : vector<256x256xf32> to vector<256x256xbf16>
    %cst_27 = arith.constant dense<0.000000e+00> : vector<256x256xf32>
    %35 = tpu.matmul %33, %34, %cst_27 {dimension_numbers = #tpu.dot_dimension_numbers<[1], [0], [0], [1], [0, 0, 1, 1], [], []>} : vector<256x256xbf16>, vector<256x256xbf16>, vector<256x256xf32> -> vector<256x256xf32>
    %36 = arith.subf %35, %13 : vector<256x256xf32>
    %c0_28 = arith.constant 0 : index
    %c256_29 = arith.constant 256 : index
    %37 = vector.load %arg3[%c0_28, %c256_29] : memref<256x512xf32, #tpu.memory_space<vmem>>, vector<256x256xf32>
    %cst_30 = arith.constant 0.271495342 : f32
    %38 = vector.broadcast %cst_30 : f32 to vector<256x256xf32>
    %39 = arith.mulf %38, %36 : vector<256x256xf32>
    %40 = arith.addf %37, %39 : vector<256x256xf32>
    %c0_31 = arith.constant 0 : index
    %c256_32 = arith.constant 256 : index
    %41 = vector.load %arg3[%c0_31, %c256_32] : memref<256x512xf32, #tpu.memory_space<vmem>>, vector<256x256xf32>
    tpu.vector_store %arg3[%c0_31, %c256_32], %40 {strides = array<i32>} : memref<256x512xf32, #tpu.memory_space<vmem>>, vector<256x256xf32>,
    %c0_33 = arith.constant 0 : index
    %c0_34 = arith.constant 0 : index
    %42 = vector.load %arg1[%c0_33, %c0_34] : memref<256x256xbf16, #tpu.memory_space<vmem>>, vector<256x256xbf16>
    %43 = arith.truncf %27 : vector<256x256xf32> to vector<256x256xbf16>
    %cst_35 = arith.constant dense<0.000000e+00> : vector<256x256xf32>
    %44 = tpu.matmul %42, %43, %cst_35 {dimension_numbers = #tpu.dot_dimension_numbers<[1], [0], [0], [1], [0, 0, 1, 1], [], []>} : vector<256x256xbf16>, vector<256x256xbf16>, vector<256x256xf32> -> vector<256x256xf32>
    %45 = arith.subf %44, %5 : vector<256x256xf32>
    %c0_36 = arith.constant 0 : index
    %c0_37 = arith.constant 0 : index
    %46 = vector.load %arg3[%c0_36, %c0_37] : memref<256x512xf32, #tpu.memory_space<vmem>>, vector<256x256xf32>
    %cst_38 = arith.constant 0.0443368517 : f32
    %47 = vector.broadcast %cst_38 : f32 to vector<256x256xf32>
    %48 = arith.mulf %47, %45 : vector<256x256xf32>
    %49 = arith.addf %46, %48 : vector<256x256xf32>
    %c0_39 = arith.constant 0 : index
    %c0_40 = arith.constant 0 : index
    %50 = vector.load %arg3[%c0_39, %c0_40] : memref<256x512xf32, #tpu.memory_space<vmem>>, vector<256x256xf32>
    tpu.vector_store %arg3[%c0_39, %c0_40], %49 {strides = array<i32>} : memref<256x512xf32, #tpu.memory_space<vmem>>, vector<256x256xf32>,
    %c0_41 = arith.constant 0 : index
    %c0_42 = arith.constant 0 : index
    %51 = vector.load %arg1[%c0_41, %c0_42] : memref<256x256xbf16, #tpu.memory_space<vmem>>, vector<256x256xbf16>
    %52 = arith.truncf %36 : vector<256x256xf32> to vector<256x256xbf16>
    %cst_43 = arith.constant dense<0.000000e+00> : vector<256x256xf32>
    %53 = tpu.matmul %51, %52, %cst_43 {dimension_numbers = #tpu.dot_dimension_numbers<[1], [0], [0], [1], [0, 0, 1, 1], [], []>} : vector<256x256xbf16>, vector<256x256xbf16>, vector<256x256xf32> -> vector<256x256xf32>
    %54 = arith.subf %53, %17 : vector<256x256xf32>
    %c0_44 = arith.constant 0 : index
    %c256_45 = arith.constant 256 : index
    %55 = vector.load %arg3[%c0_44, %c256_45] : memref<256x512xf32, #tpu.memory_space<vmem>>, vector<256x256xf32>
    %cst_46 = arith.constant 0.0443368517 : f32
    %56 = vector.broadcast %cst_46 : f32 to vector<256x256xf32>
    %57 = arith.mulf %56, %54 : vector<256x256xf32>
    %58 = arith.addf %55, %57 : vector<256x256xf32>
    %c0_47 = arith.constant 0 : index
    %c256_48 = arith.constant 256 : index
    %59 = vector.load %arg3[%c0_47, %c256_48] : memref<256x512xf32, #tpu.memory_space<vmem>>, vector<256x256xf32>
    tpu.vector_store %arg3[%c0_47, %c256_48], %58 {strides = array<i32>} : memref<256x512xf32, #tpu.memory_space<vmem>>, vector<256x256xf32>,
    %c0_49 = arith.constant 0 : index
    %c0_50 = arith.constant 0 : index
    %60 = vector.load %arg1[%c0_49, %c0_50] : memref<256x256xbf16, #tpu.memory_space<vmem>>, vector<256x256xbf16>
    %61 = arith.truncf %45 : vector<256x256xf32> to vector<256x256xbf16>
    %cst_51 = arith.constant dense<0.000000e+00> : vector<256x256xf32>
    %62 = tpu.matmul %60, %61, %cst_51 {dimension_numbers = #tpu.dot_dimension_numbers<[1], [0], [0], [1], [0, 0, 1, 1], [], []>} : vector<256x256xbf16>, vector<256x256xbf16>, vector<256x256xf32> -> vector<256x256xf32>
    %63 = arith.subf %62, %27 : vector<256x256xf32>
    %c0_52 = arith.constant 0 : index
    %c0_53 = arith.constant 0 : index
    %64 = vector.load %arg3[%c0_52, %c0_53] : memref<256x512xf32, #tpu.memory_space<vmem>>, vector<256x256xf32>
    %cst_54 = arith.constant 0.00547424052 : f32
    %65 = vector.broadcast %cst_54 : f32 to vector<256x256xf32>
    %66 = arith.mulf %65, %63 : vector<256x256xf32>
    %67 = arith.addf %64, %66 : vector<256x256xf32>
    %c0_55 = arith.constant 0 : index
    %c0_56 = arith.constant 0 : index
    %68 = vector.load %arg3[%c0_55, %c0_56] : memref<256x512xf32, #tpu.memory_space<vmem>>, vector<256x256xf32>
    tpu.vector_store %arg3[%c0_55, %c0_56], %67 {strides = array<i32>} : memref<256x512xf32, #tpu.memory_space<vmem>>, vector<256x256xf32>,
    %c0_57 = arith.constant 0 : index
    %c0_58 = arith.constant 0 : index
    %69 = vector.load %arg1[%c0_57, %c0_58] : memref<256x256xbf16, #tpu.memory_space<vmem>>, vector<256x256xbf16>
    %70 = arith.truncf %54 : vector<256x256xf32> to vector<256x256xbf16>
    %cst_59 = arith.constant dense<0.000000e+00> : vector<256x256xf32>
    %71 = tpu.matmul %69, %70, %cst_59 {dimension_numbers = #tpu.dot_dimension_numbers<[1], [0], [0], [1], [0, 0, 1, 1], [], []>} : vector<256x256xbf16>, vector<256x256xbf16>, vector<256x256xf32> -> vector<256x256xf32>
    %72 = arith.subf %71, %36 : vector<256x256xf32>
    %c0_60 = arith.constant 0 : index
    %c256_61 = arith.constant 256 : index
    %73 = vector.load %arg3[%c0_60, %c256_61] : memref<256x512xf32, #tpu.memory_space<vmem>>, vector<256x256xf32>
    %cst_62 = arith.constant 0.00547424052 : f32
    %74 = vector.broadcast %cst_62 : f32 to vector<256x256xf32>
    %75 = arith.mulf %74, %72 : vector<256x256xf32>
    %76 = arith.addf %73, %75 : vector<256x256xf32>
    %c0_63 = arith.constant 0 : index
    %c256_64 = arith.constant 256 : index
    %77 = vector.load %arg3[%c0_63, %c256_64] : memref<256x512xf32, #tpu.memory_space<vmem>>, vector<256x256xf32>
    tpu.vector_store %arg3[%c0_63, %c256_64], %76 {strides = array<i32>} : memref<256x512xf32, #tpu.memory_space<vmem>>, vector<256x256xf32>,
    return
  }
  func.func @transform_0(%arg0: i32) -> (i32, i32) {
    %c0_i32 = arith.constant 0 : i32
    %c0_i32_0 = arith.constant 0 : i32
    %c0_i32_1 = arith.constant 0 : i32
    return %c0_i32, %c0_i32_0 : i32, i32
  }
  func.func @transform_1(%arg0: i32) -> (i32, i32) {
    %c0_i32 = arith.constant 0 : i32
    %c0_i32_0 = arith.constant 0 : i32
    return %c0_i32, %arg0 : i32, i32
  }
  func.func @transform_2(%arg0: i32) -> (i32, i32) {
    %c0_i32 = arith.constant 0 : i32
    %c0_i32_0 = arith.constant 0 : i32
    return %c0_i32, %arg0 : i32, i32
  }
}

</mosaic_0001>

<llo_original>
// kernel: tpu_custom_call.1
$region0: #{tpu_custom_call.1}
  #allocation0 [shape = 'u32[]', space=smem, size = 0x4, offset = 0x4, fixed_abs, tag = 'smem constant byte address 0x4 - core index']
  #allocation1 [shape = 'u32[144,128]{1,0:T(1,128)}', space=vmem, size = 0x12000, scoped, tag = 'internal scratch']
  %s0 = inlined_call_operand.hbm [shape: bf16[256,256], index: 0, kind: input, shape index: {}]
  %s1 = inlined_call_operand.hbm [shape: bf16[256,1024], index: 1, kind: input, shape index: {}]
  %s2 = inlined_call_operand.hbm [shape: f32[256,1024], index: 2, kind: output, shape index: {}]
  %s3 = sld [smem:[#allocation0]]
  $region49: #{tpu_custom_call.1} parent=0
    _
  %s5 = ssub.s32 1, %s3
  %s6 = scalar_select 0, %s5, %s3
  $region1: #{tpu_custom_call.1} parent=0
    #allocation2 [shape = 'u8[131072]{0}', space=vmem, size = 0x20000, scoped, tag = 'input window, operand 0, single buffered']
    #allocation3 [shape = 's32[2]{0}', space=sflag, size = 0x8, scoped, tag = 'scoped memory for tpu_custom_call.1']
    #allocation4 [shape = 's32[2]{0}', space=sflag, size = 0x8, scoped, tag = 'scoped memory for tpu_custom_call.1']
    #allocation5 [shape = 'u8[524288]{0}', space=vmem, size = 0x80000, scoped, tag = 'input window, operand 1']
    #allocation6 [shape = 's32[2]{0}', space=sflag, size = 0x8, scoped, tag = 'scoped memory for tpu_custom_call.1']
    #allocation7 [shape = 'u8[1048576]{0}', space=vmem, size = 0x100000, scoped, tag = 'output window, operand 0']
    %7 = vsyncpa [#allocation3], 0
    %8 = vsyncpa [#allocation6], 0
    %s9 = scalar_lea.sflag [#allocation6], 1
    %10 = vsyncpa %s9, 0
    %11 = vsyncpa [#allocation4], 0
    %s12 = scalar_lea.sflag [#allocation4], 1
    %13 = vsyncpa %s12, 0
    loop: start=0, step=1, limit=4
    $region2: #{tpu_custom_call.1} parent=1 // loop_pre_header
      _
    $region3: #{tpu_custom_call.1} parent=1 // loop_header
      %s15 = sphi 0, %s19
      %p16 = scmp.ge.s32.totalorder %s15, 4
      %s23 = sphi 0, %s23
      %s25 = sphi 0, %s23
      %s26 = sphi 0, %s25
      %s40 = sphi 0, %s26
      %s46 = sphi 0, %s48
      %s49 = sphi 0, %s46
      %s50 = sphi 0, %s49
      %s66 = sphi 0, %s50
      %s72 = sphi 0, %s74
      %s75 = sphi 0, %s72
      %s76 = sphi 0, %s75
      %s92 = sphi 0, %s76
    $region4: #{tpu_custom_call.1} parent=1 // loop_header_branch
      %18 = sbr.rel (%p16) target = $region8
    $region5: #{tpu_custom_call.1} parent=1 // loop_body
      %s20 = ssub.s32 %s15, 1
      %s21 = ssub.s32 %s15, 2
      %s22 = sadd.s32 %s15, 1
      %s24 = sadd.s32 %s23, 1
      %p27 = scmp.eq.s32.totalorder %s15, 1
      %p28 = scmp.ne.s32.totalorder %s23, %s25
      %p29 = scmp.eq.s32.totalorder %s15, 0
      %p30 = por %p28, %p29
      %p31 = scmp.ne.s32.totalorder %s23, %s25
      %p32 = scmp.eq.s32.totalorder %s20, 1
      %p33 = por %p31, %p32
      %p34 = scmp.ne.s32.totalorder %s25, %s26
      %p35 = scmp.eq.s32.totalorder %s20, 0
      %p36 = por %p34, %p35
      %p37 = scmp.ne.s32.totalorder %s25, %s26
      %p38 = scmp.eq.s32.totalorder %s21, 1
      %p39 = por %p37, %p38
      %p41 = scmp.ne.s32.totalorder %s26, %s40
      %p42 = scmp.eq.s32.totalorder %s21, 0
      %p43 = por %p41, %p42
      %s44 = ssub.s32 %s15, %s22
      %p45 = scmp.eq.s32.totalorder %s44, 0
      %s47 = sadd.s32 %s46, 1
      %s48 = scalar_select %p45, %s46, %s47
      %p51 = pneg %p45
      %p52 = scmp.eq.s32.totalorder %s15, 1
      %p53 = por %p51, %p52
      %p54 = scmp.ne.s32.totalorder %s46, %s49
      %p55 = scmp.eq.s32.totalorder %s15, 0
      %p56 = por %p54, %p55
      %p57 = scmp.ne.s32.totalorder %s46, %s49
      %p58 = scmp.eq.s32.totalorder %s20, 1
      %p59 = por %p57, %p58
      %p60 = scmp.ne.s32.totalorder %s49, %s50
      %p61 = scmp.eq.s32.totalorder %s20, 0
      %p62 = por %p60, %p61
      %p63 = scmp.ne.s32.totalorder %s49, %s50
      %p64 = scmp.eq.s32.totalorder %s21, 1
      %p65 = por %p63, %p64
      %p67 = scmp.ne.s32.totalorder %s50, %s66
      %p68 = scmp.eq.s32.totalorder %s21, 0
      %p69 = por %p67, %p68
      %s70 = ssub.s32 %s15, %s22
      %p71 = scmp.eq.s32.totalorder %s70, 0
      %s73 = sadd.s32 %s72, 1
      %s74 = scalar_select %p71, %s72, %s73
      %p77 = pneg %p71
      %p78 = scmp.eq.s32.totalorder %s15, 1
      %p79 = por %p77, %p78
      %p80 = scmp.ne.s32.totalorder %s72, %s75
      %p81 = scmp.eq.s32.totalorder %s15, 0
      %p82 = por %p80, %p81
      %p83 = scmp.ne.s32.totalorder %s72, %s75
      %p84 = scmp.eq.s32.totalorder %s20, 1
      %p85 = por %p83, %p84
      %p86 = scmp.ne.s32.totalorder %s75, %s76
      %p87 = scmp.eq.s32.totalorder %s20, 0
      %p88 = por %p86, %p87
      %p89 = scmp.ne.s32.totalorder %s75, %s76
      %p90 = scmp.eq.s32.totalorder %s21, 1
      %p91 = por %p89, %p90
      %p93 = scmp.ne.s32.totalorder %s76, %s92
      %p94 = scmp.eq.s32.totalorder %s21, 0
      %p95 = por %p93, %p94
      %p96 = scmp.le.s32.totalorder 1, %s15
      %p97 = scmp.lt.s32.totalorder %s15, 3
      %p98 = pnand %p96, %p97
      %p99 = pneg %p98
      // Predicated region
      $region9: #{tpu_custom_call.1} parent=5 // pred_check
        _
      $region10: #{tpu_custom_call.1} parent=5 // pred_check_branch
        %101 = sbr.rel (%p98) target = $region12
      $region11: #{tpu_custom_call.1} parent=5 // pred_region
        %s102 = ssub.s32 %s15, 1
        // Predicated region
        $region13: #{tpu_custom_call.1} parent=11 // pred_check
          %p103 = pneg %p36
        $region14: #{tpu_custom_call.1} parent=11 // pred_check_branch
          %105 = sbr.rel (%p103) target = $region16
        $region15: #{tpu_custom_call.1} parent=11 // pred_region
          %s107 = ssub.s32 4096, 4096
          %108 = vsyncadd [#allocation3], %s107
          %s109 = sshll.u32 [#allocation2], 4
          %s110 = int_to_ptr.vmem [resolvable:$true] %s109
          %115 = dma.hbm_to_vmem [thread:$0]  %s0, 4096, %s110, [#allocation3], 128, 128, 8
        $region16: #{tpu_custom_call.1} parent=11 // pred_fallthru
          _
      $region12: #{tpu_custom_call.1} parent=5 // pred_fallthru
        _
      %p116 = scmp.lt.s32.totalorder %s15, 2
      // Predicated region
      $region17: #{tpu_custom_call.1} parent=5 // pred_check
        %p117 = pneg %p116
      $region18: #{tpu_custom_call.1} parent=5 // pred_check_branch
        %119 = sbr.rel (%p117) target = $region20
      $region19: #{tpu_custom_call.1} parent=5 // pred_region
        // Predicated region
        $region21: #{tpu_custom_call.1} parent=19 // pred_check
          %p120 = pneg %p56
        $region22: #{tpu_custom_call.1} parent=19 // pred_check_branch
          %122 = sbr.rel (%p120) target = $region24
        $region23: #{tpu_custom_call.1} parent=19 // pred_region
          %s123 = sand.u32 %s46, 1
          %s124 = scalar_lea.sflag [#allocation6], %s123
          %s125 = sand.u32 %s46, 1
          %s126 = smul.addr %s125, 512
          %s127 = scalar_lea.vmem [#allocation5], %s126
          %s128 = smul.u32 4, %s15
          %s130 = ssub.s32 8192, 8192
          %131 = vsyncadd %s124, %s130
          %s132 = smul.addr %s128, 64
          %s133 = scalar_lea.hbm %s1, %s132
          %s134 = sshll.u32 %s127, 4
          %s135 = int_to_ptr.vmem [resolvable:$true] %s134
          %140 = dma.hbm_to_vmem [thread:$0]  %s133, 8192, %s135, %s124, 512, 256, 16
        $region24: #{tpu_custom_call.1} parent=19 // pred_fallthru
          _
      $region20: #{tpu_custom_call.1} parent=5 // pred_fallthru
        _
      %p141 = scmp.le.s32.totalorder 1, %s15
      %p142 = scmp.lt.s32.totalorder %s15, 3
      %p143 = pnand %p141, %p142
      %p144 = pneg %p143
      // Predicated region
      $region25: #{tpu_custom_call.1} parent=5 // pred_check
        _
      $region26: #{tpu_custom_call.1} parent=5 // pred_check_branch
        %146 = sbr.rel (%p143) target = $region28
      $region27: #{tpu_custom_call.1} parent=5 // pred_region
        %s147 = ssub.s32 %s15, 1
        // Predicated region
        $region29: #{tpu_custom_call.1} parent=27 // pred_check
          %p148 = pneg %p36
        $region30: #{tpu_custom_call.1} parent=27 // pred_check_branch
          %150 = sbr.rel (%p148) target = $region32
        $region31: #{tpu_custom_call.1} parent=27 // pred_region
          %151 = dma.done [#allocation3], 4096
        $region32: #{tpu_custom_call.1} parent=27 // pred_fallthru
          _
        %s152 = sand.u32 %s49, 1
        %s153 = scalar_lea.sflag [#allocation6], %s152
        %s154 = sand.u32 %s49, 1
        %s155 = smul.addr %s154, 512
        %s156 = scalar_lea.vmem [#allocation5], %s155
        // Predicated region
        $region33: #{tpu_custom_call.1} parent=27 // pred_check
          %p157 = pneg %p62
        $region34: #{tpu_custom_call.1} parent=27 // pred_check_branch
          %159 = sbr.rel (%p157) target = $region36
        $region35: #{tpu_custom_call.1} parent=27 // pred_region
          %160 = dma.done %s153, 8192
        $region36: #{tpu_custom_call.1} parent=27 // pred_fallthru
          _
        %p161 = pneg %p36
        %p162 = pneg %p33
        %s163 = sand.u32 %s49, 1
        %s164 = scalar_lea.sflag [#allocation6], %s163
        %s165 = sand.u32 %s49, 1
        %s166 = smul.addr %s165, 512
        %s167 = scalar_lea.vmem [#allocation5], %s166
        %p168 = pneg %p62
        %p169 = pneg %p59
        %p170 = pneg %p88
        %p171 = pneg %p85
        %s172 = sand.u32 %s75, 1
        %s173 = scalar_lea.sflag [#allocation4], %s172
        %s174 = sand.u32 %s75, 1
        %s175 = smul.addr %s174, 1024
        %s176 = scalar_lea.vmem [#allocation7], %s175
        %s177 = smul.u32 4, %s20
        %s178 = smul.u32 4, %s20
        %v179 = vld [vmem:[%s156] sm:$0xff]
        %v180 = vld [vmem:[%s156 + $0x10] sm:$0xff]
        %v181 = vld [vmem:[%s156 + $0x20] sm:$0xff]
        %v182 = vld [vmem:[%s156 + $0x30] sm:$0xff]
        %v183 = vld [vmem:[%s156 + $0x40] sm:$0xff]
        %v184 = vld [vmem:[%s156 + $0x50] sm:$0xff]
        %v185 = vld [vmem:[%s156 + $0x60] sm:$0xff]
        %v186 = vld [vmem:[%s156 + $0x70] sm:$0xff]
        %v187 = vld [vmem:[%s156 + $0x80] sm:$0xff]
        %v188 = vld [vmem:[%s156 + $0x90] sm:$0xff]
        %v189 = vld [vmem:[%s156 + $0xa0] sm:$0xff]
        %v190 = vld [vmem:[%s156 + $0xb0] sm:$0xff]
        %v191 = vld [vmem:[%s156 + $0xc0] sm:$0xff]
        %v192 = vld [vmem:[%s156 + $0xd0] sm:$0xff]
        %v193 = vld [vmem:[%s156 + $0xe0] sm:$0xff]
        %v194 = vld [vmem:[%s156 + $0xf0] sm:$0xff]
        %v195 = vld [vmem:[%s156 + $0x100] sm:$0xff]
        %v196 = vld [vmem:[%s156 + $0x110] sm:$0xff]
        %v197 = vld [vmem:[%s156 + $0x120] sm:$0xff]
        %v198 = vld [vmem:[%s156 + $0x130] sm:$0xff]
        %v199 = vld [vmem:[%s156 + $0x140] sm:$0xff]
        %v200 = vld [vmem:[%s156 + $0x150] sm:$0xff]
        %v201 = vld [vmem:[%s156 + $0x160] sm:$0xff]
        %v202 = vld [vmem:[%s156 + $0x170] sm:$0xff]
        %v203 = vld [vmem:[%s156 + $0x180] sm:$0xff]
        %v204 = vld [vmem:[%s156 + $0x190] sm:$0xff]
        %v205 = vld [vmem:[%s156 + $0x1a0] sm:$0xff]
        %v206 = vld [vmem:[%s156 + $0x1b0] sm:$0xff]
        %v207 = vld [vmem:[%s156 + $0x1c0] sm:$0xff]
        %v208 = vld [vmem:[%s156 + $0x1d0] sm:$0xff]
        %v209 = vld [vmem:[%s156 + $0x1e0] sm:$0xff]
        %v210 = vld [vmem:[%s156 + $0x1f0] sm:$0xff]
        %v211 = vunpack.c.l.bf16 %v179
        %v212 = vunpack.c.h.bf16 %v179
        %v213 = vunpack.c.l.bf16 %v180
        %v214 = vunpack.c.h.bf16 %v180
        %v215 = vunpack.c.l.bf16 %v181
        %v216 = vunpack.c.h.bf16 %v181
        %v217 = vunpack.c.l.bf16 %v182
        %v218 = vunpack.c.h.bf16 %v182
        %v219 = vunpack.c.l.bf16 %v183
        %v220 = vunpack.c.h.bf16 %v183
        %v221 = vunpack.c.l.bf16 %v184
        %v222 = vunpack.c.h.bf16 %v184
        %v223 = vunpack.c.l.bf16 %v185
        %v224 = vunpack.c.h.bf16 %v185
        %v225 = vunpack.c.l.bf16 %v186
        %v226 = vunpack.c.h.bf16 %v186
        %v227 = vunpack.c.l.bf16 %v187
        %v228 = vunpack.c.h.bf16 %v187
        %v229 = vunpack.c.l.bf16 %v188
        %v230 = vunpack.c.h.bf16 %v188
        %v231 = vunpack.c.l.bf16 %v189
        %v232 = vunpack.c.h.bf16 %v189
        %v233 = vunpack.c.l.bf16 %v190
        %v234 = vunpack.c.h.bf16 %v190
        %v235 = vunpack.c.l.bf16 %v191
        %v236 = vunpack.c.h.bf16 %v191
        %v237 = vunpack.c.l.bf16 %v192
        %v238 = vunpack.c.h.bf16 %v192
        %v239 = vunpack.c.l.bf16 %v193
        %v240 = vunpack.c.h.bf16 %v193
        %v241 = vunpack.c.l.bf16 %v194
        %v242 = vunpack.c.h.bf16 %v194
        %v243 = vunpack.c.l.bf16 %v195
        %v244 = vunpack.c.h.bf16 %v195
        %v245 = vunpack.c.l.bf16 %v196
        %v246 = vunpack.c.h.bf16 %v196
        %v247 = vunpack.c.l.bf16 %v197
        %v248 = vunpack.c.h.bf16 %v197
        %v249 = vunpack.c.l.bf16 %v198
        %v250 = vunpack.c.h.bf16 %v198
        %v251 = vunpack.c.l.bf16 %v199
        %v252 = vunpack.c.h.bf16 %v199
        %v253 = vunpack.c.l.bf16 %v200
        %v254 = vunpack.c.h.bf16 %v200
        %v255 = vunpack.c.l.bf16 %v201
        %v256 = vunpack.c.h.bf16 %v201
        %v257 = vunpack.c.l.bf16 %v202
        %v258 = vunpack.c.h.bf16 %v202
        %v259 = vunpack.c.l.bf16 %v203
        %v260 = vunpack.c.h.bf16 %v203
        %v261 = vunpack.c.l.bf16 %v204
        %v262 = vunpack.c.h.bf16 %v204
        %v263 = vunpack.c.l.bf16 %v205
        %v264 = vunpack.c.h.bf16 %v205
        %v265 = vunpack.c.l.bf16 %v206
        %v266 = vunpack.c.h.bf16 %v206
        %v267 = vunpack.c.l.bf16 %v207
        %v268 = vunpack.c.h.bf16 %v207
        %v269 = vunpack.c.l.bf16 %v208
        %v270 = vunpack.c.h.bf16 %v208
        %v271 = vunpack.c.l.bf16 %v209
        %v272 = vunpack.c.h.bf16 %v209
        %v273 = vunpack.c.l.bf16 %v210
        %v274 = vunpack.c.h.bf16 %v210
        %v275 = vld [vmem:[#allocation2] sm:$0xff]
        %v276 = vld [vmem:[#allocation2 + $0x8] sm:$0xff]
        %v277 = vld [vmem:[#allocation2 + $0x10] sm:$0xff]
        %v278 = vld [vmem:[#allocation2 + $0x18] sm:$0xff]
        %v279 = vld [vmem:[#allocation2 + $0x20] sm:$0xff]
        %v280 = vld [vmem:[#allocation2 + $0x28] sm:$0xff]
        %v281 = vld [vmem:[#allocation2 + $0x30] sm:$0xff]
        %v282 = vld [vmem:[#allocation2 + $0x38] sm:$0xff]
        %v283 = vld [vmem:[#allocation2 + $0x40] sm:$0xff]
        %v284 = vld [vmem:[#allocation2 + $0x48] sm:$0xff]
        %v285 = vld [vmem:[#allocation2 + $0x50] sm:$0xff]
        %v286 = vld [vmem:[#allocation2 + $0x58] sm:$0xff]
        %v287 = vld [vmem:[#allocation2 + $0x60] sm:$0xff]
        %v288 = vld [vmem:[#allocation2 + $0x68] sm:$0xff]
        %v289 = vld [vmem:[#allocation2 + $0x70] sm:$0xff]
        %v290 = vld [vmem:[#allocation2 + $0x78] sm:$0xff]
        %v291 = vld [vmem:[#allocation2 + $0x80] sm:$0xff]
        %v292 = vld [vmem:[#allocation2 + $0x88] sm:$0xff]
        %v293 = vld [vmem:[#allocation2 + $0x90] sm:$0xff]
        %v294 = vld [vmem:[#allocation2 + $0x98] sm:$0xff]
        %v295 = vld [vmem:[#allocation2 + $0xa0] sm:$0xff]
        %v296 = vld [vmem:[#allocation2 + $0xa8] sm:$0xff]
        %v297 = vld [vmem:[#allocation2 + $0xb0] sm:$0xff]
        %v298 = vld [vmem:[#allocation2 + $0xb8] sm:$0xff]
        %v299 = vld [vmem:[#allocation2 + $0xc0] sm:$0xff]
        %v300 = vld [vmem:[#allocation2 + $0xc8] sm:$0xff]
        %v301 = vld [vmem:[#allocation2 + $0xd0] sm:$0xff]
        %v302 = vld [vmem:[#allocation2 + $0xd8] sm:$0xff]
        %v303 = vld [vmem:[#allocation2 + $0xe0] sm:$0xff]
        %v304 = vld [vmem:[#allocation2 + $0xe8] sm:$0xff]
        %v305 = vld [vmem:[#allocation2 + $0xf0] sm:$0xff]
        %v306 = vld [vmem:[#allocation2 + $0xf8] sm:$0xff]
        %v339 = vunpack.c.l.b16 %v275
        %v340 = vunpack.c.h.b16 %v275
        %v341 = vunpack.c.l.b16 %v276
        %v342 = vunpack.c.h.b16 %v276
        %v343 = vunpack.c.l.b16 %v277
        %v344 = vunpack.c.h.b16 %v277
        %v345 = vunpack.c.l.b16 %v278
        %v346 = vunpack.c.h.b16 %v278
        %v347 = vunpack.c.l.b16 %v279
        %v348 = vunpack.c.h.b16 %v279
        %v349 = vunpack.c.l.b16 %v280
        %v350 = vunpack.c.h.b16 %v280
        %v351 = vunpack.c.l.b16 %v281
        %v352 = vunpack.c.h.b16 %v281
        %v353 = vunpack.c.l.b16 %v282
        %v354 = vunpack.c.h.b16 %v282
        %v355 = vunpack.c.l.b16 %v283
        %v356 = vunpack.c.h.b16 %v283
        %v357 = vunpack.c.l.b16 %v284
        %v358 = vunpack.c.h.b16 %v284
        %v359 = vunpack.c.l.b16 %v285
        %v360 = vunpack.c.h.b16 %v285
        %v361 = vunpack.c.l.b16 %v286
        %v362 = vunpack.c.h.b16 %v286
        %v363 = vunpack.c.l.b16 %v287
        %v364 = vunpack.c.h.b16 %v287
        %v365 = vunpack.c.l.b16 %v288
        %v366 = vunpack.c.h.b16 %v288
        %v367 = vunpack.c.l.b16 %v289
        %v368 = vunpack.c.h.b16 %v289
        %v369 = vunpack.c.l.b16 %v290
        %v370 = vunpack.c.h.b16 %v290
        %v371 = vunpack.c.l.b16 %v291
        %v372 = vunpack.c.h.b16 %v291
        %v373 = vunpack.c.l.b16 %v292
        %v374 = vunpack.c.h.b16 %v292
        %v375 = vunpack.c.l.b16 %v293
        %v376 = vunpack.c.h.b16 %v293
        %v377 = vunpack.c.l.b16 %v294
        %v378 = vunpack.c.h.b16 %v294
        %v379 = vunpack.c.l.b16 %v295
        %v380 = vunpack.c.h.b16 %v295
        %v381 = vunpack.c.l.b16 %v296
        %v382 = vunpack.c.h.b16 %v296
        %v383 = vunpack.c.l.b16 %v297
        %v384 = vunpack.c.h.b16 %v297
        %v385 = vunpack.c.l.b16 %v298
        %v386 = vunpack.c.h.b16 %v298
        %v387 = vunpack.c.l.b16 %v299
        %v388 = vunpack.c.h.b16 %v299
        %v389 = vunpack.c.l.b16 %v300
        %v390 = vunpack.c.h.b16 %v300
        %v391 = vunpack.c.l.b16 %v301
        %v392 = vunpack.c.h.b16 %v301
        %v393 = vunpack.c.l.b16 %v302
        %v394 = vunpack.c.h.b16 %v302
        %v395 = vunpack.c.l.b16 %v303
        %v396 = vunpack.c.h.b16 %v303
        %v397 = vunpack.c.l.b16 %v304
        %v398 = vunpack.c.h.b16 %v304
        %v399 = vunpack.c.l.b16 %v305
        %v400 = vunpack.c.h.b16 %v305
        %v401 = vunpack.c.l.b16 %v306
        %v402 = vunpack.c.h.b16 %v306
        %v403 = vpack.c.b16 %v341, %v339
        %v404 = vpack.c.b16 %v342, %v340
        %v405 = vpack.c.b16 %v345, %v343
        %v406 = vpack.c.b16 %v346, %v344
        %v407 = vpack.c.b16 %v349, %v347
        %v408 = vpack.c.b16 %v350, %v348
        %v409 = vpack.c.b16 %v353, %v351
        %v410 = vpack.c.b16 %v354, %v352
        %v411 = vpack.c.b16 %v357, %v355
        %v412 = vpack.c.b16 %v358, %v356
        %v413 = vpack.c.b16 %v361, %v359
        %v414 = vpack.c.b16 %v362, %v360
        %v415 = vpack.c.b16 %v365, %v363
        %v416 = vpack.c.b16 %v366, %v364
        %v417 = vpack.c.b16 %v369, %v367
        %v418 = vpack.c.b16 %v370, %v368
        %v419 = vpack.c.b16 %v373, %v371
        %v420 = vpack.c.b16 %v374, %v372
        %v421 = vpack.c.b16 %v377, %v375
        %v422 = vpack.c.b16 %v378, %v376
        %v423 = vpack.c.b16 %v381, %v379
        %v424 = vpack.c.b16 %v382, %v380
        %v425 = vpack.c.b16 %v385, %v383
        %v426 = vpack.c.b16 %v386, %v384
        %v427 = vpack.c.b16 %v389, %v387
        %v428 = vpack.c.b16 %v390, %v388
        %v429 = vpack.c.b16 %v393, %v391
        %v430 = vpack.c.b16 %v394, %v392
        %v431 = vpack.c.b16 %v397, %v395
        %v432 = vpack.c.b16 %v398, %v396
        %v433 = vpack.c.b16 %v401, %v399
        %v434 = vpack.c.b16 %v402, %v400
        %v499 = vunpack.c.l.b16 %v179
        %v500 = vunpack.c.h.b16 %v179
        %v501 = vunpack.c.l.b16 %v180
        %v502 = vunpack.c.h.b16 %v180
        %v503 = vunpack.c.l.b16 %v181
        %v504 = vunpack.c.h.b16 %v181
        %v505 = vunpack.c.l.b16 %v182
        %v506 = vunpack.c.h.b16 %v182
        %v507 = vunpack.c.l.b16 %v183
        %v508 = vunpack.c.h.b16 %v183
        %v509 = vunpack.c.l.b16 %v184
        %v510 = vunpack.c.h.b16 %v184
        %v511 = vunpack.c.l.b16 %v185
        %v512 = vunpack.c.h.b16 %v185
        %v513 = vunpack.c.l.b16 %v186
        %v514 = vunpack.c.h.b16 %v186
        %v515 = vunpack.c.l.b16 %v187
        %v516 = vunpack.c.h.b16 %v187
        %v517 = vunpack.c.l.b16 %v188
        %v518 = vunpack.c.h.b16 %v188
        %v519 = vunpack.c.l.b16 %v189
        %v520 = vunpack.c.h.b16 %v189
        %v521 = vunpack.c.l.b16 %v190
        %v522 = vunpack.c.h.b16 %v190
        %v523 = vunpack.c.l.b16 %v191
        %v524 = vunpack.c.h.b16 %v191
        %v525 = vunpack.c.l.b16 %v192
        %v526 = vunpack.c.h.b16 %v192
        %v527 = vunpack.c.l.b16 %v193
        %v528 = vunpack.c.h.b16 %v193
        %v529 = vunpack.c.l.b16 %v194
        %v530 = vunpack.c.h.b16 %v194
        %v531 = vunpack.c.l.b16 %v195
        %v532 = vunpack.c.h.b16 %v195
        %v533 = vunpack.c.l.b16 %v196
        %v534 = vunpack.c.h.b16 %v196
        %v535 = vunpack.c.l.b16 %v197
        %v536 = vunpack.c.h.b16 %v197
        %v537 = vunpack.c.l.b16 %v198
        %v538 = vunpack.c.h.b16 %v198
        %v539 = vunpack.c.l.b16 %v199
        %v540 = vunpack.c.h.b16 %v199
        %v541 = vunpack.c.l.b16 %v200
        %v542 = vunpack.c.h.b16 %v200
        %v543 = vunpack.c.l.b16 %v201
        %v544 = vunpack.c.h.b16 %v201
        %v545 = vunpack.c.l.b16 %v202
        %v546 = vunpack.c.h.b16 %v202
        %v547 = vunpack.c.l.b16 %v203
        %v548 = vunpack.c.h.b16 %v203
        %v549 = vunpack.c.l.b16 %v204
        %v550 = vunpack.c.h.b16 %v204
        %v551 = vunpack.c.l.b16 %v205
        %v552 = vunpack.c.h.b16 %v205
        %v553 = vunpack.c.l.b16 %v206
        %v554 = vunpack.c.h.b16 %v206
        %v555 = vunpack.c.l.b16 %v207
        %v556 = vunpack.c.h.b16 %v207
        %v557 = vunpack.c.l.b16 %v208
        %v558 = vunpack.c.h.b16 %v208
        %v559 = vunpack.c.l.b16 %v209
        %v560 = vunpack.c.h.b16 %v209
        %v561 = vunpack.c.l.b16 %v210
        %v562 = vunpack.c.h.b16 %v210
        %v563 = vpack.c.b16 %v501, %v499
        %v564 = vpack.c.b16 %v502, %v500
        %v565 = vpack.c.b16 %v505, %v503
        %v566 = vpack.c.b16 %v506, %v504
        %v567 = vpack.c.b16 %v509, %v507
        %v568 = vpack.c.b16 %v510, %v508
        %v569 = vpack.c.b16 %v513, %v511
        %v570 = vpack.c.b16 %v514, %v512
        %v571 = vpack.c.b16 %v517, %v515
        %v572 = vpack.c.b16 %v518, %v516
        %v573 = vpack.c.b16 %v521, %v519
        %v574 = vpack.c.b16 %v522, %v520
        %v575 = vpack.c.b16 %v525, %v523
        %v576 = vpack.c.b16 %v526, %v524
        %v577 = vpack.c.b16 %v529, %v527
        %v578 = vpack.c.b16 %v530, %v528
        %v579 = vpack.c.b16 %v533, %v531
        %v580 = vpack.c.b16 %v534, %v532
        %v581 = vpack.c.b16 %v537, %v535
        %v582 = vpack.c.b16 %v538, %v536
        %v583 = vpack.c.b16 %v541, %v539
        %v584 = vpack.c.b16 %v542, %v540
        %v585 = vpack.c.b16 %v545, %v543
        %v586 = vpack.c.b16 %v546, %v544
        %v587 = vpack.c.b16 %v549, %v547
        %v588 = vpack.c.b16 %v550, %v548
        %v589 = vpack.c.b16 %v553, %v551
        %v590 = vpack.c.b16 %v554, %v552
        %v591 = vpack.c.b16 %v557, %v555
        %v592 = vpack.c.b16 %v558, %v556
        %v593 = vpack.c.b16 %v561, %v559
        %v594 = vpack.c.b16 %v562, %v560
        %627 = vmatprep.subr.bf16.mxu0 %v564
        %628 = vmatpush1.bf16.msra.mxu0 %v563
        %629 = vmatprep.subr.bf16.mxu0 %v566
        %630 = vmatpush1.bf16.msra.mxu0 %v565
        %631 = vmatprep.subr.bf16.mxu0 %v568
        %632 = vmatpush1.bf16.msra.mxu0 %v567
        %633 = vmatprep.subr.bf16.mxu0 %v570
        %634 = vmatpush1.bf16.msra.mxu0 %v569
        %635 = vmatprep.subr.bf16.mxu0 %v572
        %636 = vmatpush1.bf16.msra.mxu0 %v571
        %637 = vmatprep.subr.bf16.mxu0 %v574
        %638 = vmatpush1.bf16.msra.mxu0 %v573
        %639 = vmatprep.subr.bf16.mxu0 %v576
        %640 = vmatpush1.bf16.msra.mxu0 %v575
        %641 = vmatprep.subr.bf16.mxu0 %v578
        %642 = vmatpush1.bf16.msra.mxu0 %v577
        %643 = vmatprep.subr.bf16.mxu0 %v580
        %644 = vmatpush1.bf16.msra.mxu0 %v579
        %645 = vmatprep.subr.bf16.mxu0 %v582
        %646 = vmatpush1.bf16.msra.mxu0 %v581
        %647 = vmatprep.subr.bf16.mxu0 %v584
        %648 = vmatpush1.bf16.msra.mxu0 %v583
        %649 = vmatprep.subr.bf16.mxu0 %v586
        %650 = vmatpush1.bf16.msra.mxu0 %v585
        %651 = vmatprep.subr.bf16.mxu0 %v588
        %652 = vmatpush1.bf16.msra.mxu0 %v587
        %653 = vmatprep.subr.bf16.mxu0 %v590
        %654 = vmatpush1.bf16.msra.mxu0 %v589
        %655 = vmatprep.subr.bf16.mxu0 %v592
        %656 = vmatpush1.bf16.msra.mxu0 %v591
        %657 = vmatprep.subr.bf16.mxu0 %v594
        %658 = vmatpush1.bf16.msra.mxu0 %v593
        %659 = vmatprep.mubr.bf16.mxu0 %v404
        %660 = vmatmul.mubr.bf16.gmra.mrb[0].mxu0 %v403
        %v661 = vpop.f32.mrb[0].mxu0
        %v662 = vadd.f32 0.0, %v661
        %v663 = vpop.f32.mrb[0].mxu0
        %v664 = vadd.f32 0.0, %v663
        %v665 = vpop.f32.mrb[0].mxu0
        %v666 = vadd.f32 0.0, %v665
        %v667 = vpop.f32.mrb[0].mxu0
        %v668 = vadd.f32 0.0, %v667
        %669 = vmatprep.mubr.bf16.mxu0 %v406
        %670 = vmatmul.mubr.bf16.gmra.mrb[0].mxu0 %v405
        %v671 = vpop.f32.mrb[0].mxu0
        %v672 = vadd.f32 0.0, %v671
        %v673 = vpop.f32.mrb[0].mxu0
        %v674 = vadd.f32 0.0, %v673
        %v675 = vpop.f32.mrb[0].mxu0
        %v676 = vadd.f32 0.0, %v675
        %v677 = vpop.f32.mrb[0].mxu0
        %v678 = vadd.f32 0.0, %v677
        %679 = vmatprep.mubr.bf16.mxu0 %v408
        %680 = vmatmul.mubr.bf16.gmra.mrb[0].mxu0 %v407
        %v681 = vpop.f32.mrb[0].mxu0
        %v682 = vadd.f32 0.0, %v681
        %v683 = vpop.f32.mrb[0].mxu0
        %v684 = vadd.f32 0.0, %v683
        %v685 = vpop.f32.mrb[0].mxu0
        %v686 = vadd.f32 0.0, %v685
        %v687 = vpop.f32.mrb[0].mxu0
        %v688 = vadd.f32 0.0, %v687
        %689 = vmatprep.mubr.bf16.mxu0 %v410
        %690 = vmatmul.mubr.bf16.gmra.mrb[0].mxu0 %v409
        %v691 = vpop.f32.mrb[0].mxu0
        %v692 = vadd.f32 0.0, %v691
        %v693 = vpop.f32.mrb[0].mxu0
        %v694 = vadd.f32 0.0, %v693
        %v695 = vpop.f32.mrb[0].mxu0
        %v696 = vadd.f32 0.0, %v695
        %v697 = vpop.f32.mrb[0].mxu0
        %v698 = vadd.f32 0.0, %v697
        %699 = vmatprep.mubr.bf16.mxu0 %v412
        %700 = vmatmul.mubr.bf16.gmra.mrb[0].mxu0 %v411
        %v701 = vpop.f32.mrb[0].mxu0
        %v702 = vadd.f32 0.0, %v701
        %v703 = vpop.f32.mrb[0].mxu0
        %v704 = vadd.f32 0.0, %v703
        %v705 = vpop.f32.mrb[0].mxu0
        %v706 = vadd.f32 0.0, %v705
        %v707 = vpop.f32.mrb[0].mxu0
        %v708 = vadd.f32 0.0, %v707
        %709 = vmatprep.mubr.bf16.mxu0 %v414
        %710 = vmatmul.mubr.bf16.gmra.mrb[0].mxu0 %v413
        %v711 = vpop.f32.mrb[0].mxu0
        %v712 = vadd.f32 0.0, %v711
        %v713 = vpop.f32.mrb[0].mxu0
        %v714 = vadd.f32 0.0, %v713
        %v715 = vpop.f32.mrb[0].mxu0
        %v716 = vadd.f32 0.0, %v715
        %v717 = vpop.f32.mrb[0].mxu0
        %v718 = vadd.f32 0.0, %v717
        %719 = vmatprep.mubr.bf16.mxu0 %v416
        %720 = vmatmul.mubr.bf16.gmra.mrb[0].mxu0 %v415
        %v721 = vpop.f32.mrb[0].mxu0
        %v722 = vadd.f32 0.0, %v721
        %v723 = vpop.f32.mrb[0].mxu0
        %v724 = vadd.f32 0.0, %v723
        %v725 = vpop.f32.mrb[0].mxu0
        %v726 = vadd.f32 0.0, %v725
        %v727 = vpop.f32.mrb[0].mxu0
        %v728 = vadd.f32 0.0, %v727
        %729 = vmatprep.mubr.bf16.mxu0 %v418
        %730 = vmatmul.mubr.bf16.gmra.mrb[0].mxu0 %v417
        %v731 = vpop.f32.mrb[0].mxu0
        %v732 = vadd.f32 0.0, %v731
        %v733 = vpop.f32.mrb[0].mxu0
        %v734 = vadd.f32 0.0, %v733
        %v735 = vpop.f32.mrb[0].mxu0
        %v736 = vadd.f32 0.0, %v735
        %v737 = vpop.f32.mrb[0].mxu0
        %v738 = vadd.f32 0.0, %v737
        %739 = vmatprep.mubr.bf16.mxu0 %v420
        %740 = vmatmul.mubr.bf16.gmra.mrb[0].mxu0 %v419
        %v741 = vpop.f32.mrb[0].mxu0
        %v742 = vadd.f32 0.0, %v741
        %v743 = vpop.f32.mrb[0].mxu0
        %v744 = vadd.f32 0.0, %v743
        %v745 = vpop.f32.mrb[0].mxu0
        %v746 = vadd.f32 0.0, %v745
        %v747 = vpop.f32.mrb[0].mxu0
        %v748 = vadd.f32 0.0, %v747
        %749 = vmatprep.mubr.bf16.mxu0 %v422
        %750 = vmatmul.mubr.bf16.gmra.mrb[0].mxu0 %v421
        %v751 = vpop.f32.mrb[0].mxu0
        %v752 = vadd.f32 0.0, %v751
        %v753 = vpop.f32.mrb[0].mxu0
        %v754 = vadd.f32 0.0, %v753
        %v755 = vpop.f32.mrb[0].mxu0
        %v756 = vadd.f32 0.0, %v755
        %v757 = vpop.f32.mrb[0].mxu0
        %v758 = vadd.f32 0.0, %v757
        %759 = vmatprep.mubr.bf16.mxu0 %v424
        %760 = vmatmul.mubr.bf16.gmra.mrb[0].mxu0 %v423
        %v761 = vpop.f32.mrb[0].mxu0
        %v762 = vadd.f32 0.0, %v761
        %v763 = vpop.f32.mrb[0].mxu0
        %v764 = vadd.f32 0.0, %v763
        %v765 = vpop.f32.mrb[0].mxu0
        %v766 = vadd.f32 0.0, %v765
        %v767 = vpop.f32.mrb[0].mxu0
        %v768 = vadd.f32 0.0, %v767
        %769 = vmatprep.mubr.bf16.mxu0 %v426
        %770 = vmatmul.mubr.bf16.gmra.mrb[0].mxu0 %v425
        %v771 = vpop.f32.mrb[0].mxu0
        %v772 = vadd.f32 0.0, %v771
        %v773 = vpop.f32.mrb[0].mxu0
        %v774 = vadd.f32 0.0, %v773
        %v775 = vpop.f32.mrb[0].mxu0
        %v776 = vadd.f32 0.0, %v775
        %v777 = vpop.f32.mrb[0].mxu0
        %v778 = vadd.f32 0.0, %v777
        %779 = vmatprep.mubr.bf16.mxu0 %v428
        %780 = vmatmul.mubr.bf16.gmra.mrb[0].mxu0 %v427
        %v781 = vpop.f32.mrb[0].mxu0
        %v782 = vadd.f32 0.0, %v781
        %v783 = vpop.f32.mrb[0].mxu0
        %v784 = vadd.f32 0.0, %v783
        %v785 = vpop.f32.mrb[0].mxu0
        %v786 = vadd.f32 0.0, %v785
        %v787 = vpop.f32.mrb[0].mxu0
        %v788 = vadd.f32 0.0, %v787
        %789 = vmatprep.mubr.bf16.mxu0 %v430
        %790 = vmatmul.mubr.bf16.gmra.mrb[0].mxu0 %v429
        %v791 = vpop.f32.mrb[0].mxu0
        %v792 = vadd.f32 0.0, %v791
        %v793 = vpop.f32.mrb[0].mxu0
        %v794 = vadd.f32 0.0, %v793
        %v795 = vpop.f32.mrb[0].mxu0
        %v796 = vadd.f32 0.0, %v795
        %v797 = vpop.f32.mrb[0].mxu0
        %v798 = vadd.f32 0.0, %v797
        %799 = vmatprep.mubr.bf16.mxu0 %v432
        %800 = vmatmul.mubr.bf16.gmra.mrb[0].mxu0 %v431
        %v801 = vpop.f32.mrb[0].mxu0
        %v802 = vadd.f32 0.0, %v801
        %v803 = vpop.f32.mrb[0].mxu0
        %v804 = vadd.f32 0.0, %v803
        %v805 = vpop.f32.mrb[0].mxu0
        %v806 = vadd.f32 0.0, %v805
        %v807 = vpop.f32.mrb[0].mxu0
        %v808 = vadd.f32 0.0, %v807
        %809 = vmatprep.mubr.bf16.mxu0 %v434
        %810 = vmatmul.mubr.bf16.gmra.mrb[0].mxu0 %v433
        %v811 = vpop.f32.mrb[0].mxu0
        %v812 = vadd.f32 0.0, %v811
        %v813 = vpop.f32.mrb[0].mxu0
        %v814 = vadd.f32 0.0, %v813
        %v815 = vpop.f32.mrb[0].mxu0
        %v816 = vadd.f32 0.0, %v815
        %v817 = vpop.f32.mrb[0].mxu0
        %v818 = vadd.f32 0.0, %v817
        %819 = vdwg.mxu0
        %v820 = vmul.f32 %v662, 0.5
        %v821 = vmul.f32 %v664, 0.5
        %v822 = vmul.f32 %v666, 0.5
        %v823 = vmul.f32 %v668, 0.5
        %v824 = vmul.f32 %v672, 0.5
        %v825 = vmul.f32 %v674, 0.5
        %v826 = vmul.f32 %v676, 0.5
        %v827 = vmul.f32 %v678, 0.5
        %v828 = vmul.f32 %v682, 0.5
        %v829 = vmul.f32 %v684, 0.5
        %v830 = vmul.f32 %v686, 0.5
        %v831 = vmul.f32 %v688, 0.5
        %v832 = vmul.f32 %v692, 0.5
        %v833 = vmul.f32 %v694, 0.5
        %v834 = vmul.f32 %v696, 0.5
        %v835 = vmul.f32 %v698, 0.5
        %v836 = vmul.f32 %v702, 0.5
        %v837 = vmul.f32 %v704, 0.5
        %v838 = vmul.f32 %v706, 0.5
        %v839 = vmul.f32 %v708, 0.5
        %v840 = vmul.f32 %v712, 0.5
        %v841 = vmul.f32 %v714, 0.5
        %v842 = vmul.f32 %v716, 0.5
        %v843 = vmul.f32 %v718, 0.5
        %v844 = vmul.f32 %v722, 0.5
        %v845 = vmul.f32 %v724, 0.5
        %v846 = vmul.f32 %v726, 0.5
        %v847 = vmul.f32 %v728, 0.5
        %v848 = vmul.f32 %v732, 0.5
        %v849 = vmul.f32 %v734, 0.5
        %v850 = vmul.f32 %v736, 0.5
        %v851 = vmul.f32 %v738, 0.5
        %v852 = vmul.f32 %v742, 0.5
        %v853 = vmul.f32 %v744, 0.5
        %v854 = vmul.f32 %v746, 0.5
        %v855 = vmul.f32 %v748, 0.5
        %v856 = vmul.f32 %v752, 0.5
        %v857 = vmul.f32 %v754, 0.5
        %v858 = vmul.f32 %v756, 0.5
        %v859 = vmul.f32 %v758, 0.5
        %v860 = vmul.f32 %v762, 0.5
        %v861 = vmul.f32 %v764, 0.5
        %v862 = vmul.f32 %v766, 0.5
        %v863 = vmul.f32 %v768, 0.5
        %v864 = vmul.f32 %v772, 0.5
        %v865 = vmul.f32 %v774, 0.5
        %v866 = vmul.f32 %v776, 0.5
        %v867 = vmul.f32 %v778, 0.5
        %v868 = vmul.f32 %v782, 0.5
        %v869 = vmul.f32 %v784, 0.5
        %v870 = vmul.f32 %v786, 0.5
        %v871 = vmul.f32 %v788, 0.5
        %v872 = vmul.f32 %v792, 0.5
        %v873 = vmul.f32 %v794, 0.5
        %v874 = vmul.f32 %v796, 0.5
        %v875 = vmul.f32 %v798, 0.5
        %v876 = vmul.f32 %v802, 0.5
        %v877 = vmul.f32 %v804, 0.5
        %v878 = vmul.f32 %v806, 0.5
        %v879 = vmul.f32 %v808, 0.5
        %v880 = vmul.f32 %v812, 0.5
        %v881 = vmul.f32 %v814, 0.5
        %v882 = vmul.f32 %v816, 0.5
        %v883 = vmul.f32 %v818, 0.5
        %v884 = vmul.f32 %v211, 1.2660658
        %v885 = vmul.f32 %v212, 1.2660658
        %v886 = vmul.f32 %v213, 1.2660658
        %v887 = vmul.f32 %v214, 1.2660658
        %v888 = vmul.f32 %v215, 1.2660658
        %v889 = vmul.f32 %v216, 1.2660658
        %v890 = vmul.f32 %v217, 1.2660658
        %v891 = vmul.f32 %v218, 1.2660658
        %v892 = vmul.f32 %v219, 1.2660658
        %v893 = vmul.f32 %v220, 1.2660658
        %v894 = vmul.f32 %v221, 1.2660658
        %v895 = vmul.f32 %v222, 1.2660658
        %v896 = vmul.f32 %v223, 1.2660658
        %v897 = vmul.f32 %v224, 1.2660658
        %v898 = vmul.f32 %v225, 1.2660658
        %v899 = vmul.f32 %v226, 1.2660658
        %v900 = vmul.f32 %v227, 1.2660658
        %v901 = vmul.f32 %v228, 1.2660658
        %v902 = vmul.f32 %v229, 1.2660658
        %v903 = vmul.f32 %v230, 1.2660658
        %v904 = vmul.f32 %v231, 1.2660658
        %v905 = vmul.f32 %v232, 1.2660658
        %v906 = vmul.f32 %v233, 1.2660658
        %v907 = vmul.f32 %v234, 1.2660658
        %v908 = vmul.f32 %v235, 1.2660658
        %v909 = vmul.f32 %v236, 1.2660658
        %v910 = vmul.f32 %v237, 1.2660658
        %v911 = vmul.f32 %v238, 1.2660658
        %v912 = vmul.f32 %v239, 1.2660658
        %v913 = vmul.f32 %v240, 1.2660658
        %v914 = vmul.f32 %v241, 1.2660658
        %v915 = vmul.f32 %v242, 1.2660658
        %v916 = vmul.f32 %v243, 1.2660658
        %v917 = vmul.f32 %v244, 1.2660658
        %v918 = vmul.f32 %v245, 1.2660658
        %v919 = vmul.f32 %v246, 1.2660658
        %v920 = vmul.f32 %v247, 1.2660658
        %v921 = vmul.f32 %v248, 1.2660658
        %v922 = vmul.f32 %v249, 1.2660658
        %v923 = vmul.f32 %v250, 1.2660658
        %v924 = vmul.f32 %v251, 1.2660658
        %v925 = vmul.f32 %v252, 1.2660658
        %v926 = vmul.f32 %v253, 1.2660658
        %v927 = vmul.f32 %v254, 1.2660658
        %v928 = vmul.f32 %v255, 1.2660658
        %v929 = vmul.f32 %v256, 1.2660658
        %v930 = vmul.f32 %v257, 1.2660658
        %v931 = vmul.f32 %v258, 1.2660658
        %v932 = vmul.f32 %v259, 1.2660658
        %v933 = vmul.f32 %v260, 1.2660658
        %v934 = vmul.f32 %v261, 1.2660658
        %v935 = vmul.f32 %v262, 1.2660658
        %v936 = vmul.f32 %v263, 1.2660658
        %v937 = vmul.f32 %v264, 1.2660658
        %v938 = vmul.f32 %v265, 1.2660658
        %v939 = vmul.f32 %v266, 1.2660658
        %v940 = vmul.f32 %v267, 1.2660658
        %v941 = vmul.f32 %v268, 1.2660658
        %v942 = vmul.f32 %v269, 1.2660658
        %v943 = vmul.f32 %v270, 1.2660658
        %v944 = vmul.f32 %v271, 1.2660658
        %v945 = vmul.f32 %v272, 1.2660658
        %v946 = vmul.f32 %v273, 1.2660658
        %v947 = vmul.f32 %v274, 1.2660658
        %v948 = vmul.f32 %v820, 1.1303182
        %v949 = vmul.f32 %v821, 1.1303182
        %v950 = vmul.f32 %v822, 1.1303182
        %v951 = vmul.f32 %v823, 1.1303182
        %v952 = vmul.f32 %v824, 1.1303182
        %v953 = vmul.f32 %v825, 1.1303182
        %v954 = vmul.f32 %v826, 1.1303182
        %v955 = vmul.f32 %v827, 1.1303182
        %v956 = vmul.f32 %v828, 1.1303182
        %v957 = vmul.f32 %v829, 1.1303182
        %v958 = vmul.f32 %v830, 1.1303182
        %v959 = vmul.f32 %v831, 1.1303182
        %v960 = vmul.f32 %v832, 1.1303182
        %v961 = vmul.f32 %v833, 1.1303182
        %v962 = vmul.f32 %v834, 1.1303182
        %v963 = vmul.f32 %v835, 1.1303182
        %v964 = vmul.f32 %v836, 1.1303182
        %v965 = vmul.f32 %v837, 1.1303182
        %v966 = vmul.f32 %v838, 1.1303182
        %v967 = vmul.f32 %v839, 1.1303182
        %v968 = vmul.f32 %v840, 1.1303182
        %v969 = vmul.f32 %v841, 1.1303182
        %v970 = vmul.f32 %v842, 1.1303182
        %v971 = vmul.f32 %v843, 1.1303182
        %v972 = vmul.f32 %v844, 1.1303182
        %v973 = vmul.f32 %v845, 1.1303182
        %v974 = vmul.f32 %v846, 1.1303182
        %v975 = vmul.f32 %v847, 1.1303182
        %v976 = vmul.f32 %v848, 1.1303182
        %v977 = vmul.f32 %v849, 1.1303182
        %v978 = vmul.f32 %v850, 1.1303182
        %v979 = vmul.f32 %v851, 1.1303182
        %v980 = vmul.f32 %v852, 1.1303182
        %v981 = vmul.f32 %v853, 1.1303182
        %v982 = vmul.f32 %v854, 1.1303182
        %v983 = vmul.f32 %v855, 1.1303182
        %v984 = vmul.f32 %v856, 1.1303182
        %v985 = vmul.f32 %v857, 1.1303182
        %v986 = vmul.f32 %v858, 1.1303182
        %v987 = vmul.f32 %v859, 1.1303182
        %v988 = vmul.f32 %v860, 1.1303182
        %v989 = vmul.f32 %v861, 1.1303182
        %v990 = vmul.f32 %v862, 1.1303182
        %v991 = vmul.f32 %v863, 1.1303182
        %v992 = vmul.f32 %v864, 1.1303182
        %v993 = vmul.f32 %v865, 1.1303182
        %v994 = vmul.f32 %v866, 1.1303182
        %v995 = vmul.f32 %v867, 1.1303182
        %v996 = vmul.f32 %v868, 1.1303182
        %v997 = vmul.f32 %v869, 1.1303182
        %v998 = vmul.f32 %v870, 1.1303182
        %v999 = vmul.f32 %v871, 1.1303182
        %v1000 = vmul.f32 %v872, 1.1303182
        %v1001 = vmul.f32 %v873, 1.1303182
        %v1002 = vmul.f32 %v874, 1.1303182
        %v1003 = vmul.f32 %v875, 1.1303182
        %v1004 = vmul.f32 %v876, 1.1303182
        %v1005 = vmul.f32 %v877, 1.1303182
        %v1006 = vmul.f32 %v878, 1.1303182
        %v1007 = vmul.f32 %v879, 1.1303182
        %v1008 = vmul.f32 %v880, 1.1303182
        %v1009 = vmul.f32 %v881, 1.1303182
        %v1010 = vmul.f32 %v882, 1.1303182
        %v1011 = vmul.f32 %v883, 1.1303182
        %v1012 = vadd.f32 %v884, %v948
        %v1013 = vadd.f32 %v885, %v949
        %v1014 = vadd.f32 %v886, %v950
        %v1015 = vadd.f32 %v887, %v951
        %v1016 = vadd.f32 %v888, %v952
        %v1017 = vadd.f32 %v889, %v953
        %v1018 = vadd.f32 %v890, %v954
        %v1019 = vadd.f32 %v891, %v955
        %v1020 = vadd.f32 %v892, %v956
        %v1021 = vadd.f32 %v893, %v957
        %v1022 = vadd.f32 %v894, %v958
        %v1023 = vadd.f32 %v895, %v959
        %v1024 = vadd.f32 %v896, %v960
        %v1025 = vadd.f32 %v897, %v961
        %v1026 = vadd.f32 %v898, %v962
        %v1027 = vadd.f32 %v899, %v963
        %v1028 = vadd.f32 %v900, %v964
        %v1029 = vadd.f32 %v901, %v965
        %v1030 = vadd.f32 %v902, %v966
        %v1031 = vadd.f32 %v903, %v967
        %v1032 = vadd.f32 %v904, %v968
        %v1033 = vadd.f32 %v905, %v969
        %v1034 = vadd.f32 %v906, %v970
        %v1035 = vadd.f32 %v907, %v971
        %v1036 = vadd.f32 %v908, %v972
        %v1037 = vadd.f32 %v909, %v973
        %v1038 = vadd.f32 %v910, %v974
        %v1039 = vadd.f32 %v911, %v975
        %v1040 = vadd.f32 %v912, %v976
        %v1041 = vadd.f32 %v913, %v977
        %v1042 = vadd.f32 %v914, %v978
        %v1043 = vadd.f32 %v915, %v979
        %v1044 = vadd.f32 %v916, %v980
        %v1045 = vadd.f32 %v917, %v981
        %v1046 = vadd.f32 %v918, %v982
        %v1047 = vadd.f32 %v919, %v983
        %v1048 = vadd.f32 %v920, %v984
        %v1049 = vadd.f32 %v921, %v985
        %v1050 = vadd.f32 %v922, %v986
        %v1051 = vadd.f32 %v923, %v987
        %v1052 = vadd.f32 %v924, %v988
        %v1053 = vadd.f32 %v925, %v989
        %v1054 = vadd.f32 %v926, %v990
        %v1055 = vadd.f32 %v927, %v991
        %v1056 = vadd.f32 %v928, %v992
        %v1057 = vadd.f32 %v929, %v993
        %v1058 = vadd.f32 %v930, %v994
        %v1059 = vadd.f32 %v931, %v995
        %v1060 = vadd.f32 %v932, %v996
        %v1061 = vadd.f32 %v933, %v997
        %v1062 = vadd.f32 %v934, %v998
        %v1063 = vadd.f32 %v935, %v999
        %v1064 = vadd.f32 %v936, %v1000
        %v1065 = vadd.f32 %v937, %v1001
        %v1066 = vadd.f32 %v938, %v1002
        %v1067 = vadd.f32 %v939, %v1003
        %v1068 = vadd.f32 %v940, %v1004
        %v1069 = vadd.f32 %v941, %v1005
        %v1070 = vadd.f32 %v942, %v1006
        %v1071 = vadd.f32 %v943, %v1007
        %v1072 = vadd.f32 %v944, %v1008
        %v1073 = vadd.f32 %v945, %v1009
        %v1074 = vadd.f32 %v946, %v1010
        %v1075 = vadd.f32 %v947, %v1011
        %1076 = vst [vmem:[%s176] sm:$0xff] %v1012
        %1077 = vst [vmem:[%s176 + $0x8] sm:$0xff] %v1013
        %1078 = vst [vmem:[%s176 + $0x20] sm:$0xff] %v1014
        %1079 = vst [vmem:[%s176 + $0x28] sm:$0xff] %v1015
        %1080 = vst [vmem:[%s176 + $0x40] sm:$0xff] %v1016
        %1081 = vst [vmem:[%s176 + $0x48] sm:$0xff] %v1017
        %1082 = vst [vmem:[%s176 + $0x60] sm:$0xff] %v1018
        %1083 = vst [vmem:[%s176 + $0x68] sm:$0xff] %v1019
        %1084 = vst [vmem:[%s176 + $0x80] sm:$0xff] %v1020
        %1085 = vst [vmem:[%s176 + $0x88] sm:$0xff] %v1021
        %1086 = vst [vmem:[%s176 + $0xa0] sm:$0xff] %v1022
        %1087 = vst [vmem:[%s176 + $0xa8] sm:$0xff] %v1023
        %1088 = vst [vmem:[%s176 + $0xc0] sm:$0xff] %v1024
        %1089 = vst [vmem:[%s176 + $0xc8] sm:$0xff] %v1025
        %1090 = vst [vmem:[%s176 + $0xe0] sm:$0xff] %v1026
        %1091 = vst [vmem:[%s176 + $0xe8] sm:$0xff] %v1027
        %1092 = vst [vmem:[%s176 + $0x100] sm:$0xff] %v1028
        %1093 = vst [vmem:[%s176 + $0x108] sm:$0xff] %v1029
        %1094 = vst [vmem:[%s176 + $0x120] sm:$0xff] %v1030
        %1095 = vst [vmem:[%s176 + $0x128] sm:$0xff] %v1031
        %1096 = vst [vmem:[%s176 + $0x140] sm:$0xff] %v1032
        %1097 = vst [vmem:[%s176 + $0x148] sm:$0xff] %v1033
        %1098 = vst [vmem:[%s176 + $0x160] sm:$0xff] %v1034
        %1099 = vst [vmem:[%s176 + $0x168] sm:$0xff] %v1035
        %1100 = vst [vmem:[%s176 + $0x180] sm:$0xff] %v1036
        %1101 = vst [vmem:[%s176 + $0x188] sm:$0xff] %v1037
        %1102 = vst [vmem:[%s176 + $0x1a0] sm:$0xff] %v1038
        %1103 = vst [vmem:[%s176 + $0x1a8] sm:$0xff] %v1039
        %1104 = vst [vmem:[%s176 + $0x1c0] sm:$0xff] %v1040
        %1105 = vst [vmem:[%s176 + $0x1c8] sm:$0xff] %v1041
        %1106 = vst [vmem:[%s176 + $0x1e0] sm:$0xff] %v1042
        %1107 = vst [vmem:[%s176 + $0x1e8] sm:$0xff] %v1043
        %1108 = vst [vmem:[%s176 + $0x200] sm:$0xff] %v1044
        %1109 = vst [vmem:[%s176 + $0x208] sm:$0xff] %v1045
        %1110 = vst [vmem:[%s176 + $0x220] sm:$0xff] %v1046
        %1111 = vst [vmem:[%s176 + $0x228] sm:$0xff] %v1047
        %1112 = vst [vmem:[%s176 + $0x240] sm:$0xff] %v1048
        %1113 = vst [vmem:[%s176 + $0x248] sm:$0xff] %v1049
        %1114 = vst [vmem:[%s176 + $0x260] sm:$0xff] %v1050
        %1115 = vst [vmem:[%s176 + $0x268] sm:$0xff] %v1051
        %1116 = vst [vmem:[%s176 + $0x280] sm:$0xff] %v1052
        %1117 = vst [vmem:[%s176 + $0x288] sm:$0xff] %v1053
        %1118 = vst [vmem:[%s176 + $0x2a0] sm:$0xff] %v1054
        %1119 = vst [vmem:[%s176 + $0x2a8] sm:$0xff] %v1055
        %1120 = vst [vmem:[%s176 + $0x2c0] sm:$0xff] %v1056
        %1121 = vst [vmem:[%s176 + $0x2c8] sm:$0xff] %v1057
        %1122 = vst [vmem:[%s176 + $0x2e0] sm:$0xff] %v1058
        %1123 = vst [vmem:[%s176 + $0x2e8] sm:$0xff] %v1059
        %1124 = vst [vmem:[%s176 + $0x300] sm:$0xff] %v1060
        %1125 = vst [vmem:[%s176 + $0x308] sm:$0xff] %v1061
        %1126 = vst [vmem:[%s176 + $0x320] sm:$0xff] %v1062
        %1127 = vst [vmem:[%s176 + $0x328] sm:$0xff] %v1063
        %1128 = vst [vmem:[%s176 + $0x340] sm:$0xff] %v1064
        %1129 = vst [vmem:[%s176 + $0x348] sm:$0xff] %v1065
        %1130 = vst [vmem:[%s176 + $0x360] sm:$0xff] %v1066
        %1131 = vst [vmem:[%s176 + $0x368] sm:$0xff] %v1067
        %1132 = vst [vmem:[%s176 + $0x380] sm:$0xff] %v1068
        %1133 = vst [vmem:[%s176 + $0x388] sm:$0xff] %v1069
        %1134 = vst [vmem:[%s176 + $0x3a0] sm:$0xff] %v1070
        %1135 = vst [vmem:[%s176 + $0x3a8] sm:$0xff] %v1071
        %1136 = vst [vmem:[%s176 + $0x3c0] sm:$0xff] %v1072
        %1137 = vst [vmem:[%s176 + $0x3c8] sm:$0xff] %v1073
        %1138 = vst [vmem:[%s176 + $0x3e0] sm:$0xff] %v1074
        %1139 = vst [vmem:[%s176 + $0x3e8] sm:$0xff] %v1075
        %v1140 = vld [vmem:[%s156 + $0x8] sm:$0xff]
        %v1141 = vld [vmem:[%s156 + $0x18] sm:$0xff]
        %v1142 = vld [vmem:[%s156 + $0x28] sm:$0xff]
        %v1143 = vld [vmem:[%s156 + $0x38] sm:$0xff]
        %v1144 = vld [vmem:[%s156 + $0x48] sm:$0xff]
        %v1145 = vld [vmem:[%s156 + $0x58] sm:$0xff]
        %v1146 = vld [vmem:[%s156 + $0x68] sm:$0xff]
        %v1147 = vld [vmem:[%s156 + $0x78] sm:$0xff]
        %v1148 = vld [vmem:[%s156 + $0x88] sm:$0xff]
        %v1149 = vld [vmem:[%s156 + $0x98] sm:$0xff]
        %v1150 = vld [vmem:[%s156 + $0xa8] sm:$0xff]
        %v1151 = vld [vmem:[%s156 + $0xb8] sm:$0xff]
        %v1152 = vld [vmem:[%s156 + $0xc8] sm:$0xff]
        %v1153 = vld [vmem:[%s156 + $0xd8] sm:$0xff]
        %v1154 = vld [vmem:[%s156 + $0xe8] sm:$0xff]
        %v1155 = vld [vmem:[%s156 + $0xf8] sm:$0xff]
        %v1156 = vld [vmem:[%s156 + $0x108] sm:$0xff]
        %v1157 = vld [vmem:[%s156 + $0x118] sm:$0xff]
        %v1158 = vld [vmem:[%s156 + $0x128] sm:$0xff]
        %v1159 = vld [vmem:[%s156 + $0x138] sm:$0xff]
        %v1160 = vld [vmem:[%s156 + $0x148] sm:$0xff]
        %v1161 = vld [vmem:[%s156 + $0x158] sm:$0xff]
        %v1162 = vld [vmem:[%s156 + $0x168] sm:$0xff]
        %v1163 = vld [vmem:[%s156 + $0x178] sm:$0xff]
        %v1164 = vld [vmem:[%s156 + $0x188] sm:$0xff]
        %v1165 = vld [vmem:[%s156 + $0x198] sm:$0xff]
        %v1166 = vld [vmem:[%s156 + $0x1a8] sm:$0xff]
        %v1167 = vld [vmem:[%s156 + $0x1b8] sm:$0xff]
        %v1168 = vld [vmem:[%s156 + $0x1c8] sm:$0xff]
        %v1169 = vld [vmem:[%s156 + $0x1d8] sm:$0xff]
        %v1170 = vld [vmem:[%s156 + $0x1e8] sm:$0xff]
        %v1171 = vld [vmem:[%s156 + $0x1f8] sm:$0xff]
        %v1172 = vunpack.c.l.bf16 %v1140
        %v1173 = vunpack.c.h.bf16 %v1140
        %v1174 = vunpack.c.l.bf16 %v1141
        %v1175 = vunpack.c.h.bf16 %v1141
        %v1176 = vunpack.c.l.bf16 %v1142
        %v1177 = vunpack.c.h.bf16 %v1142
        %v1178 = vunpack.c.l.bf16 %v1143
        %v1179 = vunpack.c.h.bf16 %v1143
        %v1180 = vunpack.c.l.bf16 %v1144
        %v1181 = vunpack.c.h.bf16 %v1144
        %v1182 = vunpack.c.l.bf16 %v1145
        %v1183 = vunpack.c.h.bf16 %v1145
        %v1184 = vunpack.c.l.bf16 %v1146
        %v1185 = vunpack.c.h.bf16 %v1146
        %v1186 = vunpack.c.l.bf16 %v1147
        %v1187 = vunpack.c.h.bf16 %v1147
        %v1188 = vunpack.c.l.bf16 %v1148
        %v1189 = vunpack.c.h.bf16 %v1148
        %v1190 = vunpack.c.l.bf16 %v1149
        %v1191 = vunpack.c.h.bf16 %v1149
        %v1192 = vunpack.c.l.bf16 %v1150
        %v1193 = vunpack.c.h.bf16 %v1150
        %v1194 = vunpack.c.l.bf16 %v1151
        %v1195 = vunpack.c.h.bf16 %v1151
        %v1196 = vunpack.c.l.bf16 %v1152
        %v1197 = vunpack.c.h.bf16 %v1152
        %v1198 = vunpack.c.l.bf16 %v1153
        %v1199 = vunpack.c.h.bf16 %v1153
        %v1200 = vunpack.c.l.bf16 %v1154
        %v1201 = vunpack.c.h.bf16 %v1154
        %v1202 = vunpack.c.l.bf16 %v1155
        %v1203 = vunpack.c.h.bf16 %v1155
        %v1204 = vunpack.c.l.bf16 %v1156
        %v1205 = vunpack.c.h.bf16 %v1156
        %v1206 = vunpack.c.l.bf16 %v1157
        %v1207 = vunpack.c.h.bf16 %v1157
        %v1208 = vunpack.c.l.bf16 %v1158
        %v1209 = vunpack.c.h.bf16 %v1158
        %v1210 = vunpack.c.l.bf16 %v1159
        %v1211 = vunpack.c.h.bf16 %v1159
        %v1212 = vunpack.c.l.bf16 %v1160
        %v1213 = vunpack.c.h.bf16 %v1160
        %v1214 = vunpack.c.l.bf16 %v1161
        %v1215 = vunpack.c.h.bf16 %v1161
        %v1216 = vunpack.c.l.bf16 %v1162
        %v1217 = vunpack.c.h.bf16 %v1162
        %v1218 = vunpack.c.l.bf16 %v1163
        %v1219 = vunpack.c.h.bf16 %v1163
        %v1220 = vunpack.c.l.bf16 %v1164
        %v1221 = vunpack.c.h.bf16 %v1164
        %v1222 = vunpack.c.l.bf16 %v1165
        %v1223 = vunpack.c.h.bf16 %v1165
        %v1224 = vunpack.c.l.bf16 %v1166
        %v1225 = vunpack.c.h.bf16 %v1166
        %v1226 = vunpack.c.l.bf16 %v1167
        %v1227 = vunpack.c.h.bf16 %v1167
        %v1228 = vunpack.c.l.bf16 %v1168
        %v1229 = vunpack.c.h.bf16 %v1168
        %v1230 = vunpack.c.l.bf16 %v1169
        %v1231 = vunpack.c.h.bf16 %v1169
        %v1232 = vunpack.c.l.bf16 %v1170
        %v1233 = vunpack.c.h.bf16 %v1170
        %v1234 = vunpack.c.l.bf16 %v1171
        %v1235 = vunpack.c.h.bf16 %v1171
        %v1236 = vld [vmem:[#allocation2] sm:$0xff]
        %v1237 = vld [vmem:[#allocation2 + $0x8] sm:$0xff]
        %v1238 = vld [vmem:[#allocation2 + $0x10] sm:$0xff]
        %v1239 = vld [vmem:[#allocation2 + $0x18] sm:$0xff]
        %v1240 = vld [vmem:[#allocation2 + $0x20] sm:$0xff]
        %v1241 = vld [vmem:[#allocation2 + $0x28] sm:$0xff]
        %v1242 = vld [vmem:[#allocation2 + $0x30] sm:$0xff]
        %v1243 = vld [vmem:[#allocation2 + $0x38] sm:$0xff]
        %v1244 = vld [vmem:[#allocation2 + $0x40] sm:$0xff]
        %v1245 = vld [vmem:[#allocation2 + $0x48] sm:$0xff]
        %v1246 = vld [vmem:[#allocation2 + $0x50] sm:$0xff]
        %v1247 = vld [vmem:[#allocation2 + $0x58] sm:$0xff]
        %v1248 = vld [vmem:[#allocation2 + $0x60] sm:$0xff]
        %v1249 = vld [vmem:[#allocation2 + $0x68] sm:$0xff]
        %v1250 = vld [vmem:[#allocation2 + $0x70] sm:$0xff]
        %v1251 = vld [vmem:[#allocation2 + $0x78] sm:$0xff]
        %v1252 = vld [vmem:[#allocation2 + $0x80] sm:$0xff]
        %v1253 = vld [vmem:[#allocation2 + $0x88] sm:$0xff]
        %v1254 = vld [vmem:[#allocation2 + $0x90] sm:$0xff]
        %v1255 = vld [vmem:[#allocation2 + $0x98] sm:$0xff]
        %v1256 = vld [vmem:[#allocation2 + $0xa0] sm:$0xff]
        %v1257 = vld [vmem:[#allocation2 + $0xa8] sm:$0xff]
        %v1258 = vld [vmem:[#allocation2 + $0xb0] sm:$0xff]
        %v1259 = vld [vmem:[#allocation2 + $0xb8] sm:$0xff]
        %v1260 = vld [vmem:[#allocation2 + $0xc0] sm:$0xff]
        %v1261 = vld [vmem:[#allocation2 + $0xc8] sm:$0xff]
        %v1262 = vld [vmem:[#allocation2 + $0xd0] sm:$0xff]
        %v1263 = vld [vmem:[#allocation2 + $0xd8] sm:$0xff]
        %v1264 = vld [vmem:[#allocation2 + $0xe0] sm:$0xff]
        %v1265 = vld [vmem:[#allocation2 + $0xe8] sm:$0xff]
        %v1266 = vld [vmem:[#allocation2 + $0xf0] sm:$0xff]
        %v1267 = vld [vmem:[#allocation2 + $0xf8] sm:$0xff]
        %v1300 = vunpack.c.l.b16 %v1236
        %v1301 = vunpack.c.h.b16 %v1236
        %v1302 = vunpack.c.l.b16 %v1237
        %v1303 = vunpack.c.h.b16 %v1237
        %v1304 = vunpack.c.l.b16 %v1238
        %v1305 = vunpack.c.h.b16 %v1238
        %v1306 = vunpack.c.l.b16 %v1239
        %v1307 = vunpack.c.h.b16 %v1239
        %v1308 = vunpack.c.l.b16 %v1240
        %v1309 = vunpack.c.h.b16 %v1240
        %v1310 = vunpack.c.l.b16 %v1241
        %v1311 = vunpack.c.h.b16 %v1241
        %v1312 = vunpack.c.l.b16 %v1242
        %v1313 = vunpack.c.h.b16 %v1242
        %v1314 = vunpack.c.l.b16 %v1243
        %v1315 = vunpack.c.h.b16 %v1243
        %v1316 = vunpack.c.l.b16 %v1244
        %v1317 = vunpack.c.h.b16 %v1244
        %v1318 = vunpack.c.l.b16 %v1245
        %v1319 = vunpack.c.h.b16 %v1245
        %v1320 = vunpack.c.l.b16 %v1246
        %v1321 = vunpack.c.h.b16 %v1246
        %v1322 = vunpack.c.l.b16 %v1247
        %v1323 = vunpack.c.h.b16 %v1247
        %v1324 = vunpack.c.l.b16 %v1248
        %v1325 = vunpack.c.h.b16 %v1248
        %v1326 = vunpack.c.l.b16 %v1249
        %v1327 = vunpack.c.h.b16 %v1249
        %v1328 = vunpack.c.l.b16 %v1250
        %v1329 = vunpack.c.h.b16 %v1250
        %v1330 = vunpack.c.l.b16 %v1251
        %v1331 = vunpack.c.h.b16 %v1251
        %v1332 = vunpack.c.l.b16 %v1252
        %v1333 = vunpack.c.h.b16 %v1252
        %v1334 = vunpack.c.l.b16 %v1253
        %v1335 = vunpack.c.h.b16 %v1253
        %v1336 = vunpack.c.l.b16 %v1254
        %v1337 = vunpack.c.h.b16 %v1254
        %v1338 = vunpack.c.l.b16 %v1255
        %v1339 = vunpack.c.h.b16 %v1255
        %v1340 = vunpack.c.l.b16 %v1256
        %v1341 = vunpack.c.h.b16 %v1256
        %v1342 = vunpack.c.l.b16 %v1257
        %v1343 = vunpack.c.h.b16 %v1257
        %v1344 = vunpack.c.l.b16 %v1258
        %v1345 = vunpack.c.h.b16 %v1258
        %v1346 = vunpack.c.l.b16 %v1259
        %v1347 = vunpack.c.h.b16 %v1259
        %v1348 = vunpack.c.l.b16 %v1260
        %v1349 = vunpack.c.h.b16 %v1260
        %v1350 = vunpack.c.l.b16 %v1261
        %v1351 = vunpack.c.h.b16 %v1261
        %v1352 = vunpack.c.l.b16 %v1262
        %v1353 = vunpack.c.h.b16 %v1262
        %v1354 = vunpack.c.l.b16 %v1263
        %v1355 = vunpack.c.h.b16 %v1263
        %v1356 = vunpack.c.l.b16 %v1264
        %v1357 = vunpack.c.h.b16 %v1264
        %v1358 = vunpack.c.l.b16 %v1265
        %v1359 = vunpack.c.h.b16 %v1265
        %v1360 = vunpack.c.l.b16 %v1266
        %v1361 = vunpack.c.h.b16 %v1266
        %v1362 = vunpack.c.l.b16 %v1267
        %v1363 = vunpack.c.h.b16 %v1267
        %v1364 = vpack.c.b16 %v1302, %v1300
        %v1365 = vpack.c.b16 %v1303, %v1301
        %v1366 = vpack.c.b16 %v1306, %v1304
        %v1367 = vpack.c.b16 %v1307, %v1305
        %v1368 = vpack.c.b16 %v1310, %v1308
        %v1369 = vpack.c.b16 %v1311, %v1309
        %v1370 = vpack.c.b16 %v1314, %v1312
        %v1371 = vpack.c.b16 %v1315, %v1313
        %v1372 = vpack.c.b16 %v1318, %v1316
        %v1373 = vpack.c.b16 %v1319, %v1317
        %v1374 = vpack.c.b16 %v1322, %v1320
        %v1375 = vpack.c.b16 %v1323, %v1321
        %v1376 = vpack.c.b16 %v1326, %v1324
        %v1377 = vpack.c.b16 %v1327, %v1325
        %v1378 = vpack.c.b16 %v1330, %v1328
        %v1379 = vpack.c.b16 %v1331, %v1329
        %v1380 = vpack.c.b16 %v1334, %v1332
        %v1381 = vpack.c.b16 %v1335, %v1333
        %v1382 = vpack.c.b16 %v1338, %v1336
        %v1383 = vpack.c.b16 %v1339, %v1337
        %v1384 = vpack.c.b16 %v1342, %v1340
        %v1385 = vpack.c.b16 %v1343, %v1341
        %v1386 = vpack.c.b16 %v1346, %v1344
        %v1387 = vpack.c.b16 %v1347, %v1345
        %v1388 = vpack.c.b16 %v1350, %v1348
        %v1389 = vpack.c.b16 %v1351, %v1349
        %v1390 = vpack.c.b16 %v1354, %v1352
        %v1391 = vpack.c.b16 %v1355, %v1353
        %v1392 = vpack.c.b16 %v1358, %v1356
        %v1393 = vpack.c.b16 %v1359, %v1357
        %v1394 = vpack.c.b16 %v1362, %v1360
        %v1395 = vpack.c.b16 %v1363, %v1361
        %v1460 = vunpack.c.l.b16 %v1140
        %v1461 = vunpack.c.h.b16 %v1140
        %v1462 = vunpack.c.l.b16 %v1141
        %v1463 = vunpack.c.h.b16 %v1141
        %v1464 = vunpack.c.l.b16 %v1142
        %v1465 = vunpack.c.h.b16 %v1142
        %v1466 = vunpack.c.l.b16 %v1143
        %v1467 = vunpack.c.h.b16 %v1143
        %v1468 = vunpack.c.l.b16 %v1144
        %v1469 = vunpack.c.h.b16 %v1144
        %v1470 = vunpack.c.l.b16 %v1145
        %v1471 = vunpack.c.h.b16 %v1145
        %v1472 = vunpack.c.l.b16 %v1146
        %v1473 = vunpack.c.h.b16 %v1146
        %v1474 = vunpack.c.l.b16 %v1147
        %v1475 = vunpack.c.h.b16 %v1147
        %v1476 = vunpack.c.l.b16 %v1148
        %v1477 = vunpack.c.h.b16 %v1148
        %v1478 = vunpack.c.l.b16 %v1149
        %v1479 = vunpack.c.h.b16 %v1149
        %v1480 = vunpack.c.l.b16 %v1150
        %v1481 = vunpack.c.h.b16 %v1150
        %v1482 = vunpack.c.l.b16 %v1151
        %v1483 = vunpack.c.h.b16 %v1151
        %v1484 = vunpack.c.l.b16 %v1152
        %v1485 = vunpack.c.h.b16 %v1152
        %v1486 = vunpack.c.l.b16 %v1153
        %v1487 = vunpack.c.h.b16 %v1153
        %v1488 = vunpack.c.l.b16 %v1154
        %v1489 = vunpack.c.h.b16 %v1154
        %v1490 = vunpack.c.l.b16 %v1155
        %v1491 = vunpack.c.h.b16 %v1155
        %v1492 = vunpack.c.l.b16 %v1156
        %v1493 = vunpack.c.h.b16 %v1156
        %v1494 = vunpack.c.l.b16 %v1157
        %v1495 = vunpack.c.h.b16 %v1157
        %v1496 = vunpack.c.l.b16 %v1158
        %v1497 = vunpack.c.h.b16 %v1158
        %v1498 = vunpack.c.l.b16 %v1159
        %v1499 = vunpack.c.h.b16 %v1159
        %v1500 = vunpack.c.l.b16 %v1160
        %v1501 = vunpack.c.h.b16 %v1160
        %v1502 = vunpack.c.l.b16 %v1161
        %v1503 = vunpack.c.h.b16 %v1161
        %v1504 = vunpack.c.l.b16 %v1162
        %v1505 = vunpack.c.h.b16 %v1162
        %v1506 = vunpack.c.l.b16 %v1163
        %v1507 = vunpack.c.h.b16 %v1163
        %v1508 = vunpack.c.l.b16 %v1164
        %v1509 = vunpack.c.h.b16 %v1164
        %v1510 = vunpack.c.l.b16 %v1165
        %v1511 = vunpack.c.h.b16 %v1165
        %v1512 = vunpack.c.l.b16 %v1166
        %v1513 = vunpack.c.h.b16 %v1166
        %v1514 = vunpack.c.l.b16 %v1167
        %v1515 = vunpack.c.h.b16 %v1167
        %v1516 = vunpack.c.l.b16 %v1168
        %v1517 = vunpack.c.h.b16 %v1168
        %v1518 = vunpack.c.l.b16 %v1169
        %v1519 = vunpack.c.h.b16 %v1169
        %v1520 = vunpack.c.l.b16 %v1170
        %v1521 = vunpack.c.h.b16 %v1170
        %v1522 = vunpack.c.l.b16 %v1171
        %v1523 = vunpack.c.h.b16 %v1171
        %v1524 = vpack.c.b16 %v1462, %v1460
        %v1525 = vpack.c.b16 %v1463, %v1461
        %v1526 = vpack.c.b16 %v1466, %v1464
        %v1527 = vpack.c.b16 %v1467, %v1465
        %v1528 = vpack.c.b16 %v1470, %v1468
        %v1529 = vpack.c.b16 %v1471, %v1469
        %v1530 = vpack.c.b16 %v1474, %v1472
        %v1531 = vpack.c.b16 %v1475, %v1473
        %v1532 = vpack.c.b16 %v1478, %v1476
        %v1533 = vpack.c.b16 %v1479, %v1477
        %v1534 = vpack.c.b16 %v1482, %v1480
        %v1535 = vpack.c.b16 %v1483, %v1481
        %v1536 = vpack.c.b16 %v1486, %v1484
        %v1537 = vpack.c.b16 %v1487, %v1485
        %v1538 = vpack.c.b16 %v1490, %v1488
        %v1539 = vpack.c.b16 %v1491, %v1489
        %v1540 = vpack.c.b16 %v1494, %v1492
        %v1541 = vpack.c.b16 %v1495, %v1493
        %v1542 = vpack.c.b16 %v1498, %v1496
        %v1543 = vpack.c.b16 %v1499, %v1497
        %v1544 = vpack.c.b16 %v1502, %v1500
        %v1545 = vpack.c.b16 %v1503, %v1501
        %v1546 = vpack.c.b16 %v1506, %v1504
        %v1547 = vpack.c.b16 %v1507, %v1505
        %v1548 = vpack.c.b16 %v1510, %v1508
        %v1549 = vpack.c.b16 %v1511, %v1509
        %v1550 = vpack.c.b16 %v1514, %v1512
        %v1551 = vpack.c.b16 %v1515, %v1513
        %v1552 = vpack.c.b16 %v1518, %v1516
        %v1553 = vpack.c.b16 %v1519, %v1517
        %v1554 = vpack.c.b16 %v1522, %v1520
        %v1555 = vpack.c.b16 %v1523, %v1521
        %1588 = vmatprep.subr.bf16.mxu0 %v1525
        %1589 = vmatpush1.bf16.msra.mxu0 %v1524
        %1590 = vmatprep.subr.bf16.mxu0 %v1527
        %1591 = vmatpush1.bf16.msra.mxu0 %v1526
        %1592 = vmatprep.subr.bf16.mxu0 %v1529
        %1593 = vmatpush1.bf16.msra.mxu0 %v1528
        %1594 = vmatprep.subr.bf16.mxu0 %v1531
        %1595 = vmatpush1.bf16.msra.mxu0 %v1530
        %1596 = vmatprep.subr.bf16.mxu0 %v1533
        %1597 = vmatpush1.bf16.msra.mxu0 %v1532
        %1598 = vmatprep.subr.bf16.mxu0 %v1535
        %1599 = vmatpush1.bf16.msra.mxu0 %v1534
        %1600 = vmatprep.subr.bf16.mxu0 %v1537
        %1601 = vmatpush1.bf16.msra.mxu0 %v1536
        %1602 = vmatprep.subr.bf16.mxu0 %v1539
        %1603 = vmatpush1.bf16.msra.mxu0 %v1538
        %1604 = vmatprep.subr.bf16.mxu0 %v1541
        %1605 = vmatpush1.bf16.msra.mxu0 %v1540
        %1606 = vmatprep.subr.bf16.mxu0 %v1543
        %1607 = vmatpush1.bf16.msra.mxu0 %v1542
        %1608 = vmatprep.subr.bf16.mxu0 %v1545
        %1609 = vmatpush1.bf16.msra.mxu0 %v1544
        %1610 = vmatprep.subr.bf16.mxu0 %v1547
        %1611 = vmatpush1.bf16.msra.mxu0 %v1546
        %1612 = vmatprep.subr.bf16.mxu0 %v1549
        %1613 = vmatpush1.bf16.msra.mxu0 %v1548
        %1614 = vmatprep.subr.bf16.mxu0 %v1551
        %1615 = vmatpush1.bf16.msra.mxu0 %v1550
        %1616 = vmatprep.subr.bf16.mxu0 %v1553
        %1617 = vmatpush1.bf16.msra.mxu0 %v1552
        %1618 = vmatprep.subr.bf16.mxu0 %v1555
        %1619 = vmatpush1.bf16.msra.mxu0 %v1554
        %1620 = vmatprep.mubr.bf16.mxu0 %v1365
        %1621 = vmatmul.mubr.bf16.gmra.mrb[0].mxu0 %v1364
        %v1622 = vpop.f32.mrb[0].mxu0
        %v1623 = vadd.f32 0.0, %v1622
        %v1624 = vpop.f32.mrb[0].mxu0
        %v1625 = vadd.f32 0.0, %v1624
        %v1626 = vpop.f32.mrb[0].mxu0
        %v1627 = vadd.f32 0.0, %v1626
        %v1628 = vpop.f32.mrb[0].mxu0
        %v1629 = vadd.f32 0.0, %v1628
        %1630 = vmatprep.mubr.bf16.mxu0 %v1367
        %1631 = vmatmul.mubr.bf16.gmra.mrb[0].mxu0 %v1366
        %v1632 = vpop.f32.mrb[0].mxu0
        %v1633 = vadd.f32 0.0, %v1632
        %v1634 = vpop.f32.mrb[0].mxu0
        %v1635 = vadd.f32 0.0, %v1634
        %v1636 = vpop.f32.mrb[0].mxu0
        %v1637 = vadd.f32 0.0, %v1636
        %v1638 = vpop.f32.mrb[0].mxu0
        %v1639 = vadd.f32 0.0, %v1638
        %1640 = vmatprep.mubr.bf16.mxu0 %v1369
        %1641 = vmatmul.mubr.bf16.gmra.mrb[0].mxu0 %v1368
        %v1642 = vpop.f32.mrb[0].mxu0
        %v1643 = vadd.f32 0.0, %v1642
        %v1644 = vpop.f32.mrb[0].mxu0
        %v1645 = vadd.f32 0.0, %v1644
        %v1646 = vpop.f32.mrb[0].mxu0
        %v1647 = vadd.f32 0.0, %v1646
        %v1648 = vpop.f32.mrb[0].mxu0
        %v1649 = vadd.f32 0.0, %v1648
        %1650 = vmatprep.mubr.bf16.mxu0 %v1371
        %1651 = vmatmul.mubr.bf16.gmra.mrb[0].mxu0 %v1370
        %v1652 = vpop.f32.mrb[0].mxu0
        %v1653 = vadd.f32 0.0, %v1652
        %v1654 = vpop.f32.mrb[0].mxu0
        %v1655 = vadd.f32 0.0, %v1654
        %v1656 = vpop.f32.mrb[0].mxu0
        %v1657 = vadd.f32 0.0, %v1656
        %v1658 = vpop.f32.mrb[0].mxu0
        %v1659 = vadd.f32 0.0, %v1658
        %1660 = vmatprep.mubr.bf16.mxu0 %v1373
        %1661 = vmatmul.mubr.bf16.gmra.mrb[0].mxu0 %v1372
        %v1662 = vpop.f32.mrb[0].mxu0
        %v1663 = vadd.f32 0.0, %v1662
        %v1664 = vpop.f32.mrb[0].mxu0
        %v1665 = vadd.f32 0.0, %v1664
        %v1666 = vpop.f32.mrb[0].mxu0
        %v1667 = vadd.f32 0.0, %v1666
        %v1668 = vpop.f32.mrb[0].mxu0
        %v1669 = vadd.f32 0.0, %v1668
        %1670 = vmatprep.mubr.bf16.mxu0 %v1375
        %1671 = vmatmul.mubr.bf16.gmra.mrb[0].mxu0 %v1374
        %v1672 = vpop.f32.mrb[0].mxu0
        %v1673 = vadd.f32 0.0, %v1672
        %v1674 = vpop.f32.mrb[0].mxu0
        %v1675 = vadd.f32 0.0, %v1674
        %v1676 = vpop.f32.mrb[0].mxu0
        %v1677 = vadd.f32 0.0, %v1676
        %v1678 = vpop.f32.mrb[0].mxu0
        %v1679 = vadd.f32 0.0, %v1678
        %1680 = vmatprep.mubr.bf16.mxu0 %v1377
        %1681 = vmatmul.mubr.bf16.gmra.mrb[0].mxu0 %v1376
        %v1682 = vpop.f32.mrb[0].mxu0
        %v1683 = vadd.f32 0.0, %v1682
        %v1684 = vpop.f32.mrb[0].mxu0
        %v1685 = vadd.f32 0.0, %v1684
        %v1686 = vpop.f32.mrb[0].mxu0
        %v1687 = vadd.f32 0.0, %v1686
        %v1688 = vpop.f32.mrb[0].mxu0
        %v1689 = vadd.f32 0.0, %v1688
        %1690 = vmatprep.mubr.bf16.mxu0 %v1379
        %1691 = vmatmul.mubr.bf16.gmra.mrb[0].mxu0 %v1378
        %v1692 = vpop.f32.mrb[0].mxu0
        %v1693 = vadd.f32 0.0, %v1692
        %v1694 = vpop.f32.mrb[0].mxu0
        %v1695 = vadd.f32 0.0, %v1694
        %v1696 = vpop.f32.mrb[0].mxu0
        %v1697 = vadd.f32 0.0, %v1696
        %v1698 = vpop.f32.mrb[0].mxu0
        %v1699 = vadd.f32 0.0, %v1698
        %1700 = vmatprep.mubr.bf16.mxu0 %v1381
        %1701 = vmatmul.mubr.bf16.gmra.mrb[0].mxu0 %v1380
        %v1702 = vpop.f32.mrb[0].mxu0
        %v1703 = vadd.f32 0.0, %v1702
        %v1704 = vpop.f32.mrb[0].mxu0
        %v1705 = vadd.f32 0.0, %v1704
        %v1706 = vpop.f32.mrb[0].mxu0
        %v1707 = vadd.f32 0.0, %v1706
        %v1708 = vpop.f32.mrb[0].mxu0
        %v1709 = vadd.f32 0.0, %v1708
        %1710 = vmatprep.mubr.bf16.mxu0 %v1383
        %1711 = vmatmul.mubr.bf16.gmra.mrb[0].mxu0 %v1382
        %v1712 = vpop.f32.mrb[0].mxu0
        %v1713 = vadd.f32 0.0, %v1712
        %v1714 = vpop.f32.mrb[0].mxu0
        %v1715 = vadd.f32 0.0, %v1714
        %v1716 = vpop.f32.mrb[0].mxu0
        %v1717 = vadd.f32 0.0, %v1716
        %v1718 = vpop.f32.mrb[0].mxu0
        %v1719 = vadd.f32 0.0, %v1718
        %1720 = vmatprep.mubr.bf16.mxu0 %v1385
        %1721 = vmatmul.mubr.bf16.gmra.mrb[0].mxu0 %v1384
        %v1722 = vpop.f32.mrb[0].mxu0
        %v1723 = vadd.f32 0.0, %v1722
        %v1724 = vpop.f32.mrb[0].mxu0
        %v1725 = vadd.f32 0.0, %v1724
        %v1726 = vpop.f32.mrb[0].mxu0
        %v1727 = vadd.f32 0.0, %v1726
        %v1728 = vpop.f32.mrb[0].mxu0
        %v1729 = vadd.f32 0.0, %v1728
        %1730 = vmatprep.mubr.bf16.mxu0 %v1387
        %1731 = vmatmul.mubr.bf16.gmra.mrb[0].mxu0 %v1386
        %v1732 = vpop.f32.mrb[0].mxu0
        %v1733 = vadd.f32 0.0, %v1732
        %v1734 = vpop.f32.mrb[0].mxu0
        %v1735 = vadd.f32 0.0, %v1734
        %v1736 = vpop.f32.mrb[0].mxu0
        %v1737 = vadd.f32 0.0, %v1736
        %v1738 = vpop.f32.mrb[0].mxu0
        %v1739 = vadd.f32 0.0, %v1738
        %1740 = vmatprep.mubr.bf16.mxu0 %v1389
        %1741 = vmatmul.mubr.bf16.gmra.mrb[0].mxu0 %v1388
        %v1742 = vpop.f32.mrb[0].mxu0
        %v1743 = vadd.f32 0.0, %v1742
        %v1744 = vpop.f32.mrb[0].mxu0
        %v1745 = vadd.f32 0.0, %v1744
        %v1746 = vpop.f32.mrb[0].mxu0
        %v1747 = vadd.f32 0.0, %v1746
        %v1748 = vpop.f32.mrb[0].mxu0
        %v1749 = vadd.f32 0.0, %v1748
        %1750 = vmatprep.mubr.bf16.mxu0 %v1391
        %1751 = vmatmul.mubr.bf16.gmra.mrb[0].mxu0 %v1390
        %v1752 = vpop.f32.mrb[0].mxu0
        %v1753 = vadd.f32 0.0, %v1752
        %v1754 = vpop.f32.mrb[0].mxu0
        %v1755 = vadd.f32 0.0, %v1754
        %v1756 = vpop.f32.mrb[0].mxu0
        %v1757 = vadd.f32 0.0, %v1756
        %v1758 = vpop.f32.mrb[0].mxu0
        %v1759 = vadd.f32 0.0, %v1758
        %1760 = vmatprep.mubr.bf16.mxu0 %v1393
        %1761 = vmatmul.mubr.bf16.gmra.mrb[0].mxu0 %v1392
        %v1762 = vpop.f32.mrb[0].mxu0
        %v1763 = vadd.f32 0.0, %v1762
        %v1764 = vpop.f32.mrb[0].mxu0
        %v1765 = vadd.f32 0.0, %v1764
        %v1766 = vpop.f32.mrb[0].mxu0
        %v1767 = vadd.f32 0.0, %v1766
        %v1768 = vpop.f32.mrb[0].mxu0
        %v1769 = vadd.f32 0.0, %v1768
        %1770 = vmatprep.mubr.bf16.mxu0 %v1395
        %1771 = vmatmul.mubr.bf16.gmra.mrb[0].mxu0 %v1394
        %v1772 = vpop.f32.mrb[0].mxu0
        %v1773 = vadd.f32 0.0, %v1772
        %v1774 = vpop.f32.mrb[0].mxu0
        %v1775 = vadd.f32 0.0, %v1774
        %v1776 = vpop.f32.mrb[0].mxu0
        %v1777 = vadd.f32 0.0, %v1776
        %v1778 = vpop.f32.mrb[0].mxu0
        %v1779 = vadd.f32 0.0, %v1778
        %1780 = vdwg.mxu0
        %v1781 = vmul.f32 %v1623, 0.5
        %v1782 = vmul.f32 %v1625, 0.5
        %v1783 = vmul.f32 %v1627, 0.5
        %v1784 = vmul.f32 %v1629, 0.5
        %v1785 = vmul.f32 %v1633, 0.5
        %v1786 = vmul.f32 %v1635, 0.5
        %v1787 = vmul.f32 %v1637, 0.5
        %v1788 = vmul.f32 %v1639, 0.5
        %v1789 = vmul.f32 %v1643, 0.5
        %v1790 = vmul.f32 %v1645, 0.5
        %v1791 = vmul.f32 %v1647, 0.5
        %v1792 = vmul.f32 %v1649, 0.5
        %v1793 = vmul.f32 %v1653, 0.5
        %v1794 = vmul.f32 %v1655, 0.5
        %v1795 = vmul.f32 %v1657, 0.5
        %v1796 = vmul.f32 %v1659, 0.5
        %v1797 = vmul.f32 %v1663, 0.5
        %v1798 = vmul.f32 %v1665, 0.5
        %v1799 = vmul.f32 %v1667, 0.5
        %v1800 = vmul.f32 %v1669, 0.5
        %v1801 = vmul.f32 %v1673, 0.5
        %v1802 = vmul.f32 %v1675, 0.5
        %v1803 = vmul.f32 %v1677, 0.5
        %v1804 = vmul.f32 %v1679, 0.5
        %v1805 = vmul.f32 %v1683, 0.5
        %v1806 = vmul.f32 %v1685, 0.5
        %v1807 = vmul.f32 %v1687, 0.5
        %v1808 = vmul.f32 %v1689, 0.5
        %v1809 = vmul.f32 %v1693, 0.5
        %v1810 = vmul.f32 %v1695, 0.5
        %v1811 = vmul.f32 %v1697, 0.5
        %v1812 = vmul.f32 %v1699, 0.5
        %v1813 = vmul.f32 %v1703, 0.5
        %v1814 = vmul.f32 %v1705, 0.5
        %v1815 = vmul.f32 %v1707, 0.5
        %v1816 = vmul.f32 %v1709, 0.5
        %v1817 = vmul.f32 %v1713, 0.5
        %v1818 = vmul.f32 %v1715, 0.5
        %v1819 = vmul.f32 %v1717, 0.5
        %v1820 = vmul.f32 %v1719, 0.5
        %v1821 = vmul.f32 %v1723, 0.5
        %v1822 = vmul.f32 %v1725, 0.5
        %v1823 = vmul.f32 %v1727, 0.5
        %v1824 = vmul.f32 %v1729, 0.5
        %v1825 = vmul.f32 %v1733, 0.5
        %v1826 = vmul.f32 %v1735, 0.5
        %v1827 = vmul.f32 %v1737, 0.5
        %v1828 = vmul.f32 %v1739, 0.5
        %v1829 = vmul.f32 %v1743, 0.5
        %v1830 = vmul.f32 %v1745, 0.5
        %v1831 = vmul.f32 %v1747, 0.5
        %v1832 = vmul.f32 %v1749, 0.5
        %v1833 = vmul.f32 %v1753, 0.5
        %v1834 = vmul.f32 %v1755, 0.5
        %v1835 = vmul.f32 %v1757, 0.5
        %v1836 = vmul.f32 %v1759, 0.5
        %v1837 = vmul.f32 %v1763, 0.5
        %v1838 = vmul.f32 %v1765, 0.5
        %v1839 = vmul.f32 %v1767, 0.5
        %v1840 = vmul.f32 %v1769, 0.5
        %v1841 = vmul.f32 %v1773, 0.5
        %v1842 = vmul.f32 %v1775, 0.5
        %v1843 = vmul.f32 %v1777, 0.5
        %v1844 = vmul.f32 %v1779, 0.5
        %v1845 = vmul.f32 %v1172, 1.2660658
        %v1846 = vmul.f32 %v1173, 1.2660658
        %v1847 = vmul.f32 %v1174, 1.2660658
        %v1848 = vmul.f32 %v1175, 1.2660658
        %v1849 = vmul.f32 %v1176, 1.2660658
        %v1850 = vmul.f32 %v1177, 1.2660658
        %v1851 = vmul.f32 %v1178, 1.2660658
        %v1852 = vmul.f32 %v1179, 1.2660658
        %v1853 = vmul.f32 %v1180, 1.2660658
        %v1854 = vmul.f32 %v1181, 1.2660658
        %v1855 = vmul.f32 %v1182, 1.2660658
        %v1856 = vmul.f32 %v1183, 1.2660658
        %v1857 = vmul.f32 %v1184, 1.2660658
        %v1858 = vmul.f32 %v1185, 1.2660658
        %v1859 = vmul.f32 %v1186, 1.2660658
        %v1860 = vmul.f32 %v1187, 1.2660658
        %v1861 = vmul.f32 %v1188, 1.2660658
        %v1862 = vmul.f32 %v1189, 1.2660658
        %v1863 = vmul.f32 %v1190, 1.2660658
        %v1864 = vmul.f32 %v1191, 1.2660658
        %v1865 = vmul.f32 %v1192, 1.2660658
        %v1866 = vmul.f32 %v1193, 1.2660658
        %v1867 = vmul.f32 %v1194, 1.2660658
        %v1868 = vmul.f32 %v1195, 1.2660658
        %v1869 = vmul.f32 %v1196, 1.2660658
        %v1870 = vmul.f32 %v1197, 1.2660658
        %v1871 = vmul.f32 %v1198, 1.2660658
        %v1872 = vmul.f32 %v1199, 1.2660658
        %v1873 = vmul.f32 %v1200, 1.2660658
        %v1874 = vmul.f32 %v1201, 1.2660658
        %v1875 = vmul.f32 %v1202, 1.2660658
        %v1876 = vmul.f32 %v1203, 1.2660658
        %v1877 = vmul.f32 %v1204, 1.2660658
        %v1878 = vmul.f32 %v1205, 1.2660658
        %v1879 = vmul.f32 %v1206, 1.2660658
        %v1880 = vmul.f32 %v1207, 1.2660658
        %v1881 = vmul.f32 %v1208, 1.2660658
        %v1882 = vmul.f32 %v1209, 1.2660658
        %v1883 = vmul.f32 %v1210, 1.2660658
        %v1884 = vmul.f32 %v1211, 1.2660658
        %v1885 = vmul.f32 %v1212, 1.2660658
        %v1886 = vmul.f32 %v1213, 1.2660658
        %v1887 = vmul.f32 %v1214, 1.2660658
        %v1888 = vmul.f32 %v1215, 1.2660658
        %v1889 = vmul.f32 %v1216, 1.2660658
        %v1890 = vmul.f32 %v1217, 1.2660658
        %v1891 = vmul.f32 %v1218, 1.2660658
        %v1892 = vmul.f32 %v1219, 1.2660658
        %v1893 = vmul.f32 %v1220, 1.2660658
        %v1894 = vmul.f32 %v1221, 1.2660658
        %v1895 = vmul.f32 %v1222, 1.2660658
        %v1896 = vmul.f32 %v1223, 1.2660658
        %v1897 = vmul.f32 %v1224, 1.2660658
        %v1898 = vmul.f32 %v1225, 1.2660658
        %v1899 = vmul.f32 %v1226, 1.2660658
        %v1900 = vmul.f32 %v1227, 1.2660658
        %v1901 = vmul.f32 %v1228, 1.2660658
        %v1902 = vmul.f32 %v1229, 1.2660658
        %v1903 = vmul.f32 %v1230, 1.2660658
        %v1904 = vmul.f32 %v1231, 1.2660658
        %v1905 = vmul.f32 %v1232, 1.2660658
        %v1906 = vmul.f32 %v1233, 1.2660658
        %v1907 = vmul.f32 %v1234, 1.2660658
        %v1908 = vmul.f32 %v1235, 1.2660658
        %v1909 = vmul.f32 %v1781, 1.1303182
        %v1910 = vmul.f32 %v1782, 1.1303182
        %v1911 = vmul.f32 %v1783, 1.1303182
        %v1912 = vmul.f32 %v1784, 1.1303182
        %v1913 = vmul.f32 %v1785, 1.1303182
        %v1914 = vmul.f32 %v1786, 1.1303182
        %v1915 = vmul.f32 %v1787, 1.1303182
        %v1916 = vmul.f32 %v1788, 1.1303182
        %v1917 = vmul.f32 %v1789, 1.1303182
        %v1918 = vmul.f32 %v1790, 1.1303182
        %v1919 = vmul.f32 %v1791, 1.1303182
        %v1920 = vmul.f32 %v1792, 1.1303182
        %v1921 = vmul.f32 %v1793, 1.1303182
        %v1922 = vmul.f32 %v1794, 1.1303182
        %v1923 = vmul.f32 %v1795, 1.1303182
        %v1924 = vmul.f32 %v1796, 1.1303182
        %v1925 = vmul.f32 %v1797, 1.1303182
        %v1926 = vmul.f32 %v1798, 1.1303182
        %v1927 = vmul.f32 %v1799, 1.1303182
        %v1928 = vmul.f32 %v1800, 1.1303182
        %v1929 = vmul.f32 %v1801, 1.1303182
        %v1930 = vmul.f32 %v1802, 1.1303182
        %v1931 = vmul.f32 %v1803, 1.1303182
        %v1932 = vmul.f32 %v1804, 1.1303182
        %v1933 = vmul.f32 %v1805, 1.1303182
        %v1934 = vmul.f32 %v1806, 1.1303182
        %v1935 = vmul.f32 %v1807, 1.1303182
        %v1936 = vmul.f32 %v1808, 1.1303182
        %v1937 = vmul.f32 %v1809, 1.1303182
        %v1938 = vmul.f32 %v1810, 1.1303182
        %v1939 = vmul.f32 %v1811, 1.1303182
        %v1940 = vmul.f32 %v1812, 1.1303182
        %v1941 = vmul.f32 %v1813, 1.1303182
        %v1942 = vmul.f32 %v1814, 1.1303182
        %v1943 = vmul.f32 %v1815, 1.1303182
        %v1944 = vmul.f32 %v1816, 1.1303182
        %v1945 = vmul.f32 %v1817, 1.1303182
        %v1946 = vmul.f32 %v1818, 1.1303182
        %v1947 = vmul.f32 %v1819, 1.1303182
        %v1948 = vmul.f32 %v1820, 1.1303182
        %v1949 = vmul.f32 %v1821, 1.1303182
        %v1950 = vmul.f32 %v1822, 1.1303182
        %v1951 = vmul.f32 %v1823, 1.1303182
        %v1952 = vmul.f32 %v1824, 1.1303182
        %v1953 = vmul.f32 %v1825, 1.1303182
        %v1954 = vmul.f32 %v1826, 1.1303182
        %v1955 = vmul.f32 %v1827, 1.1303182
        %v1956 = vmul.f32 %v1828, 1.1303182
        %v1957 = vmul.f32 %v1829, 1.1303182
        %v1958 = vmul.f32 %v1830, 1.1303182
        %v1959 = vmul.f32 %v1831, 1.1303182
        %v1960 = vmul.f32 %v1832, 1.1303182
        %v1961 = vmul.f32 %v1833, 1.1303182
        %v1962 = vmul.f32 %v1834, 1.1303182
        %v1963 = vmul.f32 %v1835, 1.1303182
        %v1964 = vmul.f32 %v1836, 1.1303182
        %v1965 = vmul.f32 %v1837, 1.1303182
        %v1966 = vmul.f32 %v1838, 1.1303182
        %v1967 = vmul.f32 %v1839, 1.1303182
        %v1968 = vmul.f32 %v1840, 1.1303182
        %v1969 = vmul.f32 %v1841, 1.1303182
        %v1970 = vmul.f32 %v1842, 1.1303182
        %v1971 = vmul.f32 %v1843, 1.1303182
        %v1972 = vmul.f32 %v1844, 1.1303182
        %v1973 = vadd.f32 %v1845, %v1909
        %v1974 = vadd.f32 %v1846, %v1910
        %v1975 = vadd.f32 %v1847, %v1911
        %v1976 = vadd.f32 %v1848, %v1912
        %v1977 = vadd.f32 %v1849, %v1913
        %v1978 = vadd.f32 %v1850, %v1914
        %v1979 = vadd.f32 %v1851, %v1915
        %v1980 = vadd.f32 %v1852, %v1916
        %v1981 = vadd.f32 %v1853, %v1917
        %v1982 = vadd.f32 %v1854, %v1918
        %v1983 = vadd.f32 %v1855, %v1919
        %v1984 = vadd.f32 %v1856, %v1920
        %v1985 = vadd.f32 %v1857, %v1921
        %v1986 = vadd.f32 %v1858, %v1922
        %v1987 = vadd.f32 %v1859, %v1923
        %v1988 = vadd.f32 %v1860, %v1924
        %v1989 = vadd.f32 %v1861, %v1925
        %v1990 = vadd.f32 %v1862, %v1926
        %v1991 = vadd.f32 %v1863, %v1927
        %v1992 = vadd.f32 %v1864, %v1928
        %v1993 = vadd.f32 %v1865, %v1929
        %v1994 = vadd.f32 %v1866, %v1930
        %v1995 = vadd.f32 %v1867, %v1931
        %v1996 = vadd.f32 %v1868, %v1932
        %v1997 = vadd.f32 %v1869, %v1933
        %v1998 = vadd.f32 %v1870, %v1934
        %v1999 = vadd.f32 %v1871, %v1935
        %v2000 = vadd.f32 %v1872, %v1936
        %v2001 = vadd.f32 %v1873, %v1937
        %v2002 = vadd.f32 %v1874, %v1938
        %v2003 = vadd.f32 %v1875, %v1939
        %v2004 = vadd.f32 %v1876, %v1940
        %v2005 = vadd.f32 %v1877, %v1941
        %v2006 = vadd.f32 %v1878, %v1942
        %v2007 = vadd.f32 %v1879, %v1943
        %v2008 = vadd.f32 %v1880, %v1944
        %v2009 = vadd.f32 %v1881, %v1945
        %v2010 = vadd.f32 %v1882, %v1946
        %v2011 = vadd.f32 %v1883, %v1947
        %v2012 = vadd.f32 %v1884, %v1948
        %v2013 = vadd.f32 %v1885, %v1949
        %v2014 = vadd.f32 %v1886, %v1950
        %v2015 = vadd.f32 %v1887, %v1951
        %v2016 = vadd.f32 %v1888, %v1952
        %v2017 = vadd.f32 %v1889, %v1953
        %v2018 = vadd.f32 %v1890, %v1954
        %v2019 = vadd.f32 %v1891, %v1955
        %v2020 = vadd.f32 %v1892, %v1956
        %v2021 = vadd.f32 %v1893, %v1957
        %v2022 = vadd.f32 %v1894, %v1958
        %v2023 = vadd.f32 %v1895, %v1959
        %v2024 = vadd.f32 %v1896, %v1960
        %v2025 = vadd.f32 %v1897, %v1961
        %v2026 = vadd.f32 %v1898, %v1962
        %v2027 = vadd.f32 %v1899, %v1963
        %v2028 = vadd.f32 %v1900, %v1964
        %v2029 = vadd.f32 %v1901, %v1965
        %v2030 = vadd.f32 %v1902, %v1966
        %v2031 = vadd.f32 %v1903, %v1967
        %v2032 = vadd.f32 %v1904, %v1968
        %v2033 = vadd.f32 %v1905, %v1969
        %v2034 = vadd.f32 %v1906, %v1970
        %v2035 = vadd.f32 %v1907, %v1971
        %v2036 = vadd.f32 %v1908, %v1972
        %2037 = vst [vmem:[%s176 + $0x10] sm:$0xff] %v1973
        %2038 = vst [vmem:[%s176 + $0x18] sm:$0xff] %v1974
        %2039 = vst [vmem:[%s176 + $0x30] sm:$0xff] %v1975
        %2040 = vst [vmem:[%s176 + $0x38] sm:$0xff] %v1976
        %2041 = vst [vmem:[%s176 + $0x50] sm:$0xff] %v1977
        %2042 = vst [vmem:[%s176 + $0x58] sm:$0xff] %v1978
        %2043 = vst [vmem:[%s176 + $0x70] sm:$0xff] %v1979
        %2044 = vst [vmem:[%s176 + $0x78] sm:$0xff] %v1980
        %2045 = vst [vmem:[%s176 + $0x90] sm:$0xff] %v1981
        %2046 = vst [vmem:[%s176 + $0x98] sm:$0xff] %v1982
        %2047 = vst [vmem:[%s176 + $0xb0] sm:$0xff] %v1983
        %2048 = vst [vmem:[%s176 + $0xb8] sm:$0xff] %v1984
        %2049 = vst [vmem:[%s176 + $0xd0] sm:$0xff] %v1985
        %2050 = vst [vmem:[%s176 + $0xd8] sm:$0xff] %v1986
        %2051 = vst [vmem:[%s176 + $0xf0] sm:$0xff] %v1987
        %2052 = vst [vmem:[%s176 + $0xf8] sm:$0xff] %v1988
        %2053 = vst [vmem:[%s176 + $0x110] sm:$0xff] %v1989
        %2054 = vst [vmem:[%s176 + $0x118] sm:$0xff] %v1990
        %2055 = vst [vmem:[%s176 + $0x130] sm:$0xff] %v1991
        %2056 = vst [vmem:[%s176 + $0x138] sm:$0xff] %v1992
        %2057 = vst [vmem:[%s176 + $0x150] sm:$0xff] %v1993
        %2058 = vst [vmem:[%s176 + $0x158] sm:$0xff] %v1994
        %2059 = vst [vmem:[%s176 + $0x170] sm:$0xff] %v1995
        %2060 = vst [vmem:[%s176 + $0x178] sm:$0xff] %v1996
        %2061 = vst [vmem:[%s176 + $0x190] sm:$0xff] %v1997
        %2062 = vst [vmem:[%s176 + $0x198] sm:$0xff] %v1998
        %2063 = vst [vmem:[%s176 + $0x1b0] sm:$0xff] %v1999
        %2064 = vst [vmem:[%s176 + $0x1b8] sm:$0xff] %v2000
        %2065 = vst [vmem:[%s176 + $0x1d0] sm:$0xff] %v2001
        %2066 = vst [vmem:[%s176 + $0x1d8] sm:$0xff] %v2002
        %2067 = vst [vmem:[%s176 + $0x1f0] sm:$0xff] %v2003
        %2068 = vst [vmem:[%s176 + $0x1f8] sm:$0xff] %v2004
        %2069 = vst [vmem:[%s176 + $0x210] sm:$0xff] %v2005
        %2070 = vst [vmem:[%s176 + $0x218] sm:$0xff] %v2006
        %2071 = vst [vmem:[%s176 + $0x230] sm:$0xff] %v2007
        %2072 = vst [vmem:[%s176 + $0x238] sm:$0xff] %v2008
        %2073 = vst [vmem:[%s176 + $0x250] sm:$0xff] %v2009
        %2074 = vst [vmem:[%s176 + $0x258] sm:$0xff] %v2010
        %2075 = vst [vmem:[%s176 + $0x270] sm:$0xff] %v2011
        %2076 = vst [vmem:[%s176 + $0x278] sm:$0xff] %v2012
        %2077 = vst [vmem:[%s176 + $0x290] sm:$0xff] %v2013
        %2078 = vst [vmem:[%s176 + $0x298] sm:$0xff] %v2014
        %2079 = vst [vmem:[%s176 + $0x2b0] sm:$0xff] %v2015
        %2080 = vst [vmem:[%s176 + $0x2b8] sm:$0xff] %v2016
        %2081 = vst [vmem:[%s176 + $0x2d0] sm:$0xff] %v2017
        %2082 = vst [vmem:[%s176 + $0x2d8] sm:$0xff] %v2018
        %2083 = vst [vmem:[%s176 + $0x2f0] sm:$0xff] %v2019
        %2084 = vst [vmem:[%s176 + $0x2f8] sm:$0xff] %v2020
        %2085 = vst [vmem:[%s176 + $0x310] sm:$0xff] %v2021
        %2086 = vst [vmem:[%s176 + $0x318] sm:$0xff] %v2022
        %2087 = vst [vmem:[%s176 + $0x330] sm:$0xff] %v2023
        %2088 = vst [vmem:[%s176 + $0x338] sm:$0xff] %v2024
        %2089 = vst [vmem:[%s176 + $0x350] sm:$0xff] %v2025
        %2090 = vst [vmem:[%s176 + $0x358] sm:$0xff] %v2026
        %2091 = vst [vmem:[%s176 + $0x370] sm:$0xff] %v2027
        %2092 = vst [vmem:[%s176 + $0x378] sm:$0xff] %v2028
        %2093 = vst [vmem:[%s176 + $0x390] sm:$0xff] %v2029
        %2094 = vst [vmem:[%s176 + $0x398] sm:$0xff] %v2030
        %2095 = vst [vmem:[%s176 + $0x3b0] sm:$0xff] %v2031
        %2096 = vst [vmem:[%s176 + $0x3b8] sm:$0xff] %v2032
        %2097 = vst [vmem:[%s176 + $0x3d0] sm:$0xff] %v2033
        %2098 = vst [vmem:[%s176 + $0x3d8] sm:$0xff] %v2034
        %2099 = vst [vmem:[%s176 + $0x3f0] sm:$0xff] %v2035
        %2100 = vst [vmem:[%s176 + $0x3f8] sm:$0xff] %v2036
        %v2101 = vld [vmem:[#allocation2] sm:$0xff]
        %v2102 = vld [vmem:[#allocation2 + $0x8] sm:$0xff]
        %v2103 = vld [vmem:[#allocation2 + $0x10] sm:$0xff]
        %v2104 = vld [vmem:[#allocation2 + $0x18] sm:$0xff]
        %v2105 = vld [vmem:[#allocation2 + $0x20] sm:$0xff]
        %v2106 = vld [vmem:[#allocation2 + $0x28] sm:$0xff]
        %v2107 = vld [vmem:[#allocation2 + $0x30] sm:$0xff]
        %v2108 = vld [vmem:[#allocation2 + $0x38] sm:$0xff]
        %v2109 = vld [vmem:[#allocation2 + $0x40] sm:$0xff]
        %v2110 = vld [vmem:[#allocation2 + $0x48] sm:$0xff]
        %v2111 = vld [vmem:[#allocation2 + $0x50] sm:$0xff]
        %v2112 = vld [vmem:[#allocation2 + $0x58] sm:$0xff]
        %v2113 = vld [vmem:[#allocation2 + $0x60] sm:$0xff]
        %v2114 = vld [vmem:[#allocation2 + $0x68] sm:$0xff]
        %v2115 = vld [vmem:[#allocation2 + $0x70] sm:$0xff]
        %v2116 = vld [vmem:[#allocation2 + $0x78] sm:$0xff]
        %v2117 = vld [vmem:[#allocation2 + $0x80] sm:$0xff]
        %v2118 = vld [vmem:[#allocation2 + $0x88] sm:$0xff]
        %v2119 = vld [vmem:[#allocation2 + $0x90] sm:$0xff]
        %v2120 = vld [vmem:[#allocation2 + $0x98] sm:$0xff]
        %v2121 = vld [vmem:[#allocation2 + $0xa0] sm:$0xff]
        %v2122 = vld [vmem:[#allocation2 + $0xa8] sm:$0xff]
        %v2123 = vld [vmem:[#allocation2 + $0xb0] sm:$0xff]
        %v2124 = vld [vmem:[#allocation2 + $0xb8] sm:$0xff]
        %v2125 = vld [vmem:[#allocation2 + $0xc0] sm:$0xff]
        %v2126 = vld [vmem:[#allocation2 + $0xc8] sm:$0xff]
        %v2127 = vld [vmem:[#allocation2 + $0xd0] sm:$0xff]
        %v2128 = vld [vmem:[#allocation2 + $0xd8] sm:$0xff]
        %v2129 = vld [vmem:[#allocation2 + $0xe0] sm:$0xff]
        %v2130 = vld [vmem:[#allocation2 + $0xe8] sm:$0xff]
        %v2131 = vld [vmem:[#allocation2 + $0xf0] sm:$0xff]
        %v2132 = vld [vmem:[#allocation2 + $0xf8] sm:$0xff]
        %v2133 = vpack.c.bf16 %v822, %v820
        %v2134 = vpack.c.bf16 %v823, %v821
        %v2135 = vpack.c.bf16 %v826, %v824
        %v2136 = vpack.c.bf16 %v827, %v825
        %v2137 = vpack.c.bf16 %v830, %v828
        %v2138 = vpack.c.bf16 %v831, %v829
        %v2139 = vpack.c.bf16 %v834, %v832
        %v2140 = vpack.c.bf16 %v835, %v833
        %v2141 = vpack.c.bf16 %v838, %v836
        %v2142 = vpack.c.bf16 %v839, %v837
        %v2143 = vpack.c.bf16 %v842, %v840
        %v2144 = vpack.c.bf16 %v843, %v841
        %v2145 = vpack.c.bf16 %v846, %v844
        %v2146 = vpack.c.bf16 %v847, %v845
        %v2147 = vpack.c.bf16 %v850, %v848
        %v2148 = vpack.c.bf16 %v851, %v849
        %v2149 = vpack.c.bf16 %v854, %v852
        %v2150 = vpack.c.bf16 %v855, %v853
        %v2151 = vpack.c.bf16 %v858, %v856
        %v2152 = vpack.c.bf16 %v859, %v857
        %v2153 = vpack.c.bf16 %v862, %v860
        %v2154 = vpack.c.bf16 %v863, %v861
        %v2155 = vpack.c.bf16 %v866, %v864
        %v2156 = vpack.c.bf16 %v867, %v865
        %v2157 = vpack.c.bf16 %v870, %v868
        %v2158 = vpack.c.bf16 %v871, %v869
        %v2159 = vpack.c.bf16 %v874, %v872
        %v2160 = vpack.c.bf16 %v875, %v873
        %v2161 = vpack.c.bf16 %v878, %v876
        %v2162 = vpack.c.bf16 %v879, %v877
        %v2163 = vpack.c.bf16 %v882, %v880
        %v2164 = vpack.c.bf16 %v883, %v881
        %v2197 = vunpack.c.l.b16 %v2101
        %v2198 = vunpack.c.h.b16 %v2101
        %v2199 = vunpack.c.l.b16 %v2102
        %v2200 = vunpack.c.h.b16 %v2102
        %v2201 = vunpack.c.l.b16 %v2103
        %v2202 = vunpack.c.h.b16 %v2103
        %v2203 = vunpack.c.l.b16 %v2104
        %v2204 = vunpack.c.h.b16 %v2104
        %v2205 = vunpack.c.l.b16 %v2105
        %v2206 = vunpack.c.h.b16 %v2105
        %v2207 = vunpack.c.l.b16 %v2106
        %v2208 = vunpack.c.h.b16 %v2106
        %v2209 = vunpack.c.l.b16 %v2107
        %v2210 = vunpack.c.h.b16 %v2107
        %v2211 = vunpack.c.l.b16 %v2108
        %v2212 = vunpack.c.h.b16 %v2108
        %v2213 = vunpack.c.l.b16 %v2109
        %v2214 = vunpack.c.h.b16 %v2109
        %v2215 = vunpack.c.l.b16 %v2110
        %v2216 = vunpack.c.h.b16 %v2110
        %v2217 = vunpack.c.l.b16 %v2111
        %v2218 = vunpack.c.h.b16 %v2111
        %v2219 = vunpack.c.l.b16 %v2112
        %v2220 = vunpack.c.h.b16 %v2112
        %v2221 = vunpack.c.l.b16 %v2113
        %v2222 = vunpack.c.h.b16 %v2113
        %v2223 = vunpack.c.l.b16 %v2114
        %v2224 = vunpack.c.h.b16 %v2114
        %v2225 = vunpack.c.l.b16 %v2115
        %v2226 = vunpack.c.h.b16 %v2115
        %v2227 = vunpack.c.l.b16 %v2116
        %v2228 = vunpack.c.h.b16 %v2116
        %v2229 = vunpack.c.l.b16 %v2117
        %v2230 = vunpack.c.h.b16 %v2117
        %v2231 = vunpack.c.l.b16 %v2118
        %v2232 = vunpack.c.h.b16 %v2118
        %v2233 = vunpack.c.l.b16 %v2119
        %v2234 = vunpack.c.h.b16 %v2119
        %v2235 = vunpack.c.l.b16 %v2120
        %v2236 = vunpack.c.h.b16 %v2120
        %v2237 = vunpack.c.l.b16 %v2121
        %v2238 = vunpack.c.h.b16 %v2121
        %v2239 = vunpack.c.l.b16 %v2122
        %v2240 = vunpack.c.h.b16 %v2122
        %v2241 = vunpack.c.l.b16 %v2123
        %v2242 = vunpack.c.h.b16 %v2123
        %v2243 = vunpack.c.l.b16 %v2124
        %v2244 = vunpack.c.h.b16 %v2124
        %v2245 = vunpack.c.l.b16 %v2125
        %v2246 = vunpack.c.h.b16 %v2125
        %v2247 = vunpack.c.l.b16 %v2126
        %v2248 = vunpack.c.h.b16 %v2126
        %v2249 = vunpack.c.l.b16 %v2127
        %v2250 = vunpack.c.h.b16 %v2127
        %v2251 = vunpack.c.l.b16 %v2128
        %v2252 = vunpack.c.h.b16 %v2128
        %v2253 = vunpack.c.l.b16 %v2129
        %v2254 = vunpack.c.h.b16 %v2129
        %v2255 = vunpack.c.l.b16 %v2130
        %v2256 = vunpack.c.h.b16 %v2130
        %v2257 = vunpack.c.l.b16 %v2131
        %v2258 = vunpack.c.h.b16 %v2131
        %v2259 = vunpack.c.l.b16 %v2132
        %v2260 = vunpack.c.h.b16 %v2132
        %v2261 = vpack.c.b16 %v2199, %v2197
        %v2262 = vpack.c.b16 %v2200, %v2198
        %v2263 = vpack.c.b16 %v2203, %v2201
        %v2264 = vpack.c.b16 %v2204, %v2202
        %v2265 = vpack.c.b16 %v2207, %v2205
        %v2266 = vpack.c.b16 %v2208, %v2206
        %v2267 = vpack.c.b16 %v2211, %v2209
        %v2268 = vpack.c.b16 %v2212, %v2210
        %v2269 = vpack.c.b16 %v2215, %v2213
        %v2270 = vpack.c.b16 %v2216, %v2214
        %v2271 = vpack.c.b16 %v2219, %v2217
        %v2272 = vpack.c.b16 %v2220, %v2218
        %v2273 = vpack.c.b16 %v2223, %v2221
        %v2274 = vpack.c.b16 %v2224, %v2222
        %v2275 = vpack.c.b16 %v2227, %v2225
        %v2276 = vpack.c.b16 %v2228, %v2226
        %v2277 = vpack.c.b16 %v2231, %v2229
        %v2278 = vpack.c.b16 %v2232, %v2230
        %v2279 = vpack.c.b16 %v2235, %v2233
        %v2280 = vpack.c.b16 %v2236, %v2234
        %v2281 = vpack.c.b16 %v2239, %v2237
        %v2282 = vpack.c.b16 %v2240, %v2238
        %v2283 = vpack.c.b16 %v2243, %v2241
        %v2284 = vpack.c.b16 %v2244, %v2242
        %v2285 = vpack.c.b16 %v2247, %v2245
        %v2286 = vpack.c.b16 %v2248, %v2246
        %v2287 = vpack.c.b16 %v2251, %v2249
        %v2288 = vpack.c.b16 %v2252, %v2250
        %v2289 = vpack.c.b16 %v2255, %v2253
        %v2290 = vpack.c.b16 %v2256, %v2254
        %v2291 = vpack.c.b16 %v2259, %v2257
        %v2292 = vpack.c.b16 %v2260, %v2258
        %2325 = vmatprep.subr.bf16.mxu0 %v2134
        %2326 = vmatpush1.bf16.msra.mxu0 %v2133
        %2327 = vmatprep.subr.bf16.mxu0 %v2136
        %2328 = vmatpush1.bf16.msra.mxu0 %v2135
        %2329 = vmatprep.subr.bf16.mxu0 %v2138
        %2330 = vmatpush1.bf16.msra.mxu0 %v2137
        %2331 = vmatprep.subr.bf16.mxu0 %v2140
        %2332 = vmatpush1.bf16.msra.mxu0 %v2139
        %2333 = vmatprep.subr.bf16.mxu0 %v2142
        %2334 = vmatpush1.bf16.msra.mxu0 %v2141
        %2335 = vmatprep.subr.bf16.mxu0 %v2144
        %2336 = vmatpush1.bf16.msra.mxu0 %v2143
        %2337 = vmatprep.subr.bf16.mxu0 %v2146
        %2338 = vmatpush1.bf16.msra.mxu0 %v2145
        %2339 = vmatprep.subr.bf16.mxu0 %v2148
        %2340 = vmatpush1.bf16.msra.mxu0 %v2147
        %2341 = vmatprep.subr.bf16.mxu0 %v2150
        %2342 = vmatpush1.bf16.msra.mxu0 %v2149
        %2343 = vmatprep.subr.bf16.mxu0 %v2152
        %2344 = vmatpush1.bf16.msra.mxu0 %v2151
        %2345 = vmatprep.subr.bf16.mxu0 %v2154
        %2346 = vmatpush1.bf16.msra.mxu0 %v2153
        %2347 = vmatprep.subr.bf16.mxu0 %v2156
        %2348 = vmatpush1.bf16.msra.mxu0 %v2155
        %2349 = vmatprep.subr.bf16.mxu0 %v2158
        %2350 = vmatpush1.bf16.msra.mxu0 %v2157
        %2351 = vmatprep.subr.bf16.mxu0 %v2160
        %2352 = vmatpush1.bf16.msra.mxu0 %v2159
        %2353 = vmatprep.subr.bf16.mxu0 %v2162
        %2354 = vmatpush1.bf16.msra.mxu0 %v2161
        %2355 = vmatprep.subr.bf16.mxu0 %v2164
        %2356 = vmatpush1.bf16.msra.mxu0 %v2163
        %2357 = vmatprep.mubr.bf16.mxu0 %v2262
        %2358 = vmatmul.mubr.bf16.gmra.mrb[0].mxu0 %v2261
        %v2359 = vpop.f32.mrb[0].mxu0
        %v2360 = vadd.f32 0.0, %v2359
        %v2361 = vpop.f32.mrb[0].mxu0
        %v2362 = vadd.f32 0.0, %v2361
        %v2363 = vpop.f32.mrb[0].mxu0
        %v2364 = vadd.f32 0.0, %v2363
        %v2365 = vpop.f32.mrb[0].mxu0
        %v2366 = vadd.f32 0.0, %v2365
        %2367 = vmatprep.mubr.bf16.mxu0 %v2264
        %2368 = vmatmul.mubr.bf16.gmra.mrb[0].mxu0 %v2263
        %v2369 = vpop.f32.mrb[0].mxu0
        %v2370 = vadd.f32 0.0, %v2369
        %v2371 = vpop.f32.mrb[0].mxu0
        %v2372 = vadd.f32 0.0, %v2371
        %v2373 = vpop.f32.mrb[0].mxu0
        %v2374 = vadd.f32 0.0, %v2373
        %v2375 = vpop.f32.mrb[0].mxu0
        %v2376 = vadd.f32 0.0, %v2375
        %2377 = vmatprep.mubr.bf16.mxu0 %v2266
        %2378 = vmatmul.mubr.bf16.gmra.mrb[0].mxu0 %v2265
        %v2379 = vpop.f32.mrb[0].mxu0
        %v2380 = vadd.f32 0.0, %v2379
        %v2381 = vpop.f32.mrb[0].mxu0
        %v2382 = vadd.f32 0.0, %v2381
        %v2383 = vpop.f32.mrb[0].mxu0
        %v2384 = vadd.f32 0.0, %v2383
        %v2385 = vpop.f32.mrb[0].mxu0
        %v2386 = vadd.f32 0.0, %v2385
        %2387 = vmatprep.mubr.bf16.mxu0 %v2268
        %2388 = vmatmul.mubr.bf16.gmra.mrb[0].mxu0 %v2267
        %v2389 = vpop.f32.mrb[0].mxu0
        %v2390 = vadd.f32 0.0, %v2389
        %v2391 = vpop.f32.mrb[0].mxu0
        %v2392 = vadd.f32 0.0, %v2391
        %v2393 = vpop.f32.mrb[0].mxu0
        %v2394 = vadd.f32 0.0, %v2393
        %v2395 = vpop.f32.mrb[0].mxu0
        %v2396 = vadd.f32 0.0, %v2395
        %2397 = vmatprep.mubr.bf16.mxu0 %v2270
        %2398 = vmatmul.mubr.bf16.gmra.mrb[0].mxu0 %v2269
        %v2399 = vpop.f32.mrb[0].mxu0
        %v2400 = vadd.f32 0.0, %v2399
        %v2401 = vpop.f32.mrb[0].mxu0
        %v2402 = vadd.f32 0.0, %v2401
        %v2403 = vpop.f32.mrb[0].mxu0
        %v2404 = vadd.f32 0.0, %v2403
        %v2405 = vpop.f32.mrb[0].mxu0
        %v2406 = vadd.f32 0.0, %v2405
        %2407 = vmatprep.mubr.bf16.mxu0 %v2272
        %2408 = vmatmul.mubr.bf16.gmra.mrb[0].mxu0 %v2271
        %v2409 = vpop.f32.mrb[0].mxu0
        %v2410 = vadd.f32 0.0, %v2409
        %v2411 = vpop.f32.mrb[0].mxu0
        %v2412 = vadd.f32 0.0, %v2411
        %v2413 = vpop.f32.mrb[0].mxu0
        %v2414 = vadd.f32 0.0, %v2413
        %v2415 = vpop.f32.mrb[0].mxu0
        %v2416 = vadd.f32 0.0, %v2415
        %2417 = vmatprep.mubr.bf16.mxu0 %v2274
        %2418 = vmatmul.mubr.bf16.gmra.mrb[0].mxu0 %v2273
        %v2419 = vpop.f32.mrb[0].mxu0
        %v2420 = vadd.f32 0.0, %v2419
        %v2421 = vpop.f32.mrb[0].mxu0
        %v2422 = vadd.f32 0.0, %v2421
        %v2423 = vpop.f32.mrb[0].mxu0
        %v2424 = vadd.f32 0.0, %v2423
        %v2425 = vpop.f32.mrb[0].mxu0
        %v2426 = vadd.f32 0.0, %v2425
        %2427 = vmatprep.mubr.bf16.mxu0 %v2276
        %2428 = vmatmul.mubr.bf16.gmra.mrb[0].mxu0 %v2275
        %v2429 = vpop.f32.mrb[0].mxu0
        %v2430 = vadd.f32 0.0, %v2429
        %v2431 = vpop.f32.mrb[0].mxu0
        %v2432 = vadd.f32 0.0, %v2431
        %v2433 = vpop.f32.mrb[0].mxu0
        %v2434 = vadd.f32 0.0, %v2433
        %v2435 = vpop.f32.mrb[0].mxu0
        %v2436 = vadd.f32 0.0, %v2435
        %2437 = vmatprep.mubr.bf16.mxu0 %v2278
        %2438 = vmatmul.mubr.bf16.gmra.mrb[0].mxu0 %v2277
        %v2439 = vpop.f32.mrb[0].mxu0
        %v2440 = vadd.f32 0.0, %v2439
        %v2441 = vpop.f32.mrb[0].mxu0
        %v2442 = vadd.f32 0.0, %v2441
        %v2443 = vpop.f32.mrb[0].mxu0
        %v2444 = vadd.f32 0.0, %v2443
        %v2445 = vpop.f32.mrb[0].mxu0
        %v2446 = vadd.f32 0.0, %v2445
        %2447 = vmatprep.mubr.bf16.mxu0 %v2280
        %2448 = vmatmul.mubr.bf16.gmra.mrb[0].mxu0 %v2279
        %v2449 = vpop.f32.mrb[0].mxu0
        %v2450 = vadd.f32 0.0, %v2449
        %v2451 = vpop.f32.mrb[0].mxu0
        %v2452 = vadd.f32 0.0, %v2451
        %v2453 = vpop.f32.mrb[0].mxu0
        %v2454 = vadd.f32 0.0, %v2453
        %v2455 = vpop.f32.mrb[0].mxu0
        %v2456 = vadd.f32 0.0, %v2455
        %2457 = vmatprep.mubr.bf16.mxu0 %v2282
        %2458 = vmatmul.mubr.bf16.gmra.mrb[0].mxu0 %v2281
        %v2459 = vpop.f32.mrb[0].mxu0
        %v2460 = vadd.f32 0.0, %v2459
        %v2461 = vpop.f32.mrb[0].mxu0
        %v2462 = vadd.f32 0.0, %v2461
        %v2463 = vpop.f32.mrb[0].mxu0
        %v2464 = vadd.f32 0.0, %v2463
        %v2465 = vpop.f32.mrb[0].mxu0
        %v2466 = vadd.f32 0.0, %v2465
        %2467 = vmatprep.mubr.bf16.mxu0 %v2284
        %2468 = vmatmul.mubr.bf16.gmra.mrb[0].mxu0 %v2283
        %v2469 = vpop.f32.mrb[0].mxu0
        %v2470 = vadd.f32 0.0, %v2469
        %v2471 = vpop.f32.mrb[0].mxu0
        %v2472 = vadd.f32 0.0, %v2471
        %v2473 = vpop.f32.mrb[0].mxu0
        %v2474 = vadd.f32 0.0, %v2473
        %v2475 = vpop.f32.mrb[0].mxu0
        %v2476 = vadd.f32 0.0, %v2475
        %2477 = vmatprep.mubr.bf16.mxu0 %v2286
        %2478 = vmatmul.mubr.bf16.gmra.mrb[0].mxu0 %v2285
        %v2479 = vpop.f32.mrb[0].mxu0
        %v2480 = vadd.f32 0.0, %v2479
        %v2481 = vpop.f32.mrb[0].mxu0
        %v2482 = vadd.f32 0.0, %v2481
        %v2483 = vpop.f32.mrb[0].mxu0
        %v2484 = vadd.f32 0.0, %v2483
        %v2485 = vpop.f32.mrb[0].mxu0
        %v2486 = vadd.f32 0.0, %v2485
        %2487 = vmatprep.mubr.bf16.mxu0 %v2288
        %2488 = vmatmul.mubr.bf16.gmra.mrb[0].mxu0 %v2287
        %v2489 = vpop.f32.mrb[0].mxu0
        %v2490 = vadd.f32 0.0, %v2489
        %v2491 = vpop.f32.mrb[0].mxu0
        %v2492 = vadd.f32 0.0, %v2491
        %v2493 = vpop.f32.mrb[0].mxu0
        %v2494 = vadd.f32 0.0, %v2493
        %v2495 = vpop.f32.mrb[0].mxu0
        %v2496 = vadd.f32 0.0, %v2495
        %2497 = vmatprep.mubr.bf16.mxu0 %v2290
        %2498 = vmatmul.mubr.bf16.gmra.mrb[0].mxu0 %v2289
        %v2499 = vpop.f32.mrb[0].mxu0
        %v2500 = vadd.f32 0.0, %v2499
        %v2501 = vpop.f32.mrb[0].mxu0
        %v2502 = vadd.f32 0.0, %v2501
        %v2503 = vpop.f32.mrb[0].mxu0
        %v2504 = vadd.f32 0.0, %v2503
        %v2505 = vpop.f32.mrb[0].mxu0
        %v2506 = vadd.f32 0.0, %v2505
        %2507 = vmatprep.mubr.bf16.mxu0 %v2292
        %2508 = vmatmul.mubr.bf16.gmra.mrb[0].mxu0 %v2291
        %v2509 = vpop.f32.mrb[0].mxu0
        %v2510 = vadd.f32 0.0, %v2509
        %v2511 = vpop.f32.mrb[0].mxu0
        %v2512 = vadd.f32 0.0, %v2511
        %v2513 = vpop.f32.mrb[0].mxu0
        %v2514 = vadd.f32 0.0, %v2513
        %v2515 = vpop.f32.mrb[0].mxu0
        %v2516 = vadd.f32 0.0, %v2515
        %2517 = vdwg.mxu0
        %v2518 = vsub.f32 %v2360, %v211
        %v2519 = vsub.f32 %v2362, %v212
        %v2520 = vsub.f32 %v2364, %v213
        %v2521 = vsub.f32 %v2366, %v214
        %v2522 = vsub.f32 %v2370, %v215
        %v2523 = vsub.f32 %v2372, %v216
        %v2524 = vsub.f32 %v2374, %v217
        %v2525 = vsub.f32 %v2376, %v218
        %v2526 = vsub.f32 %v2380, %v219
        %v2527 = vsub.f32 %v2382, %v220
        %v2528 = vsub.f32 %v2384, %v221
        %v2529 = vsub.f32 %v2386, %v222
        %v2530 = vsub.f32 %v2390, %v223
        %v2531 = vsub.f32 %v2392, %v224
        %v2532 = vsub.f32 %v2394, %v225
        %v2533 = vsub.f32 %v2396, %v226
        %v2534 = vsub.f32 %v2400, %v227
        %v2535 = vsub.f32 %v2402, %v228
        %v2536 = vsub.f32 %v2404, %v229
        %v2537 = vsub.f32 %v2406, %v230
        %v2538 = vsub.f32 %v2410, %v231
        %v2539 = vsub.f32 %v2412, %v232
        %v2540 = vsub.f32 %v2414, %v233
        %v2541 = vsub.f32 %v2416, %v234
        %v2542 = vsub.f32 %v2420, %v235
        %v2543 = vsub.f32 %v2422, %v236
        %v2544 = vsub.f32 %v2424, %v237
        %v2545 = vsub.f32 %v2426, %v238
        %v2546 = vsub.f32 %v2430, %v239
        %v2547 = vsub.f32 %v2432, %v240
        %v2548 = vsub.f32 %v2434, %v241
        %v2549 = vsub.f32 %v2436, %v242
        %v2550 = vsub.f32 %v2440, %v243
        %v2551 = vsub.f32 %v2442, %v244
        %v2552 = vsub.f32 %v2444, %v245
        %v2553 = vsub.f32 %v2446, %v246
        %v2554 = vsub.f32 %v2450, %v247
        %v2555 = vsub.f32 %v2452, %v248
        %v2556 = vsub.f32 %v2454, %v249
        %v2557 = vsub.f32 %v2456, %v250
        %v2558 = vsub.f32 %v2460, %v251
        %v2559 = vsub.f32 %v2462, %v252
        %v2560 = vsub.f32 %v2464, %v253
        %v2561 = vsub.f32 %v2466, %v254
        %v2562 = vsub.f32 %v2470, %v255
        %v2563 = vsub.f32 %v2472, %v256
        %v2564 = vsub.f32 %v2474, %v257
        %v2565 = vsub.f32 %v2476, %v258
        %v2566 = vsub.f32 %v2480, %v259
        %v2567 = vsub.f32 %v2482, %v260
        %v2568 = vsub.f32 %v2484, %v261
        %v2569 = vsub.f32 %v2486, %v262
        %v2570 = vsub.f32 %v2490, %v263
        %v2571 = vsub.f32 %v2492, %v264
        %v2572 = vsub.f32 %v2494, %v265
        %v2573 = vsub.f32 %v2496, %v266
        %v2574 = vsub.f32 %v2500, %v267
        %v2575 = vsub.f32 %v2502, %v268
        %v2576 = vsub.f32 %v2504, %v269
        %v2577 = vsub.f32 %v2506, %v270
        %v2578 = vsub.f32 %v2510, %v271
        %v2579 = vsub.f32 %v2512, %v272
        %v2580 = vsub.f32 %v2514, %v273
        %v2581 = vsub.f32 %v2516, %v274
        %v2582 = vld [vmem:[%s176] sm:$0xff]
        %v2583 = vld [vmem:[%s176 + $0x8] sm:$0xff]
        %v2584 = vld [vmem:[%s176 + $0x20] sm:$0xff]
        %v2585 = vld [vmem:[%s176 + $0x28] sm:$0xff]
        %v2586 = vld [vmem:[%s176 + $0x40] sm:$0xff]
        %v2587 = vld [vmem:[%s176 + $0x48] sm:$0xff]
        %v2588 = vld [vmem:[%s176 + $0x60] sm:$0xff]
        %v2589 = vld [vmem:[%s176 + $0x68] sm:$0xff]
        %v2590 = vld [vmem:[%s176 + $0x80] sm:$0xff]
        %v2591 = vld [vmem:[%s176 + $0x88] sm:$0xff]
        %v2592 = vld [vmem:[%s176 + $0xa0] sm:$0xff]
        %v2593 = vld [vmem:[%s176 + $0xa8] sm:$0xff]
        %v2594 = vld [vmem:[%s176 + $0xc0] sm:$0xff]
        %v2595 = vld [vmem:[%s176 + $0xc8] sm:$0xff]
        %v2596 = vld [vmem:[%s176 + $0xe0] sm:$0xff]
        %v2597 = vld [vmem:[%s176 + $0xe8] sm:$0xff]
        %v2598 = vld [vmem:[%s176 + $0x100] sm:$0xff]
        %v2599 = vld [vmem:[%s176 + $0x108] sm:$0xff]
        %v2600 = vld [vmem:[%s176 + $0x120] sm:$0xff]
        %v2601 = vld [vmem:[%s176 + $0x128] sm:$0xff]
        %v2602 = vld [vmem:[%s176 + $0x140] sm:$0xff]
        %v2603 = vld [vmem:[%s176 + $0x148] sm:$0xff]
        %v2604 = vld [vmem:[%s176 + $0x160] sm:$0xff]
        %v2605 = vld [vmem:[%s176 + $0x168] sm:$0xff]
        %v2606 = vld [vmem:[%s176 + $0x180] sm:$0xff]
        %v2607 = vld [vmem:[%s176 + $0x188] sm:$0xff]
        %v2608 = vld [vmem:[%s176 + $0x1a0] sm:$0xff]
        %v2609 = vld [vmem:[%s176 + $0x1a8] sm:$0xff]
        %v2610 = vld [vmem:[%s176 + $0x1c0] sm:$0xff]
        %v2611 = vld [vmem:[%s176 + $0x1c8] sm:$0xff]
        %v2612 = vld [vmem:[%s176 + $0x1e0] sm:$0xff]
        %v2613 = vld [vmem:[%s176 + $0x1e8] sm:$0xff]
        %v2614 = vld [vmem:[%s176 + $0x200] sm:$0xff]
        %v2615 = vld [vmem:[%s176 + $0x208] sm:$0xff]
        %v2616 = vld [vmem:[%s176 + $0x220] sm:$0xff]
        %v2617 = vld [vmem:[%s176 + $0x228] sm:$0xff]
        %v2618 = vld [vmem:[%s176 + $0x240] sm:$0xff]
        %v2619 = vld [vmem:[%s176 + $0x248] sm:$0xff]
        %v2620 = vld [vmem:[%s176 + $0x260] sm:$0xff]
        %v2621 = vld [vmem:[%s176 + $0x268] sm:$0xff]
        %v2622 = vld [vmem:[%s176 + $0x280] sm:$0xff]
        %v2623 = vld [vmem:[%s176 + $0x288] sm:$0xff]
        %v2624 = vld [vmem:[%s176 + $0x2a0] sm:$0xff]
        %v2625 = vld [vmem:[%s176 + $0x2a8] sm:$0xff]
        %v2626 = vld [vmem:[%s176 + $0x2c0] sm:$0xff]
        %v2627 = vld [vmem:[%s176 + $0x2c8] sm:$0xff]
        %v2628 = vld [vmem:[%s176 + $0x2e0] sm:$0xff]
        %v2629 = vld [vmem:[%s176 + $0x2e8] sm:$0xff]
        %v2630 = vld [vmem:[%s176 + $0x300] sm:$0xff]
        %v2631 = vld [vmem:[%s176 + $0x308] sm:$0xff]
        %v2632 = vld [vmem:[%s176 + $0x320] sm:$0xff]
        %v2633 = vld [vmem:[%s176 + $0x328] sm:$0xff]
        %v2634 = vld [vmem:[%s176 + $0x340] sm:$0xff]
        %v2635 = vld [vmem:[%s176 + $0x348] sm:$0xff]
        %v2636 = vld [vmem:[%s176 + $0x360] sm:$0xff]
        %v2637 = vld [vmem:[%s176 + $0x368] sm:$0xff]
        %v2638 = vld [vmem:[%s176 + $0x380] sm:$0xff]
        %v2639 = vld [vmem:[%s176 + $0x388] sm:$0xff]
        %v2640 = vld [vmem:[%s176 + $0x3a0] sm:$0xff]
        %v2641 = vld [vmem:[%s176 + $0x3a8] sm:$0xff]
        %v2642 = vld [vmem:[%s176 + $0x3c0] sm:$0xff]
        %v2643 = vld [vmem:[%s176 + $0x3c8] sm:$0xff]
        %v2644 = vld [vmem:[%s176 + $0x3e0] sm:$0xff]
        %v2645 = vld [vmem:[%s176 + $0x3e8] sm:$0xff]
        %v2646 = vmul.f32 %v2518, 0.27149534
        %v2647 = vmul.f32 %v2519, 0.27149534
        %v2648 = vmul.f32 %v2520, 0.27149534
        %v2649 = vmul.f32 %v2521, 0.27149534
        %v2650 = vmul.f32 %v2522, 0.27149534
        %v2651 = vmul.f32 %v2523, 0.27149534
        %v2652 = vmul.f32 %v2524, 0.27149534
        %v2653 = vmul.f32 %v2525, 0.27149534
        %v2654 = vmul.f32 %v2526, 0.27149534
        %v2655 = vmul.f32 %v2527, 0.27149534
        %v2656 = vmul.f32 %v2528, 0.27149534
        %v2657 = vmul.f32 %v2529, 0.27149534
        %v2658 = vmul.f32 %v2530, 0.27149534
        %v2659 = vmul.f32 %v2531, 0.27149534
        %v2660 = vmul.f32 %v2532, 0.27149534
        %v2661 = vmul.f32 %v2533, 0.27149534
        %v2662 = vmul.f32 %v2534, 0.27149534
        %v2663 = vmul.f32 %v2535, 0.27149534
        %v2664 = vmul.f32 %v2536, 0.27149534
        %v2665 = vmul.f32 %v2537, 0.27149534
        %v2666 = vmul.f32 %v2538, 0.27149534
        %v2667 = vmul.f32 %v2539, 0.27149534
        %v2668 = vmul.f32 %v2540, 0.27149534
        %v2669 = vmul.f32 %v2541, 0.27149534
        %v2670 = vmul.f32 %v2542, 0.27149534
        %v2671 = vmul.f32 %v2543, 0.27149534
        %v2672 = vmul.f32 %v2544, 0.27149534
        %v2673 = vmul.f32 %v2545, 0.27149534
        %v2674 = vmul.f32 %v2546, 0.27149534
        %v2675 = vmul.f32 %v2547, 0.27149534
        %v2676 = vmul.f32 %v2548, 0.27149534
        %v2677 = vmul.f32 %v2549, 0.27149534
        %v2678 = vmul.f32 %v2550, 0.27149534
        %v2679 = vmul.f32 %v2551, 0.27149534
        %v2680 = vmul.f32 %v2552, 0.27149534
        %v2681 = vmul.f32 %v2553, 0.27149534
        %v2682 = vmul.f32 %v2554, 0.27149534
        %v2683 = vmul.f32 %v2555, 0.27149534
        %v2684 = vmul.f32 %v2556, 0.27149534
        %v2685 = vmul.f32 %v2557, 0.27149534
        %v2686 = vmul.f32 %v2558, 0.27149534
        %v2687 = vmul.f32 %v2559, 0.27149534
        %v2688 = vmul.f32 %v2560, 0.27149534
        %v2689 = vmul.f32 %v2561, 0.27149534
        %v2690 = vmul.f32 %v2562, 0.27149534
        %v2691 = vmul.f32 %v2563, 0.27149534
        %v2692 = vmul.f32 %v2564, 0.27149534
        %v2693 = vmul.f32 %v2565, 0.27149534
        %v2694 = vmul.f32 %v2566, 0.27149534
        %v2695 = vmul.f32 %v2567, 0.27149534
        %v2696 = vmul.f32 %v2568, 0.27149534
        %v2697 = vmul.f32 %v2569, 0.27149534
        %v2698 = vmul.f32 %v2570, 0.27149534
        %v2699 = vmul.f32 %v2571, 0.27149534
        %v2700 = vmul.f32 %v2572, 0.27149534
        %v2701 = vmul.f32 %v2573, 0.27149534
        %v2702 = vmul.f32 %v2574, 0.27149534
        %v2703 = vmul.f32 %v2575, 0.27149534
        %v2704 = vmul.f32 %v2576, 0.27149534
        %v2705 = vmul.f32 %v2577, 0.27149534
        %v2706 = vmul.f32 %v2578, 0.27149534
        %v2707 = vmul.f32 %v2579, 0.27149534
        %v2708 = vmul.f32 %v2580, 0.27149534
        %v2709 = vmul.f32 %v2581, 0.27149534
        %v2710 = vadd.f32 %v2582, %v2646
        %v2711 = vadd.f32 %v2583, %v2647
        %v2712 = vadd.f32 %v2584, %v2648
        %v2713 = vadd.f32 %v2585, %v2649
        %v2714 = vadd.f32 %v2586, %v2650
        %v2715 = vadd.f32 %v2587, %v2651
        %v2716 = vadd.f32 %v2588, %v2652
        %v2717 = vadd.f32 %v2589, %v2653
        %v2718 = vadd.f32 %v2590, %v2654
        %v2719 = vadd.f32 %v2591, %v2655
        %v2720 = vadd.f32 %v2592, %v2656
        %v2721 = vadd.f32 %v2593, %v2657
        %v2722 = vadd.f32 %v2594, %v2658
        %v2723 = vadd.f32 %v2595, %v2659
        %v2724 = vadd.f32 %v2596, %v2660
        %v2725 = vadd.f32 %v2597, %v2661
        %v2726 = vadd.f32 %v2598, %v2662
        %v2727 = vadd.f32 %v2599, %v2663
        %v2728 = vadd.f32 %v2600, %v2664
        %v2729 = vadd.f32 %v2601, %v2665
        %v2730 = vadd.f32 %v2602, %v2666
        %v2731 = vadd.f32 %v2603, %v2667
        %v2732 = vadd.f32 %v2604, %v2668
        %v2733 = vadd.f32 %v2605, %v2669
        %v2734 = vadd.f32 %v2606, %v2670
        %v2735 = vadd.f32 %v2607, %v2671
        %v2736 = vadd.f32 %v2608, %v2672
        %v2737 = vadd.f32 %v2609, %v2673
        %v2738 = vadd.f32 %v2610, %v2674
        %v2739 = vadd.f32 %v2611, %v2675
        %v2740 = vadd.f32 %v2612, %v2676
        %v2741 = vadd.f32 %v2613, %v2677
        %v2742 = vadd.f32 %v2614, %v2678
        %v2743 = vadd.f32 %v2615, %v2679
        %v2744 = vadd.f32 %v2616, %v2680
        %v2745 = vadd.f32 %v2617, %v2681
        %v2746 = vadd.f32 %v2618, %v2682
        %v2747 = vadd.f32 %v2619, %v2683
        %v2748 = vadd.f32 %v2620, %v2684
        %v2749 = vadd.f32 %v2621, %v2685
        %v2750 = vadd.f32 %v2622, %v2686
        %v2751 = vadd.f32 %v2623, %v2687
        %v2752 = vadd.f32 %v2624, %v2688
        %v2753 = vadd.f32 %v2625, %v2689
        %v2754 = vadd.f32 %v2626, %v2690
        %v2755 = vadd.f32 %v2627, %v2691
        %v2756 = vadd.f32 %v2628, %v2692
        %v2757 = vadd.f32 %v2629, %v2693
        %v2758 = vadd.f32 %v2630, %v2694
        %v2759 = vadd.f32 %v2631, %v2695
        %v2760 = vadd.f32 %v2632, %v2696
        %v2761 = vadd.f32 %v2633, %v2697
        %v2762 = vadd.f32 %v2634, %v2698
        %v2763 = vadd.f32 %v2635, %v2699
        %v2764 = vadd.f32 %v2636, %v2700
        %v2765 = vadd.f32 %v2637, %v2701
        %v2766 = vadd.f32 %v2638, %v2702
        %v2767 = vadd.f32 %v2639, %v2703
        %v2768 = vadd.f32 %v2640, %v2704
        %v2769 = vadd.f32 %v2641, %v2705
        %v2770 = vadd.f32 %v2642, %v2706
        %v2771 = vadd.f32 %v2643, %v2707
        %v2772 = vadd.f32 %v2644, %v2708
        %v2773 = vadd.f32 %v2645, %v2709
        %2774 = vst [vmem:[%s176] sm:$0xff] %v2710
        %2775 = vst [vmem:[%s176 + $0x8] sm:$0xff] %v2711
        %2776 = vst [vmem:[%s176 + $0x20] sm:$0xff] %v2712
        %2777 = vst [vmem:[%s176 + $0x28] sm:$0xff] %v2713
        %2778 = vst [vmem:[%s176 + $0x40] sm:$0xff] %v2714
        %2779 = vst [vmem:[%s176 + $0x48] sm:$0xff] %v2715
        %2780 = vst [vmem:[%s176 + $0x60] sm:$0xff] %v2716
        %2781 = vst [vmem:[%s176 + $0x68] sm:$0xff] %v2717
        %2782 = vst [vmem:[%s176 + $0x80] sm:$0xff] %v2718
        %2783 = vst [vmem:[%s176 + $0x88] sm:$0xff] %v2719
        %2784 = vst [vmem:[%s176 + $0xa0] sm:$0xff] %v2720
        %2785 = vst [vmem:[%s176 + $0xa8] sm:$0xff] %v2721
        %2786 = vst [vmem:[%s176 + $0xc0] sm:$0xff] %v2722
        %2787 = vst [vmem:[%s176 + $0xc8] sm:$0xff] %v2723
        %2788 = vst [vmem:[%s176 + $0xe0] sm:$0xff] %v2724
        %2789 = vst [vmem:[%s176 + $0xe8] sm:$0xff] %v2725
        %2790 = vst [vmem:[%s176 + $0x100] sm:$0xff] %v2726
        %2791 = vst [vmem:[%s176 + $0x108] sm:$0xff] %v2727
        %2792 = vst [vmem:[%s176 + $0x120] sm:$0xff] %v2728
        %2793 = vst [vmem:[%s176 + $0x128] sm:$0xff] %v2729
        %2794 = vst [vmem:[%s176 + $0x140] sm:$0xff] %v2730
        %2795 = vst [vmem:[%s176 + $0x148] sm:$0xff] %v2731
        %2796 = vst [vmem:[%s176 + $0x160] sm:$0xff] %v2732
        %2797 = vst [vmem:[%s176 + $0x168] sm:$0xff] %v2733
        %2798 = vst [vmem:[%s176 + $0x180] sm:$0xff] %v2734
        %2799 = vst [vmem:[%s176 + $0x188] sm:$0xff] %v2735
        %2800 = vst [vmem:[%s176 + $0x1a0] sm:$0xff] %v2736
        %2801 = vst [vmem:[%s176 + $0x1a8] sm:$0xff] %v2737
        %2802 = vst [vmem:[%s176 + $0x1c0] sm:$0xff] %v2738
        %2803 = vst [vmem:[%s176 + $0x1c8] sm:$0xff] %v2739
        %2804 = vst [vmem:[%s176 + $0x1e0] sm:$0xff] %v2740
        %2805 = vst [vmem:[%s176 + $0x1e8] sm:$0xff] %v2741
        %2806 = vst [vmem:[%s176 + $0x200] sm:$0xff] %v2742
        %2807 = vst [vmem:[%s176 + $0x208] sm:$0xff] %v2743
        %2808 = vst [vmem:[%s176 + $0x220] sm:$0xff] %v2744
        %2809 = vst [vmem:[%s176 + $0x228] sm:$0xff] %v2745
        %2810 = vst [vmem:[%s176 + $0x240] sm:$0xff] %v2746
        %2811 = vst [vmem:[%s176 + $0x248] sm:$0xff] %v2747
        %2812 = vst [vmem:[%s176 + $0x260] sm:$0xff] %v2748
        %2813 = vst [vmem:[%s176 + $0x268] sm:$0xff] %v2749
        %2814 = vst [vmem:[%s176 + $0x280] sm:$0xff] %v2750
        %2815 = vst [vmem:[%s176 + $0x288] sm:$0xff] %v2751
        %2816 = vst [vmem:[%s176 + $0x2a0] sm:$0xff] %v2752
        %2817 = vst [vmem:[%s176 + $0x2a8] sm:$0xff] %v2753
        %2818 = vst [vmem:[%s176 + $0x2c0] sm:$0xff] %v2754
        %2819 = vst [vmem:[%s176 + $0x2c8] sm:$0xff] %v2755
        %2820 = vst [vmem:[%s176 + $0x2e0] sm:$0xff] %v2756
        %2821 = vst [vmem:[%s176 + $0x2e8] sm:$0xff] %v2757
        %2822 = vst [vmem:[%s176 + $0x300] sm:$0xff] %v2758
        %2823 = vst [vmem:[%s176 + $0x308] sm:$0xff] %v2759
        %2824 = vst [vmem:[%s176 + $0x320] sm:$0xff] %v2760
        %2825 = vst [vmem:[%s176 + $0x328] sm:$0xff] %v2761
        %2826 = vst [vmem:[%s176 + $0x340] sm:$0xff] %v2762
        %2827 = vst [vmem:[%s176 + $0x348] sm:$0xff] %v2763
        %2828 = vst [vmem:[%s176 + $0x360] sm:$0xff] %v2764
        %2829 = vst [vmem:[%s176 + $0x368] sm:$0xff] %v2765
        %2830 = vst [vmem:[%s176 + $0x380] sm:$0xff] %v2766
        %2831 = vst [vmem:[%s176 + $0x388] sm:$0xff] %v2767
        %2832 = vst [vmem:[%s176 + $0x3a0] sm:$0xff] %v2768
        %2833 = vst [vmem:[%s176 + $0x3a8] sm:$0xff] %v2769
        %2834 = vst [vmem:[%s176 + $0x3c0] sm:$0xff] %v2770
        %2835 = vst [vmem:[%s176 + $0x3c8] sm:$0xff] %v2771
        %2836 = vst [vmem:[%s176 + $0x3e0] sm:$0xff] %v2772
        %2837 = vst [vmem:[%s176 + $0x3e8] sm:$0xff] %v2773
        %v2838 = vld [vmem:[#allocation2] sm:$0xff]
        %v2839 = vld [vmem:[#allocation2 + $0x8] sm:$0xff]
        %v2840 = vld [vmem:[#allocation2 + $0x10] sm:$0xff]
        %v2841 = vld [vmem:[#allocation2 + $0x18] sm:$0xff]
        %v2842 = vld [vmem:[#allocation2 + $0x20] sm:$0xff]
        %v2843 = vld [vmem:[#allocation2 + $0x28] sm:$0xff]
        %v2844 = vld [vmem:[#allocation2 + $0x30] sm:$0xff]
        %v2845 = vld [vmem:[#allocation2 + $0x38] sm:$0xff]
        %v2846 = vld [vmem:[#allocation2 + $0x40] sm:$0xff]
        %v2847 = vld [vmem:[#allocation2 + $0x48] sm:$0xff]
        %v2848 = vld [vmem:[#allocation2 + $0x50] sm:$0xff]
        %v2849 = vld [vmem:[#allocation2 + $0x58] sm:$0xff]
        %v2850 = vld [vmem:[#allocation2 + $0x60] sm:$0xff]
        %v2851 = vld [vmem:[#allocation2 + $0x68] sm:$0xff]
        %v2852 = vld [vmem:[#allocation2 + $0x70] sm:$0xff]
        %v2853 = vld [vmem:[#allocation2 + $0x78] sm:$0xff]
        %v2854 = vld [vmem:[#allocation2 + $0x80] sm:$0xff]
        %v2855 = vld [vmem:[#allocation2 + $0x88] sm:$0xff]
        %v2856 = vld [vmem:[#allocation2 + $0x90] sm:$0xff]
        %v2857 = vld [vmem:[#allocation2 + $0x98] sm:$0xff]
        %v2858 = vld [vmem:[#allocation2 + $0xa0] sm:$0xff]
        %v2859 = vld [vmem:[#allocation2 + $0xa8] sm:$0xff]
        %v2860 = vld [vmem:[#allocation2 + $0xb0] sm:$0xff]
        %v2861 = vld [vmem:[#allocation2 + $0xb8] sm:$0xff]
        %v2862 = vld [vmem:[#allocation2 + $0xc0] sm:$0xff]
        %v2863 = vld [vmem:[#allocation2 + $0xc8] sm:$0xff]
        %v2864 = vld [vmem:[#allocation2 + $0xd0] sm:$0xff]
        %v2865 = vld [vmem:[#allocation2 + $0xd8] sm:$0xff]
        %v2866 = vld [vmem:[#allocation2 + $0xe0] sm:$0xff]
        %v2867 = vld [vmem:[#allocation2 + $0xe8] sm:$0xff]
        %v2868 = vld [vmem:[#allocation2 + $0xf0] sm:$0xff]
        %v2869 = vld [vmem:[#allocation2 + $0xf8] sm:$0xff]
        %v2870 = vpack.c.bf16 %v1783, %v1781
        %v2871 = vpack.c.bf16 %v1784, %v1782
        %v2872 = vpack.c.bf16 %v1787, %v1785
        %v2873 = vpack.c.bf16 %v1788, %v1786
        %v2874 = vpack.c.bf16 %v1791, %v1789
        %v2875 = vpack.c.bf16 %v1792, %v1790
        %v2876 = vpack.c.bf16 %v1795, %v1793
        %v2877 = vpack.c.bf16 %v1796, %v1794
        %v2878 = vpack.c.bf16 %v1799, %v1797
        %v2879 = vpack.c.bf16 %v1800, %v1798
        %v2880 = vpack.c.bf16 %v1803, %v1801
        %v2881 = vpack.c.bf16 %v1804, %v1802
        %v2882 = vpack.c.bf16 %v1807, %v1805
        %v2883 = vpack.c.bf16 %v1808, %v1806
        %v2884 = vpack.c.bf16 %v1811, %v1809
        %v2885 = vpack.c.bf16 %v1812, %v1810
        %v2886 = vpack.c.bf16 %v1815, %v1813
        %v2887 = vpack.c.bf16 %v1816, %v1814
        %v2888 = vpack.c.bf16 %v1819, %v1817
        %v2889 = vpack.c.bf16 %v1820, %v1818
        %v2890 = vpack.c.bf16 %v1823, %v1821
        %v2891 = vpack.c.bf16 %v1824, %v1822
        %v2892 = vpack.c.bf16 %v1827, %v1825
        %v2893 = vpack.c.bf16 %v1828, %v1826
        %v2894 = vpack.c.bf16 %v1831, %v1829
        %v2895 = vpack.c.bf16 %v1832, %v1830
        %v2896 = vpack.c.bf16 %v1835, %v1833
        %v2897 = vpack.c.bf16 %v1836, %v1834
        %v2898 = vpack.c.bf16 %v1839, %v1837
        %v2899 = vpack.c.bf16 %v1840, %v1838
        %v2900 = vpack.c.bf16 %v1843, %v1841
        %v2901 = vpack.c.bf16 %v1844, %v1842
        %v2934 = vunpack.c.l.b16 %v2838
        %v2935 = vunpack.c.h.b16 %v2838
        %v2936 = vunpack.c.l.b16 %v2839
        %v2937 = vunpack.c.h.b16 %v2839
        %v2938 = vunpack.c.l.b16 %v2840
        %v2939 = vunpack.c.h.b16 %v2840
        %v2940 = vunpack.c.l.b16 %v2841
        %v2941 = vunpack.c.h.b16 %v2841
        %v2942 = vunpack.c.l.b16 %v2842
        %v2943 = vunpack.c.h.b16 %v2842
        %v2944 = vunpack.c.l.b16 %v2843
        %v2945 = vunpack.c.h.b16 %v2843
        %v2946 = vunpack.c.l.b16 %v2844
        %v2947 = vunpack.c.h.b16 %v2844
        %v2948 = vunpack.c.l.b16 %v2845
        %v2949 = vunpack.c.h.b16 %v2845
        %v2950 = vunpack.c.l.b16 %v2846
        %v2951 = vunpack.c.h.b16 %v2846
        %v2952 = vunpack.c.l.b16 %v2847
        %v2953 = vunpack.c.h.b16 %v2847
        %v2954 = vunpack.c.l.b16 %v2848
        %v2955 = vunpack.c.h.b16 %v2848
        %v2956 = vunpack.c.l.b16 %v2849
        %v2957 = vunpack.c.h.b16 %v2849
        %v2958 = vunpack.c.l.b16 %v2850
        %v2959 = vunpack.c.h.b16 %v2850
        %v2960 = vunpack.c.l.b16 %v2851
        %v2961 = vunpack.c.h.b16 %v2851
        %v2962 = vunpack.c.l.b16 %v2852
        %v2963 = vunpack.c.h.b16 %v2852
        %v2964 = vunpack.c.l.b16 %v2853
        %v2965 = vunpack.c.h.b16 %v2853
        %v2966 = vunpack.c.l.b16 %v2854
        %v2967 = vunpack.c.h.b16 %v2854
        %v2968 = vunpack.c.l.b16 %v2855
        %v2969 = vunpack.c.h.b16 %v2855
        %v2970 = vunpack.c.l.b16 %v2856
        %v2971 = vunpack.c.h.b16 %v2856
        %v2972 = vunpack.c.l.b16 %v2857
        %v2973 = vunpack.c.h.b16 %v2857
        %v2974 = vunpack.c.l.b16 %v2858
        %v2975 = vunpack.c.h.b16 %v2858
        %v2976 = vunpack.c.l.b16 %v2859
        %v2977 = vunpack.c.h.b16 %v2859
        %v2978 = vunpack.c.l.b16 %v2860
        %v2979 = vunpack.c.h.b16 %v2860
        %v2980 = vunpack.c.l.b16 %v2861
        %v2981 = vunpack.c.h.b16 %v2861
        %v2982 = vunpack.c.l.b16 %v2862
        %v2983 = vunpack.c.h.b16 %v2862
        %v2984 = vunpack.c.l.b16 %v2863
        %v2985 = vunpack.c.h.b16 %v2863
        %v2986 = vunpack.c.l.b16 %v2864
        %v2987 = vunpack.c.h.b16 %v2864
        %v2988 = vunpack.c.l.b16 %v2865
        %v2989 = vunpack.c.h.b16 %v2865
        %v2990 = vunpack.c.l.b16 %v2866
        %v2991 = vunpack.c.h.b16 %v2866
        %v2992 = vunpack.c.l.b16 %v2867
        %v2993 = vunpack.c.h.b16 %v2867
        %v2994 = vunpack.c.l.b16 %v2868
        %v2995 = vunpack.c.h.b16 %v2868
        %v2996 = vunpack.c.l.b16 %v2869
        %v2997 = vunpack.c.h.b16 %v2869
        %v2998 = vpack.c.b16 %v2936, %v2934
        %v2999 = vpack.c.b16 %v2937, %v2935
        %v3000 = vpack.c.b16 %v2940, %v2938
        %v3001 = vpack.c.b16 %v2941, %v2939
        %v3002 = vpack.c.b16 %v2944, %v2942
        %v3003 = vpack.c.b16 %v2945, %v2943
        %v3004 = vpack.c.b16 %v2948, %v2946
        %v3005 = vpack.c.b16 %v2949, %v2947
        %v3006 = vpack.c.b16 %v2952, %v2950
        %v3007 = vpack.c.b16 %v2953, %v2951
        %v3008 = vpack.c.b16 %v2956, %v2954
        %v3009 = vpack.c.b16 %v2957, %v2955
        %v3010 = vpack.c.b16 %v2960, %v2958
        %v3011 = vpack.c.b16 %v2961, %v2959
        %v3012 = vpack.c.b16 %v2964, %v2962
        %v3013 = vpack.c.b16 %v2965, %v2963
        %v3014 = vpack.c.b16 %v2968, %v2966
        %v3015 = vpack.c.b16 %v2969, %v2967
        %v3016 = vpack.c.b16 %v2972, %v2970
        %v3017 = vpack.c.b16 %v2973, %v2971
        %v3018 = vpack.c.b16 %v2976, %v2974
        %v3019 = vpack.c.b16 %v2977, %v2975
        %v3020 = vpack.c.b16 %v2980, %v2978
        %v3021 = vpack.c.b16 %v2981, %v2979
        %v3022 = vpack.c.b16 %v2984, %v2982
        %v3023 = vpack.c.b16 %v2985, %v2983
        %v3024 = vpack.c.b16 %v2988, %v2986
        %v3025 = vpack.c.b16 %v2989, %v2987
        %v3026 = vpack.c.b16 %v2992, %v2990
        %v3027 = vpack.c.b16 %v2993, %v2991
        %v3028 = vpack.c.b16 %v2996, %v2994
        %v3029 = vpack.c.b16 %v2997, %v2995
        %3062 = vmatprep.subr.bf16.mxu0 %v2871
        %3063 = vmatpush1.bf16.msra.mxu0 %v2870
        %3064 = vmatprep.subr.bf16.mxu0 %v2873
        %3065 = vmatpush1.bf16.msra.mxu0 %v2872
        %3066 = vmatprep.subr.bf16.mxu0 %v2875
        %3067 = vmatpush1.bf16.msra.mxu0 %v2874
        %3068 = vmatprep.subr.bf16.mxu0 %v2877
        %3069 = vmatpush1.bf16.msra.mxu0 %v2876
        %3070 = vmatprep.subr.bf16.mxu0 %v2879
        %3071 = vmatpush1.bf16.msra.mxu0 %v2878
        %3072 = vmatprep.subr.bf16.mxu0 %v2881
        %3073 = vmatpush1.bf16.msra.mxu0 %v2880
        %3074 = vmatprep.subr.bf16.mxu0 %v2883
        %3075 = vmatpush1.bf16.msra.mxu0 %v2882
        %3076 = vmatprep.subr.bf16.mxu0 %v2885
        %3077 = vmatpush1.bf16.msra.mxu0 %v2884
        %3078 = vmatprep.subr.bf16.mxu0 %v2887
        %3079 = vmatpush1.bf16.msra.mxu0 %v2886
        %3080 = vmatprep.subr.bf16.mxu0 %v2889
        %3081 = vmatpush1.bf16.msra.mxu0 %v2888
        %3082 = vmatprep.subr.bf16.mxu0 %v2891
        %3083 = vmatpush1.bf16.msra.mxu0 %v2890
        %3084 = vmatprep.subr.bf16.mxu0 %v2893
        %3085 = vmatpush1.bf16.msra.mxu0 %v2892
        %3086 = vmatprep.subr.bf16.mxu0 %v2895
        %3087 = vmatpush1.bf16.msra.mxu0 %v2894
        %3088 = vmatprep.subr.bf16.mxu0 %v2897
        %3089 = vmatpush1.bf16.msra.mxu0 %v2896
        %3090 = vmatprep.subr.bf16.mxu0 %v2899
        %3091 = vmatpush1.bf16.msra.mxu0 %v2898
        %3092 = vmatprep.subr.bf16.mxu0 %v2901
        %3093 = vmatpush1.bf16.msra.mxu0 %v2900
        %3094 = vmatprep.mubr.bf16.mxu0 %v2999
        %3095 = vmatmul.mubr.bf16.gmra.mrb[0].mxu0 %v2998
        %v3096 = vpop.f32.mrb[0].mxu0
        %v3097 = vadd.f32 0.0, %v3096
        %v3098 = vpop.f32.mrb[0].mxu0
        %v3099 = vadd.f32 0.0, %v3098
        %v3100 = vpop.f32.mrb[0].mxu0
        %v3101 = vadd.f32 0.0, %v3100
        %v3102 = vpop.f32.mrb[0].mxu0
        %v3103 = vadd.f32 0.0, %v3102
        %3104 = vmatprep.mubr.bf16.mxu0 %v3001
        %3105 = vmatmul.mubr.bf16.gmra.mrb[0].mxu0 %v3000
        %v3106 = vpop.f32.mrb[0].mxu0
        %v3107 = vadd.f32 0.0, %v3106
        %v3108 = vpop.f32.mrb[0].mxu0
        %v3109 = vadd.f32 0.0, %v3108
        %v3110 = vpop.f32.mrb[0].mxu0
        %v3111 = vadd.f32 0.0, %v3110
        %v3112 = vpop.f32.mrb[0].mxu0
        %v3113 = vadd.f32 0.0, %v3112
        %3114 = vmatprep.mubr.bf16.mxu0 %v3003
        %3115 = vmatmul.mubr.bf16.gmra.mrb[0].mxu0 %v3002
        %v3116 = vpop.f32.mrb[0].mxu0
        %v3117 = vadd.f32 0.0, %v3116
        %v3118 = vpop.f32.mrb[0].mxu0
        %v3119 = vadd.f32 0.0, %v3118
        %v3120 = vpop.f32.mrb[0].mxu0
        %v3121 = vadd.f32 0.0, %v3120
        %v3122 = vpop.f32.mrb[0].mxu0
        %v3123 = vadd.f32 0.0, %v3122
        %3124 = vmatprep.mubr.bf16.mxu0 %v3005
        %3125 = vmatmul.mubr.bf16.gmra.mrb[0].mxu0 %v3004
        %v3126 = vpop.f32.mrb[0].mxu0
        %v3127 = vadd.f32 0.0, %v3126
        %v3128 = vpop.f32.mrb[0].mxu0
        %v3129 = vadd.f32 0.0, %v3128
        %v3130 = vpop.f32.mrb[0].mxu0
        %v3131 = vadd.f32 0.0, %v3130
        %v3132 = vpop.f32.mrb[0].mxu0
        %v3133 = vadd.f32 0.0, %v3132
        %3134 = vmatprep.mubr.bf16.mxu0 %v3007
        %3135 = vmatmul.mubr.bf16.gmra.mrb[0].mxu0 %v3006
        %v3136 = vpop.f32.mrb[0].mxu0
        %v3137 = vadd.f32 0.0, %v3136
        %v3138 = vpop.f32.mrb[0].mxu0
        %v3139 = vadd.f32 0.0, %v3138
        %v3140 = vpop.f32.mrb[0].mxu0
        %v3141 = vadd.f32 0.0, %v3140
        %v3142 = vpop.f32.mrb[0].mxu0
        %v3143 = vadd.f32 0.0, %v3142
        %3144 = vmatprep.mubr.bf16.mxu0 %v3009
        %3145 = vmatmul.mubr.bf16.gmra.mrb[0].mxu0 %v3008
        %v3146 = vpop.f32.mrb[0].mxu0
        %v3147 = vadd.f32 0.0, %v3146
        %v3148 = vpop.f32.mrb[0].mxu0
        %v3149 = vadd.f32 0.0, %v3148
        %v3150 = vpop.f32.mrb[0].mxu0
        %v3151 = vadd.f32 0.0, %v3150
        %v3152 = vpop.f32.mrb[0].mxu0
        %v3153 = vadd.f32 0.0, %v3152
        %3154 = vmatprep.mubr.bf16.mxu0 %v3011
        %3155 = vmatmul.mubr.bf16.gmra.mrb[0].mxu0 %v3010
        %v3156 = vpop.f32.mrb[0].mxu0
        %v3157 = vadd.f32 0.0, %v3156
        %v3158 = vpop.f32.mrb[0].mxu0
        %v3159 = vadd.f32 0.0, %v3158
        %v3160 = vpop.f32.mrb[0].mxu0
        %v3161 = vadd.f32 0.0, %v3160
        %v3162 = vpop.f32.mrb[0].mxu0
        %v3163 = vadd.f32 0.0, %v3162
        %3164 = vmatprep.mubr.bf16.mxu0 %v3013
        %3165 = vmatmul.mubr.bf16.gmra.mrb[0].mxu0 %v3012
        %v3166 = vpop.f32.mrb[0].mxu0
        %v3167 = vadd.f32 0.0, %v3166
        %v3168 = vpop.f32.mrb[0].mxu0
        %v3169 = vadd.f32 0.0, %v3168
        %v3170 = vpop.f32.mrb[0].mxu0
        %v3171 = vadd.f32 0.0, %v3170
        %v3172 = vpop.f32.mrb[0].mxu0
        %v3173 = vadd.f32 0.0, %v3172
        %3174 = vmatprep.mubr.bf16.mxu0 %v3015
        %3175 = vmatmul.mubr.bf16.gmra.mrb[0].mxu0 %v3014
        %v3176 = vpop.f32.mrb[0].mxu0
        %v3177 = vadd.f32 0.0, %v3176
        %v3178 = vpop.f32.mrb[0].mxu0
        %v3179 = vadd.f32 0.0, %v3178
        %v3180 = vpop.f32.mrb[0].mxu0
        %v3181 = vadd.f32 0.0, %v3180
        %v3182 = vpop.f32.mrb[0].mxu0
        %v3183 = vadd.f32 0.0, %v3182
        %3184 = vmatprep.mubr.bf16.mxu0 %v3017
        %3185 = vmatmul.mubr.bf16.gmra.mrb[0].mxu0 %v3016
        %v3186 = vpop.f32.mrb[0].mxu0
        %v3187 = vadd.f32 0.0, %v3186
        %v3188 = vpop.f32.mrb[0].mxu0
        %v3189 = vadd.f32 0.0, %v3188
        %v3190 = vpop.f32.mrb[0].mxu0
        %v3191 = vadd.f32 0.0, %v3190
        %v3192 = vpop.f32.mrb[0].mxu0
        %v3193 = vadd.f32 0.0, %v3192
        %3194 = vmatprep.mubr.bf16.mxu0 %v3019
        %3195 = vmatmul.mubr.bf16.gmra.mrb[0].mxu0 %v3018
        %v3196 = vpop.f32.mrb[0].mxu0
        %v3197 = vadd.f32 0.0, %v3196
        %v3198 = vpop.f32.mrb[0].mxu0
        %v3199 = vadd.f32 0.0, %v3198
        %v3200 = vpop.f32.mrb[0].mxu0
        %v3201 = vadd.f32 0.0, %v3200
        %v3202 = vpop.f32.mrb[0].mxu0
        %v3203 = vadd.f32 0.0, %v3202
        %3204 = vmatprep.mubr.bf16.mxu0 %v3021
        %3205 = vmatmul.mubr.bf16.gmra.mrb[0].mxu0 %v3020
        %v3206 = vpop.f32.mrb[0].mxu0
        %v3207 = vadd.f32 0.0, %v3206
        %v3208 = vpop.f32.mrb[0].mxu0
        %v3209 = vadd.f32 0.0, %v3208
        %v3210 = vpop.f32.mrb[0].mxu0
        %v3211 = vadd.f32 0.0, %v3210
        %v3212 = vpop.f32.mrb[0].mxu0
        %v3213 = vadd.f32 0.0, %v3212
        %3214 = vmatprep.mubr.bf16.mxu0 %v3023
        %3215 = vmatmul.mubr.bf16.gmra.mrb[0].mxu0 %v3022
        %v3216 = vpop.f32.mrb[0].mxu0
        %v3217 = vadd.f32 0.0, %v3216
        %v3218 = vpop.f32.mrb[0].mxu0
        %v3219 = vadd.f32 0.0, %v3218
        %v3220 = vpop.f32.mrb[0].mxu0
        %v3221 = vadd.f32 0.0, %v3220
        %v3222 = vpop.f32.mrb[0].mxu0
        %v3223 = vadd.f32 0.0, %v3222
        %3224 = vmatprep.mubr.bf16.mxu0 %v3025
        %3225 = vmatmul.mubr.bf16.gmra.mrb[0].mxu0 %v3024
        %v3226 = vpop.f32.mrb[0].mxu0
        %v3227 = vadd.f32 0.0, %v3226
        %v3228 = vpop.f32.mrb[0].mxu0
        %v3229 = vadd.f32 0.0, %v3228
        %v3230 = vpop.f32.mrb[0].mxu0
        %v3231 = vadd.f32 0.0, %v3230
        %v3232 = vpop.f32.mrb[0].mxu0
        %v3233 = vadd.f32 0.0, %v3232
        %3234 = vmatprep.mubr.bf16.mxu0 %v3027
        %3235 = vmatmul.mubr.bf16.gmra.mrb[0].mxu0 %v3026
        %v3236 = vpop.f32.mrb[0].mxu0
        %v3237 = vadd.f32 0.0, %v3236
        %v3238 = vpop.f32.mrb[0].mxu0
        %v3239 = vadd.f32 0.0, %v3238
        %v3240 = vpop.f32.mrb[0].mxu0
        %v3241 = vadd.f32 0.0, %v3240
        %v3242 = vpop.f32.mrb[0].mxu0
        %v3243 = vadd.f32 0.0, %v3242
        %3244 = vmatprep.mubr.bf16.mxu0 %v3029
        %3245 = vmatmul.mubr.bf16.gmra.mrb[0].mxu0 %v3028
        %v3246 = vpop.f32.mrb[0].mxu0
        %v3247 = vadd.f32 0.0, %v3246
        %v3248 = vpop.f32.mrb[0].mxu0
        %v3249 = vadd.f32 0.0, %v3248
        %v3250 = vpop.f32.mrb[0].mxu0
        %v3251 = vadd.f32 0.0, %v3250
        %v3252 = vpop.f32.mrb[0].mxu0
        %v3253 = vadd.f32 0.0, %v3252
        %3254 = vdwg.mxu0
        %v3255 = vsub.f32 %v3097, %v1172
        %v3256 = vsub.f32 %v3099, %v1173
        %v3257 = vsub.f32 %v3101, %v1174
        %v3258 = vsub.f32 %v3103, %v1175
        %v3259 = vsub.f32 %v3107, %v1176
        %v3260 = vsub.f32 %v3109, %v1177
        %v3261 = vsub.f32 %v3111, %v1178
        %v3262 = vsub.f32 %v3113, %v1179
        %v3263 = vsub.f32 %v3117, %v1180
        %v3264 = vsub.f32 %v3119, %v1181
        %v3265 = vsub.f32 %v3121, %v1182
        %v3266 = vsub.f32 %v3123, %v1183
        %v3267 = vsub.f32 %v3127, %v1184
        %v3268 = vsub.f32 %v3129, %v1185
        %v3269 = vsub.f32 %v3131, %v1186
        %v3270 = vsub.f32 %v3133, %v1187
        %v3271 = vsub.f32 %v3137, %v1188
        %v3272 = vsub.f32 %v3139, %v1189
        %v3273 = vsub.f32 %v3141, %v1190
        %v3274 = vsub.f32 %v3143, %v1191
        %v3275 = vsub.f32 %v3147, %v1192
        %v3276 = vsub.f32 %v3149, %v1193
        %v3277 = vsub.f32 %v3151, %v1194
        %v3278 = vsub.f32 %v3153, %v1195
        %v3279 = vsub.f32 %v3157, %v1196
        %v3280 = vsub.f32 %v3159, %v1197
        %v3281 = vsub.f32 %v3161, %v1198
        %v3282 = vsub.f32 %v3163, %v1199
        %v3283 = vsub.f32 %v3167, %v1200
        %v3284 = vsub.f32 %v3169, %v1201
        %v3285 = vsub.f32 %v3171, %v1202
        %v3286 = vsub.f32 %v3173, %v1203
        %v3287 = vsub.f32 %v3177, %v1204
        %v3288 = vsub.f32 %v3179, %v1205
        %v3289 = vsub.f32 %v3181, %v1206
        %v3290 = vsub.f32 %v3183, %v1207
        %v3291 = vsub.f32 %v3187, %v1208
        %v3292 = vsub.f32 %v3189, %v1209
        %v3293 = vsub.f32 %v3191, %v1210
        %v3294 = vsub.f32 %v3193, %v1211
        %v3295 = vsub.f32 %v3197, %v1212
        %v3296 = vsub.f32 %v3199, %v1213
        %v3297 = vsub.f32 %v3201, %v1214
        %v3298 = vsub.f32 %v3203, %v1215
        %v3299 = vsub.f32 %v3207, %v1216
        %v3300 = vsub.f32 %v3209, %v1217
        %v3301 = vsub.f32 %v3211, %v1218
        %v3302 = vsub.f32 %v3213, %v1219
        %v3303 = vsub.f32 %v3217, %v1220
        %v3304 = vsub.f32 %v3219, %v1221
        %v3305 = vsub.f32 %v3221, %v1222
        %v3306 = vsub.f32 %v3223, %v1223
        %v3307 = vsub.f32 %v3227, %v1224
        %v3308 = vsub.f32 %v3229, %v1225
        %v3309 = vsub.f32 %v3231, %v1226
        %v3310 = vsub.f32 %v3233, %v1227
        %v3311 = vsub.f32 %v3237, %v1228
        %v3312 = vsub.f32 %v3239, %v1229
        %v3313 = vsub.f32 %v3241, %v1230
        %v3314 = vsub.f32 %v3243, %v1231
        %v3315 = vsub.f32 %v3247, %v1232
        %v3316 = vsub.f32 %v3249, %v1233
        %v3317 = vsub.f32 %v3251, %v1234
        %v3318 = vsub.f32 %v3253, %v1235
        %v3319 = vld [vmem:[%s176 + $0x10] sm:$0xff]
        %v3320 = vld [vmem:[%s176 + $0x18] sm:$0xff]
        %v3321 = vld [vmem:[%s176 + $0x30] sm:$0xff]
        %v3322 = vld [vmem:[%s176 + $0x38] sm:$0xff]
        %v3323 = vld [vmem:[%s176 + $0x50] sm:$0xff]
        %v3324 = vld [vmem:[%s176 + $0x58] sm:$0xff]
        %v3325 = vld [vmem:[%s176 + $0x70] sm:$0xff]
        %v3326 = vld [vmem:[%s176 + $0x78] sm:$0xff]
        %v3327 = vld [vmem:[%s176 + $0x90] sm:$0xff]
        %v3328 = vld [vmem:[%s176 + $0x98] sm:$0xff]
        %v3329 = vld [vmem:[%s176 + $0xb0] sm:$0xff]
        %v3330 = vld [vmem:[%s176 + $0xb8] sm:$0xff]
        %v3331 = vld [vmem:[%s176 + $0xd0] sm:$0xff]
        %v3332 = vld [vmem:[%s176 + $0xd8] sm:$0xff]
        %v3333 = vld [vmem:[%s176 + $0xf0] sm:$0xff]
        %v3334 = vld [vmem:[%s176 + $0xf8] sm:$0xff]
        %v3335 = vld [vmem:[%s176 + $0x110] sm:$0xff]
        %v3336 = vld [vmem:[%s176 + $0x118] sm:$0xff]
        %v3337 = vld [vmem:[%s176 + $0x130] sm:$0xff]
        %v3338 = vld [vmem:[%s176 + $0x138] sm:$0xff]
        %v3339 = vld [vmem:[%s176 + $0x150] sm:$0xff]
        %v3340 = vld [vmem:[%s176 + $0x158] sm:$0xff]
        %v3341 = vld [vmem:[%s176 + $0x170] sm:$0xff]
        %v3342 = vld [vmem:[%s176 + $0x178] sm:$0xff]
        %v3343 = vld [vmem:[%s176 + $0x190] sm:$0xff]
        %v3344 = vld [vmem:[%s176 + $0x198] sm:$0xff]
        %v3345 = vld [vmem:[%s176 + $0x1b0] sm:$0xff]
        %v3346 = vld [vmem:[%s176 + $0x1b8] sm:$0xff]
        %v3347 = vld [vmem:[%s176 + $0x1d0] sm:$0xff]
        %v3348 = vld [vmem:[%s176 + $0x1d8] sm:$0xff]
        %v3349 = vld [vmem:[%s176 + $0x1f0] sm:$0xff]
        %v3350 = vld [vmem:[%s176 + $0x1f8] sm:$0xff]
        %v3351 = vld [vmem:[%s176 + $0x210] sm:$0xff]
        %v3352 = vld [vmem:[%s176 + $0x218] sm:$0xff]
        %v3353 = vld [vmem:[%s176 + $0x230] sm:$0xff]
        %v3354 = vld [vmem:[%s176 + $0x238] sm:$0xff]
        %v3355 = vld [vmem:[%s176 + $0x250] sm:$0xff]
        %v3356 = vld [vmem:[%s176 + $0x258] sm:$0xff]
        %v3357 = vld [vmem:[%s176 + $0x270] sm:$0xff]
        %v3358 = vld [vmem:[%s176 + $0x278] sm:$0xff]
        %v3359 = vld [vmem:[%s176 + $0x290] sm:$0xff]
        %v3360 = vld [vmem:[%s176 + $0x298] sm:$0xff]
        %v3361 = vld [vmem:[%s176 + $0x2b0] sm:$0xff]
        %v3362 = vld [vmem:[%s176 + $0x2b8] sm:$0xff]
        %v3363 = vld [vmem:[%s176 + $0x2d0] sm:$0xff]
        %v3364 = vld [vmem:[%s176 + $0x2d8] sm:$0xff]
        %v3365 = vld [vmem:[%s176 + $0x2f0] sm:$0xff]
        %v3366 = vld [vmem:[%s176 + $0x2f8] sm:$0xff]
        %v3367 = vld [vmem:[%s176 + $0x310] sm:$0xff]
        %v3368 = vld [vmem:[%s176 + $0x318] sm:$0xff]
        %v3369 = vld [vmem:[%s176 + $0x330] sm:$0xff]
        %v3370 = vld [vmem:[%s176 + $0x338] sm:$0xff]
        %v3371 = vld [vmem:[%s176 + $0x350] sm:$0xff]
        %v3372 = vld [vmem:[%s176 + $0x358] sm:$0xff]
        %v3373 = vld [vmem:[%s176 + $0x370] sm:$0xff]
        %v3374 = vld [vmem:[%s176 + $0x378] sm:$0xff]
        %v3375 = vld [vmem:[%s176 + $0x390] sm:$0xff]
        %v3376 = vld [vmem:[%s176 + $0x398] sm:$0xff]
        %v3377 = vld [vmem:[%s176 + $0x3b0] sm:$0xff]
        %v3378 = vld [vmem:[%s176 + $0x3b8] sm:$0xff]
        %v3379 = vld [vmem:[%s176 + $0x3d0] sm:$0xff]
        %v3380 = vld [vmem:[%s176 + $0x3d8] sm:$0xff]
        %v3381 = vld [vmem:[%s176 + $0x3f0] sm:$0xff]
        %v3382 = vld [vmem:[%s176 + $0x3f8] sm:$0xff]
        %v3383 = vmul.f32 %v3255, 0.27149534
        %v3384 = vmul.f32 %v3256, 0.27149534
        %v3385 = vmul.f32 %v3257, 0.27149534
        %v3386 = vmul.f32 %v3258, 0.27149534
        %v3387 = vmul.f32 %v3259, 0.27149534
        %v3388 = vmul.f32 %v3260, 0.27149534
        %v3389 = vmul.f32 %v3261, 0.27149534
        %v3390 = vmul.f32 %v3262, 0.27149534
        %v3391 = vmul.f32 %v3263, 0.27149534
        %v3392 = vmul.f32 %v3264, 0.27149534
        %v3393 = vmul.f32 %v3265, 0.27149534
        %v3394 = vmul.f32 %v3266, 0.27149534
        %v3395 = vmul.f32 %v3267, 0.27149534
        %v3396 = vmul.f32 %v3268, 0.27149534
        %v3397 = vmul.f32 %v3269, 0.27149534
        %v3398 = vmul.f32 %v3270, 0.27149534
        %v3399 = vmul.f32 %v3271, 0.27149534
        %v3400 = vmul.f32 %v3272, 0.27149534
        %v3401 = vmul.f32 %v3273, 0.27149534
        %v3402 = vmul.f32 %v3274, 0.27149534
        %v3403 = vmul.f32 %v3275, 0.27149534
        %v3404 = vmul.f32 %v3276, 0.27149534
        %v3405 = vmul.f32 %v3277, 0.27149534
        %v3406 = vmul.f32 %v3278, 0.27149534
        %v3407 = vmul.f32 %v3279, 0.27149534
        %v3408 = vmul.f32 %v3280, 0.27149534
        %v3409 = vmul.f32 %v3281, 0.27149534
        %v3410 = vmul.f32 %v3282, 0.27149534
        %v3411 = vmul.f32 %v3283, 0.27149534
        %v3412 = vmul.f32 %v3284, 0.27149534
        %v3413 = vmul.f32 %v3285, 0.27149534
        %v3414 = vmul.f32 %v3286, 0.27149534
        %v3415 = vmul.f32 %v3287, 0.27149534
        %v3416 = vmul.f32 %v3288, 0.27149534
        %v3417 = vmul.f32 %v3289, 0.27149534
        %v3418 = vmul.f32 %v3290, 0.27149534
        %v3419 = vmul.f32 %v3291, 0.27149534
        %v3420 = vmul.f32 %v3292, 0.27149534
        %v3421 = vmul.f32 %v3293, 0.27149534
        %v3422 = vmul.f32 %v3294, 0.27149534
        %v3423 = vmul.f32 %v3295, 0.27149534
        %v3424 = vmul.f32 %v3296, 0.27149534
        %v3425 = vmul.f32 %v3297, 0.27149534
        %v3426 = vmul.f32 %v3298, 0.27149534
        %v3427 = vmul.f32 %v3299, 0.27149534
        %v3428 = vmul.f32 %v3300, 0.27149534
        %v3429 = vmul.f32 %v3301, 0.27149534
        %v3430 = vmul.f32 %v3302, 0.27149534
        %v3431 = vmul.f32 %v3303, 0.27149534
        %v3432 = vmul.f32 %v3304, 0.27149534
        %v3433 = vmul.f32 %v3305, 0.27149534
        %v3434 = vmul.f32 %v3306, 0.27149534
        %v3435 = vmul.f32 %v3307, 0.27149534
        %v3436 = vmul.f32 %v3308, 0.27149534
        %v3437 = vmul.f32 %v3309, 0.27149534
        %v3438 = vmul.f32 %v3310, 0.27149534
        %v3439 = vmul.f32 %v3311, 0.27149534
        %v3440 = vmul.f32 %v3312, 0.27149534
        %v3441 = vmul.f32 %v3313, 0.27149534
        %v3442 = vmul.f32 %v3314, 0.27149534
        %v3443 = vmul.f32 %v3315, 0.27149534
        %v3444 = vmul.f32 %v3316, 0.27149534
        %v3445 = vmul.f32 %v3317, 0.27149534
        %v3446 = vmul.f32 %v3318, 0.27149534
        %v3447 = vadd.f32 %v3319, %v3383
        %v3448 = vadd.f32 %v3320, %v3384
        %v3449 = vadd.f32 %v3321, %v3385
        %v3450 = vadd.f32 %v3322, %v3386
        %v3451 = vadd.f32 %v3323, %v3387
        %v3452 = vadd.f32 %v3324, %v3388
        %v3453 = vadd.f32 %v3325, %v3389
        %v3454 = vadd.f32 %v3326, %v3390
        %v3455 = vadd.f32 %v3327, %v3391
        %v3456 = vadd.f32 %v3328, %v3392
        %v3457 = vadd.f32 %v3329, %v3393
        %v3458 = vadd.f32 %v3330, %v3394
        %v3459 = vadd.f32 %v3331, %v3395
        %v3460 = vadd.f32 %v3332, %v3396
        %v3461 = vadd.f32 %v3333, %v3397
        %v3462 = vadd.f32 %v3334, %v3398
        %v3463 = vadd.f32 %v3335, %v3399
        %v3464 = vadd.f32 %v3336, %v3400
        %v3465 = vadd.f32 %v3337, %v3401
        %v3466 = vadd.f32 %v3338, %v3402
        %v3467 = vadd.f32 %v3339, %v3403
        %v3468 = vadd.f32 %v3340, %v3404
        %v3469 = vadd.f32 %v3341, %v3405
        %v3470 = vadd.f32 %v3342, %v3406
        %v3471 = vadd.f32 %v3343, %v3407
        %v3472 = vadd.f32 %v3344, %v3408
        %v3473 = vadd.f32 %v3345, %v3409
        %v3474 = vadd.f32 %v3346, %v3410
        %v3475 = vadd.f32 %v3347, %v3411
        %v3476 = vadd.f32 %v3348, %v3412
        %v3477 = vadd.f32 %v3349, %v3413
        %v3478 = vadd.f32 %v3350, %v3414
        %v3479 = vadd.f32 %v3351, %v3415
        %v3480 = vadd.f32 %v3352, %v3416
        %v3481 = vadd.f32 %v3353, %v3417
        %v3482 = vadd.f32 %v3354, %v3418
        %v3483 = vadd.f32 %v3355, %v3419
        %v3484 = vadd.f32 %v3356, %v3420
        %v3485 = vadd.f32 %v3357, %v3421
        %v3486 = vadd.f32 %v3358, %v3422
        %v3487 = vadd.f32 %v3359, %v3423
        %v3488 = vadd.f32 %v3360, %v3424
        %v3489 = vadd.f32 %v3361, %v3425
        %v3490 = vadd.f32 %v3362, %v3426
        %v3491 = vadd.f32 %v3363, %v3427
        %v3492 = vadd.f32 %v3364, %v3428
        %v3493 = vadd.f32 %v3365, %v3429
        %v3494 = vadd.f32 %v3366, %v3430
        %v3495 = vadd.f32 %v3367, %v3431
        %v3496 = vadd.f32 %v3368, %v3432
        %v3497 = vadd.f32 %v3369, %v3433
        %v3498 = vadd.f32 %v3370, %v3434
        %v3499 = vadd.f32 %v3371, %v3435
        %v3500 = vadd.f32 %v3372, %v3436
        %v3501 = vadd.f32 %v3373, %v3437
        %v3502 = vadd.f32 %v3374, %v3438
        %v3503 = vadd.f32 %v3375, %v3439
        %v3504 = vadd.f32 %v3376, %v3440
        %v3505 = vadd.f32 %v3377, %v3441
        %v3506 = vadd.f32 %v3378, %v3442
        %v3507 = vadd.f32 %v3379, %v3443
        %v3508 = vadd.f32 %v3380, %v3444
        %v3509 = vadd.f32 %v3381, %v3445
        %v3510 = vadd.f32 %v3382, %v3446
        %3511 = vst [vmem:[%s176 + $0x10] sm:$0xff] %v3447
        %3512 = vst [vmem:[%s176 + $0x18] sm:$0xff] %v3448
        %3513 = vst [vmem:[%s176 + $0x30] sm:$0xff] %v3449
        %3514 = vst [vmem:[%s176 + $0x38] sm:$0xff] %v3450
        %3515 = vst [vmem:[%s176 + $0x50] sm:$0xff] %v3451
        %3516 = vst [vmem:[%s176 + $0x58] sm:$0xff] %v3452
        %3517 = vst [vmem:[%s176 + $0x70] sm:$0xff] %v3453
        %3518 = vst [vmem:[%s176 + $0x78] sm:$0xff] %v3454
        %3519 = vst [vmem:[%s176 + $0x90] sm:$0xff] %v3455
        %3520 = vst [vmem:[%s176 + $0x98] sm:$0xff] %v3456
        %3521 = vst [vmem:[%s176 + $0xb0] sm:$0xff] %v3457
        %3522 = vst [vmem:[%s176 + $0xb8] sm:$0xff] %v3458
        %3523 = vst [vmem:[%s176 + $0xd0] sm:$0xff] %v3459
        %3524 = vst [vmem:[%s176 + $0xd8] sm:$0xff] %v3460
        %3525 = vst [vmem:[%s176 + $0xf0] sm:$0xff] %v3461
        %3526 = vst [vmem:[%s176 + $0xf8] sm:$0xff] %v3462
        %3527 = vst [vmem:[%s176 + $0x110] sm:$0xff] %v3463
        %3528 = vst [vmem:[%s176 + $0x118] sm:$0xff] %v3464
        %3529 = vst [vmem:[%s176 + $0x130] sm:$0xff] %v3465
        %3530 = vst [vmem:[%s176 + $0x138] sm:$0xff] %v3466
        %3531 = vst [vmem:[%s176 + $0x150] sm:$0xff] %v3467
        %3532 = vst [vmem:[%s176 + $0x158] sm:$0xff] %v3468
        %3533 = vst [vmem:[%s176 + $0x170] sm:$0xff] %v3469
        %3534 = vst [vmem:[%s176 + $0x178] sm:$0xff] %v3470
        %3535 = vst [vmem:[%s176 + $0x190] sm:$0xff] %v3471
        %3536 = vst [vmem:[%s176 + $0x198] sm:$0xff] %v3472
        %3537 = vst [vmem:[%s176 + $0x1b0] sm:$0xff] %v3473
        %3538 = vst [vmem:[%s176 + $0x1b8] sm:$0xff] %v3474
        %3539 = vst [vmem:[%s176 + $0x1d0] sm:$0xff] %v3475
        %3540 = vst [vmem:[%s176 + $0x1d8] sm:$0xff] %v3476
        %3541 = vst [vmem:[%s176 + $0x1f0] sm:$0xff] %v3477
        %3542 = vst [vmem:[%s176 + $0x1f8] sm:$0xff] %v3478
        %3543 = vst [vmem:[%s176 + $0x210] sm:$0xff] %v3479
        %3544 = vst [vmem:[%s176 + $0x218] sm:$0xff] %v3480
        %3545 = vst [vmem:[%s176 + $0x230] sm:$0xff] %v3481
        %3546 = vst [vmem:[%s176 + $0x238] sm:$0xff] %v3482
        %3547 = vst [vmem:[%s176 + $0x250] sm:$0xff] %v3483
        %3548 = vst [vmem:[%s176 + $0x258] sm:$0xff] %v3484
        %3549 = vst [vmem:[%s176 + $0x270] sm:$0xff] %v3485
        %3550 = vst [vmem:[%s176 + $0x278] sm:$0xff] %v3486
        %3551 = vst [vmem:[%s176 + $0x290] sm:$0xff] %v3487
        %3552 = vst [vmem:[%s176 + $0x298] sm:$0xff] %v3488
        %3553 = vst [vmem:[%s176 + $0x2b0] sm:$0xff] %v3489
        %3554 = vst [vmem:[%s176 + $0x2b8] sm:$0xff] %v3490
        %3555 = vst [vmem:[%s176 + $0x2d0] sm:$0xff] %v3491
        %3556 = vst [vmem:[%s176 + $0x2d8] sm:$0xff] %v3492
        %3557 = vst [vmem:[%s176 + $0x2f0] sm:$0xff] %v3493
        %3558 = vst [vmem:[%s176 + $0x2f8] sm:$0xff] %v3494
        %3559 = vst [vmem:[%s176 + $0x310] sm:$0xff] %v3495
        %3560 = vst [vmem:[%s176 + $0x318] sm:$0xff] %v3496
        %3561 = vst [vmem:[%s176 + $0x330] sm:$0xff] %v3497
        %3562 = vst [vmem:[%s176 + $0x338] sm:$0xff] %v3498
        %3563 = vst [vmem:[%s176 + $0x350] sm:$0xff] %v3499
        %3564 = vst [vmem:[%s176 + $0x358] sm:$0xff] %v3500
        %3565 = vst [vmem:[%s176 + $0x370] sm:$0xff] %v3501
        %3566 = vst [vmem:[%s176 + $0x378] sm:$0xff] %v3502
        %3567 = vst [vmem:[%s176 + $0x390] sm:$0xff] %v3503
        %3568 = vst [vmem:[%s176 + $0x398] sm:$0xff] %v3504
        %3569 = vst [vmem:[%s176 + $0x3b0] sm:$0xff] %v3505
        %3570 = vst [vmem:[%s176 + $0x3b8] sm:$0xff] %v3506
        %3571 = vst [vmem:[%s176 + $0x3d0] sm:$0xff] %v3507
        %3572 = vst [vmem:[%s176 + $0x3d8] sm:$0xff] %v3508
        %3573 = vst [vmem:[%s176 + $0x3f0] sm:$0xff] %v3509
        %3574 = vst [vmem:[%s176 + $0x3f8] sm:$0xff] %v3510
        %v3575 = vld [vmem:[#allocation2] sm:$0xff]
        %v3576 = vld [vmem:[#allocation2 + $0x8] sm:$0xff]
        %v3577 = vld [vmem:[#allocation2 + $0x10] sm:$0xff]
        %v3578 = vld [vmem:[#allocation2 + $0x18] sm:$0xff]
        %v3579 = vld [vmem:[#allocation2 + $0x20] sm:$0xff]
        %v3580 = vld [vmem:[#allocation2 + $0x28] sm:$0xff]
        %v3581 = vld [vmem:[#allocation2 + $0x30] sm:$0xff]
        %v3582 = vld [vmem:[#allocation2 + $0x38] sm:$0xff]
        %v3583 = vld [vmem:[#allocation2 + $0x40] sm:$0xff]
        %v3584 = vld [vmem:[#allocation2 + $0x48] sm:$0xff]
        %v3585 = vld [vmem:[#allocation2 + $0x50] sm:$0xff]
        %v3586 = vld [vmem:[#allocation2 + $0x58] sm:$0xff]
        %v3587 = vld [vmem:[#allocation2 + $0x60] sm:$0xff]
        %v3588 = vld [vmem:[#allocation2 + $0x68] sm:$0xff]
        %v3589 = vld [vmem:[#allocation2 + $0x70] sm:$0xff]
        %v3590 = vld [vmem:[#allocation2 + $0x78] sm:$0xff]
        %v3591 = vld [vmem:[#allocation2 + $0x80] sm:$0xff]
        %v3592 = vld [vmem:[#allocation2 + $0x88] sm:$0xff]
        %v3593 = vld [vmem:[#allocation2 + $0x90] sm:$0xff]
        %v3594 = vld [vmem:[#allocation2 + $0x98] sm:$0xff]
        %v3595 = vld [vmem:[#allocation2 + $0xa0] sm:$0xff]
        %v3596 = vld [vmem:[#allocation2 + $0xa8] sm:$0xff]
        %v3597 = vld [vmem:[#allocation2 + $0xb0] sm:$0xff]
        %v3598 = vld [vmem:[#allocation2 + $0xb8] sm:$0xff]
        %v3599 = vld [vmem:[#allocation2 + $0xc0] sm:$0xff]
        %v3600 = vld [vmem:[#allocation2 + $0xc8] sm:$0xff]
        %v3601 = vld [vmem:[#allocation2 + $0xd0] sm:$0xff]
        %v3602 = vld [vmem:[#allocation2 + $0xd8] sm:$0xff]
        %v3603 = vld [vmem:[#allocation2 + $0xe0] sm:$0xff]
        %v3604 = vld [vmem:[#allocation2 + $0xe8] sm:$0xff]
        %v3605 = vld [vmem:[#allocation2 + $0xf0] sm:$0xff]
        %v3606 = vld [vmem:[#allocation2 + $0xf8] sm:$0xff]
        %v3607 = vpack.c.bf16 %v2520, %v2518
        %v3608 = vpack.c.bf16 %v2521, %v2519
        %v3609 = vpack.c.bf16 %v2524, %v2522
        %v3610 = vpack.c.bf16 %v2525, %v2523
        %v3611 = vpack.c.bf16 %v2528, %v2526
        %v3612 = vpack.c.bf16 %v2529, %v2527
        %v3613 = vpack.c.bf16 %v2532, %v2530
        %v3614 = vpack.c.bf16 %v2533, %v2531
        %v3615 = vpack.c.bf16 %v2536, %v2534
        %v3616 = vpack.c.bf16 %v2537, %v2535
        %v3617 = vpack.c.bf16 %v2540, %v2538
        %v3618 = vpack.c.bf16 %v2541, %v2539
        %v3619 = vpack.c.bf16 %v2544, %v2542
        %v3620 = vpack.c.bf16 %v2545, %v2543
        %v3621 = vpack.c.bf16 %v2548, %v2546
        %v3622 = vpack.c.bf16 %v2549, %v2547
        %v3623 = vpack.c.bf16 %v2552, %v2550
        %v3624 = vpack.c.bf16 %v2553, %v2551
        %v3625 = vpack.c.bf16 %v2556, %v2554
        %v3626 = vpack.c.bf16 %v2557, %v2555
        %v3627 = vpack.c.bf16 %v2560, %v2558
        %v3628 = vpack.c.bf16 %v2561, %v2559
        %v3629 = vpack.c.bf16 %v2564, %v2562
        %v3630 = vpack.c.bf16 %v2565, %v2563
        %v3631 = vpack.c.bf16 %v2568, %v2566
        %v3632 = vpack.c.bf16 %v2569, %v2567
        %v3633 = vpack.c.bf16 %v2572, %v2570
        %v3634 = vpack.c.bf16 %v2573, %v2571
        %v3635 = vpack.c.bf16 %v2576, %v2574
        %v3636 = vpack.c.bf16 %v2577, %v2575
        %v3637 = vpack.c.bf16 %v2580, %v2578
        %v3638 = vpack.c.bf16 %v2581, %v2579
        %v3671 = vunpack.c.l.b16 %v3575
        %v3672 = vunpack.c.h.b16 %v3575
        %v3673 = vunpack.c.l.b16 %v3576
        %v3674 = vunpack.c.h.b16 %v3576
        %v3675 = vunpack.c.l.b16 %v3577
        %v3676 = vunpack.c.h.b16 %v3577
        %v3677 = vunpack.c.l.b16 %v3578
        %v3678 = vunpack.c.h.b16 %v3578
        %v3679 = vunpack.c.l.b16 %v3579
        %v3680 = vunpack.c.h.b16 %v3579
        %v3681 = vunpack.c.l.b16 %v3580
        %v3682 = vunpack.c.h.b16 %v3580
        %v3683 = vunpack.c.l.b16 %v3581
        %v3684 = vunpack.c.h.b16 %v3581
        %v3685 = vunpack.c.l.b16 %v3582
        %v3686 = vunpack.c.h.b16 %v3582
        %v3687 = vunpack.c.l.b16 %v3583
        %v3688 = vunpack.c.h.b16 %v3583
        %v3689 = vunpack.c.l.b16 %v3584
        %v3690 = vunpack.c.h.b16 %v3584
        %v3691 = vunpack.c.l.b16 %v3585
        %v3692 = vunpack.c.h.b16 %v3585
        %v3693 = vunpack.c.l.b16 %v3586
        %v3694 = vunpack.c.h.b16 %v3586
        %v3695 = vunpack.c.l.b16 %v3587
        %v3696 = vunpack.c.h.b16 %v3587
        %v3697 = vunpack.c.l.b16 %v3588
        %v3698 = vunpack.c.h.b16 %v3588
        %v3699 = vunpack.c.l.b16 %v3589
        %v3700 = vunpack.c.h.b16 %v3589
        %v3701 = vunpack.c.l.b16 %v3590
        %v3702 = vunpack.c.h.b16 %v3590
        %v3703 = vunpack.c.l.b16 %v3591
        %v3704 = vunpack.c.h.b16 %v3591
        %v3705 = vunpack.c.l.b16 %v3592
        %v3706 = vunpack.c.h.b16 %v3592
        %v3707 = vunpack.c.l.b16 %v3593
        %v3708 = vunpack.c.h.b16 %v3593
        %v3709 = vunpack.c.l.b16 %v3594
        %v3710 = vunpack.c.h.b16 %v3594
        %v3711 = vunpack.c.l.b16 %v3595
        %v3712 = vunpack.c.h.b16 %v3595
        %v3713 = vunpack.c.l.b16 %v3596
        %v3714 = vunpack.c.h.b16 %v3596
        %v3715 = vunpack.c.l.b16 %v3597
        %v3716 = vunpack.c.h.b16 %v3597
        %v3717 = vunpack.c.l.b16 %v3598
        %v3718 = vunpack.c.h.b16 %v3598
        %v3719 = vunpack.c.l.b16 %v3599
        %v3720 = vunpack.c.h.b16 %v3599
        %v3721 = vunpack.c.l.b16 %v3600
        %v3722 = vunpack.c.h.b16 %v3600
        %v3723 = vunpack.c.l.b16 %v3601
        %v3724 = vunpack.c.h.b16 %v3601
        %v3725 = vunpack.c.l.b16 %v3602
        %v3726 = vunpack.c.h.b16 %v3602
        %v3727 = vunpack.c.l.b16 %v3603
        %v3728 = vunpack.c.h.b16 %v3603
        %v3729 = vunpack.c.l.b16 %v3604
        %v3730 = vunpack.c.h.b16 %v3604
        %v3731 = vunpack.c.l.b16 %v3605
        %v3732 = vunpack.c.h.b16 %v3605
        %v3733 = vunpack.c.l.b16 %v3606
        %v3734 = vunpack.c.h.b16 %v3606
        %v3735 = vpack.c.b16 %v3673, %v3671
        %v3736 = vpack.c.b16 %v3674, %v3672
        %v3737 = vpack.c.b16 %v3677, %v3675
        %v3738 = vpack.c.b16 %v3678, %v3676
        %v3739 = vpack.c.b16 %v3681, %v3679
        %v3740 = vpack.c.b16 %v3682, %v3680
        %v3741 = vpack.c.b16 %v3685, %v3683
        %v3742 = vpack.c.b16 %v3686, %v3684
        %v3743 = vpack.c.b16 %v3689, %v3687
        %v3744 = vpack.c.b16 %v3690, %v3688
        %v3745 = vpack.c.b16 %v3693, %v3691
        %v3746 = vpack.c.b16 %v3694, %v3692
        %v3747 = vpack.c.b16 %v3697, %v3695
        %v3748 = vpack.c.b16 %v3698, %v3696
        %v3749 = vpack.c.b16 %v3701, %v3699
        %v3750 = vpack.c.b16 %v3702, %v3700
        %v3751 = vpack.c.b16 %v3705, %v3703
        %v3752 = vpack.c.b16 %v3706, %v3704
        %v3753 = vpack.c.b16 %v3709, %v3707
        %v3754 = vpack.c.b16 %v3710, %v3708
        %v3755 = vpack.c.b16 %v3713, %v3711
        %v3756 = vpack.c.b16 %v3714, %v3712
        %v3757 = vpack.c.b16 %v3717, %v3715
        %v3758 = vpack.c.b16 %v3718, %v3716
        %v3759 = vpack.c.b16 %v3721, %v3719
        %v3760 = vpack.c.b16 %v3722, %v3720
        %v3761 = vpack.c.b16 %v3725, %v3723
        %v3762 = vpack.c.b16 %v3726, %v3724
        %v3763 = vpack.c.b16 %v3729, %v3727
        %v3764 = vpack.c.b16 %v3730, %v3728
        %v3765 = vpack.c.b16 %v3733, %v3731
        %v3766 = vpack.c.b16 %v3734, %v3732
        %3799 = vmatprep.subr.bf16.mxu0 %v3608
        %3800 = vmatpush1.bf16.msra.mxu0 %v3607
        %3801 = vmatprep.subr.bf16.mxu0 %v3610
        %3802 = vmatpush1.bf16.msra.mxu0 %v3609
        %3803 = vmatprep.subr.bf16.mxu0 %v3612
        %3804 = vmatpush1.bf16.msra.mxu0 %v3611
        %3805 = vmatprep.subr.bf16.mxu0 %v3614
        %3806 = vmatpush1.bf16.msra.mxu0 %v3613
        %3807 = vmatprep.subr.bf16.mxu0 %v3616
        %3808 = vmatpush1.bf16.msra.mxu0 %v3615
        %3809 = vmatprep.subr.bf16.mxu0 %v3618
        %3810 = vmatpush1.bf16.msra.mxu0 %v3617
        %3811 = vmatprep.subr.bf16.mxu0 %v3620
        %3812 = vmatpush1.bf16.msra.mxu0 %v3619
        %3813 = vmatprep.subr.bf16.mxu0 %v3622
        %3814 = vmatpush1.bf16.msra.mxu0 %v3621
        %3815 = vmatprep.subr.bf16.mxu0 %v3624
        %3816 = vmatpush1.bf16.msra.mxu0 %v3623
        %3817 = vmatprep.subr.bf16.mxu0 %v3626
        %3818 = vmatpush1.bf16.msra.mxu0 %v3625
        %3819 = vmatprep.subr.bf16.mxu0 %v3628
        %3820 = vmatpush1.bf16.msra.mxu0 %v3627
        %3821 = vmatprep.subr.bf16.mxu0 %v3630
        %3822 = vmatpush1.bf16.msra.mxu0 %v3629
        %3823 = vmatprep.subr.bf16.mxu0 %v3632
        %3824 = vmatpush1.bf16.msra.mxu0 %v3631
        %3825 = vmatprep.subr.bf16.mxu0 %v3634
        %3826 = vmatpush1.bf16.msra.mxu0 %v3633
        %3827 = vmatprep.subr.bf16.mxu0 %v3636
        %3828 = vmatpush1.bf16.msra.mxu0 %v3635
        %3829 = vmatprep.subr.bf16.mxu0 %v3638
        %3830 = vmatpush1.bf16.msra.mxu0 %v3637
        %3831 = vmatprep.mubr.bf16.mxu0 %v3736
        %3832 = vmatmul.mubr.bf16.gmra.mrb[0].mxu0 %v3735
        %v3833 = vpop.f32.mrb[0].mxu0
        %v3834 = vadd.f32 0.0, %v3833
        %v3835 = vpop.f32.mrb[0].mxu0
        %v3836 = vadd.f32 0.0, %v3835
        %v3837 = vpop.f32.mrb[0].mxu0
        %v3838 = vadd.f32 0.0, %v3837
        %v3839 = vpop.f32.mrb[0].mxu0
        %v3840 = vadd.f32 0.0, %v3839
        %3841 = vmatprep.mubr.bf16.mxu0 %v3738
        %3842 = vmatmul.mubr.bf16.gmra.mrb[0].mxu0 %v3737
        %v3843 = vpop.f32.mrb[0].mxu0
        %v3844 = vadd.f32 0.0, %v3843
        %v3845 = vpop.f32.mrb[0].mxu0
        %v3846 = vadd.f32 0.0, %v3845
        %v3847 = vpop.f32.mrb[0].mxu0
        %v3848 = vadd.f32 0.0, %v3847
        %v3849 = vpop.f32.mrb[0].mxu0
        %v3850 = vadd.f32 0.0, %v3849
        %3851 = vmatprep.mubr.bf16.mxu0 %v3740
        %3852 = vmatmul.mubr.bf16.gmra.mrb[0].mxu0 %v3739
        %v3853 = vpop.f32.mrb[0].mxu0
        %v3854 = vadd.f32 0.0, %v3853
        %v3855 = vpop.f32.mrb[0].mxu0
        %v3856 = vadd.f32 0.0, %v3855
        %v3857 = vpop.f32.mrb[0].mxu0
        %v3858 = vadd.f32 0.0, %v3857
        %v3859 = vpop.f32.mrb[0].mxu0
        %v3860 = vadd.f32 0.0, %v3859
        %3861 = vmatprep.mubr.bf16.mxu0 %v3742
        %3862 = vmatmul.mubr.bf16.gmra.mrb[0].mxu0 %v3741
        %v3863 = vpop.f32.mrb[0].mxu0
        %v3864 = vadd.f32 0.0, %v3863
        %v3865 = vpop.f32.mrb[0].mxu0
        %v3866 = vadd.f32 0.0, %v3865
        %v3867 = vpop.f32.mrb[0].mxu0
        %v3868 = vadd.f32 0.0, %v3867
        %v3869 = vpop.f32.mrb[0].mxu0
        %v3870 = vadd.f32 0.0, %v3869
        %3871 = vmatprep.mubr.bf16.mxu0 %v3744
        %3872 = vmatmul.mubr.bf16.gmra.mrb[0].mxu0 %v3743
        %v3873 = vpop.f32.mrb[0].mxu0
        %v3874 = vadd.f32 0.0, %v3873
        %v3875 = vpop.f32.mrb[0].mxu0
        %v3876 = vadd.f32 0.0, %v3875
        %v3877 = vpop.f32.mrb[0].mxu0
        %v3878 = vadd.f32 0.0, %v3877
        %v3879 = vpop.f32.mrb[0].mxu0
        %v3880 = vadd.f32 0.0, %v3879
        %3881 = vmatprep.mubr.bf16.mxu0 %v3746
        %3882 = vmatmul.mubr.bf16.gmra.mrb[0].mxu0 %v3745
        %v3883 = vpop.f32.mrb[0].mxu0
        %v3884 = vadd.f32 0.0, %v3883
        %v3885 = vpop.f32.mrb[0].mxu0
        %v3886 = vadd.f32 0.0, %v3885
        %v3887 = vpop.f32.mrb[0].mxu0
        %v3888 = vadd.f32 0.0, %v3887
        %v3889 = vpop.f32.mrb[0].mxu0
        %v3890 = vadd.f32 0.0, %v3889
        %3891 = vmatprep.mubr.bf16.mxu0 %v3748
        %3892 = vmatmul.mubr.bf16.gmra.mrb[0].mxu0 %v3747
        %v3893 = vpop.f32.mrb[0].mxu0
        %v3894 = vadd.f32 0.0, %v3893
        %v3895 = vpop.f32.mrb[0].mxu0
        %v3896 = vadd.f32 0.0, %v3895
        %v3897 = vpop.f32.mrb[0].mxu0
        %v3898 = vadd.f32 0.0, %v3897
        %v3899 = vpop.f32.mrb[0].mxu0
        %v3900 = vadd.f32 0.0, %v3899
        %3901 = vmatprep.mubr.bf16.mxu0 %v3750
        %3902 = vmatmul.mubr.bf16.gmra.mrb[0].mxu0 %v3749
        %v3903 = vpop.f32.mrb[0].mxu0
        %v3904 = vadd.f32 0.0, %v3903
        %v3905 = vpop.f32.mrb[0].mxu0
        %v3906 = vadd.f32 0.0, %v3905
        %v3907 = vpop.f32.mrb[0].mxu0
        %v3908 = vadd.f32 0.0, %v3907
        %v3909 = vpop.f32.mrb[0].mxu0
        %v3910 = vadd.f32 0.0, %v3909
        %3911 = vmatprep.mubr.bf16.mxu0 %v3752
        %3912 = vmatmul.mubr.bf16.gmra.mrb[0].mxu0 %v3751
        %v3913 = vpop.f32.mrb[0].mxu0
        %v3914 = vadd.f32 0.0, %v3913
        %v3915 = vpop.f32.mrb[0].mxu0
        %v3916 = vadd.f32 0.0, %v3915
        %v3917 = vpop.f32.mrb[0].mxu0
        %v3918 = vadd.f32 0.0, %v3917
        %v3919 = vpop.f32.mrb[0].mxu0
        %v3920 = vadd.f32 0.0, %v3919
        %3921 = vmatprep.mubr.bf16.mxu0 %v3754
        %3922 = vmatmul.mubr.bf16.gmra.mrb[0].mxu0 %v3753
        %v3923 = vpop.f32.mrb[0].mxu0
        %v3924 = vadd.f32 0.0, %v3923
        %v3925 = vpop.f32.mrb[0].mxu0
        %v3926 = vadd.f32 0.0, %v3925
        %v3927 = vpop.f32.mrb[0].mxu0
        %v3928 = vadd.f32 0.0, %v3927
        %v3929 = vpop.f32.mrb[0].mxu0
        %v3930 = vadd.f32 0.0, %v3929
        %3931 = vmatprep.mubr.bf16.mxu0 %v3756
        %3932 = vmatmul.mubr.bf16.gmra.mrb[0].mxu0 %v3755
        %v3933 = vpop.f32.mrb[0].mxu0
        %v3934 = vadd.f32 0.0, %v3933
        %v3935 = vpop.f32.mrb[0].mxu0
        %v3936 = vadd.f32 0.0, %v3935
        %v3937 = vpop.f32.mrb[0].mxu0
        %v3938 = vadd.f32 0.0, %v3937
        %v3939 = vpop.f32.mrb[0].mxu0
        %v3940 = vadd.f32 0.0, %v3939
        %3941 = vmatprep.mubr.bf16.mxu0 %v3758
        %3942 = vmatmul.mubr.bf16.gmra.mrb[0].mxu0 %v3757
        %v3943 = vpop.f32.mrb[0].mxu0
        %v3944 = vadd.f32 0.0, %v3943
        %v3945 = vpop.f32.mrb[0].mxu0
        %v3946 = vadd.f32 0.0, %v3945
        %v3947 = vpop.f32.mrb[0].mxu0
        %v3948 = vadd.f32 0.0, %v3947
        %v3949 = vpop.f32.mrb[0].mxu0
        %v3950 = vadd.f32 0.0, %v3949
        %3951 = vmatprep.mubr.bf16.mxu0 %v3760
        %3952 = vmatmul.mubr.bf16.gmra.mrb[0].mxu0 %v3759
        %v3953 = vpop.f32.mrb[0].mxu0
        %v3954 = vadd.f32 0.0, %v3953
        %v3955 = vpop.f32.mrb[0].mxu0
        %v3956 = vadd.f32 0.0, %v3955
        %v3957 = vpop.f32.mrb[0].mxu0
        %v3958 = vadd.f32 0.0, %v3957
        %v3959 = vpop.f32.mrb[0].mxu0
        %v3960 = vadd.f32 0.0, %v3959
        %3961 = vmatprep.mubr.bf16.mxu0 %v3762
        %3962 = vmatmul.mubr.bf16.gmra.mrb[0].mxu0 %v3761
        %v3963 = vpop.f32.mrb[0].mxu0
        %v3964 = vadd.f32 0.0, %v3963
        %v3965 = vpop.f32.mrb[0].mxu0
        %v3966 = vadd.f32 0.0, %v3965
        %v3967 = vpop.f32.mrb[0].mxu0
        %v3968 = vadd.f32 0.0, %v3967
        %v3969 = vpop.f32.mrb[0].mxu0
        %v3970 = vadd.f32 0.0, %v3969
        %3971 = vmatprep.mubr.bf16.mxu0 %v3764
        %3972 = vmatmul.mubr.bf16.gmra.mrb[0].mxu0 %v3763
        %v3973 = vpop.f32.mrb[0].mxu0
        %v3974 = vadd.f32 0.0, %v3973
        %v3975 = vpop.f32.mrb[0].mxu0
        %v3976 = vadd.f32 0.0, %v3975
        %v3977 = vpop.f32.mrb[0].mxu0
        %v3978 = vadd.f32 0.0, %v3977
        %v3979 = vpop.f32.mrb[0].mxu0
        %v3980 = vadd.f32 0.0, %v3979
        %3981 = vmatprep.mubr.bf16.mxu0 %v3766
        %3982 = vmatmul.mubr.bf16.gmra.mrb[0].mxu0 %v3765
        %v3983 = vpop.f32.mrb[0].mxu0
        %v3984 = vadd.f32 0.0, %v3983
        %v3985 = vpop.f32.mrb[0].mxu0
        %v3986 = vadd.f32 0.0, %v3985
        %v3987 = vpop.f32.mrb[0].mxu0
        %v3988 = vadd.f32 0.0, %v3987
        %v3989 = vpop.f32.mrb[0].mxu0
        %v3990 = vadd.f32 0.0, %v3989
        %3991 = vdwg.mxu0
        %v3992 = vsub.f32 %v3834, %v820
        %v3993 = vsub.f32 %v3836, %v821
        %v3994 = vsub.f32 %v3838, %v822
        %v3995 = vsub.f32 %v3840, %v823
        %v3996 = vsub.f32 %v3844, %v824
        %v3997 = vsub.f32 %v3846, %v825
        %v3998 = vsub.f32 %v3848, %v826
        %v3999 = vsub.f32 %v3850, %v827
        %v4000 = vsub.f32 %v3854, %v828
        %v4001 = vsub.f32 %v3856, %v829
        %v4002 = vsub.f32 %v3858, %v830
        %v4003 = vsub.f32 %v3860, %v831
        %v4004 = vsub.f32 %v3864, %v832
        %v4005 = vsub.f32 %v3866, %v833
        %v4006 = vsub.f32 %v3868, %v834
        %v4007 = vsub.f32 %v3870, %v835
        %v4008 = vsub.f32 %v3874, %v836
        %v4009 = vsub.f32 %v3876, %v837
        %v4010 = vsub.f32 %v3878, %v838
        %v4011 = vsub.f32 %v3880, %v839
        %v4012 = vsub.f32 %v3884, %v840
        %v4013 = vsub.f32 %v3886, %v841
        %v4014 = vsub.f32 %v3888, %v842
        %v4015 = vsub.f32 %v3890, %v843
        %v4016 = vsub.f32 %v3894, %v844
        %v4017 = vsub.f32 %v3896, %v845
        %v4018 = vsub.f32 %v3898, %v846
        %v4019 = vsub.f32 %v3900, %v847
        %v4020 = vsub.f32 %v3904, %v848
        %v4021 = vsub.f32 %v3906, %v849
        %v4022 = vsub.f32 %v3908, %v850
        %v4023 = vsub.f32 %v3910, %v851
        %v4024 = vsub.f32 %v3914, %v852
        %v4025 = vsub.f32 %v3916, %v853
        %v4026 = vsub.f32 %v3918, %v854
        %v4027 = vsub.f32 %v3920, %v855
        %v4028 = vsub.f32 %v3924, %v856
        %v4029 = vsub.f32 %v3926, %v857
        %v4030 = vsub.f32 %v3928, %v858
        %v4031 = vsub.f32 %v3930, %v859
        %v4032 = vsub.f32 %v3934, %v860
        %v4033 = vsub.f32 %v3936, %v861
        %v4034 = vsub.f32 %v3938, %v862
        %v4035 = vsub.f32 %v3940, %v863
        %v4036 = vsub.f32 %v3944, %v864
        %v4037 = vsub.f32 %v3946, %v865
        %v4038 = vsub.f32 %v3948, %v866
        %v4039 = vsub.f32 %v3950, %v867
        %v4040 = vsub.f32 %v3954, %v868
        %v4041 = vsub.f32 %v3956, %v869
        %v4042 = vsub.f32 %v3958, %v870
        %v4043 = vsub.f32 %v3960, %v871
        %v4044 = vsub.f32 %v3964, %v872
        %v4045 = vsub.f32 %v3966, %v873
        %v4046 = vsub.f32 %v3968, %v874
        %v4047 = vsub.f32 %v3970, %v875
        %v4048 = vsub.f32 %v3974, %v876
        %v4049 = vsub.f32 %v3976, %v877
        %v4050 = vsub.f32 %v3978, %v878
        %v4051 = vsub.f32 %v3980, %v879
        %v4052 = vsub.f32 %v3984, %v880
        %v4053 = vsub.f32 %v3986, %v881
        %v4054 = vsub.f32 %v3988, %v882
        %v4055 = vsub.f32 %v3990, %v883
        %v4056 = vld [vmem:[%s176] sm:$0xff]
        %v4057 = vld [vmem:[%s176 + $0x8] sm:$0xff]
        %v4058 = vld [vmem:[%s176 + $0x20] sm:$0xff]
        %v4059 = vld [vmem:[%s176 + $0x28] sm:$0xff]
        %v4060 = vld [vmem:[%s176 + $0x40] sm:$0xff]
        %v4061 = vld [vmem:[%s176 + $0x48] sm:$0xff]
        %v4062 = vld [vmem:[%s176 + $0x60] sm:$0xff]
        %v4063 = vld [vmem:[%s176 + $0x68] sm:$0xff]
        %v4064 = vld [vmem:[%s176 + $0x80] sm:$0xff]
        %v4065 = vld [vmem:[%s176 + $0x88] sm:$0xff]
        %v4066 = vld [vmem:[%s176 + $0xa0] sm:$0xff]
        %v4067 = vld [vmem:[%s176 + $0xa8] sm:$0xff]
        %v4068 = vld [vmem:[%s176 + $0xc0] sm:$0xff]
        %v4069 = vld [vmem:[%s176 + $0xc8] sm:$0xff]
        %v4070 = vld [vmem:[%s176 + $0xe0] sm:$0xff]
        %v4071 = vld [vmem:[%s176 + $0xe8] sm:$0xff]
        %v4072 = vld [vmem:[%s176 + $0x100] sm:$0xff]
        %v4073 = vld [vmem:[%s176 + $0x108] sm:$0xff]
        %v4074 = vld [vmem:[%s176 + $0x120] sm:$0xff]
        %v4075 = vld [vmem:[%s176 + $0x128] sm:$0xff]
        %v4076 = vld [vmem:[%s176 + $0x140] sm:$0xff]
        %v4077 = vld [vmem:[%s176 + $0x148] sm:$0xff]
        %v4078 = vld [vmem:[%s176 + $0x160] sm:$0xff]
        %v4079 = vld [vmem:[%s176 + $0x168] sm:$0xff]
        %v4080 = vld [vmem:[%s176 + $0x180] sm:$0xff]
        %v4081 = vld [vmem:[%s176 + $0x188] sm:$0xff]
        %v4082 = vld [vmem:[%s176 + $0x1a0] sm:$0xff]
        %v4083 = vld [vmem:[%s176 + $0x1a8] sm:$0xff]
        %v4084 = vld [vmem:[%s176 + $0x1c0] sm:$0xff]
        %v4085 = vld [vmem:[%s176 + $0x1c8] sm:$0xff]
        %v4086 = vld [vmem:[%s176 + $0x1e0] sm:$0xff]
        %v4087 = vld [vmem:[%s176 + $0x1e8] sm:$0xff]
        %v4088 = vld [vmem:[%s176 + $0x200] sm:$0xff]
        %v4089 = vld [vmem:[%s176 + $0x208] sm:$0xff]
        %v4090 = vld [vmem:[%s176 + $0x220] sm:$0xff]
        %v4091 = vld [vmem:[%s176 + $0x228] sm:$0xff]
        %v4092 = vld [vmem:[%s176 + $0x240] sm:$0xff]
        %v4093 = vld [vmem:[%s176 + $0x248] sm:$0xff]
        %v4094 = vld [vmem:[%s176 + $0x260] sm:$0xff]
        %v4095 = vld [vmem:[%s176 + $0x268] sm:$0xff]
        %v4096 = vld [vmem:[%s176 + $0x280] sm:$0xff]
        %v4097 = vld [vmem:[%s176 + $0x288] sm:$0xff]
        %v4098 = vld [vmem:[%s176 + $0x2a0] sm:$0xff]
        %v4099 = vld [vmem:[%s176 + $0x2a8] sm:$0xff]
        %v4100 = vld [vmem:[%s176 + $0x2c0] sm:$0xff]
        %v4101 = vld [vmem:[%s176 + $0x2c8] sm:$0xff]
        %v4102 = vld [vmem:[%s176 + $0x2e0] sm:$0xff]
        %v4103 = vld [vmem:[%s176 + $0x2e8] sm:$0xff]
        %v4104 = vld [vmem:[%s176 + $0x300] sm:$0xff]
        %v4105 = vld [vmem:[%s176 + $0x308] sm:$0xff]
        %v4106 = vld [vmem:[%s176 + $0x320] sm:$0xff]
        %v4107 = vld [vmem:[%s176 + $0x328] sm:$0xff]
        %v4108 = vld [vmem:[%s176 + $0x340] sm:$0xff]
        %v4109 = vld [vmem:[%s176 + $0x348] sm:$0xff]
        %v4110 = vld [vmem:[%s176 + $0x360] sm:$0xff]
        %v4111 = vld [vmem:[%s176 + $0x368] sm:$0xff]
        %v4112 = vld [vmem:[%s176 + $0x380] sm:$0xff]
        %v4113 = vld [vmem:[%s176 + $0x388] sm:$0xff]
        %v4114 = vld [vmem:[%s176 + $0x3a0] sm:$0xff]
        %v4115 = vld [vmem:[%s176 + $0x3a8] sm:$0xff]
        %v4116 = vld [vmem:[%s176 + $0x3c0] sm:$0xff]
        %v4117 = vld [vmem:[%s176 + $0x3c8] sm:$0xff]
        %v4118 = vld [vmem:[%s176 + $0x3e0] sm:$0xff]
        %v4119 = vld [vmem:[%s176 + $0x3e8] sm:$0xff]
        %v4120 = vmul.f32 %v3992, 0.04433685
        %v4121 = vmul.f32 %v3993, 0.04433685
        %v4122 = vmul.f32 %v3994, 0.04433685
        %v4123 = vmul.f32 %v3995, 0.04433685
        %v4124 = vmul.f32 %v3996, 0.04433685
        %v4125 = vmul.f32 %v3997, 0.04433685
        %v4126 = vmul.f32 %v3998, 0.04433685
        %v4127 = vmul.f32 %v3999, 0.04433685
        %v4128 = vmul.f32 %v4000, 0.04433685
        %v4129 = vmul.f32 %v4001, 0.04433685
        %v4130 = vmul.f32 %v4002, 0.04433685
        %v4131 = vmul.f32 %v4003, 0.04433685
        %v4132 = vmul.f32 %v4004, 0.04433685
        %v4133 = vmul.f32 %v4005, 0.04433685
        %v4134 = vmul.f32 %v4006, 0.04433685
        %v4135 = vmul.f32 %v4007, 0.04433685
        %v4136 = vmul.f32 %v4008, 0.04433685
        %v4137 = vmul.f32 %v4009, 0.04433685
        %v4138 = vmul.f32 %v4010, 0.04433685
        %v4139 = vmul.f32 %v4011, 0.04433685
        %v4140 = vmul.f32 %v4012, 0.04433685
        %v4141 = vmul.f32 %v4013, 0.04433685
        %v4142 = vmul.f32 %v4014, 0.04433685
        %v4143 = vmul.f32 %v4015, 0.04433685
        %v4144 = vmul.f32 %v4016, 0.04433685
        %v4145 = vmul.f32 %v4017, 0.04433685
        %v4146 = vmul.f32 %v4018, 0.04433685
        %v4147 = vmul.f32 %v4019, 0.04433685
        %v4148 = vmul.f32 %v4020, 0.04433685
        %v4149 = vmul.f32 %v4021, 0.04433685
        %v4150 = vmul.f32 %v4022, 0.04433685
        %v4151 = vmul.f32 %v4023, 0.04433685
        %v4152 = vmul.f32 %v4024, 0.04433685
        %v4153 = vmul.f32 %v4025, 0.04433685
        %v4154 = vmul.f32 %v4026, 0.04433685
        %v4155 = vmul.f32 %v4027, 0.04433685
        %v4156 = vmul.f32 %v4028, 0.04433685
        %v4157 = vmul.f32 %v4029, 0.04433685
        %v4158 = vmul.f32 %v4030, 0.04433685
        %v4159 = vmul.f32 %v4031, 0.04433685
        %v4160 = vmul.f32 %v4032, 0.04433685
        %v4161 = vmul.f32 %v4033, 0.04433685
        %v4162 = vmul.f32 %v4034, 0.04433685
        %v4163 = vmul.f32 %v4035, 0.04433685
        %v4164 = vmul.f32 %v4036, 0.04433685
        %v4165 = vmul.f32 %v4037, 0.04433685
        %v4166 = vmul.f32 %v4038, 0.04433685
        %v4167 = vmul.f32 %v4039, 0.04433685
        %v4168 = vmul.f32 %v4040, 0.04433685
        %v4169 = vmul.f32 %v4041, 0.04433685
        %v4170 = vmul.f32 %v4042, 0.04433685
        %v4171 = vmul.f32 %v4043, 0.04433685
        %v4172 = vmul.f32 %v4044, 0.04433685
        %v4173 = vmul.f32 %v4045, 0.04433685
        %v4174 = vmul.f32 %v4046, 0.04433685
        %v4175 = vmul.f32 %v4047, 0.04433685
        %v4176 = vmul.f32 %v4048, 0.04433685
        %v4177 = vmul.f32 %v4049, 0.04433685
        %v4178 = vmul.f32 %v4050, 0.04433685
        %v4179 = vmul.f32 %v4051, 0.04433685
        %v4180 = vmul.f32 %v4052, 0.04433685
        %v4181 = vmul.f32 %v4053, 0.04433685
        %v4182 = vmul.f32 %v4054, 0.04433685
        %v4183 = vmul.f32 %v4055, 0.04433685
        %v4184 = vadd.f32 %v4056, %v4120
        %v4185 = vadd.f32 %v4057, %v4121
        %v4186 = vadd.f32 %v4058, %v4122
        %v4187 = vadd.f32 %v4059, %v4123
        %v4188 = vadd.f32 %v4060, %v4124
        %v4189 = vadd.f32 %v4061, %v4125
        %v4190 = vadd.f32 %v4062, %v4126
        %v4191 = vadd.f32 %v4063, %v4127
        %v4192 = vadd.f32 %v4064, %v4128
        %v4193 = vadd.f32 %v4065, %v4129
        %v4194 = vadd.f32 %v4066, %v4130
        %v4195 = vadd.f32 %v4067, %v4131
        %v4196 = vadd.f32 %v4068, %v4132
        %v4197 = vadd.f32 %v4069, %v4133
        %v4198 = vadd.f32 %v4070, %v4134
        %v4199 = vadd.f32 %v4071, %v4135
        %v4200 = vadd.f32 %v4072, %v4136
        %v4201 = vadd.f32 %v4073, %v4137
        %v4202 = vadd.f32 %v4074, %v4138
        %v4203 = vadd.f32 %v4075, %v4139
        %v4204 = vadd.f32 %v4076, %v4140
        %v4205 = vadd.f32 %v4077, %v4141
        %v4206 = vadd.f32 %v4078, %v4142
        %v4207 = vadd.f32 %v4079, %v4143
        %v4208 = vadd.f32 %v4080, %v4144
        %v4209 = vadd.f32 %v4081, %v4145
        %v4210 = vadd.f32 %v4082, %v4146
        %v4211 = vadd.f32 %v4083, %v4147
        %v4212 = vadd.f32 %v4084, %v4148
        %v4213 = vadd.f32 %v4085, %v4149
        %v4214 = vadd.f32 %v4086, %v4150
        %v4215 = vadd.f32 %v4087, %v4151
        %v4216 = vadd.f32 %v4088, %v4152
        %v4217 = vadd.f32 %v4089, %v4153
        %v4218 = vadd.f32 %v4090, %v4154
        %v4219 = vadd.f32 %v4091, %v4155
        %v4220 = vadd.f32 %v4092, %v4156
        %v4221 = vadd.f32 %v4093, %v4157
        %v4222 = vadd.f32 %v4094, %v4158
        %v4223 = vadd.f32 %v4095, %v4159
        %v4224 = vadd.f32 %v4096, %v4160
        %v4225 = vadd.f32 %v4097, %v4161
        %v4226 = vadd.f32 %v4098, %v4162
        %v4227 = vadd.f32 %v4099, %v4163
        %v4228 = vadd.f32 %v4100, %v4164
        %v4229 = vadd.f32 %v4101, %v4165
        %v4230 = vadd.f32 %v4102, %v4166
        %v4231 = vadd.f32 %v4103, %v4167
        %v4232 = vadd.f32 %v4104, %v4168
        %v4233 = vadd.f32 %v4105, %v4169
        %v4234 = vadd.f32 %v4106, %v4170
        %v4235 = vadd.f32 %v4107, %v4171
        %v4236 = vadd.f32 %v4108, %v4172
        %v4237 = vadd.f32 %v4109, %v4173
        %v4238 = vadd.f32 %v4110, %v4174
        %v4239 = vadd.f32 %v4111, %v4175
        %v4240 = vadd.f32 %v4112, %v4176
        %v4241 = vadd.f32 %v4113, %v4177
        %v4242 = vadd.f32 %v4114, %v4178
        %v4243 = vadd.f32 %v4115, %v4179
        %v4244 = vadd.f32 %v4116, %v4180
        %v4245 = vadd.f32 %v4117, %v4181
        %v4246 = vadd.f32 %v4118, %v4182
        %v4247 = vadd.f32 %v4119, %v4183
        %4248 = vst [vmem:[%s176] sm:$0xff] %v4184
        %4249 = vst [vmem:[%s176 + $0x8] sm:$0xff] %v4185
        %4250 = vst [vmem:[%s176 + $0x20] sm:$0xff] %v4186
        %4251 = vst [vmem:[%s176 + $0x28] sm:$0xff] %v4187
        %4252 = vst [vmem:[%s176 + $0x40] sm:$0xff] %v4188
        %4253 = vst [vmem:[%s176 + $0x48] sm:$0xff] %v4189
        %4254 = vst [vmem:[%s176 + $0x60] sm:$0xff] %v4190
        %4255 = vst [vmem:[%s176 + $0x68] sm:$0xff] %v4191
        %4256 = vst [vmem:[%s176 + $0x80] sm:$0xff] %v4192
        %4257 = vst [vmem:[%s176 + $0x88] sm:$0xff] %v4193
        %4258 = vst [vmem:[%s176 + $0xa0] sm:$0xff] %v4194
        %4259 = vst [vmem:[%s176 + $0xa8] sm:$0xff] %v4195
        %4260 = vst [vmem:[%s176 + $0xc0] sm:$0xff] %v4196
        %4261 = vst [vmem:[%s176 + $0xc8] sm:$0xff] %v4197
        %4262 = vst [vmem:[%s176 + $0xe0] sm:$0xff] %v4198
        %4263 = vst [vmem:[%s176 + $0xe8] sm:$0xff] %v4199
        %4264 = vst [vmem:[%s176 + $0x100] sm:$0xff] %v4200
        %4265 = vst [vmem:[%s176 + $0x108] sm:$0xff] %v4201
        %4266 = vst [vmem:[%s176 + $0x120] sm:$0xff] %v4202
        %4267 = vst [vmem:[%s176 + $0x128] sm:$0xff] %v4203
        %4268 = vst [vmem:[%s176 + $0x140] sm:$0xff] %v4204
        %4269 = vst [vmem:[%s176 + $0x148] sm:$0xff] %v4205
        %4270 = vst [vmem:[%s176 + $0x160] sm:$0xff] %v4206
        %4271 = vst [vmem:[%s176 + $0x168] sm:$0xff] %v4207
        %4272 = vst [vmem:[%s176 + $0x180] sm:$0xff] %v4208
        %4273 = vst [vmem:[%s176 + $0x188] sm:$0xff] %v4209
        %4274 = vst [vmem:[%s176 + $0x1a0] sm:$0xff] %v4210
        %4275 = vst [vmem:[%s176 + $0x1a8] sm:$0xff] %v4211
        %4276 = vst [vmem:[%s176 + $0x1c0] sm:$0xff] %v4212
        %4277 = vst [vmem:[%s176 + $0x1c8] sm:$0xff] %v4213
        %4278 = vst [vmem:[%s176 + $0x1e0] sm:$0xff] %v4214
        %4279 = vst [vmem:[%s176 + $0x1e8] sm:$0xff] %v4215
        %4280 = vst [vmem:[%s176 + $0x200] sm:$0xff] %v4216
        %4281 = vst [vmem:[%s176 + $0x208] sm:$0xff] %v4217
        %4282 = vst [vmem:[%s176 + $0x220] sm:$0xff] %v4218
        %4283 = vst [vmem:[%s176 + $0x228] sm:$0xff] %v4219
        %4284 = vst [vmem:[%s176 + $0x240] sm:$0xff] %v4220
        %4285 = vst [vmem:[%s176 + $0x248] sm:$0xff] %v4221
        %4286 = vst [vmem:[%s176 + $0x260] sm:$0xff] %v4222
        %4287 = vst [vmem:[%s176 + $0x268] sm:$0xff] %v4223
        %4288 = vst [vmem:[%s176 + $0x280] sm:$0xff] %v4224
        %4289 = vst [vmem:[%s176 + $0x288] sm:$0xff] %v4225
        %4290 = vst [vmem:[%s176 + $0x2a0] sm:$0xff] %v4226
        %4291 = vst [vmem:[%s176 + $0x2a8] sm:$0xff] %v4227
        %4292 = vst [vmem:[%s176 + $0x2c0] sm:$0xff] %v4228
        %4293 = vst [vmem:[%s176 + $0x2c8] sm:$0xff] %v4229
        %4294 = vst [vmem:[%s176 + $0x2e0] sm:$0xff] %v4230
        %4295 = vst [vmem:[%s176 + $0x2e8] sm:$0xff] %v4231
        %4296 = vst [vmem:[%s176 + $0x300] sm:$0xff] %v4232
        %4297 = vst [vmem:[%s176 + $0x308] sm:$0xff] %v4233
        %4298 = vst [vmem:[%s176 + $0x320] sm:$0xff] %v4234
        %4299 = vst [vmem:[%s176 + $0x328] sm:$0xff] %v4235
        %4300 = vst [vmem:[%s176 + $0x340] sm:$0xff] %v4236
        %4301 = vst [vmem:[%s176 + $0x348] sm:$0xff] %v4237
        %4302 = vst [vmem:[%s176 + $0x360] sm:$0xff] %v4238
        %4303 = vst [vmem:[%s176 + $0x368] sm:$0xff] %v4239
        %4304 = vst [vmem:[%s176 + $0x380] sm:$0xff] %v4240
        %4305 = vst [vmem:[%s176 + $0x388] sm:$0xff] %v4241
        %4306 = vst [vmem:[%s176 + $0x3a0] sm:$0xff] %v4242
        %4307 = vst [vmem:[%s176 + $0x3a8] sm:$0xff] %v4243
        %4308 = vst [vmem:[%s176 + $0x3c0] sm:$0xff] %v4244
        %4309 = vst [vmem:[%s176 + $0x3c8] sm:$0xff] %v4245
        %4310 = vst [vmem:[%s176 + $0x3e0] sm:$0xff] %v4246
        %4311 = vst [vmem:[%s176 + $0x3e8] sm:$0xff] %v4247
        %v4312 = vld [vmem:[#allocation2] sm:$0xff]
        %v4313 = vld [vmem:[#allocation2 + $0x8] sm:$0xff]
        %v4314 = vld [vmem:[#allocation2 + $0x10] sm:$0xff]
        %v4315 = vld [vmem:[#allocation2 + $0x18] sm:$0xff]
        %v4316 = vld [vmem:[#allocation2 + $0x20] sm:$0xff]
        %v4317 = vld [vmem:[#allocation2 + $0x28] sm:$0xff]
        %v4318 = vld [vmem:[#allocation2 + $0x30] sm:$0xff]
        %v4319 = vld [vmem:[#allocation2 + $0x38] sm:$0xff]
        %v4320 = vld [vmem:[#allocation2 + $0x40] sm:$0xff]
        %v4321 = vld [vmem:[#allocation2 + $0x48] sm:$0xff]
        %v4322 = vld [vmem:[#allocation2 + $0x50] sm:$0xff]
        %v4323 = vld [vmem:[#allocation2 + $0x58] sm:$0xff]
        %v4324 = vld [vmem:[#allocation2 + $0x60] sm:$0xff]
        %v4325 = vld [vmem:[#allocation2 + $0x68] sm:$0xff]
        %v4326 = vld [vmem:[#allocation2 + $0x70] sm:$0xff]
        %v4327 = vld [vmem:[#allocation2 + $0x78] sm:$0xff]
        %v4328 = vld [vmem:[#allocation2 + $0x80] sm:$0xff]
        %v4329 = vld [vmem:[#allocation2 + $0x88] sm:$0xff]
        %v4330 = vld [vmem:[#allocation2 + $0x90] sm:$0xff]
        %v4331 = vld [vmem:[#allocation2 + $0x98] sm:$0xff]
        %v4332 = vld [vmem:[#allocation2 + $0xa0] sm:$0xff]
        %v4333 = vld [vmem:[#allocation2 + $0xa8] sm:$0xff]
        %v4334 = vld [vmem:[#allocation2 + $0xb0] sm:$0xff]
        %v4335 = vld [vmem:[#allocation2 + $0xb8] sm:$0xff]
        %v4336 = vld [vmem:[#allocation2 + $0xc0] sm:$0xff]
        %v4337 = vld [vmem:[#allocation2 + $0xc8] sm:$0xff]
        %v4338 = vld [vmem:[#allocation2 + $0xd0] sm:$0xff]
        %v4339 = vld [vmem:[#allocation2 + $0xd8] sm:$0xff]
        %v4340 = vld [vmem:[#allocation2 + $0xe0] sm:$0xff]
        %v4341 = vld [vmem:[#allocation2 + $0xe8] sm:$0xff]
        %v4342 = vld [vmem:[#allocation2 + $0xf0] sm:$0xff]
        %v4343 = vld [vmem:[#allocation2 + $0xf8] sm:$0xff]
        %v4344 = vpack.c.bf16 %v3257, %v3255
        %v4345 = vpack.c.bf16 %v3258, %v3256
        %v4346 = vpack.c.bf16 %v3261, %v3259
        %v4347 = vpack.c.bf16 %v3262, %v3260
        %v4348 = vpack.c.bf16 %v3265, %v3263
        %v4349 = vpack.c.bf16 %v3266, %v3264
        %v4350 = vpack.c.bf16 %v3269, %v3267
        %v4351 = vpack.c.bf16 %v3270, %v3268
        %v4352 = vpack.c.bf16 %v3273, %v3271
        %v4353 = vpack.c.bf16 %v3274, %v3272
        %v4354 = vpack.c.bf16 %v3277, %v3275
        %v4355 = vpack.c.bf16 %v3278, %v3276
        %v4356 = vpack.c.bf16 %v3281, %v3279
        %v4357 = vpack.c.bf16 %v3282, %v3280
        %v4358 = vpack.c.bf16 %v3285, %v3283
        %v4359 = vpack.c.bf16 %v3286, %v3284
        %v4360 = vpack.c.bf16 %v3289, %v3287
        %v4361 = vpack.c.bf16 %v3290, %v3288
        %v4362 = vpack.c.bf16 %v3293, %v3291
        %v4363 = vpack.c.bf16 %v3294, %v3292
        %v4364 = vpack.c.bf16 %v3297, %v3295
        %v4365 = vpack.c.bf16 %v3298, %v3296
        %v4366 = vpack.c.bf16 %v3301, %v3299
        %v4367 = vpack.c.bf16 %v3302, %v3300
        %v4368 = vpack.c.bf16 %v3305, %v3303
        %v4369 = vpack.c.bf16 %v3306, %v3304
        %v4370 = vpack.c.bf16 %v3309, %v3307
        %v4371 = vpack.c.bf16 %v3310, %v3308
        %v4372 = vpack.c.bf16 %v3313, %v3311
        %v4373 = vpack.c.bf16 %v3314, %v3312
        %v4374 = vpack.c.bf16 %v3317, %v3315
        %v4375 = vpack.c.bf16 %v3318, %v3316
        %v4408 = vunpack.c.l.b16 %v4312
        %v4409 = vunpack.c.h.b16 %v4312
        %v4410 = vunpack.c.l.b16 %v4313
        %v4411 = vunpack.c.h.b16 %v4313
        %v4412 = vunpack.c.l.b16 %v4314
        %v4413 = vunpack.c.h.b16 %v4314
        %v4414 = vunpack.c.l.b16 %v4315
        %v4415 = vunpack.c.h.b16 %v4315
        %v4416 = vunpack.c.l.b16 %v4316
        %v4417 = vunpack.c.h.b16 %v4316
        %v4418 = vunpack.c.l.b16 %v4317
        %v4419 = vunpack.c.h.b16 %v4317
        %v4420 = vunpack.c.l.b16 %v4318
        %v4421 = vunpack.c.h.b16 %v4318
        %v4422 = vunpack.c.l.b16 %v4319
        %v4423 = vunpack.c.h.b16 %v4319
        %v4424 = vunpack.c.l.b16 %v4320
        %v4425 = vunpack.c.h.b16 %v4320
        %v4426 = vunpack.c.l.b16 %v4321
        %v4427 = vunpack.c.h.b16 %v4321
        %v4428 = vunpack.c.l.b16 %v4322
        %v4429 = vunpack.c.h.b16 %v4322
        %v4430 = vunpack.c.l.b16 %v4323
        %v4431 = vunpack.c.h.b16 %v4323
        %v4432 = vunpack.c.l.b16 %v4324
        %v4433 = vunpack.c.h.b16 %v4324
        %v4434 = vunpack.c.l.b16 %v4325
        %v4435 = vunpack.c.h.b16 %v4325
        %v4436 = vunpack.c.l.b16 %v4326
        %v4437 = vunpack.c.h.b16 %v4326
        %v4438 = vunpack.c.l.b16 %v4327
        %v4439 = vunpack.c.h.b16 %v4327
        %v4440 = vunpack.c.l.b16 %v4328
        %v4441 = vunpack.c.h.b16 %v4328
        %v4442 = vunpack.c.l.b16 %v4329
        %v4443 = vunpack.c.h.b16 %v4329
        %v4444 = vunpack.c.l.b16 %v4330
        %v4445 = vunpack.c.h.b16 %v4330
        %v4446 = vunpack.c.l.b16 %v4331
        %v4447 = vunpack.c.h.b16 %v4331
        %v4448 = vunpack.c.l.b16 %v4332
        %v4449 = vunpack.c.h.b16 %v4332
        %v4450 = vunpack.c.l.b16 %v4333
        %v4451 = vunpack.c.h.b16 %v4333
        %v4452 = vunpack.c.l.b16 %v4334
        %v4453 = vunpack.c.h.b16 %v4334
        %v4454 = vunpack.c.l.b16 %v4335
        %v4455 = vunpack.c.h.b16 %v4335
        %v4456 = vunpack.c.l.b16 %v4336
        %v4457 = vunpack.c.h.b16 %v4336
        %v4458 = vunpack.c.l.b16 %v4337
        %v4459 = vunpack.c.h.b16 %v4337
        %v4460 = vunpack.c.l.b16 %v4338
        %v4461 = vunpack.c.h.b16 %v4338
        %v4462 = vunpack.c.l.b16 %v4339
        %v4463 = vunpack.c.h.b16 %v4339
        %v4464 = vunpack.c.l.b16 %v4340
        %v4465 = vunpack.c.h.b16 %v4340
        %v4466 = vunpack.c.l.b16 %v4341
        %v4467 = vunpack.c.h.b16 %v4341
        %v4468 = vunpack.c.l.b16 %v4342
        %v4469 = vunpack.c.h.b16 %v4342
        %v4470 = vunpack.c.l.b16 %v4343
        %v4471 = vunpack.c.h.b16 %v4343
        %v4472 = vpack.c.b16 %v4410, %v4408
        %v4473 = vpack.c.b16 %v4411, %v4409
        %v4474 = vpack.c.b16 %v4414, %v4412
        %v4475 = vpack.c.b16 %v4415, %v4413
        %v4476 = vpack.c.b16 %v4418, %v4416
        %v4477 = vpack.c.b16 %v4419, %v4417
        %v4478 = vpack.c.b16 %v4422, %v4420
        %v4479 = vpack.c.b16 %v4423, %v4421
        %v4480 = vpack.c.b16 %v4426, %v4424
        %v4481 = vpack.c.b16 %v4427, %v4425
        %v4482 = vpack.c.b16 %v4430, %v4428
        %v4483 = vpack.c.b16 %v4431, %v4429
        %v4484 = vpack.c.b16 %v4434, %v4432
        %v4485 = vpack.c.b16 %v4435, %v4433
        %v4486 = vpack.c.b16 %v4438, %v4436
        %v4487 = vpack.c.b16 %v4439, %v4437
        %v4488 = vpack.c.b16 %v4442, %v4440
        %v4489 = vpack.c.b16 %v4443, %v4441
        %v4490 = vpack.c.b16 %v4446, %v4444
        %v4491 = vpack.c.b16 %v4447, %v4445
        %v4492 = vpack.c.b16 %v4450, %v4448
        %v4493 = vpack.c.b16 %v4451, %v4449
        %v4494 = vpack.c.b16 %v4454, %v4452
        %v4495 = vpack.c.b16 %v4455, %v4453
        %v4496 = vpack.c.b16 %v4458, %v4456
        %v4497 = vpack.c.b16 %v4459, %v4457
        %v4498 = vpack.c.b16 %v4462, %v4460
        %v4499 = vpack.c.b16 %v4463, %v4461
        %v4500 = vpack.c.b16 %v4466, %v4464
        %v4501 = vpack.c.b16 %v4467, %v4465
        %v4502 = vpack.c.b16 %v4470, %v4468
        %v4503 = vpack.c.b16 %v4471, %v4469
        %4536 = vmatprep.subr.bf16.mxu0 %v4345
        %4537 = vmatpush1.bf16.msra.mxu0 %v4344
        %4538 = vmatprep.subr.bf16.mxu0 %v4347
        %4539 = vmatpush1.bf16.msra.mxu0 %v4346
        %4540 = vmatprep.subr.bf16.mxu0 %v4349
        %4541 = vmatpush1.bf16.msra.mxu0 %v4348
        %4542 = vmatprep.subr.bf16.mxu0 %v4351
        %4543 = vmatpush1.bf16.msra.mxu0 %v4350
        %4544 = vmatprep.subr.bf16.mxu0 %v4353
        %4545 = vmatpush1.bf16.msra.mxu0 %v4352
        %4546 = vmatprep.subr.bf16.mxu0 %v4355
        %4547 = vmatpush1.bf16.msra.mxu0 %v4354
        %4548 = vmatprep.subr.bf16.mxu0 %v4357
        %4549 = vmatpush1.bf16.msra.mxu0 %v4356
        %4550 = vmatprep.subr.bf16.mxu0 %v4359
        %4551 = vmatpush1.bf16.msra.mxu0 %v4358
        %4552 = vmatprep.subr.bf16.mxu0 %v4361
        %4553 = vmatpush1.bf16.msra.mxu0 %v4360
        %4554 = vmatprep.subr.bf16.mxu0 %v4363
        %4555 = vmatpush1.bf16.msra.mxu0 %v4362
        %4556 = vmatprep.subr.bf16.mxu0 %v4365
        %4557 = vmatpush1.bf16.msra.mxu0 %v4364
        %4558 = vmatprep.subr.bf16.mxu0 %v4367
        %4559 = vmatpush1.bf16.msra.mxu0 %v4366
        %4560 = vmatprep.subr.bf16.mxu0 %v4369
        %4561 = vmatpush1.bf16.msra.mxu0 %v4368
        %4562 = vmatprep.subr.bf16.mxu0 %v4371
        %4563 = vmatpush1.bf16.msra.mxu0 %v4370
        %4564 = vmatprep.subr.bf16.mxu0 %v4373
        %4565 = vmatpush1.bf16.msra.mxu0 %v4372
        %4566 = vmatprep.subr.bf16.mxu0 %v4375
        %4567 = vmatpush1.bf16.msra.mxu0 %v4374
        %4568 = vmatprep.mubr.bf16.mxu0 %v4473
        %4569 = vmatmul.mubr.bf16.gmra.mrb[0].mxu0 %v4472
        %v4570 = vpop.f32.mrb[0].mxu0
        %v4571 = vadd.f32 0.0, %v4570
        %v4572 = vpop.f32.mrb[0].mxu0
        %v4573 = vadd.f32 0.0, %v4572
        %v4574 = vpop.f32.mrb[0].mxu0
        %v4575 = vadd.f32 0.0, %v4574
        %v4576 = vpop.f32.mrb[0].mxu0
        %v4577 = vadd.f32 0.0, %v4576
        %4578 = vmatprep.mubr.bf16.mxu0 %v4475
        %4579 = vmatmul.mubr.bf16.gmra.mrb[0].mxu0 %v4474
        %v4580 = vpop.f32.mrb[0].mxu0
        %v4581 = vadd.f32 0.0, %v4580
        %v4582 = vpop.f32.mrb[0].mxu0
        %v4583 = vadd.f32 0.0, %v4582
        %v4584 = vpop.f32.mrb[0].mxu0
        %v4585 = vadd.f32 0.0, %v4584
        %v4586 = vpop.f32.mrb[0].mxu0
        %v4587 = vadd.f32 0.0, %v4586
        %4588 = vmatprep.mubr.bf16.mxu0 %v4477
        %4589 = vmatmul.mubr.bf16.gmra.mrb[0].mxu0 %v4476
        %v4590 = vpop.f32.mrb[0].mxu0
        %v4591 = vadd.f32 0.0, %v4590
        %v4592 = vpop.f32.mrb[0].mxu0
        %v4593 = vadd.f32 0.0, %v4592
        %v4594 = vpop.f32.mrb[0].mxu0
        %v4595 = vadd.f32 0.0, %v4594
        %v4596 = vpop.f32.mrb[0].mxu0
        %v4597 = vadd.f32 0.0, %v4596
        %4598 = vmatprep.mubr.bf16.mxu0 %v4479
        %4599 = vmatmul.mubr.bf16.gmra.mrb[0].mxu0 %v4478
        %v4600 = vpop.f32.mrb[0].mxu0
        %v4601 = vadd.f32 0.0, %v4600
        %v4602 = vpop.f32.mrb[0].mxu0
        %v4603 = vadd.f32 0.0, %v4602
        %v4604 = vpop.f32.mrb[0].mxu0
        %v4605 = vadd.f32 0.0, %v4604
        %v4606 = vpop.f32.mrb[0].mxu0
        %v4607 = vadd.f32 0.0, %v4606
        %4608 = vmatprep.mubr.bf16.mxu0 %v4481
        %4609 = vmatmul.mubr.bf16.gmra.mrb[0].mxu0 %v4480
        %v4610 = vpop.f32.mrb[0].mxu0
        %v4611 = vadd.f32 0.0, %v4610
        %v4612 = vpop.f32.mrb[0].mxu0
        %v4613 = vadd.f32 0.0, %v4612
        %v4614 = vpop.f32.mrb[0].mxu0
        %v4615 = vadd.f32 0.0, %v4614
        %v4616 = vpop.f32.mrb[0].mxu0
        %v4617 = vadd.f32 0.0, %v4616
        %4618 = vmatprep.mubr.bf16.mxu0 %v4483
        %4619 = vmatmul.mubr.bf16.gmra.mrb[0].mxu0 %v4482
        %v4620 = vpop.f32.mrb[0].mxu0
        %v4621 = vadd.f32 0.0, %v4620
        %v4622 = vpop.f32.mrb[0].mxu0
        %v4623 = vadd.f32 0.0, %v4622
        %v4624 = vpop.f32.mrb[0].mxu0
        %v4625 = vadd.f32 0.0, %v4624
        %v4626 = vpop.f32.mrb[0].mxu0
        %v4627 = vadd.f32 0.0, %v4626
        %4628 = vmatprep.mubr.bf16.mxu0 %v4485
        %4629 = vmatmul.mubr.bf16.gmra.mrb[0].mxu0 %v4484
        %v4630 = vpop.f32.mrb[0].mxu0
        %v4631 = vadd.f32 0.0, %v4630
        %v4632 = vpop.f32.mrb[0].mxu0
        %v4633 = vadd.f32 0.0, %v4632
        %v4634 = vpop.f32.mrb[0].mxu0
        %v4635 = vadd.f32 0.0, %v4634
        %v4636 = vpop.f32.mrb[0].mxu0
        %v4637 = vadd.f32 0.0, %v4636
        %4638 = vmatprep.mubr.bf16.mxu0 %v4487
        %4639 = vmatmul.mubr.bf16.gmra.mrb[0].mxu0 %v4486
        %v4640 = vpop.f32.mrb[0].mxu0
        %v4641 = vadd.f32 0.0, %v4640
        %v4642 = vpop.f32.mrb[0].mxu0
        %v4643 = vadd.f32 0.0, %v4642
        %v4644 = vpop.f32.mrb[0].mxu0
        %v4645 = vadd.f32 0.0, %v4644
        %v4646 = vpop.f32.mrb[0].mxu0
        %v4647 = vadd.f32 0.0, %v4646
        %4648 = vmatprep.mubr.bf16.mxu0 %v4489
        %4649 = vmatmul.mubr.bf16.gmra.mrb[0].mxu0 %v4488
        %v4650 = vpop.f32.mrb[0].mxu0
        %v4651 = vadd.f32 0.0, %v4650
        %v4652 = vpop.f32.mrb[0].mxu0
        %v4653 = vadd.f32 0.0, %v4652
        %v4654 = vpop.f32.mrb[0].mxu0
        %v4655 = vadd.f32 0.0, %v4654
        %v4656 = vpop.f32.mrb[0].mxu0
        %v4657 = vadd.f32 0.0, %v4656
        %4658 = vmatprep.mubr.bf16.mxu0 %v4491
        %4659 = vmatmul.mubr.bf16.gmra.mrb[0].mxu0 %v4490
        %v4660 = vpop.f32.mrb[0].mxu0
        %v4661 = vadd.f32 0.0, %v4660
        %v4662 = vpop.f32.mrb[0].mxu0
        %v4663 = vadd.f32 0.0, %v4662
        %v4664 = vpop.f32.mrb[0].mxu0
        %v4665 = vadd.f32 0.0, %v4664
        %v4666 = vpop.f32.mrb[0].mxu0
        %v4667 = vadd.f32 0.0, %v4666
        %4668 = vmatprep.mubr.bf16.mxu0 %v4493
        %4669 = vmatmul.mubr.bf16.gmra.mrb[0].mxu0 %v4492
        %v4670 = vpop.f32.mrb[0].mxu0
        %v4671 = vadd.f32 0.0, %v4670
        %v4672 = vpop.f32.mrb[0].mxu0
        %v4673 = vadd.f32 0.0, %v4672
        %v4674 = vpop.f32.mrb[0].mxu0
        %v4675 = vadd.f32 0.0, %v4674
        %v4676 = vpop.f32.mrb[0].mxu0
        %v4677 = vadd.f32 0.0, %v4676
        %4678 = vmatprep.mubr.bf16.mxu0 %v4495
        %4679 = vmatmul.mubr.bf16.gmra.mrb[0].mxu0 %v4494
        %v4680 = vpop.f32.mrb[0].mxu0
        %v4681 = vadd.f32 0.0, %v4680
        %v4682 = vpop.f32.mrb[0].mxu0
        %v4683 = vadd.f32 0.0, %v4682
        %v4684 = vpop.f32.mrb[0].mxu0
        %v4685 = vadd.f32 0.0, %v4684
        %v4686 = vpop.f32.mrb[0].mxu0
        %v4687 = vadd.f32 0.0, %v4686
        %4688 = vmatprep.mubr.bf16.mxu0 %v4497
        %4689 = vmatmul.mubr.bf16.gmra.mrb[0].mxu0 %v4496
        %v4690 = vpop.f32.mrb[0].mxu0
        %v4691 = vadd.f32 0.0, %v4690
        %v4692 = vpop.f32.mrb[0].mxu0
        %v4693 = vadd.f32 0.0, %v4692
        %v4694 = vpop.f32.mrb[0].mxu0
        %v4695 = vadd.f32 0.0, %v4694
        %v4696 = vpop.f32.mrb[0].mxu0
        %v4697 = vadd.f32 0.0, %v4696
        %4698 = vmatprep.mubr.bf16.mxu0 %v4499
        %4699 = vmatmul.mubr.bf16.gmra.mrb[0].mxu0 %v4498
        %v4700 = vpop.f32.mrb[0].mxu0
        %v4701 = vadd.f32 0.0, %v4700
        %v4702 = vpop.f32.mrb[0].mxu0
        %v4703 = vadd.f32 0.0, %v4702
        %v4704 = vpop.f32.mrb[0].mxu0
        %v4705 = vadd.f32 0.0, %v4704
        %v4706 = vpop.f32.mrb[0].mxu0
        %v4707 = vadd.f32 0.0, %v4706
        %4708 = vmatprep.mubr.bf16.mxu0 %v4501
        %4709 = vmatmul.mubr.bf16.gmra.mrb[0].mxu0 %v4500
        %v4710 = vpop.f32.mrb[0].mxu0
        %v4711 = vadd.f32 0.0, %v4710
        %v4712 = vpop.f32.mrb[0].mxu0
        %v4713 = vadd.f32 0.0, %v4712
        %v4714 = vpop.f32.mrb[0].mxu0
        %v4715 = vadd.f32 0.0, %v4714
        %v4716 = vpop.f32.mrb[0].mxu0
        %v4717 = vadd.f32 0.0, %v4716
        %4718 = vmatprep.mubr.bf16.mxu0 %v4503
        %4719 = vmatmul.mubr.bf16.gmra.mrb[0].mxu0 %v4502
        %v4720 = vpop.f32.mrb[0].mxu0
        %v4721 = vadd.f32 0.0, %v4720
        %v4722 = vpop.f32.mrb[0].mxu0
        %v4723 = vadd.f32 0.0, %v4722
        %v4724 = vpop.f32.mrb[0].mxu0
        %v4725 = vadd.f32 0.0, %v4724
        %v4726 = vpop.f32.mrb[0].mxu0
        %v4727 = vadd.f32 0.0, %v4726
        %4728 = vdwg.mxu0
        %v4729 = vsub.f32 %v4571, %v1781
        %v4730 = vsub.f32 %v4573, %v1782
        %v4731 = vsub.f32 %v4575, %v1783
        %v4732 = vsub.f32 %v4577, %v1784
        %v4733 = vsub.f32 %v4581, %v1785
        %v4734 = vsub.f32 %v4583, %v1786
        %v4735 = vsub.f32 %v4585, %v1787
        %v4736 = vsub.f32 %v4587, %v1788
        %v4737 = vsub.f32 %v4591, %v1789
        %v4738 = vsub.f32 %v4593, %v1790
        %v4739 = vsub.f32 %v4595, %v1791
        %v4740 = vsub.f32 %v4597, %v1792
        %v4741 = vsub.f32 %v4601, %v1793
        %v4742 = vsub.f32 %v4603, %v1794
        %v4743 = vsub.f32 %v4605, %v1795
        %v4744 = vsub.f32 %v4607, %v1796
        %v4745 = vsub.f32 %v4611, %v1797
        %v4746 = vsub.f32 %v4613, %v1798
        %v4747 = vsub.f32 %v4615, %v1799
        %v4748 = vsub.f32 %v4617, %v1800
        %v4749 = vsub.f32 %v4621, %v1801
        %v4750 = vsub.f32 %v4623, %v1802
        %v4751 = vsub.f32 %v4625, %v1803
        %v4752 = vsub.f32 %v4627, %v1804
        %v4753 = vsub.f32 %v4631, %v1805
        %v4754 = vsub.f32 %v4633, %v1806
        %v4755 = vsub.f32 %v4635, %v1807
        %v4756 = vsub.f32 %v4637, %v1808
        %v4757 = vsub.f32 %v4641, %v1809
        %v4758 = vsub.f32 %v4643, %v1810
        %v4759 = vsub.f32 %v4645, %v1811
        %v4760 = vsub.f32 %v4647, %v1812
        %v4761 = vsub.f32 %v4651, %v1813
        %v4762 = vsub.f32 %v4653, %v1814
        %v4763 = vsub.f32 %v4655, %v1815
        %v4764 = vsub.f32 %v4657, %v1816
        %v4765 = vsub.f32 %v4661, %v1817
        %v4766 = vsub.f32 %v4663, %v1818
        %v4767 = vsub.f32 %v4665, %v1819
        %v4768 = vsub.f32 %v4667, %v1820
        %v4769 = vsub.f32 %v4671, %v1821
        %v4770 = vsub.f32 %v4673, %v1822
        %v4771 = vsub.f32 %v4675, %v1823
        %v4772 = vsub.f32 %v4677, %v1824
        %v4773 = vsub.f32 %v4681, %v1825
        %v4774 = vsub.f32 %v4683, %v1826
        %v4775 = vsub.f32 %v4685, %v1827
        %v4776 = vsub.f32 %v4687, %v1828
        %v4777 = vsub.f32 %v4691, %v1829
        %v4778 = vsub.f32 %v4693, %v1830
        %v4779 = vsub.f32 %v4695, %v1831
        %v4780 = vsub.f32 %v4697, %v1832
        %v4781 = vsub.f32 %v4701, %v1833
        %v4782 = vsub.f32 %v4703, %v1834
        %v4783 = vsub.f32 %v4705, %v1835
        %v4784 = vsub.f32 %v4707, %v1836
        %v4785 = vsub.f32 %v4711, %v1837
        %v4786 = vsub.f32 %v4713, %v1838
        %v4787 = vsub.f32 %v4715, %v1839
        %v4788 = vsub.f32 %v4717, %v1840
        %v4789 = vsub.f32 %v4721, %v1841
        %v4790 = vsub.f32 %v4723, %v1842
        %v4791 = vsub.f32 %v4725, %v1843
        %v4792 = vsub.f32 %v4727, %v1844
        %v4793 = vld [vmem:[%s176 + $0x10] sm:$0xff]
        %v4794 = vld [vmem:[%s176 + $0x18] sm:$0xff]
        %v4795 = vld [vmem:[%s176 + $0x30] sm:$0xff]
        %v4796 = vld [vmem:[%s176 + $0x38] sm:$0xff]
        %v4797 = vld [vmem:[%s176 + $0x50] sm:$0xff]
        %v4798 = vld [vmem:[%s176 + $0x58] sm:$0xff]
        %v4799 = vld [vmem:[%s176 + $0x70] sm:$0xff]
        %v4800 = vld [vmem:[%s176 + $0x78] sm:$0xff]
        %v4801 = vld [vmem:[%s176 + $0x90] sm:$0xff]
        %v4802 = vld [vmem:[%s176 + $0x98] sm:$0xff]
        %v4803 = vld [vmem:[%s176 + $0xb0] sm:$0xff]
        %v4804 = vld [vmem:[%s176 + $0xb8] sm:$0xff]
        %v4805 = vld [vmem:[%s176 + $0xd0] sm:$0xff]
        %v4806 = vld [vmem:[%s176 + $0xd8] sm:$0xff]
        %v4807 = vld [vmem:[%s176 + $0xf0] sm:$0xff]
        %v4808 = vld [vmem:[%s176 + $0xf8] sm:$0xff]
        %v4809 = vld [vmem:[%s176 + $0x110] sm:$0xff]
        %v4810 = vld [vmem:[%s176 + $0x118] sm:$0xff]
        %v4811 = vld [vmem:[%s176 + $0x130] sm:$0xff]
        %v4812 = vld [vmem:[%s176 + $0x138] sm:$0xff]
        %v4813 = vld [vmem:[%s176 + $0x150] sm:$0xff]
        %v4814 = vld [vmem:[%s176 + $0x158] sm:$0xff]
        %v4815 = vld [vmem:[%s176 + $0x170] sm:$0xff]
        %v4816 = vld [vmem:[%s176 + $0x178] sm:$0xff]
        %v4817 = vld [vmem:[%s176 + $0x190] sm:$0xff]
        %v4818 = vld [vmem:[%s176 + $0x198] sm:$0xff]
        %v4819 = vld [vmem:[%s176 + $0x1b0] sm:$0xff]
        %v4820 = vld [vmem:[%s176 + $0x1b8] sm:$0xff]
        %v4821 = vld [vmem:[%s176 + $0x1d0] sm:$0xff]
        %v4822 = vld [vmem:[%s176 + $0x1d8] sm:$0xff]
        %v4823 = vld [vmem:[%s176 + $0x1f0] sm:$0xff]
        %v4824 = vld [vmem:[%s176 + $0x1f8] sm:$0xff]
        %v4825 = vld [vmem:[%s176 + $0x210] sm:$0xff]
        %v4826 = vld [vmem:[%s176 + $0x218] sm:$0xff]
        %v4827 = vld [vmem:[%s176 + $0x230] sm:$0xff]
        %v4828 = vld [vmem:[%s176 + $0x238] sm:$0xff]
        %v4829 = vld [vmem:[%s176 + $0x250] sm:$0xff]
        %v4830 = vld [vmem:[%s176 + $0x258] sm:$0xff]
        %v4831 = vld [vmem:[%s176 + $0x270] sm:$0xff]
        %v4832 = vld [vmem:[%s176 + $0x278] sm:$0xff]
        %v4833 = vld [vmem:[%s176 + $0x290] sm:$0xff]
        %v4834 = vld [vmem:[%s176 + $0x298] sm:$0xff]
        %v4835 = vld [vmem:[%s176 + $0x2b0] sm:$0xff]
        %v4836 = vld [vmem:[%s176 + $0x2b8] sm:$0xff]
        %v4837 = vld [vmem:[%s176 + $0x2d0] sm:$0xff]
        %v4838 = vld [vmem:[%s176 + $0x2d8] sm:$0xff]
        %v4839 = vld [vmem:[%s176 + $0x2f0] sm:$0xff]
        %v4840 = vld [vmem:[%s176 + $0x2f8] sm:$0xff]
        %v4841 = vld [vmem:[%s176 + $0x310] sm:$0xff]
        %v4842 = vld [vmem:[%s176 + $0x318] sm:$0xff]
        %v4843 = vld [vmem:[%s176 + $0x330] sm:$0xff]
        %v4844 = vld [vmem:[%s176 + $0x338] sm:$0xff]
        %v4845 = vld [vmem:[%s176 + $0x350] sm:$0xff]
        %v4846 = vld [vmem:[%s176 + $0x358] sm:$0xff]
        %v4847 = vld [vmem:[%s176 + $0x370] sm:$0xff]
        %v4848 = vld [vmem:[%s176 + $0x378] sm:$0xff]
        %v4849 = vld [vmem:[%s176 + $0x390] sm:$0xff]
        %v4850 = vld [vmem:[%s176 + $0x398] sm:$0xff]
        %v4851 = vld [vmem:[%s176 + $0x3b0] sm:$0xff]
        %v4852 = vld [vmem:[%s176 + $0x3b8] sm:$0xff]
        %v4853 = vld [vmem:[%s176 + $0x3d0] sm:$0xff]
        %v4854 = vld [vmem:[%s176 + $0x3d8] sm:$0xff]
        %v4855 = vld [vmem:[%s176 + $0x3f0] sm:$0xff]
        %v4856 = vld [vmem:[%s176 + $0x3f8] sm:$0xff]
        %v4857 = vmul.f32 %v4729, 0.04433685
        %v4858 = vmul.f32 %v4730, 0.04433685
        %v4859 = vmul.f32 %v4731, 0.04433685
        %v4860 = vmul.f32 %v4732, 0.04433685
        %v4861 = vmul.f32 %v4733, 0.04433685
        %v4862 = vmul.f32 %v4734, 0.04433685
        %v4863 = vmul.f32 %v4735, 0.04433685
        %v4864 = vmul.f32 %v4736, 0.04433685
        %v4865 = vmul.f32 %v4737, 0.04433685
        %v4866 = vmul.f32 %v4738, 0.04433685
        %v4867 = vmul.f32 %v4739, 0.04433685
        %v4868 = vmul.f32 %v4740, 0.04433685
        %v4869 = vmul.f32 %v4741, 0.04433685
        %v4870 = vmul.f32 %v4742, 0.04433685
        %v4871 = vmul.f32 %v4743, 0.04433685
        %v4872 = vmul.f32 %v4744, 0.04433685
        %v4873 = vmul.f32 %v4745, 0.04433685
        %v4874 = vmul.f32 %v4746, 0.04433685
        %v4875 = vmul.f32 %v4747, 0.04433685
        %v4876 = vmul.f32 %v4748, 0.04433685
        %v4877 = vmul.f32 %v4749, 0.04433685
        %v4878 = vmul.f32 %v4750, 0.04433685
        %v4879 = vmul.f32 %v4751, 0.04433685
        %v4880 = vmul.f32 %v4752, 0.04433685
        %v4881 = vmul.f32 %v4753, 0.04433685
        %v4882 = vmul.f32 %v4754, 0.04433685
        %v4883 = vmul.f32 %v4755, 0.04433685
        %v4884 = vmul.f32 %v4756, 0.04433685
        %v4885 = vmul.f32 %v4757, 0.04433685
        %v4886 = vmul.f32 %v4758, 0.04433685
        %v4887 = vmul.f32 %v4759, 0.04433685
        %v4888 = vmul.f32 %v4760, 0.04433685
        %v4889 = vmul.f32 %v4761, 0.04433685
        %v4890 = vmul.f32 %v4762, 0.04433685
        %v4891 = vmul.f32 %v4763, 0.04433685
        %v4892 = vmul.f32 %v4764, 0.04433685
        %v4893 = vmul.f32 %v4765, 0.04433685
        %v4894 = vmul.f32 %v4766, 0.04433685
        %v4895 = vmul.f32 %v4767, 0.04433685
        %v4896 = vmul.f32 %v4768, 0.04433685
        %v4897 = vmul.f32 %v4769, 0.04433685
        %v4898 = vmul.f32 %v4770, 0.04433685
        %v4899 = vmul.f32 %v4771, 0.04433685
        %v4900 = vmul.f32 %v4772, 0.04433685
        %v4901 = vmul.f32 %v4773, 0.04433685
        %v4902 = vmul.f32 %v4774, 0.04433685
        %v4903 = vmul.f32 %v4775, 0.04433685
        %v4904 = vmul.f32 %v4776, 0.04433685
        %v4905 = vmul.f32 %v4777, 0.04433685
        %v4906 = vmul.f32 %v4778, 0.04433685
        %v4907 = vmul.f32 %v4779, 0.04433685
        %v4908 = vmul.f32 %v4780, 0.04433685
        %v4909 = vmul.f32 %v4781, 0.04433685
        %v4910 = vmul.f32 %v4782, 0.04433685
        %v4911 = vmul.f32 %v4783, 0.04433685
        %v4912 = vmul.f32 %v4784, 0.04433685
        %v4913 = vmul.f32 %v4785, 0.04433685
        %v4914 = vmul.f32 %v4786, 0.04433685
        %v4915 = vmul.f32 %v4787, 0.04433685
        %v4916 = vmul.f32 %v4788, 0.04433685
        %v4917 = vmul.f32 %v4789, 0.04433685
        %v4918 = vmul.f32 %v4790, 0.04433685
        %v4919 = vmul.f32 %v4791, 0.04433685
        %v4920 = vmul.f32 %v4792, 0.04433685
        %v4921 = vadd.f32 %v4793, %v4857
        %v4922 = vadd.f32 %v4794, %v4858
        %v4923 = vadd.f32 %v4795, %v4859
        %v4924 = vadd.f32 %v4796, %v4860
        %v4925 = vadd.f32 %v4797, %v4861
        %v4926 = vadd.f32 %v4798, %v4862
        %v4927 = vadd.f32 %v4799, %v4863
        %v4928 = vadd.f32 %v4800, %v4864
        %v4929 = vadd.f32 %v4801, %v4865
        %v4930 = vadd.f32 %v4802, %v4866
        %v4931 = vadd.f32 %v4803, %v4867
        %v4932 = vadd.f32 %v4804, %v4868
        %v4933 = vadd.f32 %v4805, %v4869
        %v4934 = vadd.f32 %v4806, %v4870
        %v4935 = vadd.f32 %v4807, %v4871
        %v4936 = vadd.f32 %v4808, %v4872
        %v4937 = vadd.f32 %v4809, %v4873
        %v4938 = vadd.f32 %v4810, %v4874
        %v4939 = vadd.f32 %v4811, %v4875
        %v4940 = vadd.f32 %v4812, %v4876
        %v4941 = vadd.f32 %v4813, %v4877
        %v4942 = vadd.f32 %v4814, %v4878
        %v4943 = vadd.f32 %v4815, %v4879
        %v4944 = vadd.f32 %v4816, %v4880
        %v4945 = vadd.f32 %v4817, %v4881
        %v4946 = vadd.f32 %v4818, %v4882
        %v4947 = vadd.f32 %v4819, %v4883
        %v4948 = vadd.f32 %v4820, %v4884
        %v4949 = vadd.f32 %v4821, %v4885
        %v4950 = vadd.f32 %v4822, %v4886
        %v4951 = vadd.f32 %v4823, %v4887
        %v4952 = vadd.f32 %v4824, %v4888
        %v4953 = vadd.f32 %v4825, %v4889
        %v4954 = vadd.f32 %v4826, %v4890
        %v4955 = vadd.f32 %v4827, %v4891
        %v4956 = vadd.f32 %v4828, %v4892
        %v4957 = vadd.f32 %v4829, %v4893
        %v4958 = vadd.f32 %v4830, %v4894
        %v4959 = vadd.f32 %v4831, %v4895
        %v4960 = vadd.f32 %v4832, %v4896
        %v4961 = vadd.f32 %v4833, %v4897
        %v4962 = vadd.f32 %v4834, %v4898
        %v4963 = vadd.f32 %v4835, %v4899
        %v4964 = vadd.f32 %v4836, %v4900
        %v4965 = vadd.f32 %v4837, %v4901
        %v4966 = vadd.f32 %v4838, %v4902
        %v4967 = vadd.f32 %v4839, %v4903
        %v4968 = vadd.f32 %v4840, %v4904
        %v4969 = vadd.f32 %v4841, %v4905
        %v4970 = vadd.f32 %v4842, %v4906
        %v4971 = vadd.f32 %v4843, %v4907
        %v4972 = vadd.f32 %v4844, %v4908
        %v4973 = vadd.f32 %v4845, %v4909
        %v4974 = vadd.f32 %v4846, %v4910
        %v4975 = vadd.f32 %v4847, %v4911
        %v4976 = vadd.f32 %v4848, %v4912
        %v4977 = vadd.f32 %v4849, %v4913
        %v4978 = vadd.f32 %v4850, %v4914
        %v4979 = vadd.f32 %v4851, %v4915
        %v4980 = vadd.f32 %v4852, %v4916
        %v4981 = vadd.f32 %v4853, %v4917
        %v4982 = vadd.f32 %v4854, %v4918
        %v4983 = vadd.f32 %v4855, %v4919
        %v4984 = vadd.f32 %v4856, %v4920
        %4985 = vst [vmem:[%s176 + $0x10] sm:$0xff] %v4921
        %4986 = vst [vmem:[%s176 + $0x18] sm:$0xff] %v4922
        %4987 = vst [vmem:[%s176 + $0x30] sm:$0xff] %v4923
        %4988 = vst [vmem:[%s176 + $0x38] sm:$0xff] %v4924
        %4989 = vst [vmem:[%s176 + $0x50] sm:$0xff] %v4925
        %4990 = vst [vmem:[%s176 + $0x58] sm:$0xff] %v4926
        %4991 = vst [vmem:[%s176 + $0x70] sm:$0xff] %v4927
        %4992 = vst [vmem:[%s176 + $0x78] sm:$0xff] %v4928
        %4993 = vst [vmem:[%s176 + $0x90] sm:$0xff] %v4929
        %4994 = vst [vmem:[%s176 + $0x98] sm:$0xff] %v4930
        %4995 = vst [vmem:[%s176 + $0xb0] sm:$0xff] %v4931
        %4996 = vst [vmem:[%s176 + $0xb8] sm:$0xff] %v4932
        %4997 = vst [vmem:[%s176 + $0xd0] sm:$0xff] %v4933
        %4998 = vst [vmem:[%s176 + $0xd8] sm:$0xff] %v4934
        %4999 = vst [vmem:[%s176 + $0xf0] sm:$0xff] %v4935
        %5000 = vst [vmem:[%s176 + $0xf8] sm:$0xff] %v4936
        %5001 = vst [vmem:[%s176 + $0x110] sm:$0xff] %v4937
        %5002 = vst [vmem:[%s176 + $0x118] sm:$0xff] %v4938
        %5003 = vst [vmem:[%s176 + $0x130] sm:$0xff] %v4939
        %5004 = vst [vmem:[%s176 + $0x138] sm:$0xff] %v4940
        %5005 = vst [vmem:[%s176 + $0x150] sm:$0xff] %v4941
        %5006 = vst [vmem:[%s176 + $0x158] sm:$0xff] %v4942
        %5007 = vst [vmem:[%s176 + $0x170] sm:$0xff] %v4943
        %5008 = vst [vmem:[%s176 + $0x178] sm:$0xff] %v4944
        %5009 = vst [vmem:[%s176 + $0x190] sm:$0xff] %v4945
        %5010 = vst [vmem:[%s176 + $0x198] sm:$0xff] %v4946
        %5011 = vst [vmem:[%s176 + $0x1b0] sm:$0xff] %v4947
        %5012 = vst [vmem:[%s176 + $0x1b8] sm:$0xff] %v4948
        %5013 = vst [vmem:[%s176 + $0x1d0] sm:$0xff] %v4949
        %5014 = vst [vmem:[%s176 + $0x1d8] sm:$0xff] %v4950
        %5015 = vst [vmem:[%s176 + $0x1f0] sm:$0xff] %v4951
        %5016 = vst [vmem:[%s176 + $0x1f8] sm:$0xff] %v4952
        %5017 = vst [vmem:[%s176 + $0x210] sm:$0xff] %v4953
        %5018 = vst [vmem:[%s176 + $0x218] sm:$0xff] %v4954
        %5019 = vst [vmem:[%s176 + $0x230] sm:$0xff] %v4955
        %5020 = vst [vmem:[%s176 + $0x238] sm:$0xff] %v4956
        %5021 = vst [vmem:[%s176 + $0x250] sm:$0xff] %v4957
        %5022 = vst [vmem:[%s176 + $0x258] sm:$0xff] %v4958
        %5023 = vst [vmem:[%s176 + $0x270] sm:$0xff] %v4959
        %5024 = vst [vmem:[%s176 + $0x278] sm:$0xff] %v4960
        %5025 = vst [vmem:[%s176 + $0x290] sm:$0xff] %v4961
        %5026 = vst [vmem:[%s176 + $0x298] sm:$0xff] %v4962
        %5027 = vst [vmem:[%s176 + $0x2b0] sm:$0xff] %v4963
        %5028 = vst [vmem:[%s176 + $0x2b8] sm:$0xff] %v4964
        %5029 = vst [vmem:[%s176 + $0x2d0] sm:$0xff] %v4965
        %5030 = vst [vmem:[%s176 + $0x2d8] sm:$0xff] %v4966
        %5031 = vst [vmem:[%s176 + $0x2f0] sm:$0xff] %v4967
        %5032 = vst [vmem:[%s176 + $0x2f8] sm:$0xff] %v4968
        %5033 = vst [vmem:[%s176 + $0x310] sm:$0xff] %v4969
        %5034 = vst [vmem:[%s176 + $0x318] sm:$0xff] %v4970
        %5035 = vst [vmem:[%s176 + $0x330] sm:$0xff] %v4971
        %5036 = vst [vmem:[%s176 + $0x338] sm:$0xff] %v4972
        %5037 = vst [vmem:[%s176 + $0x350] sm:$0xff] %v4973
        %5038 = vst [vmem:[%s176 + $0x358] sm:$0xff] %v4974
        %5039 = vst [vmem:[%s176 + $0x370] sm:$0xff] %v4975
        %5040 = vst [vmem:[%s176 + $0x378] sm:$0xff] %v4976
        %5041 = vst [vmem:[%s176 + $0x390] sm:$0xff] %v4977
        %5042 = vst [vmem:[%s176 + $0x398] sm:$0xff] %v4978
        %5043 = vst [vmem:[%s176 + $0x3b0] sm:$0xff] %v4979
        %5044 = vst [vmem:[%s176 + $0x3b8] sm:$0xff] %v4980
        %5045 = vst [vmem:[%s176 + $0x3d0] sm:$0xff] %v4981
        %5046 = vst [vmem:[%s176 + $0x3d8] sm:$0xff] %v4982
        %5047 = vst [vmem:[%s176 + $0x3f0] sm:$0xff] %v4983
        %5048 = vst [vmem:[%s176 + $0x3f8] sm:$0xff] %v4984
        %v5049 = vld [vmem:[#allocation2] sm:$0xff]
        %v5050 = vld [vmem:[#allocation2 + $0x8] sm:$0xff]
        %v5051 = vld [vmem:[#allocation2 + $0x10] sm:$0xff]
        %v5052 = vld [vmem:[#allocation2 + $0x18] sm:$0xff]
        %v5053 = vld [vmem:[#allocation2 + $0x20] sm:$0xff]
        %v5054 = vld [vmem:[#allocation2 + $0x28] sm:$0xff]
        %v5055 = vld [vmem:[#allocation2 + $0x30] sm:$0xff]
        %v5056 = vld [vmem:[#allocation2 + $0x38] sm:$0xff]
        %v5057 = vld [vmem:[#allocation2 + $0x40] sm:$0xff]
        %v5058 = vld [vmem:[#allocation2 + $0x48] sm:$0xff]
        %v5059 = vld [vmem:[#allocation2 + $0x50] sm:$0xff]
        %v5060 = vld [vmem:[#allocation2 + $0x58] sm:$0xff]
        %v5061 = vld [vmem:[#allocation2 + $0x60] sm:$0xff]
        %v5062 = vld [vmem:[#allocation2 + $0x68] sm:$0xff]
        %v5063 = vld [vmem:[#allocation2 + $0x70] sm:$0xff]
        %v5064 = vld [vmem:[#allocation2 + $0x78] sm:$0xff]
        %v5065 = vld [vmem:[#allocation2 + $0x80] sm:$0xff]
        %v5066 = vld [vmem:[#allocation2 + $0x88] sm:$0xff]
        %v5067 = vld [vmem:[#allocation2 + $0x90] sm:$0xff]
        %v5068 = vld [vmem:[#allocation2 + $0x98] sm:$0xff]
        %v5069 = vld [vmem:[#allocation2 + $0xa0] sm:$0xff]
        %v5070 = vld [vmem:[#allocation2 + $0xa8] sm:$0xff]
        %v5071 = vld [vmem:[#allocation2 + $0xb0] sm:$0xff]
        %v5072 = vld [vmem:[#allocation2 + $0xb8] sm:$0xff]
        %v5073 = vld [vmem:[#allocation2 + $0xc0] sm:$0xff]
        %v5074 = vld [vmem:[#allocation2 + $0xc8] sm:$0xff]
        %v5075 = vld [vmem:[#allocation2 + $0xd0] sm:$0xff]
        %v5076 = vld [vmem:[#allocation2 + $0xd8] sm:$0xff]
        %v5077 = vld [vmem:[#allocation2 + $0xe0] sm:$0xff]
        %v5078 = vld [vmem:[#allocation2 + $0xe8] sm:$0xff]
        %v5079 = vld [vmem:[#allocation2 + $0xf0] sm:$0xff]
        %v5080 = vld [vmem:[#allocation2 + $0xf8] sm:$0xff]
        %v5081 = vpack.c.bf16 %v3994, %v3992
        %v5082 = vpack.c.bf16 %v3995, %v3993
        %v5083 = vpack.c.bf16 %v3998, %v3996
        %v5084 = vpack.c.bf16 %v3999, %v3997
        %v5085 = vpack.c.bf16 %v4002, %v4000
        %v5086 = vpack.c.bf16 %v4003, %v4001
        %v5087 = vpack.c.bf16 %v4006, %v4004
        %v5088 = vpack.c.bf16 %v4007, %v4005
        %v5089 = vpack.c.bf16 %v4010, %v4008
        %v5090 = vpack.c.bf16 %v4011, %v4009
        %v5091 = vpack.c.bf16 %v4014, %v4012
        %v5092 = vpack.c.bf16 %v4015, %v4013
        %v5093 = vpack.c.bf16 %v4018, %v4016
        %v5094 = vpack.c.bf16 %v4019, %v4017
        %v5095 = vpack.c.bf16 %v4022, %v4020
        %v5096 = vpack.c.bf16 %v4023, %v4021
        %v5097 = vpack.c.bf16 %v4026, %v4024
        %v5098 = vpack.c.bf16 %v4027, %v4025
        %v5099 = vpack.c.bf16 %v4030, %v4028
        %v5100 = vpack.c.bf16 %v4031, %v4029
        %v5101 = vpack.c.bf16 %v4034, %v4032
        %v5102 = vpack.c.bf16 %v4035, %v4033
        %v5103 = vpack.c.bf16 %v4038, %v4036
        %v5104 = vpack.c.bf16 %v4039, %v4037
        %v5105 = vpack.c.bf16 %v4042, %v4040
        %v5106 = vpack.c.bf16 %v4043, %v4041
        %v5107 = vpack.c.bf16 %v4046, %v4044
        %v5108 = vpack.c.bf16 %v4047, %v4045
        %v5109 = vpack.c.bf16 %v4050, %v4048
        %v5110 = vpack.c.bf16 %v4051, %v4049
        %v5111 = vpack.c.bf16 %v4054, %v4052
        %v5112 = vpack.c.bf16 %v4055, %v4053
        %v5145 = vunpack.c.l.b16 %v5049
        %v5146 = vunpack.c.h.b16 %v5049
        %v5147 = vunpack.c.l.b16 %v5050
        %v5148 = vunpack.c.h.b16 %v5050
        %v5149 = vunpack.c.l.b16 %v5051
        %v5150 = vunpack.c.h.b16 %v5051
        %v5151 = vunpack.c.l.b16 %v5052
        %v5152 = vunpack.c.h.b16 %v5052
        %v5153 = vunpack.c.l.b16 %v5053
        %v5154 = vunpack.c.h.b16 %v5053
        %v5155 = vunpack.c.l.b16 %v5054
        %v5156 = vunpack.c.h.b16 %v5054
        %v5157 = vunpack.c.l.b16 %v5055
        %v5158 = vunpack.c.h.b16 %v5055
        %v5159 = vunpack.c.l.b16 %v5056
        %v5160 = vunpack.c.h.b16 %v5056
        %v5161 = vunpack.c.l.b16 %v5057
        %v5162 = vunpack.c.h.b16 %v5057
        %v5163 = vunpack.c.l.b16 %v5058
        %v5164 = vunpack.c.h.b16 %v5058
        %v5165 = vunpack.c.l.b16 %v5059
        %v5166 = vunpack.c.h.b16 %v5059
        %v5167 = vunpack.c.l.b16 %v5060
        %v5168 = vunpack.c.h.b16 %v5060
        %v5169 = vunpack.c.l.b16 %v5061
        %v5170 = vunpack.c.h.b16 %v5061
        %v5171 = vunpack.c.l.b16 %v5062
        %v5172 = vunpack.c.h.b16 %v5062
        %v5173 = vunpack.c.l.b16 %v5063
        %v5174 = vunpack.c.h.b16 %v5063
        %v5175 = vunpack.c.l.b16 %v5064
        %v5176 = vunpack.c.h.b16 %v5064
        %v5177 = vunpack.c.l.b16 %v5065
        %v5178 = vunpack.c.h.b16 %v5065
        %v5179 = vunpack.c.l.b16 %v5066
        %v5180 = vunpack.c.h.b16 %v5066
        %v5181 = vunpack.c.l.b16 %v5067
        %v5182 = vunpack.c.h.b16 %v5067
        %v5183 = vunpack.c.l.b16 %v5068
        %v5184 = vunpack.c.h.b16 %v5068
        %v5185 = vunpack.c.l.b16 %v5069
        %v5186 = vunpack.c.h.b16 %v5069
        %v5187 = vunpack.c.l.b16 %v5070
        %v5188 = vunpack.c.h.b16 %v5070
        %v5189 = vunpack.c.l.b16 %v5071
        %v5190 = vunpack.c.h.b16 %v5071
        %v5191 = vunpack.c.l.b16 %v5072
        %v5192 = vunpack.c.h.b16 %v5072
        %v5193 = vunpack.c.l.b16 %v5073
        %v5194 = vunpack.c.h.b16 %v5073
        %v5195 = vunpack.c.l.b16 %v5074
        %v5196 = vunpack.c.h.b16 %v5074
        %v5197 = vunpack.c.l.b16 %v5075
        %v5198 = vunpack.c.h.b16 %v5075
        %v5199 = vunpack.c.l.b16 %v5076
        %v5200 = vunpack.c.h.b16 %v5076
        %v5201 = vunpack.c.l.b16 %v5077
        %v5202 = vunpack.c.h.b16 %v5077
        %v5203 = vunpack.c.l.b16 %v5078
        %v5204 = vunpack.c.h.b16 %v5078
        %v5205 = vunpack.c.l.b16 %v5079
        %v5206 = vunpack.c.h.b16 %v5079
        %v5207 = vunpack.c.l.b16 %v5080
        %v5208 = vunpack.c.h.b16 %v5080
        %v5209 = vpack.c.b16 %v5147, %v5145
        %v5210 = vpack.c.b16 %v5148, %v5146
        %v5211 = vpack.c.b16 %v5151, %v5149
        %v5212 = vpack.c.b16 %v5152, %v5150
        %v5213 = vpack.c.b16 %v5155, %v5153
        %v5214 = vpack.c.b16 %v5156, %v5154
        %v5215 = vpack.c.b16 %v5159, %v5157
        %v5216 = vpack.c.b16 %v5160, %v5158
        %v5217 = vpack.c.b16 %v5163, %v5161
        %v5218 = vpack.c.b16 %v5164, %v5162
        %v5219 = vpack.c.b16 %v5167, %v5165
        %v5220 = vpack.c.b16 %v5168, %v5166
        %v5221 = vpack.c.b16 %v5171, %v5169
        %v5222 = vpack.c.b16 %v5172, %v5170
        %v5223 = vpack.c.b16 %v5175, %v5173
        %v5224 = vpack.c.b16 %v5176, %v5174
        %v5225 = vpack.c.b16 %v5179, %v5177
        %v5226 = vpack.c.b16 %v5180, %v5178
        %v5227 = vpack.c.b16 %v5183, %v5181
        %v5228 = vpack.c.b16 %v5184, %v5182
        %v5229 = vpack.c.b16 %v5187, %v5185
        %v5230 = vpack.c.b16 %v5188, %v5186
        %v5231 = vpack.c.b16 %v5191, %v5189
        %v5232 = vpack.c.b16 %v5192, %v5190
        %v5233 = vpack.c.b16 %v5195, %v5193
        %v5234 = vpack.c.b16 %v5196, %v5194
        %v5235 = vpack.c.b16 %v5199, %v5197
        %v5236 = vpack.c.b16 %v5200, %v5198
        %v5237 = vpack.c.b16 %v5203, %v5201
        %v5238 = vpack.c.b16 %v5204, %v5202
        %v5239 = vpack.c.b16 %v5207, %v5205
        %v5240 = vpack.c.b16 %v5208, %v5206
        %5273 = vmatprep.subr.bf16.mxu0 %v5082
        %5274 = vmatpush1.bf16.msra.mxu0 %v5081
        %5275 = vmatprep.subr.bf16.mxu0 %v5084
        %5276 = vmatpush1.bf16.msra.mxu0 %v5083
        %5277 = vmatprep.subr.bf16.mxu0 %v5086
        %5278 = vmatpush1.bf16.msra.mxu0 %v5085
        %5279 = vmatprep.subr.bf16.mxu0 %v5088
        %5280 = vmatpush1.bf16.msra.mxu0 %v5087
        %5281 = vmatprep.subr.bf16.mxu0 %v5090
        %5282 = vmatpush1.bf16.msra.mxu0 %v5089
        %5283 = vmatprep.subr.bf16.mxu0 %v5092
        %5284 = vmatpush1.bf16.msra.mxu0 %v5091
        %5285 = vmatprep.subr.bf16.mxu0 %v5094
        %5286 = vmatpush1.bf16.msra.mxu0 %v5093
        %5287 = vmatprep.subr.bf16.mxu0 %v5096
        %5288 = vmatpush1.bf16.msra.mxu0 %v5095
        %5289 = vmatprep.subr.bf16.mxu0 %v5098
        %5290 = vmatpush1.bf16.msra.mxu0 %v5097
        %5291 = vmatprep.subr.bf16.mxu0 %v5100
        %5292 = vmatpush1.bf16.msra.mxu0 %v5099
        %5293 = vmatprep.subr.bf16.mxu0 %v5102
        %5294 = vmatpush1.bf16.msra.mxu0 %v5101
        %5295 = vmatprep.subr.bf16.mxu0 %v5104
        %5296 = vmatpush1.bf16.msra.mxu0 %v5103
        %5297 = vmatprep.subr.bf16.mxu0 %v5106
        %5298 = vmatpush1.bf16.msra.mxu0 %v5105
        %5299 = vmatprep.subr.bf16.mxu0 %v5108
        %5300 = vmatpush1.bf16.msra.mxu0 %v5107
        %5301 = vmatprep.subr.bf16.mxu0 %v5110
        %5302 = vmatpush1.bf16.msra.mxu0 %v5109
        %5303 = vmatprep.subr.bf16.mxu0 %v5112
        %5304 = vmatpush1.bf16.msra.mxu0 %v5111
        %5305 = vmatprep.mubr.bf16.mxu0 %v5210
        %5306 = vmatmul.mubr.bf16.gmra.mrb[0].mxu0 %v5209
        %v5307 = vpop.f32.mrb[0].mxu0
        %v5308 = vadd.f32 0.0, %v5307
        %v5309 = vpop.f32.mrb[0].mxu0
        %v5310 = vadd.f32 0.0, %v5309
        %v5311 = vpop.f32.mrb[0].mxu0
        %v5312 = vadd.f32 0.0, %v5311
        %v5313 = vpop.f32.mrb[0].mxu0
        %v5314 = vadd.f32 0.0, %v5313
        %5315 = vmatprep.mubr.bf16.mxu0 %v5212
        %5316 = vmatmul.mubr.bf16.gmra.mrb[0].mxu0 %v5211
        %v5317 = vpop.f32.mrb[0].mxu0
        %v5318 = vadd.f32 0.0, %v5317
        %v5319 = vpop.f32.mrb[0].mxu0
        %v5320 = vadd.f32 0.0, %v5319
        %v5321 = vpop.f32.mrb[0].mxu0
        %v5322 = vadd.f32 0.0, %v5321
        %v5323 = vpop.f32.mrb[0].mxu0
        %v5324 = vadd.f32 0.0, %v5323
        %5325 = vmatprep.mubr.bf16.mxu0 %v5214
        %5326 = vmatmul.mubr.bf16.gmra.mrb[0].mxu0 %v5213
        %v5327 = vpop.f32.mrb[0].mxu0
        %v5328 = vadd.f32 0.0, %v5327
        %v5329 = vpop.f32.mrb[0].mxu0
        %v5330 = vadd.f32 0.0, %v5329
        %v5331 = vpop.f32.mrb[0].mxu0
        %v5332 = vadd.f32 0.0, %v5331
        %v5333 = vpop.f32.mrb[0].mxu0
        %v5334 = vadd.f32 0.0, %v5333
        %5335 = vmatprep.mubr.bf16.mxu0 %v5216
        %5336 = vmatmul.mubr.bf16.gmra.mrb[0].mxu0 %v5215
        %v5337 = vpop.f32.mrb[0].mxu0
        %v5338 = vadd.f32 0.0, %v5337
        %v5339 = vpop.f32.mrb[0].mxu0
        %v5340 = vadd.f32 0.0, %v5339
        %v5341 = vpop.f32.mrb[0].mxu0
        %v5342 = vadd.f32 0.0, %v5341
        %v5343 = vpop.f32.mrb[0].mxu0
        %v5344 = vadd.f32 0.0, %v5343
        %5345 = vmatprep.mubr.bf16.mxu0 %v5218
        %5346 = vmatmul.mubr.bf16.gmra.mrb[0].mxu0 %v5217
        %v5347 = vpop.f32.mrb[0].mxu0
        %v5348 = vadd.f32 0.0, %v5347
        %v5349 = vpop.f32.mrb[0].mxu0
        %v5350 = vadd.f32 0.0, %v5349
        %v5351 = vpop.f32.mrb[0].mxu0
        %v5352 = vadd.f32 0.0, %v5351
        %v5353 = vpop.f32.mrb[0].mxu0
        %v5354 = vadd.f32 0.0, %v5353
        %5355 = vmatprep.mubr.bf16.mxu0 %v5220
        %5356 = vmatmul.mubr.bf16.gmra.mrb[0].mxu0 %v5219
        %v5357 = vpop.f32.mrb[0].mxu0
        %v5358 = vadd.f32 0.0, %v5357
        %v5359 = vpop.f32.mrb[0].mxu0
        %v5360 = vadd.f32 0.0, %v5359
        %v5361 = vpop.f32.mrb[0].mxu0
        %v5362 = vadd.f32 0.0, %v5361
        %v5363 = vpop.f32.mrb[0].mxu0
        %v5364 = vadd.f32 0.0, %v5363
        %5365 = vmatprep.mubr.bf16.mxu0 %v5222
        %5366 = vmatmul.mubr.bf16.gmra.mrb[0].mxu0 %v5221
        %v5367 = vpop.f32.mrb[0].mxu0
        %v5368 = vadd.f32 0.0, %v5367
        %v5369 = vpop.f32.mrb[0].mxu0
        %v5370 = vadd.f32 0.0, %v5369
        %v5371 = vpop.f32.mrb[0].mxu0
        %v5372 = vadd.f32 0.0, %v5371
        %v5373 = vpop.f32.mrb[0].mxu0
        %v5374 = vadd.f32 0.0, %v5373
        %5375 = vmatprep.mubr.bf16.mxu0 %v5224
        %5376 = vmatmul.mubr.bf16.gmra.mrb[0].mxu0 %v5223
        %v5377 = vpop.f32.mrb[0].mxu0
        %v5378 = vadd.f32 0.0, %v5377
        %v5379 = vpop.f32.mrb[0].mxu0
        %v5380 = vadd.f32 0.0, %v5379
        %v5381 = vpop.f32.mrb[0].mxu0
        %v5382 = vadd.f32 0.0, %v5381
        %v5383 = vpop.f32.mrb[0].mxu0
        %v5384 = vadd.f32 0.0, %v5383
        %5385 = vmatprep.mubr.bf16.mxu0 %v5226
        %5386 = vmatmul.mubr.bf16.gmra.mrb[0].mxu0 %v5225
        %v5387 = vpop.f32.mrb[0].mxu0
        %v5388 = vadd.f32 0.0, %v5387
        %v5389 = vpop.f32.mrb[0].mxu0
        %v5390 = vadd.f32 0.0, %v5389
        %v5391 = vpop.f32.mrb[0].mxu0
        %v5392 = vadd.f32 0.0, %v5391
        %v5393 = vpop.f32.mrb[0].mxu0
        %v5394 = vadd.f32 0.0, %v5393
        %5395 = vmatprep.mubr.bf16.mxu0 %v5228
        %5396 = vmatmul.mubr.bf16.gmra.mrb[0].mxu0 %v5227
        %v5397 = vpop.f32.mrb[0].mxu0
        %v5398 = vadd.f32 0.0, %v5397
        %v5399 = vpop.f32.mrb[0].mxu0
        %v5400 = vadd.f32 0.0, %v5399
        %v5401 = vpop.f32.mrb[0].mxu0
        %v5402 = vadd.f32 0.0, %v5401
        %v5403 = vpop.f32.mrb[0].mxu0
        %v5404 = vadd.f32 0.0, %v5403
        %5405 = vmatprep.mubr.bf16.mxu0 %v5230
        %5406 = vmatmul.mubr.bf16.gmra.mrb[0].mxu0 %v5229
        %v5407 = vpop.f32.mrb[0].mxu0
        %v5408 = vadd.f32 0.0, %v5407
        %v5409 = vpop.f32.mrb[0].mxu0
        %v5410 = vadd.f32 0.0, %v5409
        %v5411 = vpop.f32.mrb[0].mxu0
        %v5412 = vadd.f32 0.0, %v5411
        %v5413 = vpop.f32.mrb[0].mxu0
        %v5414 = vadd.f32 0.0, %v5413
        %5415 = vmatprep.mubr.bf16.mxu0 %v5232
        %5416 = vmatmul.mubr.bf16.gmra.mrb[0].mxu0 %v5231
        %v5417 = vpop.f32.mrb[0].mxu0
        %v5418 = vadd.f32 0.0, %v5417
        %v5419 = vpop.f32.mrb[0].mxu0
        %v5420 = vadd.f32 0.0, %v5419
        %v5421 = vpop.f32.mrb[0].mxu0
        %v5422 = vadd.f32 0.0, %v5421
        %v5423 = vpop.f32.mrb[0].mxu0
        %v5424 = vadd.f32 0.0, %v5423
        %5425 = vmatprep.mubr.bf16.mxu0 %v5234
        %5426 = vmatmul.mubr.bf16.gmra.mrb[0].mxu0 %v5233
        %v5427 = vpop.f32.mrb[0].mxu0
        %v5428 = vadd.f32 0.0, %v5427
        %v5429 = vpop.f32.mrb[0].mxu0
        %v5430 = vadd.f32 0.0, %v5429
        %v5431 = vpop.f32.mrb[0].mxu0
        %v5432 = vadd.f32 0.0, %v5431
        %v5433 = vpop.f32.mrb[0].mxu0
        %v5434 = vadd.f32 0.0, %v5433
        %5435 = vmatprep.mubr.bf16.mxu0 %v5236
        %5436 = vmatmul.mubr.bf16.gmra.mrb[0].mxu0 %v5235
        %v5437 = vpop.f32.mrb[0].mxu0
        %v5438 = vadd.f32 0.0, %v5437
        %v5439 = vpop.f32.mrb[0].mxu0
        %v5440 = vadd.f32 0.0, %v5439
        %v5441 = vpop.f32.mrb[0].mxu0
        %v5442 = vadd.f32 0.0, %v5441
        %v5443 = vpop.f32.mrb[0].mxu0
        %v5444 = vadd.f32 0.0, %v5443
        %5445 = vmatprep.mubr.bf16.mxu0 %v5238
        %5446 = vmatmul.mubr.bf16.gmra.mrb[0].mxu0 %v5237
        %v5447 = vpop.f32.mrb[0].mxu0
        %v5448 = vadd.f32 0.0, %v5447
        %v5449 = vpop.f32.mrb[0].mxu0
        %v5450 = vadd.f32 0.0, %v5449
        %v5451 = vpop.f32.mrb[0].mxu0
        %v5452 = vadd.f32 0.0, %v5451
        %v5453 = vpop.f32.mrb[0].mxu0
        %v5454 = vadd.f32 0.0, %v5453
        %5455 = vmatprep.mubr.bf16.mxu0 %v5240
        %5456 = vmatmul.mubr.bf16.gmra.mrb[0].mxu0 %v5239
        %v5457 = vpop.f32.mrb[0].mxu0
        %v5458 = vadd.f32 0.0, %v5457
        %v5459 = vpop.f32.mrb[0].mxu0
        %v5460 = vadd.f32 0.0, %v5459
        %v5461 = vpop.f32.mrb[0].mxu0
        %v5462 = vadd.f32 0.0, %v5461
        %v5463 = vpop.f32.mrb[0].mxu0
        %v5464 = vadd.f32 0.0, %v5463
        %5465 = vdwg.mxu0
        %v5466 = vsub.f32 %v5308, %v2518
        %v5467 = vsub.f32 %v5310, %v2519
        %v5468 = vsub.f32 %v5312, %v2520
        %v5469 = vsub.f32 %v5314, %v2521
        %v5470 = vsub.f32 %v5318, %v2522
        %v5471 = vsub.f32 %v5320, %v2523
        %v5472 = vsub.f32 %v5322, %v2524
        %v5473 = vsub.f32 %v5324, %v2525
        %v5474 = vsub.f32 %v5328, %v2526
        %v5475 = vsub.f32 %v5330, %v2527
        %v5476 = vsub.f32 %v5332, %v2528
        %v5477 = vsub.f32 %v5334, %v2529
        %v5478 = vsub.f32 %v5338, %v2530
        %v5479 = vsub.f32 %v5340, %v2531
        %v5480 = vsub.f32 %v5342, %v2532
        %v5481 = vsub.f32 %v5344, %v2533
        %v5482 = vsub.f32 %v5348, %v2534
        %v5483 = vsub.f32 %v5350, %v2535
        %v5484 = vsub.f32 %v5352, %v2536
        %v5485 = vsub.f32 %v5354, %v2537
        %v5486 = vsub.f32 %v5358, %v2538
        %v5487 = vsub.f32 %v5360, %v2539
        %v5488 = vsub.f32 %v5362, %v2540
        %v5489 = vsub.f32 %v5364, %v2541
        %v5490 = vsub.f32 %v5368, %v2542
        %v5491 = vsub.f32 %v5370, %v2543
        %v5492 = vsub.f32 %v5372, %v2544
        %v5493 = vsub.f32 %v5374, %v2545
        %v5494 = vsub.f32 %v5378, %v2546
        %v5495 = vsub.f32 %v5380, %v2547
        %v5496 = vsub.f32 %v5382, %v2548
        %v5497 = vsub.f32 %v5384, %v2549
        %v5498 = vsub.f32 %v5388, %v2550
        %v5499 = vsub.f32 %v5390, %v2551
        %v5500 = vsub.f32 %v5392, %v2552
        %v5501 = vsub.f32 %v5394, %v2553
        %v5502 = vsub.f32 %v5398, %v2554
        %v5503 = vsub.f32 %v5400, %v2555
        %v5504 = vsub.f32 %v5402, %v2556
        %v5505 = vsub.f32 %v5404, %v2557
        %v5506 = vsub.f32 %v5408, %v2558
        %v5507 = vsub.f32 %v5410, %v2559
        %v5508 = vsub.f32 %v5412, %v2560
        %v5509 = vsub.f32 %v5414, %v2561
        %v5510 = vsub.f32 %v5418, %v2562
        %v5511 = vsub.f32 %v5420, %v2563
        %v5512 = vsub.f32 %v5422, %v2564
        %v5513 = vsub.f32 %v5424, %v2565
        %v5514 = vsub.f32 %v5428, %v2566
        %v5515 = vsub.f32 %v5430, %v2567
        %v5516 = vsub.f32 %v5432, %v2568
        %v5517 = vsub.f32 %v5434, %v2569
        %v5518 = vsub.f32 %v5438, %v2570
        %v5519 = vsub.f32 %v5440, %v2571
        %v5520 = vsub.f32 %v5442, %v2572
        %v5521 = vsub.f32 %v5444, %v2573
        %v5522 = vsub.f32 %v5448, %v2574
        %v5523 = vsub.f32 %v5450, %v2575
        %v5524 = vsub.f32 %v5452, %v2576
        %v5525 = vsub.f32 %v5454, %v2577
        %v5526 = vsub.f32 %v5458, %v2578
        %v5527 = vsub.f32 %v5460, %v2579
        %v5528 = vsub.f32 %v5462, %v2580
        %v5529 = vsub.f32 %v5464, %v2581
        %v5530 = vld [vmem:[%s176] sm:$0xff]
        %v5531 = vld [vmem:[%s176 + $0x8] sm:$0xff]
        %v5532 = vld [vmem:[%s176 + $0x20] sm:$0xff]
        %v5533 = vld [vmem:[%s176 + $0x28] sm:$0xff]
        %v5534 = vld [vmem:[%s176 + $0x40] sm:$0xff]
        %v5535 = vld [vmem:[%s176 + $0x48] sm:$0xff]
        %v5536 = vld [vmem:[%s176 + $0x60] sm:$0xff]
        %v5537 = vld [vmem:[%s176 + $0x68] sm:$0xff]
        %v5538 = vld [vmem:[%s176 + $0x80] sm:$0xff]
        %v5539 = vld [vmem:[%s176 + $0x88] sm:$0xff]
        %v5540 = vld [vmem:[%s176 + $0xa0] sm:$0xff]
        %v5541 = vld [vmem:[%s176 + $0xa8] sm:$0xff]
        %v5542 = vld [vmem:[%s176 + $0xc0] sm:$0xff]
        %v5543 = vld [vmem:[%s176 + $0xc8] sm:$0xff]
        %v5544 = vld [vmem:[%s176 + $0xe0] sm:$0xff]
        %v5545 = vld [vmem:[%s176 + $0xe8] sm:$0xff]
        %v5546 = vld [vmem:[%s176 + $0x100] sm:$0xff]
        %v5547 = vld [vmem:[%s176 + $0x108] sm:$0xff]
        %v5548 = vld [vmem:[%s176 + $0x120] sm:$0xff]
        %v5549 = vld [vmem:[%s176 + $0x128] sm:$0xff]
        %v5550 = vld [vmem:[%s176 + $0x140] sm:$0xff]
        %v5551 = vld [vmem:[%s176 + $0x148] sm:$0xff]
        %v5552 = vld [vmem:[%s176 + $0x160] sm:$0xff]
        %v5553 = vld [vmem:[%s176 + $0x168] sm:$0xff]
        %v5554 = vld [vmem:[%s176 + $0x180] sm:$0xff]
        %v5555 = vld [vmem:[%s176 + $0x188] sm:$0xff]
        %v5556 = vld [vmem:[%s176 + $0x1a0] sm:$0xff]
        %v5557 = vld [vmem:[%s176 + $0x1a8] sm:$0xff]
        %v5558 = vld [vmem:[%s176 + $0x1c0] sm:$0xff]
        %v5559 = vld [vmem:[%s176 + $0x1c8] sm:$0xff]
        %v5560 = vld [vmem:[%s176 + $0x1e0] sm:$0xff]
        %v5561 = vld [vmem:[%s176 + $0x1e8] sm:$0xff]
        %v5562 = vld [vmem:[%s176 + $0x200] sm:$0xff]
        %v5563 = vld [vmem:[%s176 + $0x208] sm:$0xff]
        %v5564 = vld [vmem:[%s176 + $0x220] sm:$0xff]
        %v5565 = vld [vmem:[%s176 + $0x228] sm:$0xff]
        %v5566 = vld [vmem:[%s176 + $0x240] sm:$0xff]
        %v5567 = vld [vmem:[%s176 + $0x248] sm:$0xff]
        %v5568 = vld [vmem:[%s176 + $0x260] sm:$0xff]
        %v5569 = vld [vmem:[%s176 + $0x268] sm:$0xff]
        %v5570 = vld [vmem:[%s176 + $0x280] sm:$0xff]
        %v5571 = vld [vmem:[%s176 + $0x288] sm:$0xff]
        %v5572 = vld [vmem:[%s176 + $0x2a0] sm:$0xff]
        %v5573 = vld [vmem:[%s176 + $0x2a8] sm:$0xff]
        %v5574 = vld [vmem:[%s176 + $0x2c0] sm:$0xff]
        %v5575 = vld [vmem:[%s176 + $0x2c8] sm:$0xff]
        %v5576 = vld [vmem:[%s176 + $0x2e0] sm:$0xff]
        %v5577 = vld [vmem:[%s176 + $0x2e8] sm:$0xff]
        %v5578 = vld [vmem:[%s176 + $0x300] sm:$0xff]
        %v5579 = vld [vmem:[%s176 + $0x308] sm:$0xff]
        %v5580 = vld [vmem:[%s176 + $0x320] sm:$0xff]
        %v5581 = vld [vmem:[%s176 + $0x328] sm:$0xff]
        %v5582 = vld [vmem:[%s176 + $0x340] sm:$0xff]
        %v5583 = vld [vmem:[%s176 + $0x348] sm:$0xff]
        %v5584 = vld [vmem:[%s176 + $0x360] sm:$0xff]
        %v5585 = vld [vmem:[%s176 + $0x368] sm:$0xff]
        %v5586 = vld [vmem:[%s176 + $0x380] sm:$0xff]
        %v5587 = vld [vmem:[%s176 + $0x388] sm:$0xff]
        %v5588 = vld [vmem:[%s176 + $0x3a0] sm:$0xff]
        %v5589 = vld [vmem:[%s176 + $0x3a8] sm:$0xff]
        %v5590 = vld [vmem:[%s176 + $0x3c0] sm:$0xff]
        %v5591 = vld [vmem:[%s176 + $0x3c8] sm:$0xff]
        %v5592 = vld [vmem:[%s176 + $0x3e0] sm:$0xff]
        %v5593 = vld [vmem:[%s176 + $0x3e8] sm:$0xff]
        %v5594 = vmul.f32 %v5466, 0.0054742405
        %v5595 = vmul.f32 %v5467, 0.0054742405
        %v5596 = vmul.f32 %v5468, 0.0054742405
        %v5597 = vmul.f32 %v5469, 0.0054742405
        %v5598 = vmul.f32 %v5470, 0.0054742405
        %v5599 = vmul.f32 %v5471, 0.0054742405
        %v5600 = vmul.f32 %v5472, 0.0054742405
        %v5601 = vmul.f32 %v5473, 0.0054742405
        %v5602 = vmul.f32 %v5474, 0.0054742405
        %v5603 = vmul.f32 %v5475, 0.0054742405
        %v5604 = vmul.f32 %v5476, 0.0054742405
        %v5605 = vmul.f32 %v5477, 0.0054742405
        %v5606 = vmul.f32 %v5478, 0.0054742405
        %v5607 = vmul.f32 %v5479, 0.0054742405
        %v5608 = vmul.f32 %v5480, 0.0054742405
        %v5609 = vmul.f32 %v5481, 0.0054742405
        %v5610 = vmul.f32 %v5482, 0.0054742405
        %v5611 = vmul.f32 %v5483, 0.0054742405
        %v5612 = vmul.f32 %v5484, 0.0054742405
        %v5613 = vmul.f32 %v5485, 0.0054742405
        %v5614 = vmul.f32 %v5486, 0.0054742405
        %v5615 = vmul.f32 %v5487, 0.0054742405
        %v5616 = vmul.f32 %v5488, 0.0054742405
        %v5617 = vmul.f32 %v5489, 0.0054742405
        %v5618 = vmul.f32 %v5490, 0.0054742405
        %v5619 = vmul.f32 %v5491, 0.0054742405
        %v5620 = vmul.f32 %v5492, 0.0054742405
        %v5621 = vmul.f32 %v5493, 0.0054742405
        %v5622 = vmul.f32 %v5494, 0.0054742405
        %v5623 = vmul.f32 %v5495, 0.0054742405
        %v5624 = vmul.f32 %v5496, 0.0054742405
        %v5625 = vmul.f32 %v5497, 0.0054742405
        %v5626 = vmul.f32 %v5498, 0.0054742405
        %v5627 = vmul.f32 %v5499, 0.0054742405
        %v5628 = vmul.f32 %v5500, 0.0054742405
        %v5629 = vmul.f32 %v5501, 0.0054742405
        %v5630 = vmul.f32 %v5502, 0.0054742405
        %v5631 = vmul.f32 %v5503, 0.0054742405
        %v5632 = vmul.f32 %v5504, 0.0054742405
        %v5633 = vmul.f32 %v5505, 0.0054742405
        %v5634 = vmul.f32 %v5506, 0.0054742405
        %v5635 = vmul.f32 %v5507, 0.0054742405
        %v5636 = vmul.f32 %v5508, 0.0054742405
        %v5637 = vmul.f32 %v5509, 0.0054742405
        %v5638 = vmul.f32 %v5510, 0.0054742405
        %v5639 = vmul.f32 %v5511, 0.0054742405
        %v5640 = vmul.f32 %v5512, 0.0054742405
        %v5641 = vmul.f32 %v5513, 0.0054742405
        %v5642 = vmul.f32 %v5514, 0.0054742405
        %v5643 = vmul.f32 %v5515, 0.0054742405
        %v5644 = vmul.f32 %v5516, 0.0054742405
        %v5645 = vmul.f32 %v5517, 0.0054742405
        %v5646 = vmul.f32 %v5518, 0.0054742405
        %v5647 = vmul.f32 %v5519, 0.0054742405
        %v5648 = vmul.f32 %v5520, 0.0054742405
        %v5649 = vmul.f32 %v5521, 0.0054742405
        %v5650 = vmul.f32 %v5522, 0.0054742405
        %v5651 = vmul.f32 %v5523, 0.0054742405
        %v5652 = vmul.f32 %v5524, 0.0054742405
        %v5653 = vmul.f32 %v5525, 0.0054742405
        %v5654 = vmul.f32 %v5526, 0.0054742405
        %v5655 = vmul.f32 %v5527, 0.0054742405
        %v5656 = vmul.f32 %v5528, 0.0054742405
        %v5657 = vmul.f32 %v5529, 0.0054742405
        %v5658 = vadd.f32 %v5530, %v5594
        %v5659 = vadd.f32 %v5531, %v5595
        %v5660 = vadd.f32 %v5532, %v5596
        %v5661 = vadd.f32 %v5533, %v5597
        %v5662 = vadd.f32 %v5534, %v5598
        %v5663 = vadd.f32 %v5535, %v5599
        %v5664 = vadd.f32 %v5536, %v5600
        %v5665 = vadd.f32 %v5537, %v5601
        %v5666 = vadd.f32 %v5538, %v5602
        %v5667 = vadd.f32 %v5539, %v5603
        %v5668 = vadd.f32 %v5540, %v5604
        %v5669 = vadd.f32 %v5541, %v5605
        %v5670 = vadd.f32 %v5542, %v5606
        %v5671 = vadd.f32 %v5543, %v5607
        %v5672 = vadd.f32 %v5544, %v5608
        %v5673 = vadd.f32 %v5545, %v5609
        %v5674 = vadd.f32 %v5546, %v5610
        %v5675 = vadd.f32 %v5547, %v5611
        %v5676 = vadd.f32 %v5548, %v5612
        %v5677 = vadd.f32 %v5549, %v5613
        %v5678 = vadd.f32 %v5550, %v5614
        %v5679 = vadd.f32 %v5551, %v5615
        %v5680 = vadd.f32 %v5552, %v5616
        %v5681 = vadd.f32 %v5553, %v5617
        %v5682 = vadd.f32 %v5554, %v5618
        %v5683 = vadd.f32 %v5555, %v5619
        %v5684 = vadd.f32 %v5556, %v5620
        %v5685 = vadd.f32 %v5557, %v5621
        %v5686 = vadd.f32 %v5558, %v5622
        %v5687 = vadd.f32 %v5559, %v5623
        %v5688 = vadd.f32 %v5560, %v5624
        %v5689 = vadd.f32 %v5561, %v5625
        %v5690 = vadd.f32 %v5562, %v5626
        %v5691 = vadd.f32 %v5563, %v5627
        %v5692 = vadd.f32 %v5564, %v5628
        %v5693 = vadd.f32 %v5565, %v5629
        %v5694 = vadd.f32 %v5566, %v5630
        %v5695 = vadd.f32 %v5567, %v5631
        %v5696 = vadd.f32 %v5568, %v5632
        %v5697 = vadd.f32 %v5569, %v5633
        %v5698 = vadd.f32 %v5570, %v5634
        %v5699 = vadd.f32 %v5571, %v5635
        %v5700 = vadd.f32 %v5572, %v5636
        %v5701 = vadd.f32 %v5573, %v5637
        %v5702 = vadd.f32 %v5574, %v5638
        %v5703 = vadd.f32 %v5575, %v5639
        %v5704 = vadd.f32 %v5576, %v5640
        %v5705 = vadd.f32 %v5577, %v5641
        %v5706 = vadd.f32 %v5578, %v5642
        %v5707 = vadd.f32 %v5579, %v5643
        %v5708 = vadd.f32 %v5580, %v5644
        %v5709 = vadd.f32 %v5581, %v5645
        %v5710 = vadd.f32 %v5582, %v5646
        %v5711 = vadd.f32 %v5583, %v5647
        %v5712 = vadd.f32 %v5584, %v5648
        %v5713 = vadd.f32 %v5585, %v5649
        %v5714 = vadd.f32 %v5586, %v5650
        %v5715 = vadd.f32 %v5587, %v5651
        %v5716 = vadd.f32 %v5588, %v5652
        %v5717 = vadd.f32 %v5589, %v5653
        %v5718 = vadd.f32 %v5590, %v5654
        %v5719 = vadd.f32 %v5591, %v5655
        %v5720 = vadd.f32 %v5592, %v5656
        %v5721 = vadd.f32 %v5593, %v5657
        %5722 = vst [vmem:[%s176] sm:$0xff] %v5658
        %5723 = vst [vmem:[%s176 + $0x8] sm:$0xff] %v5659
        %5724 = vst [vmem:[%s176 + $0x20] sm:$0xff] %v5660
        %5725 = vst [vmem:[%s176 + $0x28] sm:$0xff] %v5661
        %5726 = vst [vmem:[%s176 + $0x40] sm:$0xff] %v5662
        %5727 = vst [vmem:[%s176 + $0x48] sm:$0xff] %v5663
        %5728 = vst [vmem:[%s176 + $0x60] sm:$0xff] %v5664
        %5729 = vst [vmem:[%s176 + $0x68] sm:$0xff] %v5665
        %5730 = vst [vmem:[%s176 + $0x80] sm:$0xff] %v5666
        %5731 = vst [vmem:[%s176 + $0x88] sm:$0xff] %v5667
        %5732 = vst [vmem:[%s176 + $0xa0] sm:$0xff] %v5668
        %5733 = vst [vmem:[%s176 + $0xa8] sm:$0xff] %v5669
        %5734 = vst [vmem:[%s176 + $0xc0] sm:$0xff] %v5670
        %5735 = vst [vmem:[%s176 + $0xc8] sm:$0xff] %v5671
        %5736 = vst [vmem:[%s176 + $0xe0] sm:$0xff] %v5672
        %5737 = vst [vmem:[%s176 + $0xe8] sm:$0xff] %v5673
        %5738 = vst [vmem:[%s176 + $0x100] sm:$0xff] %v5674
        %5739 = vst [vmem:[%s176 + $0x108] sm:$0xff] %v5675
        %5740 = vst [vmem:[%s176 + $0x120] sm:$0xff] %v5676
        %5741 = vst [vmem:[%s176 + $0x128] sm:$0xff] %v5677
        %5742 = vst [vmem:[%s176 + $0x140] sm:$0xff] %v5678
        %5743 = vst [vmem:[%s176 + $0x148] sm:$0xff] %v5679
        %5744 = vst [vmem:[%s176 + $0x160] sm:$0xff] %v5680
        %5745 = vst [vmem:[%s176 + $0x168] sm:$0xff] %v5681
        %5746 = vst [vmem:[%s176 + $0x180] sm:$0xff] %v5682
        %5747 = vst [vmem:[%s176 + $0x188] sm:$0xff] %v5683
        %5748 = vst [vmem:[%s176 + $0x1a0] sm:$0xff] %v5684
        %5749 = vst [vmem:[%s176 + $0x1a8] sm:$0xff] %v5685
        %5750 = vst [vmem:[%s176 + $0x1c0] sm:$0xff] %v5686
        %5751 = vst [vmem:[%s176 + $0x1c8] sm:$0xff] %v5687
        %5752 = vst [vmem:[%s176 + $0x1e0] sm:$0xff] %v5688
        %5753 = vst [vmem:[%s176 + $0x1e8] sm:$0xff] %v5689
        %5754 = vst [vmem:[%s176 + $0x200] sm:$0xff] %v5690
        %5755 = vst [vmem:[%s176 + $0x208] sm:$0xff] %v5691
        %5756 = vst [vmem:[%s176 + $0x220] sm:$0xff] %v5692
        %5757 = vst [vmem:[%s176 + $0x228] sm:$0xff] %v5693
        %5758 = vst [vmem:[%s176 + $0x240] sm:$0xff] %v5694
        %5759 = vst [vmem:[%s176 + $0x248] sm:$0xff] %v5695
        %5760 = vst [vmem:[%s176 + $0x260] sm:$0xff] %v5696
        %5761 = vst [vmem:[%s176 + $0x268] sm:$0xff] %v5697
        %5762 = vst [vmem:[%s176 + $0x280] sm:$0xff] %v5698
        %5763 = vst [vmem:[%s176 + $0x288] sm:$0xff] %v5699
        %5764 = vst [vmem:[%s176 + $0x2a0] sm:$0xff] %v5700
        %5765 = vst [vmem:[%s176 + $0x2a8] sm:$0xff] %v5701
        %5766 = vst [vmem:[%s176 + $0x2c0] sm:$0xff] %v5702
        %5767 = vst [vmem:[%s176 + $0x2c8] sm:$0xff] %v5703
        %5768 = vst [vmem:[%s176 + $0x2e0] sm:$0xff] %v5704
        %5769 = vst [vmem:[%s176 + $0x2e8] sm:$0xff] %v5705
        %5770 = vst [vmem:[%s176 + $0x300] sm:$0xff] %v5706
        %5771 = vst [vmem:[%s176 + $0x308] sm:$0xff] %v5707
        %5772 = vst [vmem:[%s176 + $0x320] sm:$0xff] %v5708
        %5773 = vst [vmem:[%s176 + $0x328] sm:$0xff] %v5709
        %5774 = vst [vmem:[%s176 + $0x340] sm:$0xff] %v5710
        %5775 = vst [vmem:[%s176 + $0x348] sm:$0xff] %v5711
        %5776 = vst [vmem:[%s176 + $0x360] sm:$0xff] %v5712
        %5777 = vst [vmem:[%s176 + $0x368] sm:$0xff] %v5713
        %5778 = vst [vmem:[%s176 + $0x380] sm:$0xff] %v5714
        %5779 = vst [vmem:[%s176 + $0x388] sm:$0xff] %v5715
        %5780 = vst [vmem:[%s176 + $0x3a0] sm:$0xff] %v5716
        %5781 = vst [vmem:[%s176 + $0x3a8] sm:$0xff] %v5717
        %5782 = vst [vmem:[%s176 + $0x3c0] sm:$0xff] %v5718
        %5783 = vst [vmem:[%s176 + $0x3c8] sm:$0xff] %v5719
        %5784 = vst [vmem:[%s176 + $0x3e0] sm:$0xff] %v5720
        %5785 = vst [vmem:[%s176 + $0x3e8] sm:$0xff] %v5721
        %v5786 = vld [vmem:[#allocation2] sm:$0xff]
        %v5787 = vld [vmem:[#allocation2 + $0x8] sm:$0xff]
        %v5788 = vld [vmem:[#allocation2 + $0x10] sm:$0xff]
        %v5789 = vld [vmem:[#allocation2 + $0x18] sm:$0xff]
        %v5790 = vld [vmem:[#allocation2 + $0x20] sm:$0xff]
        %v5791 = vld [vmem:[#allocation2 + $0x28] sm:$0xff]
        %v5792 = vld [vmem:[#allocation2 + $0x30] sm:$0xff]
        %v5793 = vld [vmem:[#allocation2 + $0x38] sm:$0xff]
        %v5794 = vld [vmem:[#allocation2 + $0x40] sm:$0xff]
        %v5795 = vld [vmem:[#allocation2 + $0x48] sm:$0xff]
        %v5796 = vld [vmem:[#allocation2 + $0x50] sm:$0xff]
        %v5797 = vld [vmem:[#allocation2 + $0x58] sm:$0xff]
        %v5798 = vld [vmem:[#allocation2 + $0x60] sm:$0xff]
        %v5799 = vld [vmem:[#allocation2 + $0x68] sm:$0xff]
        %v5800 = vld [vmem:[#allocation2 + $0x70] sm:$0xff]
        %v5801 = vld [vmem:[#allocation2 + $0x78] sm:$0xff]
        %v5802 = vld [vmem:[#allocation2 + $0x80] sm:$0xff]
        %v5803 = vld [vmem:[#allocation2 + $0x88] sm:$0xff]
        %v5804 = vld [vmem:[#allocation2 + $0x90] sm:$0xff]
        %v5805 = vld [vmem:[#allocation2 + $0x98] sm:$0xff]
        %v5806 = vld [vmem:[#allocation2 + $0xa0] sm:$0xff]
        %v5807 = vld [vmem:[#allocation2 + $0xa8] sm:$0xff]
        %v5808 = vld [vmem:[#allocation2 + $0xb0] sm:$0xff]
        %v5809 = vld [vmem:[#allocation2 + $0xb8] sm:$0xff]
        %v5810 = vld [vmem:[#allocation2 + $0xc0] sm:$0xff]
        %v5811 = vld [vmem:[#allocation2 + $0xc8] sm:$0xff]
        %v5812 = vld [vmem:[#allocation2 + $0xd0] sm:$0xff]
        %v5813 = vld [vmem:[#allocation2 + $0xd8] sm:$0xff]
        %v5814 = vld [vmem:[#allocation2 + $0xe0] sm:$0xff]
        %v5815 = vld [vmem:[#allocation2 + $0xe8] sm:$0xff]
        %v5816 = vld [vmem:[#allocation2 + $0xf0] sm:$0xff]
        %v5817 = vld [vmem:[#allocation2 + $0xf8] sm:$0xff]
        %v5818 = vpack.c.bf16 %v4731, %v4729
        %v5819 = vpack.c.bf16 %v4732, %v4730
        %v5820 = vpack.c.bf16 %v4735, %v4733
        %v5821 = vpack.c.bf16 %v4736, %v4734
        %v5822 = vpack.c.bf16 %v4739, %v4737
        %v5823 = vpack.c.bf16 %v4740, %v4738
        %v5824 = vpack.c.bf16 %v4743, %v4741
        %v5825 = vpack.c.bf16 %v4744, %v4742
        %v5826 = vpack.c.bf16 %v4747, %v4745
        %v5827 = vpack.c.bf16 %v4748, %v4746
        %v5828 = vpack.c.bf16 %v4751, %v4749
        %v5829 = vpack.c.bf16 %v4752, %v4750
        %v5830 = vpack.c.bf16 %v4755, %v4753
        %v5831 = vpack.c.bf16 %v4756, %v4754
        %v5832 = vpack.c.bf16 %v4759, %v4757
        %v5833 = vpack.c.bf16 %v4760, %v4758
        %v5834 = vpack.c.bf16 %v4763, %v4761
        %v5835 = vpack.c.bf16 %v4764, %v4762
        %v5836 = vpack.c.bf16 %v4767, %v4765
        %v5837 = vpack.c.bf16 %v4768, %v4766
        %v5838 = vpack.c.bf16 %v4771, %v4769
        %v5839 = vpack.c.bf16 %v4772, %v4770
        %v5840 = vpack.c.bf16 %v4775, %v4773
        %v5841 = vpack.c.bf16 %v4776, %v4774
        %v5842 = vpack.c.bf16 %v4779, %v4777
        %v5843 = vpack.c.bf16 %v4780, %v4778
        %v5844 = vpack.c.bf16 %v4783, %v4781
        %v5845 = vpack.c.bf16 %v4784, %v4782
        %v5846 = vpack.c.bf16 %v4787, %v4785
        %v5847 = vpack.c.bf16 %v4788, %v4786
        %v5848 = vpack.c.bf16 %v4791, %v4789
        %v5849 = vpack.c.bf16 %v4792, %v4790
        %v5882 = vunpack.c.l.b16 %v5786
        %v5883 = vunpack.c.h.b16 %v5786
        %v5884 = vunpack.c.l.b16 %v5787
        %v5885 = vunpack.c.h.b16 %v5787
        %v5886 = vunpack.c.l.b16 %v5788
        %v5887 = vunpack.c.h.b16 %v5788
        %v5888 = vunpack.c.l.b16 %v5789
        %v5889 = vunpack.c.h.b16 %v5789
        %v5890 = vunpack.c.l.b16 %v5790
        %v5891 = vunpack.c.h.b16 %v5790
        %v5892 = vunpack.c.l.b16 %v5791
        %v5893 = vunpack.c.h.b16 %v5791
        %v5894 = vunpack.c.l.b16 %v5792
        %v5895 = vunpack.c.h.b16 %v5792
        %v5896 = vunpack.c.l.b16 %v5793
        %v5897 = vunpack.c.h.b16 %v5793
        %v5898 = vunpack.c.l.b16 %v5794
        %v5899 = vunpack.c.h.b16 %v5794
        %v5900 = vunpack.c.l.b16 %v5795
        %v5901 = vunpack.c.h.b16 %v5795
        %v5902 = vunpack.c.l.b16 %v5796
        %v5903 = vunpack.c.h.b16 %v5796
        %v5904 = vunpack.c.l.b16 %v5797
        %v5905 = vunpack.c.h.b16 %v5797
        %v5906 = vunpack.c.l.b16 %v5798
        %v5907 = vunpack.c.h.b16 %v5798
        %v5908 = vunpack.c.l.b16 %v5799
        %v5909 = vunpack.c.h.b16 %v5799
        %v5910 = vunpack.c.l.b16 %v5800
        %v5911 = vunpack.c.h.b16 %v5800
        %v5912 = vunpack.c.l.b16 %v5801
        %v5913 = vunpack.c.h.b16 %v5801
        %v5914 = vunpack.c.l.b16 %v5802
        %v5915 = vunpack.c.h.b16 %v5802
        %v5916 = vunpack.c.l.b16 %v5803
        %v5917 = vunpack.c.h.b16 %v5803
        %v5918 = vunpack.c.l.b16 %v5804
        %v5919 = vunpack.c.h.b16 %v5804
        %v5920 = vunpack.c.l.b16 %v5805
        %v5921 = vunpack.c.h.b16 %v5805
        %v5922 = vunpack.c.l.b16 %v5806
        %v5923 = vunpack.c.h.b16 %v5806
        %v5924 = vunpack.c.l.b16 %v5807
        %v5925 = vunpack.c.h.b16 %v5807
        %v5926 = vunpack.c.l.b16 %v5808
        %v5927 = vunpack.c.h.b16 %v5808
        %v5928 = vunpack.c.l.b16 %v5809
        %v5929 = vunpack.c.h.b16 %v5809
        %v5930 = vunpack.c.l.b16 %v5810
        %v5931 = vunpack.c.h.b16 %v5810
        %v5932 = vunpack.c.l.b16 %v5811
        %v5933 = vunpack.c.h.b16 %v5811
        %v5934 = vunpack.c.l.b16 %v5812
        %v5935 = vunpack.c.h.b16 %v5812
        %v5936 = vunpack.c.l.b16 %v5813
        %v5937 = vunpack.c.h.b16 %v5813
        %v5938 = vunpack.c.l.b16 %v5814
        %v5939 = vunpack.c.h.b16 %v5814
        %v5940 = vunpack.c.l.b16 %v5815
        %v5941 = vunpack.c.h.b16 %v5815
        %v5942 = vunpack.c.l.b16 %v5816
        %v5943 = vunpack.c.h.b16 %v5816
        %v5944 = vunpack.c.l.b16 %v5817
        %v5945 = vunpack.c.h.b16 %v5817
        %v5946 = vpack.c.b16 %v5884, %v5882
        %v5947 = vpack.c.b16 %v5885, %v5883
        %v5948 = vpack.c.b16 %v5888, %v5886
        %v5949 = vpack.c.b16 %v5889, %v5887
        %v5950 = vpack.c.b16 %v5892, %v5890
        %v5951 = vpack.c.b16 %v5893, %v5891
        %v5952 = vpack.c.b16 %v5896, %v5894
        %v5953 = vpack.c.b16 %v5897, %v5895
        %v5954 = vpack.c.b16 %v5900, %v5898
        %v5955 = vpack.c.b16 %v5901, %v5899
        %v5956 = vpack.c.b16 %v5904, %v5902
        %v5957 = vpack.c.b16 %v5905, %v5903
        %v5958 = vpack.c.b16 %v5908, %v5906
        %v5959 = vpack.c.b16 %v5909, %v5907
        %v5960 = vpack.c.b16 %v5912, %v5910
        %v5961 = vpack.c.b16 %v5913, %v5911
        %v5962 = vpack.c.b16 %v5916, %v5914
        %v5963 = vpack.c.b16 %v5917, %v5915
        %v5964 = vpack.c.b16 %v5920, %v5918
        %v5965 = vpack.c.b16 %v5921, %v5919
        %v5966 = vpack.c.b16 %v5924, %v5922
        %v5967 = vpack.c.b16 %v5925, %v5923
        %v5968 = vpack.c.b16 %v5928, %v5926
        %v5969 = vpack.c.b16 %v5929, %v5927
        %v5970 = vpack.c.b16 %v5932, %v5930
        %v5971 = vpack.c.b16 %v5933, %v5931
        %v5972 = vpack.c.b16 %v5936, %v5934
        %v5973 = vpack.c.b16 %v5937, %v5935
        %v5974 = vpack.c.b16 %v5940, %v5938
        %v5975 = vpack.c.b16 %v5941, %v5939
        %v5976 = vpack.c.b16 %v5944, %v5942
        %v5977 = vpack.c.b16 %v5945, %v5943
        %6010 = vmatprep.subr.bf16.mxu0 %v5819
        %6011 = vmatpush1.bf16.msra.mxu0 %v5818
        %6012 = vmatprep.subr.bf16.mxu0 %v5821
        %6013 = vmatpush1.bf16.msra.mxu0 %v5820
        %6014 = vmatprep.subr.bf16.mxu0 %v5823
        %6015 = vmatpush1.bf16.msra.mxu0 %v5822
        %6016 = vmatprep.subr.bf16.mxu0 %v5825
        %6017 = vmatpush1.bf16.msra.mxu0 %v5824
        %6018 = vmatprep.subr.bf16.mxu0 %v5827
        %6019 = vmatpush1.bf16.msra.mxu0 %v5826
        %6020 = vmatprep.subr.bf16.mxu0 %v5829
        %6021 = vmatpush1.bf16.msra.mxu0 %v5828
        %6022 = vmatprep.subr.bf16.mxu0 %v5831
        %6023 = vmatpush1.bf16.msra.mxu0 %v5830
        %6024 = vmatprep.subr.bf16.mxu0 %v5833
        %6025 = vmatpush1.bf16.msra.mxu0 %v5832
        %6026 = vmatprep.subr.bf16.mxu0 %v5835
        %6027 = vmatpush1.bf16.msra.mxu0 %v5834
        %6028 = vmatprep.subr.bf16.mxu0 %v5837
        %6029 = vmatpush1.bf16.msra.mxu0 %v5836
        %6030 = vmatprep.subr.bf16.mxu0 %v5839
        %6031 = vmatpush1.bf16.msra.mxu0 %v5838
        %6032 = vmatprep.subr.bf16.mxu0 %v5841
        %6033 = vmatpush1.bf16.msra.mxu0 %v5840
        %6034 = vmatprep.subr.bf16.mxu0 %v5843
        %6035 = vmatpush1.bf16.msra.mxu0 %v5842
        %6036 = vmatprep.subr.bf16.mxu0 %v5845
        %6037 = vmatpush1.bf16.msra.mxu0 %v5844
        %6038 = vmatprep.subr.bf16.mxu0 %v5847
        %6039 = vmatpush1.bf16.msra.mxu0 %v5846
        %6040 = vmatprep.subr.bf16.mxu0 %v5849
        %6041 = vmatpush1.bf16.msra.mxu0 %v5848
        %6042 = vmatprep.mubr.bf16.mxu0 %v5947
        %6043 = vmatmul.mubr.bf16.gmra.mrb[0].mxu0 %v5946
        %v6044 = vpop.f32.mrb[0].mxu0
        %v6045 = vadd.f32 0.0, %v6044
        %v6046 = vpop.f32.mrb[0].mxu0
        %v6047 = vadd.f32 0.0, %v6046
        %v6048 = vpop.f32.mrb[0].mxu0
        %v6049 = vadd.f32 0.0, %v6048
        %v6050 = vpop.f32.mrb[0].mxu0
        %v6051 = vadd.f32 0.0, %v6050
        %6052 = vmatprep.mubr.bf16.mxu0 %v5949
        %6053 = vmatmul.mubr.bf16.gmra.mrb[0].mxu0 %v5948
        %v6054 = vpop.f32.mrb[0].mxu0
        %v6055 = vadd.f32 0.0, %v6054
        %v6056 = vpop.f32.mrb[0].mxu0
        %v6057 = vadd.f32 0.0, %v6056
        %v6058 = vpop.f32.mrb[0].mxu0
        %v6059 = vadd.f32 0.0, %v6058
        %v6060 = vpop.f32.mrb[0].mxu0
        %v6061 = vadd.f32 0.0, %v6060
        %6062 = vmatprep.mubr.bf16.mxu0 %v5951
        %6063 = vmatmul.mubr.bf16.gmra.mrb[0].mxu0 %v5950
        %v6064 = vpop.f32.mrb[0].mxu0
        %v6065 = vadd.f32 0.0, %v6064
        %v6066 = vpop.f32.mrb[0].mxu0
        %v6067 = vadd.f32 0.0, %v6066
        %v6068 = vpop.f32.mrb[0].mxu0
        %v6069 = vadd.f32 0.0, %v6068
        %v6070 = vpop.f32.mrb[0].mxu0
        %v6071 = vadd.f32 0.0, %v6070
        %6072 = vmatprep.mubr.bf16.mxu0 %v5953
        %6073 = vmatmul.mubr.bf16.gmra.mrb[0].mxu0 %v5952
        %v6074 = vpop.f32.mrb[0].mxu0
        %v6075 = vadd.f32 0.0, %v6074
        %v6076 = vpop.f32.mrb[0].mxu0
        %v6077 = vadd.f32 0.0, %v6076
        %v6078 = vpop.f32.mrb[0].mxu0
        %v6079 = vadd.f32 0.0, %v6078
        %v6080 = vpop.f32.mrb[0].mxu0
        %v6081 = vadd.f32 0.0, %v6080
        %6082 = vmatprep.mubr.bf16.mxu0 %v5955
        %6083 = vmatmul.mubr.bf16.gmra.mrb[0].mxu0 %v5954
        %v6084 = vpop.f32.mrb[0].mxu0
        %v6085 = vadd.f32 0.0, %v6084
        %v6086 = vpop.f32.mrb[0].mxu0
        %v6087 = vadd.f32 0.0, %v6086
        %v6088 = vpop.f32.mrb[0].mxu0
        %v6089 = vadd.f32 0.0, %v6088
        %v6090 = vpop.f32.mrb[0].mxu0
        %v6091 = vadd.f32 0.0, %v6090
        %6092 = vmatprep.mubr.bf16.mxu0 %v5957
        %6093 = vmatmul.mubr.bf16.gmra.mrb[0].mxu0 %v5956
        %v6094 = vpop.f32.mrb[0].mxu0
        %v6095 = vadd.f32 0.0, %v6094
        %v6096 = vpop.f32.mrb[0].mxu0
        %v6097 = vadd.f32 0.0, %v6096
        %v6098 = vpop.f32.mrb[0].mxu0
        %v6099 = vadd.f32 0.0, %v6098
        %v6100 = vpop.f32.mrb[0].mxu0
        %v6101 = vadd.f32 0.0, %v6100
        %6102 = vmatprep.mubr.bf16.mxu0 %v5959
        %6103 = vmatmul.mubr.bf16.gmra.mrb[0].mxu0 %v5958
        %v6104 = vpop.f32.mrb[0].mxu0
        %v6105 = vadd.f32 0.0, %v6104
        %v6106 = vpop.f32.mrb[0].mxu0
        %v6107 = vadd.f32 0.0, %v6106
        %v6108 = vpop.f32.mrb[0].mxu0
        %v6109 = vadd.f32 0.0, %v6108
        %v6110 = vpop.f32.mrb[0].mxu0
        %v6111 = vadd.f32 0.0, %v6110
        %6112 = vmatprep.mubr.bf16.mxu0 %v5961
        %6113 = vmatmul.mubr.bf16.gmra.mrb[0].mxu0 %v5960
        %v6114 = vpop.f32.mrb[0].mxu0
        %v6115 = vadd.f32 0.0, %v6114
        %v6116 = vpop.f32.mrb[0].mxu0
        %v6117 = vadd.f32 0.0, %v6116
        %v6118 = vpop.f32.mrb[0].mxu0
        %v6119 = vadd.f32 0.0, %v6118
        %v6120 = vpop.f32.mrb[0].mxu0
        %v6121 = vadd.f32 0.0, %v6120
        %6122 = vmatprep.mubr.bf16.mxu0 %v5963
        %6123 = vmatmul.mubr.bf16.gmra.mrb[0].mxu0 %v5962
        %v6124 = vpop.f32.mrb[0].mxu0
        %v6125 = vadd.f32 0.0, %v6124
        %v6126 = vpop.f32.mrb[0].mxu0
        %v6127 = vadd.f32 0.0, %v6126
        %v6128 = vpop.f32.mrb[0].mxu0
        %v6129 = vadd.f32 0.0, %v6128
        %v6130 = vpop.f32.mrb[0].mxu0
        %v6131 = vadd.f32 0.0, %v6130
        %6132 = vmatprep.mubr.bf16.mxu0 %v5965
        %6133 = vmatmul.mubr.bf16.gmra.mrb[0].mxu0 %v5964
        %v6134 = vpop.f32.mrb[0].mxu0
        %v6135 = vadd.f32 0.0, %v6134
        %v6136 = vpop.f32.mrb[0].mxu0
        %v6137 = vadd.f32 0.0, %v6136
        %v6138 = vpop.f32.mrb[0].mxu0
        %v6139 = vadd.f32 0.0, %v6138
        %v6140 = vpop.f32.mrb[0].mxu0
        %v6141 = vadd.f32 0.0, %v6140
        %6142 = vmatprep.mubr.bf16.mxu0 %v5967
        %6143 = vmatmul.mubr.bf16.gmra.mrb[0].mxu0 %v5966
        %v6144 = vpop.f32.mrb[0].mxu0
        %v6145 = vadd.f32 0.0, %v6144
        %v6146 = vpop.f32.mrb[0].mxu0
        %v6147 = vadd.f32 0.0, %v6146
        %v6148 = vpop.f32.mrb[0].mxu0
        %v6149 = vadd.f32 0.0, %v6148
        %v6150 = vpop.f32.mrb[0].mxu0
        %v6151 = vadd.f32 0.0, %v6150
        %6152 = vmatprep.mubr.bf16.mxu0 %v5969
        %6153 = vmatmul.mubr.bf16.gmra.mrb[0].mxu0 %v5968
        %v6154 = vpop.f32.mrb[0].mxu0
        %v6155 = vadd.f32 0.0, %v6154
        %v6156 = vpop.f32.mrb[0].mxu0
        %v6157 = vadd.f32 0.0, %v6156
        %v6158 = vpop.f32.mrb[0].mxu0
        %v6159 = vadd.f32 0.0, %v6158
        %v6160 = vpop.f32.mrb[0].mxu0
        %v6161 = vadd.f32 0.0, %v6160
        %6162 = vmatprep.mubr.bf16.mxu0 %v5971
        %6163 = vmatmul.mubr.bf16.gmra.mrb[0].mxu0 %v5970
        %v6164 = vpop.f32.mrb[0].mxu0
        %v6165 = vadd.f32 0.0, %v6164
        %v6166 = vpop.f32.mrb[0].mxu0
        %v6167 = vadd.f32 0.0, %v6166
        %v6168 = vpop.f32.mrb[0].mxu0
        %v6169 = vadd.f32 0.0, %v6168
        %v6170 = vpop.f32.mrb[0].mxu0
        %v6171 = vadd.f32 0.0, %v6170
        %6172 = vmatprep.mubr.bf16.mxu0 %v5973
        %6173 = vmatmul.mubr.bf16.gmra.mrb[0].mxu0 %v5972
        %v6174 = vpop.f32.mrb[0].mxu0
        %v6175 = vadd.f32 0.0, %v6174
        %v6176 = vpop.f32.mrb[0].mxu0
        %v6177 = vadd.f32 0.0, %v6176
        %v6178 = vpop.f32.mrb[0].mxu0
        %v6179 = vadd.f32 0.0, %v6178
        %v6180 = vpop.f32.mrb[0].mxu0
        %v6181 = vadd.f32 0.0, %v6180
        %6182 = vmatprep.mubr.bf16.mxu0 %v5975
        %6183 = vmatmul.mubr.bf16.gmra.mrb[0].mxu0 %v5974
        %v6184 = vpop.f32.mrb[0].mxu0
        %v6185 = vadd.f32 0.0, %v6184
        %v6186 = vpop.f32.mrb[0].mxu0
        %v6187 = vadd.f32 0.0, %v6186
        %v6188 = vpop.f32.mrb[0].mxu0
        %v6189 = vadd.f32 0.0, %v6188
        %v6190 = vpop.f32.mrb[0].mxu0
        %v6191 = vadd.f32 0.0, %v6190
        %6192 = vmatprep.mubr.bf16.mxu0 %v5977
        %6193 = vmatmul.mubr.bf16.gmra.mrb[0].mxu0 %v5976
        %v6194 = vpop.f32.mrb[0].mxu0
        %v6195 = vadd.f32 0.0, %v6194
        %v6196 = vpop.f32.mrb[0].mxu0
        %v6197 = vadd.f32 0.0, %v6196
        %v6198 = vpop.f32.mrb[0].mxu0
        %v6199 = vadd.f32 0.0, %v6198
        %v6200 = vpop.f32.mrb[0].mxu0
        %v6201 = vadd.f32 0.0, %v6200
        %6202 = vdwg.mxu0
        %v6203 = vsub.f32 %v6045, %v3255
        %v6204 = vsub.f32 %v6047, %v3256
        %v6205 = vsub.f32 %v6049, %v3257
        %v6206 = vsub.f32 %v6051, %v3258
        %v6207 = vsub.f32 %v6055, %v3259
        %v6208 = vsub.f32 %v6057, %v3260
        %v6209 = vsub.f32 %v6059, %v3261
        %v6210 = vsub.f32 %v6061, %v3262
        %v6211 = vsub.f32 %v6065, %v3263
        %v6212 = vsub.f32 %v6067, %v3264
        %v6213 = vsub.f32 %v6069, %v3265
        %v6214 = vsub.f32 %v6071, %v3266
        %v6215 = vsub.f32 %v6075, %v3267
        %v6216 = vsub.f32 %v6077, %v3268
        %v6217 = vsub.f32 %v6079, %v3269
        %v6218 = vsub.f32 %v6081, %v3270
        %v6219 = vsub.f32 %v6085, %v3271
        %v6220 = vsub.f32 %v6087, %v3272
        %v6221 = vsub.f32 %v6089, %v3273
        %v6222 = vsub.f32 %v6091, %v3274
        %v6223 = vsub.f32 %v6095, %v3275
        %v6224 = vsub.f32 %v6097, %v3276
        %v6225 = vsub.f32 %v6099, %v3277
        %v6226 = vsub.f32 %v6101, %v3278
        %v6227 = vsub.f32 %v6105, %v3279
        %v6228 = vsub.f32 %v6107, %v3280
        %v6229 = vsub.f32 %v6109, %v3281
        %v6230 = vsub.f32 %v6111, %v3282
        %v6231 = vsub.f32 %v6115, %v3283
        %v6232 = vsub.f32 %v6117, %v3284
        %v6233 = vsub.f32 %v6119, %v3285
        %v6234 = vsub.f32 %v6121, %v3286
        %v6235 = vsub.f32 %v6125, %v3287
        %v6236 = vsub.f32 %v6127, %v3288
        %v6237 = vsub.f32 %v6129, %v3289
        %v6238 = vsub.f32 %v6131, %v3290
        %v6239 = vsub.f32 %v6135, %v3291
        %v6240 = vsub.f32 %v6137, %v3292
        %v6241 = vsub.f32 %v6139, %v3293
        %v6242 = vsub.f32 %v6141, %v3294
        %v6243 = vsub.f32 %v6145, %v3295
        %v6244 = vsub.f32 %v6147, %v3296
        %v6245 = vsub.f32 %v6149, %v3297
        %v6246 = vsub.f32 %v6151, %v3298
        %v6247 = vsub.f32 %v6155, %v3299
        %v6248 = vsub.f32 %v6157, %v3300
        %v6249 = vsub.f32 %v6159, %v3301
        %v6250 = vsub.f32 %v6161, %v3302
        %v6251 = vsub.f32 %v6165, %v3303
        %v6252 = vsub.f32 %v6167, %v3304
        %v6253 = vsub.f32 %v6169, %v3305
        %v6254 = vsub.f32 %v6171, %v3306
        %v6255 = vsub.f32 %v6175, %v3307
        %v6256 = vsub.f32 %v6177, %v3308
        %v6257 = vsub.f32 %v6179, %v3309
        %v6258 = vsub.f32 %v6181, %v3310
        %v6259 = vsub.f32 %v6185, %v3311
        %v6260 = vsub.f32 %v6187, %v3312
        %v6261 = vsub.f32 %v6189, %v3313
        %v6262 = vsub.f32 %v6191, %v3314
        %v6263 = vsub.f32 %v6195, %v3315
        %v6264 = vsub.f32 %v6197, %v3316
        %v6265 = vsub.f32 %v6199, %v3317
        %v6266 = vsub.f32 %v6201, %v3318
        %v6267 = vld [vmem:[%s176 + $0x10] sm:$0xff]
        %v6268 = vld [vmem:[%s176 + $0x18] sm:$0xff]
        %v6269 = vld [vmem:[%s176 + $0x30] sm:$0xff]
        %v6270 = vld [vmem:[%s176 + $0x38] sm:$0xff]
        %v6271 = vld [vmem:[%s176 + $0x50] sm:$0xff]
        %v6272 = vld [vmem:[%s176 + $0x58] sm:$0xff]
        %v6273 = vld [vmem:[%s176 + $0x70] sm:$0xff]
        %v6274 = vld [vmem:[%s176 + $0x78] sm:$0xff]
        %v6275 = vld [vmem:[%s176 + $0x90] sm:$0xff]
        %v6276 = vld [vmem:[%s176 + $0x98] sm:$0xff]
        %v6277 = vld [vmem:[%s176 + $0xb0] sm:$0xff]
        %v6278 = vld [vmem:[%s176 + $0xb8] sm:$0xff]
        %v6279 = vld [vmem:[%s176 + $0xd0] sm:$0xff]
        %v6280 = vld [vmem:[%s176 + $0xd8] sm:$0xff]
        %v6281 = vld [vmem:[%s176 + $0xf0] sm:$0xff]
        %v6282 = vld [vmem:[%s176 + $0xf8] sm:$0xff]
        %v6283 = vld [vmem:[%s176 + $0x110] sm:$0xff]
        %v6284 = vld [vmem:[%s176 + $0x118] sm:$0xff]
        %v6285 = vld [vmem:[%s176 + $0x130] sm:$0xff]
        %v6286 = vld [vmem:[%s176 + $0x138] sm:$0xff]
        %v6287 = vld [vmem:[%s176 + $0x150] sm:$0xff]
        %v6288 = vld [vmem:[%s176 + $0x158] sm:$0xff]
        %v6289 = vld [vmem:[%s176 + $0x170] sm:$0xff]
        %v6290 = vld [vmem:[%s176 + $0x178] sm:$0xff]
        %v6291 = vld [vmem:[%s176 + $0x190] sm:$0xff]
        %v6292 = vld [vmem:[%s176 + $0x198] sm:$0xff]
        %v6293 = vld [vmem:[%s176 + $0x1b0] sm:$0xff]
        %v6294 = vld [vmem:[%s176 + $0x1b8] sm:$0xff]
        %v6295 = vld [vmem:[%s176 + $0x1d0] sm:$0xff]
        %v6296 = vld [vmem:[%s176 + $0x1d8] sm:$0xff]
        %v6297 = vld [vmem:[%s176 + $0x1f0] sm:$0xff]
        %v6298 = vld [vmem:[%s176 + $0x1f8] sm:$0xff]
        %v6299 = vld [vmem:[%s176 + $0x210] sm:$0xff]
        %v6300 = vld [vmem:[%s176 + $0x218] sm:$0xff]
        %v6301 = vld [vmem:[%s176 + $0x230] sm:$0xff]
        %v6302 = vld [vmem:[%s176 + $0x238] sm:$0xff]
        %v6303 = vld [vmem:[%s176 + $0x250] sm:$0xff]
        %v6304 = vld [vmem:[%s176 + $0x258] sm:$0xff]
        %v6305 = vld [vmem:[%s176 + $0x270] sm:$0xff]
        %v6306 = vld [vmem:[%s176 + $0x278] sm:$0xff]
        %v6307 = vld [vmem:[%s176 + $0x290] sm:$0xff]
        %v6308 = vld [vmem:[%s176 + $0x298] sm:$0xff]
        %v6309 = vld [vmem:[%s176 + $0x2b0] sm:$0xff]
        %v6310 = vld [vmem:[%s176 + $0x2b8] sm:$0xff]
        %v6311 = vld [vmem:[%s176 + $0x2d0] sm:$0xff]
        %v6312 = vld [vmem:[%s176 + $0x2d8] sm:$0xff]
        %v6313 = vld [vmem:[%s176 + $0x2f0] sm:$0xff]
        %v6314 = vld [vmem:[%s176 + $0x2f8] sm:$0xff]
        %v6315 = vld [vmem:[%s176 + $0x310] sm:$0xff]
        %v6316 = vld [vmem:[%s176 + $0x318] sm:$0xff]
        %v6317 = vld [vmem:[%s176 + $0x330] sm:$0xff]
        %v6318 = vld [vmem:[%s176 + $0x338] sm:$0xff]
        %v6319 = vld [vmem:[%s176 + $0x350] sm:$0xff]
        %v6320 = vld [vmem:[%s176 + $0x358] sm:$0xff]
        %v6321 = vld [vmem:[%s176 + $0x370] sm:$0xff]
        %v6322 = vld [vmem:[%s176 + $0x378] sm:$0xff]
        %v6323 = vld [vmem:[%s176 + $0x390] sm:$0xff]
        %v6324 = vld [vmem:[%s176 + $0x398] sm:$0xff]
        %v6325 = vld [vmem:[%s176 + $0x3b0] sm:$0xff]
        %v6326 = vld [vmem:[%s176 + $0x3b8] sm:$0xff]
        %v6327 = vld [vmem:[%s176 + $0x3d0] sm:$0xff]
        %v6328 = vld [vmem:[%s176 + $0x3d8] sm:$0xff]
        %v6329 = vld [vmem:[%s176 + $0x3f0] sm:$0xff]
        %v6330 = vld [vmem:[%s176 + $0x3f8] sm:$0xff]
        %v6331 = vmul.f32 %v6203, 0.0054742405
        %v6332 = vmul.f32 %v6204, 0.0054742405
        %v6333 = vmul.f32 %v6205, 0.0054742405
        %v6334 = vmul.f32 %v6206, 0.0054742405
        %v6335 = vmul.f32 %v6207, 0.0054742405
        %v6336 = vmul.f32 %v6208, 0.0054742405
        %v6337 = vmul.f32 %v6209, 0.0054742405
        %v6338 = vmul.f32 %v6210, 0.0054742405
        %v6339 = vmul.f32 %v6211, 0.0054742405
        %v6340 = vmul.f32 %v6212, 0.0054742405
        %v6341 = vmul.f32 %v6213, 0.0054742405
        %v6342 = vmul.f32 %v6214, 0.0054742405
        %v6343 = vmul.f32 %v6215, 0.0054742405
        %v6344 = vmul.f32 %v6216, 0.0054742405
        %v6345 = vmul.f32 %v6217, 0.0054742405
        %v6346 = vmul.f32 %v6218, 0.0054742405
        %v6347 = vmul.f32 %v6219, 0.0054742405
        %v6348 = vmul.f32 %v6220, 0.0054742405
        %v6349 = vmul.f32 %v6221, 0.0054742405
        %v6350 = vmul.f32 %v6222, 0.0054742405
        %v6351 = vmul.f32 %v6223, 0.0054742405
        %v6352 = vmul.f32 %v6224, 0.0054742405
        %v6353 = vmul.f32 %v6225, 0.0054742405
        %v6354 = vmul.f32 %v6226, 0.0054742405
        %v6355 = vmul.f32 %v6227, 0.0054742405
        %v6356 = vmul.f32 %v6228, 0.0054742405
        %v6357 = vmul.f32 %v6229, 0.0054742405
        %v6358 = vmul.f32 %v6230, 0.0054742405
        %v6359 = vmul.f32 %v6231, 0.0054742405
        %v6360 = vmul.f32 %v6232, 0.0054742405
        %v6361 = vmul.f32 %v6233, 0.0054742405
        %v6362 = vmul.f32 %v6234, 0.0054742405
        %v6363 = vmul.f32 %v6235, 0.0054742405
        %v6364 = vmul.f32 %v6236, 0.0054742405
        %v6365 = vmul.f32 %v6237, 0.0054742405
        %v6366 = vmul.f32 %v6238, 0.0054742405
        %v6367 = vmul.f32 %v6239, 0.0054742405
        %v6368 = vmul.f32 %v6240, 0.0054742405
        %v6369 = vmul.f32 %v6241, 0.0054742405
        %v6370 = vmul.f32 %v6242, 0.0054742405
        %v6371 = vmul.f32 %v6243, 0.0054742405
        %v6372 = vmul.f32 %v6244, 0.0054742405
        %v6373 = vmul.f32 %v6245, 0.0054742405
        %v6374 = vmul.f32 %v6246, 0.0054742405
        %v6375 = vmul.f32 %v6247, 0.0054742405
        %v6376 = vmul.f32 %v6248, 0.0054742405
        %v6377 = vmul.f32 %v6249, 0.0054742405
        %v6378 = vmul.f32 %v6250, 0.0054742405
        %v6379 = vmul.f32 %v6251, 0.0054742405
        %v6380 = vmul.f32 %v6252, 0.0054742405
        %v6381 = vmul.f32 %v6253, 0.0054742405
        %v6382 = vmul.f32 %v6254, 0.0054742405
        %v6383 = vmul.f32 %v6255, 0.0054742405
        %v6384 = vmul.f32 %v6256, 0.0054742405
        %v6385 = vmul.f32 %v6257, 0.0054742405
        %v6386 = vmul.f32 %v6258, 0.0054742405
        %v6387 = vmul.f32 %v6259, 0.0054742405
        %v6388 = vmul.f32 %v6260, 0.0054742405
        %v6389 = vmul.f32 %v6261, 0.0054742405
        %v6390 = vmul.f32 %v6262, 0.0054742405
        %v6391 = vmul.f32 %v6263, 0.0054742405
        %v6392 = vmul.f32 %v6264, 0.0054742405
        %v6393 = vmul.f32 %v6265, 0.0054742405
        %v6394 = vmul.f32 %v6266, 0.0054742405
        %v6395 = vadd.f32 %v6267, %v6331
        %v6396 = vadd.f32 %v6268, %v6332
        %v6397 = vadd.f32 %v6269, %v6333
        %v6398 = vadd.f32 %v6270, %v6334
        %v6399 = vadd.f32 %v6271, %v6335
        %v6400 = vadd.f32 %v6272, %v6336
        %v6401 = vadd.f32 %v6273, %v6337
        %v6402 = vadd.f32 %v6274, %v6338
        %v6403 = vadd.f32 %v6275, %v6339
        %v6404 = vadd.f32 %v6276, %v6340
        %v6405 = vadd.f32 %v6277, %v6341
        %v6406 = vadd.f32 %v6278, %v6342
        %v6407 = vadd.f32 %v6279, %v6343
        %v6408 = vadd.f32 %v6280, %v6344
        %v6409 = vadd.f32 %v6281, %v6345
        %v6410 = vadd.f32 %v6282, %v6346
        %v6411 = vadd.f32 %v6283, %v6347
        %v6412 = vadd.f32 %v6284, %v6348
        %v6413 = vadd.f32 %v6285, %v6349
        %v6414 = vadd.f32 %v6286, %v6350
        %v6415 = vadd.f32 %v6287, %v6351
        %v6416 = vadd.f32 %v6288, %v6352
        %v6417 = vadd.f32 %v6289, %v6353
        %v6418 = vadd.f32 %v6290, %v6354
        %v6419 = vadd.f32 %v6291, %v6355
        %v6420 = vadd.f32 %v6292, %v6356
        %v6421 = vadd.f32 %v6293, %v6357
        %v6422 = vadd.f32 %v6294, %v6358
        %v6423 = vadd.f32 %v6295, %v6359
        %v6424 = vadd.f32 %v6296, %v6360
        %v6425 = vadd.f32 %v6297, %v6361
        %v6426 = vadd.f32 %v6298, %v6362
        %v6427 = vadd.f32 %v6299, %v6363
        %v6428 = vadd.f32 %v6300, %v6364
        %v6429 = vadd.f32 %v6301, %v6365
        %v6430 = vadd.f32 %v6302, %v6366
        %v6431 = vadd.f32 %v6303, %v6367
        %v6432 = vadd.f32 %v6304, %v6368
        %v6433 = vadd.f32 %v6305, %v6369
        %v6434 = vadd.f32 %v6306, %v6370
        %v6435 = vadd.f32 %v6307, %v6371
        %v6436 = vadd.f32 %v6308, %v6372
        %v6437 = vadd.f32 %v6309, %v6373
        %v6438 = vadd.f32 %v6310, %v6374
        %v6439 = vadd.f32 %v6311, %v6375
        %v6440 = vadd.f32 %v6312, %v6376
        %v6441 = vadd.f32 %v6313, %v6377
        %v6442 = vadd.f32 %v6314, %v6378
        %v6443 = vadd.f32 %v6315, %v6379
        %v6444 = vadd.f32 %v6316, %v6380
        %v6445 = vadd.f32 %v6317, %v6381
        %v6446 = vadd.f32 %v6318, %v6382
        %v6447 = vadd.f32 %v6319, %v6383
        %v6448 = vadd.f32 %v6320, %v6384
        %v6449 = vadd.f32 %v6321, %v6385
        %v6450 = vadd.f32 %v6322, %v6386
        %v6451 = vadd.f32 %v6323, %v6387
        %v6452 = vadd.f32 %v6324, %v6388
        %v6453 = vadd.f32 %v6325, %v6389
        %v6454 = vadd.f32 %v6326, %v6390
        %v6455 = vadd.f32 %v6327, %v6391
        %v6456 = vadd.f32 %v6328, %v6392
        %v6457 = vadd.f32 %v6329, %v6393
        %v6458 = vadd.f32 %v6330, %v6394
        %6459 = vst [vmem:[%s176 + $0x10] sm:$0xff] %v6395
        %6460 = vst [vmem:[%s176 + $0x18] sm:$0xff] %v6396
        %6461 = vst [vmem:[%s176 + $0x30] sm:$0xff] %v6397
        %6462 = vst [vmem:[%s176 + $0x38] sm:$0xff] %v6398
        %6463 = vst [vmem:[%s176 + $0x50] sm:$0xff] %v6399
        %6464 = vst [vmem:[%s176 + $0x58] sm:$0xff] %v6400
        %6465 = vst [vmem:[%s176 + $0x70] sm:$0xff] %v6401
        %6466 = vst [vmem:[%s176 + $0x78] sm:$0xff] %v6402
        %6467 = vst [vmem:[%s176 + $0x90] sm:$0xff] %v6403
        %6468 = vst [vmem:[%s176 + $0x98] sm:$0xff] %v6404
        %6469 = vst [vmem:[%s176 + $0xb0] sm:$0xff] %v6405
        %6470 = vst [vmem:[%s176 + $0xb8] sm:$0xff] %v6406
        %6471 = vst [vmem:[%s176 + $0xd0] sm:$0xff] %v6407
        %6472 = vst [vmem:[%s176 + $0xd8] sm:$0xff] %v6408
        %6473 = vst [vmem:[%s176 + $0xf0] sm:$0xff] %v6409
        %6474 = vst [vmem:[%s176 + $0xf8] sm:$0xff] %v6410
        %6475 = vst [vmem:[%s176 + $0x110] sm:$0xff] %v6411
        %6476 = vst [vmem:[%s176 + $0x118] sm:$0xff] %v6412
        %6477 = vst [vmem:[%s176 + $0x130] sm:$0xff] %v6413
        %6478 = vst [vmem:[%s176 + $0x138] sm:$0xff] %v6414
        %6479 = vst [vmem:[%s176 + $0x150] sm:$0xff] %v6415
        %6480 = vst [vmem:[%s176 + $0x158] sm:$0xff] %v6416
        %6481 = vst [vmem:[%s176 + $0x170] sm:$0xff] %v6417
        %6482 = vst [vmem:[%s176 + $0x178] sm:$0xff] %v6418
        %6483 = vst [vmem:[%s176 + $0x190] sm:$0xff] %v6419
        %6484 = vst [vmem:[%s176 + $0x198] sm:$0xff] %v6420
        %6485 = vst [vmem:[%s176 + $0x1b0] sm:$0xff] %v6421
        %6486 = vst [vmem:[%s176 + $0x1b8] sm:$0xff] %v6422
        %6487 = vst [vmem:[%s176 + $0x1d0] sm:$0xff] %v6423
        %6488 = vst [vmem:[%s176 + $0x1d8] sm:$0xff] %v6424
        %6489 = vst [vmem:[%s176 + $0x1f0] sm:$0xff] %v6425
        %6490 = vst [vmem:[%s176 + $0x1f8] sm:$0xff] %v6426
        %6491 = vst [vmem:[%s176 + $0x210] sm:$0xff] %v6427
        %6492 = vst [vmem:[%s176 + $0x218] sm:$0xff] %v6428
        %6493 = vst [vmem:[%s176 + $0x230] sm:$0xff] %v6429
        %6494 = vst [vmem:[%s176 + $0x238] sm:$0xff] %v6430
        %6495 = vst [vmem:[%s176 + $0x250] sm:$0xff] %v6431
        %6496 = vst [vmem:[%s176 + $0x258] sm:$0xff] %v6432
        %6497 = vst [vmem:[%s176 + $0x270] sm:$0xff] %v6433
        %6498 = vst [vmem:[%s176 + $0x278] sm:$0xff] %v6434
        %6499 = vst [vmem:[%s176 + $0x290] sm:$0xff] %v6435
        %6500 = vst [vmem:[%s176 + $0x298] sm:$0xff] %v6436
        %6501 = vst [vmem:[%s176 + $0x2b0] sm:$0xff] %v6437
        %6502 = vst [vmem:[%s176 + $0x2b8] sm:$0xff] %v6438
        %6503 = vst [vmem:[%s176 + $0x2d0] sm:$0xff] %v6439
        %6504 = vst [vmem:[%s176 + $0x2d8] sm:$0xff] %v6440
        %6505 = vst [vmem:[%s176 + $0x2f0] sm:$0xff] %v6441
        %6506 = vst [vmem:[%s176 + $0x2f8] sm:$0xff] %v6442
        %6507 = vst [vmem:[%s176 + $0x310] sm:$0xff] %v6443
        %6508 = vst [vmem:[%s176 + $0x318] sm:$0xff] %v6444
        %6509 = vst [vmem:[%s176 + $0x330] sm:$0xff] %v6445
        %6510 = vst [vmem:[%s176 + $0x338] sm:$0xff] %v6446
        %6511 = vst [vmem:[%s176 + $0x350] sm:$0xff] %v6447
        %6512 = vst [vmem:[%s176 + $0x358] sm:$0xff] %v6448
        %6513 = vst [vmem:[%s176 + $0x370] sm:$0xff] %v6449
        %6514 = vst [vmem:[%s176 + $0x378] sm:$0xff] %v6450
        %6515 = vst [vmem:[%s176 + $0x390] sm:$0xff] %v6451
        %6516 = vst [vmem:[%s176 + $0x398] sm:$0xff] %v6452
        %6517 = vst [vmem:[%s176 + $0x3b0] sm:$0xff] %v6453
        %6518 = vst [vmem:[%s176 + $0x3b8] sm:$0xff] %v6454
        %6519 = vst [vmem:[%s176 + $0x3d0] sm:$0xff] %v6455
        %6520 = vst [vmem:[%s176 + $0x3d8] sm:$0xff] %v6456
        %6521 = vst [vmem:[%s176 + $0x3f0] sm:$0xff] %v6457
        %6522 = vst [vmem:[%s176 + $0x3f8] sm:$0xff] %v6458
        %s6523 = sand.u32 %s75, 1
        %s6524 = scalar_lea.sflag [#allocation4], %s6523
        %s6525 = sand.u32 %s75, 1
        %s6526 = smul.addr %s6525, 1024
        %s6527 = scalar_lea.vmem [#allocation7], %s6526
        // Predicated region
        $region37: #{tpu_custom_call.1} parent=27 // pred_check
          %p6528 = pneg %p85
        $region38: #{tpu_custom_call.1} parent=27 // pred_check_branch
          %6530 = sbr.rel (%p6528) target = $region40
        $region39: #{tpu_custom_call.1} parent=27 // pred_region
          %s6531 = smul.u32 4, %s20
          %s6533 = ssub.s32 16384, 16384
          %6534 = vsyncadd %s6524, %s6533
          %s6535 = smul.addr %s6531, 128
          %s6536 = scalar_lea.hbm %s2, %s6535
          %s6537 = sshll.u32 %s6527, 4
          %s6538 = int_to_ptr.vmem [resolvable:$true] %s6537
          %6543 = dma.vmem_to_hbm [thread:$0]  %s6538, 16384, %s6536, %s6524, 512, 1024, 32
        $region40: #{tpu_custom_call.1} parent=27 // pred_fallthru
          _
      $region28: #{tpu_custom_call.1} parent=5 // pred_fallthru
        _
      %p6544 = scmp.le.s32.totalorder 2, %s15
      // Predicated region
      $region41: #{tpu_custom_call.1} parent=5 // pred_check
        %p6545 = pneg %p6544
      $region42: #{tpu_custom_call.1} parent=5 // pred_check_branch
        %6547 = sbr.rel (%p6545) target = $region44
      $region43: #{tpu_custom_call.1} parent=5 // pred_region
        %s6548 = ssub.s32 %s15, 2
        // Predicated region
        $region45: #{tpu_custom_call.1} parent=43 // pred_check
          %p6549 = pneg %p91
        $region46: #{tpu_custom_call.1} parent=43 // pred_check_branch
          %6551 = sbr.rel (%p6549) target = $region48
        $region47: #{tpu_custom_call.1} parent=43 // pred_region
          %s6552 = sand.u32 %s76, 1
          %s6553 = scalar_lea.sflag [#allocation4], %s6552
          %s6554 = sand.u32 %s76, 1
          %s6555 = smul.addr %s6554, 1024
          %s6556 = scalar_lea.vmem [#allocation7], %s6555
          %6557 = dma.done %s6553, 16384
        $region48: #{tpu_custom_call.1} parent=43 // pred_fallthru
          _
      $region44: #{tpu_custom_call.1} parent=5 // pred_fallthru
        _
    $region6: #{tpu_custom_call.1} parent=1 // loop_footer
      %s19 = sadd.s32 1, %s15
    $region7: #{tpu_custom_call.1} parent=1 // loop_footer_branch
      %14 = sbr.rel target = $region3
    $region8: #{tpu_custom_call.1} parent=1 // loop_exit
      _
    %6558 = vsyncpa [#allocation3], 1
    %s6559 = scalar_lea.sflag [#allocation3], 1
    %6560 = vsyncpa %s6559, 1
    %6561 = vsyncpa [#allocation6], 1
    %s6562 = scalar_lea.sflag [#allocation6], 1
    %6563 = vsyncpa %s6562, 1
    %6564 = vsyncpa [#allocation4], 1
    %s6565 = scalar_lea.sflag [#allocation4], 1
    %6566 = vsyncpa %s6565, 1

</llo_original>
